<compile_context>
chip_gen: v6e
topology: v6e:2x2x1
jax: 0.10.0
libtpu: 0.0.40
codegen_flags: <defaults>
</compile_context>

<pallas_src>
import functools
import math

import jax
import jax.numpy as jnp
from jax import lax
from jax.experimental import pallas as pl
from jax.experimental.pallas import tpu as pltpu

# ------------------------- small synthetic config -------------------------
BATCH = 2
IMG = 16
PATCH = 4
IN_CH = 3
HIDDEN = 32
NUM_LAYERS = 2
NUM_HEADS = 4
MLP_RATIO = 4
POSEMBS = (IMG // PATCH, IMG // PATCH)          # (4, 4)
N_REF_POSITIONS = POSEMBS[0] * POSEMBS[1]       # 16
HEAD_HIDDEN = 64
HEAD_BOTTLENECK = 32
HEAD_OUTPUT = 48
LN_EPS = 1e-5                                   # nn.LayerNorm default

# Set to jnp.bfloat16 at real ViT dims for MXU peak (accumulation stays f32).
MATMUL_DTYPE = jnp.float32


# --------------------------- in-kernel helpers ---------------------------

def _mm(a, b):
    return jnp.dot(a.astype(MATMUL_DTYPE), b.astype(MATMUL_DTYPE),
                   preferred_element_type=jnp.float32)


def _gelu_exact(x):
    # nn.GELU() default = exact erf-based GELU
    return 0.5 * x * (1.0 + lax.erf(x * (1.0 / math.sqrt(2.0))))


def _layernorm(x, g, b):
    mean = jnp.mean(x, axis=-1, keepdims=True)
    xc = x - mean
    var = jnp.mean(xc * xc, axis=-1, keepdims=True)
    return xc * lax.rsqrt(var + LN_EPS) * g + b


def _softmax_rows(s):
    s = s - jnp.max(s, axis=-1, keepdims=True)
    p = jnp.exp(s)
    return p * pl.reciprocal(jnp.sum(p, axis=-1, keepdims=True), approx=True)


def _mha_into_proj(q, k, v, proj_w, num_heads):
    """Multi-head attention fused with the output projection.

    q, k, v: (S, C) values.  proj_w: (C, C).  Heads are lane slices of width
    D = C // num_heads; each head's output is accumulated straight through the
    matching rows of proj_w (no concat, no head-dim transpose).
    """
    S, C = q.shape
    D = C // num_heads
    scale = 1.0 / math.sqrt(D)
    acc = jnp.zeros((S, C), jnp.float32)
    for h in range(num_heads):
        sl = slice(h * D, (h + 1) * D)
        qh = q[:, sl]
        kh = k[:, sl]
        vh = v[:, sl]
        p = _softmax_rows(_mm(qh, kh.T) * scale)      # (S, S)
        oh = _mm(p, vh)                               # (S, D)
        acc = acc + _mm(oh, proj_w[sl, :])            # (S, C)
    return acc


# ------------------------------ fused kernel ------------------------------

def _fused_forward_kernel(*refs, num_layers, num_heads):
    """Whole eval-mode ViT4LOCA forward for one batch element.

    Ref order (inputs then outputs):
      patches, embed_w, embed_b, pos,
      [per encoder block x num_layers: ln1_g, ln1_b, qkv_w, qkv_b, proj_w,
       proj_b, ln2_g, ln2_b, fc1_w, fc1_b, fc2_w, fc2_b],
      enc_norm_g, enc_norm_b,
      head: w1, b1, w2, b2, wb, bb, wproto_hat,
      cross: ln1_g, ln1_b, wq, bq, wk, bk, wv, bv, wo, bo,
             ln2_g, ln2_b, fc1_w, fc1_b, fc2_w, fc2_b,
      final_norm_g, final_norm_b, pos_pred_w, pos_pred_b,
      out_ref, cluster_ref, repr_ref
    """
    it = iter(refs)
    p_ref = next(it)
    embed_w = next(it); embed_b = next(it); pos = next(it)
    blocks = [tuple(next(it) for _ in range(12)) for _ in range(num_layers)]
    ng = next(it); nb = next(it)
    hw1 = next(it); hb1 = next(it); hw2 = next(it); hb2 = next(it)
    hwb = next(it); hbb = next(it); wproto = next(it)
    cg1 = next(it); cb1 = next(it)
    wq = next(it); bq = next(it); wk = next(it); bk = next(it)
    wv = next(it); bv = next(it); wo = next(it); bo = next(it)
    cg2 = next(it); cb2 = next(it)
    cf1w = next(it); cf1b = next(it); cf2w = next(it); cf2b = next(it)
    fng = next(it); fnb = next(it); pw = next(it); pb = next(it)
    out_ref = next(it); clu_ref = next(it); repr_ref = next(it)

    # --- ToTokenSequence: stride==kernel conv as im2row matmul + learned PE ---
    x = _mm(p_ref[...].astype(jnp.float32), embed_w[...]) + embed_b[...] + pos[...]
    C = x.shape[-1]

    # --- encoder blocks (timm-style Block, eval mode: drop_path = identity) ---
    for l in range(num_layers):
        (ln1_g, ln1_b, qkv_w, qkv_b, proj_w, proj_b,
         ln2_g, ln2_b, fc1_w, fc1_b, fc2_w, fc2_b) = blocks[l]
        h = _layernorm(x, ln1_g[...], ln1_b[...])
        qkv = _mm(h, qkv_w[...]) + qkv_b[...]                 # (S, 3C)
        q = qkv[:, 0:C]
        k = qkv[:, C:2 * C]
        v = qkv[:, 2 * C:3 * C]
        x = x + _mha_into_proj(q, k, v, proj_w[...], num_heads) + proj_b[...]
        h = _layernorm(x, ln2_g[...], ln2_b[...])
        h = _gelu_exact(_mm(h, fc1_w[...]) + fc1_b[...])
        x = x + _mm(h, fc2_w[...]) + fc2_b[...]

    # --- encoder_norm -> patches_repr ---
    xn = _layernorm(x, ng[...], nb[...])
    repr_ref[...] = xn.astype(repr_ref.dtype)

    # --- ProjectionHead (cluster predictions); wproto pre weight-normalized ---
    h = _mm(xn, hw1[...]) + hb1[...]                          # first_layer
    h = _gelu_exact(_mm(h, hw2[...]) + hb2[...])              # mlp_layers[0]
    h = _mm(h, hwb[...]) + hbb[...]                           # bottleneck
    nrm = jnp.maximum(jnp.sqrt(jnp.sum(h * h, axis=-1, keepdims=True)), 1e-12)
    h = h * pl.reciprocal(nrm, approx=True)                   # F.normalize
    clu_ref[...] = _mm(h, wproto[...]).astype(clu_ref.dtype)  # prototypes

    # --- cross-attention block: q-stream == kv-stream == patches_repr ---
    xc = xn
    qn = _layernorm(xc, cg1[...], cb1[...])
    q = _mm(qn, wq[...]) + bq[...]
    k = _mm(qn, wk[...]) + bk[...]
    v = _mm(qn, wv[...]) + bv[...]
    xc = xc + _mha_into_proj(q, k, v, wo[...], num_heads) + bo[...]
    h = _layernorm(xc, cg2[...], cb2[...])
    h = _gelu_exact(_mm(h, cf1w[...]) + cf1b[...])
    xc = xc + _mm(h, cf2w[...]) + cf2b[...]

    # --- final_norm + position_predictor ---
    y = _layernorm(xc, fng[...], fnb[...])
    out_ref[...] = (_mm(y, pw[...]) + pb[...]).astype(out_ref.dtype)


# --------------------------- pallas_call wrapper ---------------------------

def _act_spec(S, F):
    # per-batch activation block; batch dim is the (parallel) grid axis
    return pl.BlockSpec((None, S, F), lambda b: (b, 0, 0))


def _w_spec(shape):
    nd = len(shape)
    return pl.BlockSpec(shape, lambda b: (0,) * nd)


def pallas_vit4loca_fused(patches, params, wproto_hat, *, num_heads, num_layers):
    B, S, K = patches.shape
    C = params["embed_w"].shape[1]
    NP = wproto_hat.shape[1]
    NR = params["pos_pred_w"].shape[1]

    # (h, w) == posembs -> no interpolation; flatten the learned grid PE.
    pos2d = params["pos_embed"].reshape(S, C)

    weights = [params["embed_w"], params["embed_b"], pos2d]
    for blk in params["blocks"]:
        weights += [blk["ln1_g"], blk["ln1_b"], blk["qkv_w"], blk["qkv_b"],
                    blk["proj_w"], blk["proj_b"], blk["ln2_g"], blk["ln2_b"],
                    blk["fc1_w"], blk["fc1_b"], blk["fc2_w"], blk["fc2_b"]]
    hp = params["head"]
    weights += [params["enc_norm_g"], params["enc_norm_b"],
                hp["w1"], hp["b1"], hp["w2"], hp["b2"],
                hp["wb"], hp["bb"], wproto_hat]
    cp = params["cross"]
    weights += [cp["ln1_g"], cp["ln1_b"], cp["wq"], cp["bq"], cp["wk"], cp["bk"],
                cp["wv"], cp["bv"], cp["wo"], cp["bo"],
                cp["ln2_g"], cp["ln2_b"], cp["fc1_w"], cp["fc1_b"],
                cp["fc2_w"], cp["fc2_b"],
                params["final_norm_g"], params["final_norm_b"],
                params["pos_pred_w"], params["pos_pred_b"]]

    kernel = functools.partial(_fused_forward_kernel,
                               num_layers=num_layers, num_heads=num_heads)
    out, cluster, patches_repr = pl.pallas_call(
        kernel,
        out_shape=(jax.ShapeDtypeStruct((B, S, NR), patches.dtype),
                   jax.ShapeDtypeStruct((B, S, NP), patches.dtype),
                   jax.ShapeDtypeStruct((B, S, C), patches.dtype)),
        grid=(B,),
        in_specs=[_act_spec(S, K)] + [_w_spec(w.shape) for w in weights],
        out_specs=(_act_spec(S, NR), _act_spec(S, NP), _act_spec(S, C)),
        compiler_params=pltpu.CompilerParams(
            dimension_semantics=("parallel",)),
    )(patches, *weights)
    return out, cluster, patches_repr


# ------------------------------ model forward ------------------------------

def vit4loca_forward(params, x_nchw):
    """Eval-mode forward: seqlen=-1, drop_moment='early', use_pe=True, inputs_kv=None."""
    B, Cin, H, W = x_nchw.shape
    P = PATCH
    hg, wg = H // P, W // P
    S = hg * wg
    # Patch-embedding conv (stride == kernel) as im2row; the matmul runs in-kernel.
    patches = x_nchw.reshape(B, Cin, hg, P, wg, P)
    patches = patches.transpose(0, 2, 4, 1, 3, 5).reshape(B, S, Cin * P * P)

    # WeightNormLinear: torch weight (out,in), norm over dim=0 (the out dim);
    # with (in,out) storage that is axis=1.  Hoisted out of the kernel
    # (constant parameter at inference).
    wp = params["head"]["wproto"]
    wp_hat = wp / (jnp.sqrt(jnp.sum(wp * wp, axis=1, keepdims=True)) + 1e-10)

    out, cluster, patches_repr = pallas_vit4loca_fused(
        patches, params, wp_hat, num_heads=NUM_HEADS, num_layers=NUM_LAYERS)
    cluster_pred = cluster.reshape(-1, HEAD_OUTPUT)
    return out, cluster_pred, patches_repr, None   # idx_kept_tokens=None (seqlen=-1)


# ------------------------------ parameter init ------------------------------

def init_params(key):
    keys = iter(jax.random.split(key, 64))

    def nrm(shape, scale=0.02):
        return jax.random.normal(next(keys), shape, jnp.float32) * scale

    C = HIDDEN
    M = C * MLP_RATIO
    params = {
        "embed_w": nrm((IN_CH * PATCH * PATCH, HIDDEN), 0.05),
        "embed_b": nrm((1, HIDDEN), 0.01),
        "pos_embed": nrm((1, POSEMBS[0], POSEMBS[1], HIDDEN), 1.0 / math.sqrt(HIDDEN)),
        "enc_norm_g": jnp.ones((1, C), jnp.float32),
        "enc_norm_b": jnp.zeros((1, C), jnp.float32),
        "final_norm_g": jnp.ones((1, C), jnp.float32),
        "final_norm_b": jnp.zeros((1, C), jnp.float32),
        "pos_pred_w": nrm((C, N_REF_POSITIONS)),
        "pos_pred_b": nrm((1, N_REF_POSITIONS), 0.01),
    }
    params["blocks"] = [
        dict(ln1_g=jnp.ones((1, C), jnp.float32), ln1_b=jnp.zeros((1, C), jnp.float32),
             qkv_w=nrm((C, 3 * C)), qkv_b=nrm((1, 3 * C), 0.01),
             proj_w=nrm((C, C)), proj_b=nrm((1, C), 0.01),
             ln2_g=jnp.ones((1, C), jnp.float32), ln2_b=jnp.zeros((1, C), jnp.float32),
             fc1_w=nrm((C, M)), fc1_b=nrm((1, M), 0.01),
             fc2_w=nrm((M, C)), fc2_b=nrm((1, C), 0.01))
        for _ in range(NUM_LAYERS)
    ]
    params["head"] = dict(
        w1=nrm((C, HEAD_HIDDEN)), b1=nrm((1, HEAD_HIDDEN), 0.01),
        w2=nrm((HEAD_HIDDEN, HEAD_HIDDEN)), b2=nrm((1, HEAD_HIDDEN), 0.01),
        wb=nrm((HEAD_HIDDEN, HEAD_BOTTLENECK)), bb=nrm((1, HEAD_BOTTLENECK), 0.01),
        wproto=nrm((HEAD_BOTTLENECK, HEAD_OUTPUT)),
    )
    params["cross"] = dict(
        ln1_g=jnp.ones((1, C), jnp.float32), ln1_b=jnp.zeros((1, C), jnp.float32),
        wq=nrm((C, C)), bq=nrm((1, C), 0.01),
        wk=nrm((C, C)), bk=nrm((1, C), 0.01),
        wv=nrm((C, C)), bv=nrm((1, C), 0.01),
        wo=nrm((C, C)), bo=nrm((1, C), 0.01),
        ln2_g=jnp.ones((1, C), jnp.float32), ln2_b=jnp.zeros((1, C), jnp.float32),
        fc1_w=nrm((C, M)), fc1_b=nrm((1, M), 0.01),
        fc2_w=nrm((M, C)), fc2_b=nrm((1, C), 0.01),
    )
    return params


# ----------------------------------- main -----------------------------------

if __name__ == "__main__":
    key = jax.random.PRNGKey(0)
    pkey, xkey = jax.random.split(key)
    params = init_params(pkey)
    x = jax.random.normal(xkey, (BATCH, IN_CH, IMG, IMG), jnp.float32)

    fwd = jax.jit(vit4loca_forward)
    out, cluster_pred, patches_repr, idx_kept = fwd(params, x)
    jax.block_until_ready((out, cluster_pred, patches_repr))

    assert out.shape == (BATCH, N_REF_POSITIONS, N_REF_POSITIONS)
    assert cluster_pred.shape == (BATCH * N_REF_POSITIONS, HEAD_OUTPUT)
    assert patches_repr.shape == (BATCH, N_REF_POSITIONS, HIDDEN)
    assert idx_kept is None
    assert bool(jnp.all(jnp.isfinite(out)))
    assert bool(jnp.all(jnp.isfinite(cluster_pred)))
    assert bool(jnp.all(jnp.isfinite(patches_repr)))
    print("KERNEL_OK")
</pallas_src>

<mosaic_0001>
module attributes {stable_mosaic.version = 11 : i64} {
  func.func @_fused_forward_kernel(%arg0: i32, %arg1: memref<1x16x48xf32, #tpu.memory_space<vmem>>, %arg2: memref<48x32xf32, #tpu.memory_space<vmem>>, %arg3: memref<1x32xf32, #tpu.memory_space<vmem>>, %arg4: memref<16x32xf32, #tpu.memory_space<vmem>>, %arg5: memref<1x32xf32, #tpu.memory_space<vmem>>, %arg6: memref<1x32xf32, #tpu.memory_space<vmem>>, %arg7: memref<32x96xf32, #tpu.memory_space<vmem>>, %arg8: memref<1x96xf32, #tpu.memory_space<vmem>>, %arg9: memref<32x32xf32, #tpu.memory_space<vmem>>, %arg10: memref<1x32xf32, #tpu.memory_space<vmem>>, %arg11: memref<1x32xf32, #tpu.memory_space<vmem>>, %arg12: memref<1x32xf32, #tpu.memory_space<vmem>>, %arg13: memref<32x128xf32, #tpu.memory_space<vmem>>, %arg14: memref<1x128xf32, #tpu.memory_space<vmem>>, %arg15: memref<128x32xf32, #tpu.memory_space<vmem>>, %arg16: memref<1x32xf32, #tpu.memory_space<vmem>>, %arg17: memref<1x32xf32, #tpu.memory_space<vmem>>, %arg18: memref<1x32xf32, #tpu.memory_space<vmem>>, %arg19: memref<32x96xf32, #tpu.memory_space<vmem>>, %arg20: memref<1x96xf32, #tpu.memory_space<vmem>>, %arg21: memref<32x32xf32, #tpu.memory_space<vmem>>, %arg22: memref<1x32xf32, #tpu.memory_space<vmem>>, %arg23: memref<1x32xf32, #tpu.memory_space<vmem>>, %arg24: memref<1x32xf32, #tpu.memory_space<vmem>>, %arg25: memref<32x128xf32, #tpu.memory_space<vmem>>, %arg26: memref<1x128xf32, #tpu.memory_space<vmem>>, %arg27: memref<128x32xf32, #tpu.memory_space<vmem>>, %arg28: memref<1x32xf32, #tpu.memory_space<vmem>>, %arg29: memref<1x32xf32, #tpu.memory_space<vmem>>, %arg30: memref<1x32xf32, #tpu.memory_space<vmem>>, %arg31: memref<32x64xf32, #tpu.memory_space<vmem>>, %arg32: memref<1x64xf32, #tpu.memory_space<vmem>>, %arg33: memref<64x64xf32, #tpu.memory_space<vmem>>, %arg34: memref<1x64xf32, #tpu.memory_space<vmem>>, %arg35: memref<64x32xf32, #tpu.memory_space<vmem>>, %arg36: memref<1x32xf32, #tpu.memory_space<vmem>>, %arg37: memref<32x48xf32, #tpu.memory_space<vmem>>, %arg38: memref<1x32xf32, #tpu.memory_space<vmem>>, %arg39: memref<1x32xf32, #tpu.memory_space<vmem>>, %arg40: memref<32x32xf32, #tpu.memory_space<vmem>>, %arg41: memref<1x32xf32, #tpu.memory_space<vmem>>, %arg42: memref<32x32xf32, #tpu.memory_space<vmem>>, %arg43: memref<1x32xf32, #tpu.memory_space<vmem>>, %arg44: memref<32x32xf32, #tpu.memory_space<vmem>>, %arg45: memref<1x32xf32, #tpu.memory_space<vmem>>, %arg46: memref<32x32xf32, #tpu.memory_space<vmem>>, %arg47: memref<1x32xf32, #tpu.memory_space<vmem>>, %arg48: memref<1x32xf32, #tpu.memory_space<vmem>>, %arg49: memref<1x32xf32, #tpu.memory_space<vmem>>, %arg50: memref<32x128xf32, #tpu.memory_space<vmem>>, %arg51: memref<1x128xf32, #tpu.memory_space<vmem>>, %arg52: memref<128x32xf32, #tpu.memory_space<vmem>>, %arg53: memref<1x32xf32, #tpu.memory_space<vmem>>, %arg54: memref<1x32xf32, #tpu.memory_space<vmem>>, %arg55: memref<1x32xf32, #tpu.memory_space<vmem>>, %arg56: memref<32x16xf32, #tpu.memory_space<vmem>>, %arg57: memref<1x16xf32, #tpu.memory_space<vmem>>, %arg58: memref<1x16x16xf32, #tpu.memory_space<vmem>>, %arg59: memref<1x16x48xf32, #tpu.memory_space<vmem>>, %arg60: memref<1x16x32xf32, #tpu.memory_space<vmem>>) attributes {dimension_semantics = [#tpu.dimension_semantics<parallel>], iteration_bounds = array<i64: 2>, scalar_prefetch = 0 : i64, scratch_operands = 0 : i64, tpu.core_type = #tpu.core_type<tc>, window_params = [{transform_indices = @transform_0, window_bounds = array<i64: 1, 16, 48>}, {pipeline_mode = #tpu.pipeline_mode<synchronous>, transform_indices = @transform_1, window_bounds = array<i64: 48, 32>}, {pipeline_mode = #tpu.pipeline_mode<synchronous>, transform_indices = @transform_2, window_bounds = array<i64: 1, 32>}, {pipeline_mode = #tpu.pipeline_mode<synchronous>, transform_indices = @transform_3, window_bounds = array<i64: 16, 32>}, {pipeline_mode = #tpu.pipeline_mode<synchronous>, transform_indices = @transform_4, window_bounds = array<i64: 1, 32>}, {pipeline_mode = #tpu.pipeline_mode<synchronous>, transform_indices = @transform_5, window_bounds = array<i64: 1, 32>}, {pipeline_mode = #tpu.pipeline_mode<synchronous>, transform_indices = @transform_6, window_bounds = array<i64: 32, 96>}, {pipeline_mode = #tpu.pipeline_mode<synchronous>, transform_indices = @transform_7, window_bounds = array<i64: 1, 96>}, {pipeline_mode = #tpu.pipeline_mode<synchronous>, transform_indices = @transform_8, window_bounds = array<i64: 32, 32>}, {pipeline_mode = #tpu.pipeline_mode<synchronous>, transform_indices = @transform_9, window_bounds = array<i64: 1, 32>}, {pipeline_mode = #tpu.pipeline_mode<synchronous>, transform_indices = @transform_10, window_bounds = array<i64: 1, 32>}, {pipeline_mode = #tpu.pipeline_mode<synchronous>, transform_indices = @transform_11, window_bounds = array<i64: 1, 32>}, {pipeline_mode = #tpu.pipeline_mode<synchronous>, transform_indices = @transform_12, window_bounds = array<i64: 32, 128>}, {pipeline_mode = #tpu.pipeline_mode<synchronous>, transform_indices = @transform_13, window_bounds = array<i64: 1, 128>}, {pipeline_mode = #tpu.pipeline_mode<synchronous>, transform_indices = @transform_14, window_bounds = array<i64: 128, 32>}, {pipeline_mode = #tpu.pipeline_mode<synchronous>, transform_indices = @transform_15, window_bounds = array<i64: 1, 32>}, {pipeline_mode = #tpu.pipeline_mode<synchronous>, transform_indices = @transform_16, window_bounds = array<i64: 1, 32>}, {pipeline_mode = #tpu.pipeline_mode<synchronous>, transform_indices = @transform_17, window_bounds = array<i64: 1, 32>}, {pipeline_mode = #tpu.pipeline_mode<synchronous>, transform_indices = @transform_18, window_bounds = array<i64: 32, 96>}, {pipeline_mode = #tpu.pipeline_mode<synchronous>, transform_indices = @transform_19, window_bounds = array<i64: 1, 96>}, {pipeline_mode = #tpu.pipeline_mode<synchronous>, transform_indices = @transform_20, window_bounds = array<i64: 32, 32>}, {pipeline_mode = #tpu.pipeline_mode<synchronous>, transform_indices = @transform_21, window_bounds = array<i64: 1, 32>}, {pipeline_mode = #tpu.pipeline_mode<synchronous>, transform_indices = @transform_22, window_bounds = array<i64: 1, 32>}, {pipeline_mode = #tpu.pipeline_mode<synchronous>, transform_indices = @transform_23, window_bounds = array<i64: 1, 32>}, {pipeline_mode = #tpu.pipeline_mode<synchronous>, transform_indices = @transform_24, window_bounds = array<i64: 32, 128>}, {pipeline_mode = #tpu.pipeline_mode<synchronous>, transform_indices = @transform_25, window_bounds = array<i64: 1, 128>}, {pipeline_mode = #tpu.pipeline_mode<synchronous>, transform_indices = @transform_26, window_bounds = array<i64: 128, 32>}, {pipeline_mode = #tpu.pipeline_mode<synchronous>, transform_indices = @transform_27, window_bounds = array<i64: 1, 32>}, {pipeline_mode = #tpu.pipeline_mode<synchronous>, transform_indices = @transform_28, window_bounds = array<i64: 1, 32>}, {pipeline_mode = #tpu.pipeline_mode<synchronous>, transform_indices = @transform_29, window_bounds = array<i64: 1, 32>}, {pipeline_mode = #tpu.pipeline_mode<synchronous>, transform_indices = @transform_30, window_bounds = array<i64: 32, 64>}, {pipeline_mode = #tpu.pipeline_mode<synchronous>, transform_indices = @transform_31, window_bounds = array<i64: 1, 64>}, {pipeline_mode = #tpu.pipeline_mode<synchronous>, transform_indices = @transform_32, window_bounds = array<i64: 64, 64>}, {pipeline_mode = #tpu.pipeline_mode<synchronous>, transform_indices = @transform_33, window_bounds = array<i64: 1, 64>}, {pipeline_mode = #tpu.pipeline_mode<synchronous>, transform_indices = @transform_34, window_bounds = array<i64: 64, 32>}, {pipeline_mode = #tpu.pipeline_mode<synchronous>, transform_indices = @transform_35, window_bounds = array<i64: 1, 32>}, {pipeline_mode = #tpu.pipeline_mode<synchronous>, transform_indices = @transform_36, window_bounds = array<i64: 32, 48>}, {pipeline_mode = #tpu.pipeline_mode<synchronous>, transform_indices = @transform_37, window_bounds = array<i64: 1, 32>}, {pipeline_mode = #tpu.pipeline_mode<synchronous>, transform_indices = @transform_38, window_bounds = array<i64: 1, 32>}, {pipeline_mode = #tpu.pipeline_mode<synchronous>, transform_indices = @transform_39, window_bounds = array<i64: 32, 32>}, {pipeline_mode = #tpu.pipeline_mode<synchronous>, transform_indices = @transform_40, window_bounds = array<i64: 1, 32>}, {pipeline_mode = #tpu.pipeline_mode<synchronous>, transform_indices = @transform_41, window_bounds = array<i64: 32, 32>}, {pipeline_mode = #tpu.pipeline_mode<synchronous>, transform_indices = @transform_42, window_bounds = array<i64: 1, 32>}, {pipeline_mode = #tpu.pipeline_mode<synchronous>, transform_indices = @transform_43, window_bounds = array<i64: 32, 32>}, {pipeline_mode = #tpu.pipeline_mode<synchronous>, transform_indices = @transform_44, window_bounds = array<i64: 1, 32>}, {pipeline_mode = #tpu.pipeline_mode<synchronous>, transform_indices = @transform_45, window_bounds = array<i64: 32, 32>}, {pipeline_mode = #tpu.pipeline_mode<synchronous>, transform_indices = @transform_46, window_bounds = array<i64: 1, 32>}, {pipeline_mode = #tpu.pipeline_mode<synchronous>, transform_indices = @transform_47, window_bounds = array<i64: 1, 32>}, {pipeline_mode = #tpu.pipeline_mode<synchronous>, transform_indices = @transform_48, window_bounds = array<i64: 1, 32>}, {pipeline_mode = #tpu.pipeline_mode<synchronous>, transform_indices = @transform_49, window_bounds = array<i64: 32, 128>}, {pipeline_mode = #tpu.pipeline_mode<synchronous>, transform_indices = @transform_50, window_bounds = array<i64: 1, 128>}, {pipeline_mode = #tpu.pipeline_mode<synchronous>, transform_indices = @transform_51, window_bounds = array<i64: 128, 32>}, {pipeline_mode = #tpu.pipeline_mode<synchronous>, transform_indices = @transform_52, window_bounds = array<i64: 1, 32>}, {pipeline_mode = #tpu.pipeline_mode<synchronous>, transform_indices = @transform_53, window_bounds = array<i64: 1, 32>}, {pipeline_mode = #tpu.pipeline_mode<synchronous>, transform_indices = @transform_54, window_bounds = array<i64: 1, 32>}, {pipeline_mode = #tpu.pipeline_mode<synchronous>, transform_indices = @transform_55, window_bounds = array<i64: 32, 16>}, {pipeline_mode = #tpu.pipeline_mode<synchronous>, transform_indices = @transform_56, window_bounds = array<i64: 1, 16>}, {transform_indices = @transform_57, window_bounds = array<i64: 1, 16, 16>}, {transform_indices = @transform_58, window_bounds = array<i64: 1, 16, 48>}, {transform_indices = @transform_59, window_bounds = array<i64: 1, 16, 32>}]} {
    %c0 = arith.constant 0 : index
    %c0_0 = arith.constant 0 : index
    %c0_1 = arith.constant 0 : index
    %0 = vector.load %arg1[%c0, %c0_0, %c0_1] : memref<1x16x48xf32, #tpu.memory_space<vmem>>, vector<1x16x48xf32>
    %1 = vector.shape_cast %0 : vector<1x16x48xf32> to vector<16x48xf32>
    %c0_2 = arith.constant 0 : index
    %c0_3 = arith.constant 0 : index
    %2 = vector.load %arg2[%c0_2, %c0_3] : memref<48x32xf32, #tpu.memory_space<vmem>>, vector<48x32xf32>
    %cst = arith.constant dense<0.000000e+00> : vector<16x32xf32>
    %3 = tpu.matmul %1, %2, %cst {dimension_numbers = #tpu.dot_dimension_numbers<[1], [0], [0], [1], [0, 0, 1, 1], [], []>} : vector<16x48xf32>, vector<48x32xf32>, vector<16x32xf32> -> vector<16x32xf32>
    %c0_4 = arith.constant 0 : index
    %c0_5 = arith.constant 0 : index
    %4 = vector.load %arg3[%c0_4, %c0_5] : memref<1x32xf32, #tpu.memory_space<vmem>>, vector<1x32xf32>
    %5 = vector.broadcast %4 : vector<1x32xf32> to vector<16x32xf32>
    %6 = arith.addf %3, %5 : vector<16x32xf32>
    %c0_6 = arith.constant 0 : index
    %c0_7 = arith.constant 0 : index
    %7 = vector.load %arg4[%c0_6, %c0_7] : memref<16x32xf32, #tpu.memory_space<vmem>>, vector<16x32xf32>
    %8 = arith.addf %6, %7 : vector<16x32xf32>
    %c0_8 = arith.constant 0 : index
    %c0_9 = arith.constant 0 : index
    %9 = vector.load %arg5[%c0_8, %c0_9] : memref<1x32xf32, #tpu.memory_space<vmem>>, vector<1x32xf32>
    %c0_10 = arith.constant 0 : index
    %c0_11 = arith.constant 0 : index
    %10 = vector.load %arg6[%c0_10, %c0_11] : memref<1x32xf32, #tpu.memory_space<vmem>>, vector<1x32xf32>
    %cst_12 = arith.constant dense<0.000000e+00> : vector<16xf32>
    %11 = vector.multi_reduction <add>, %8, %cst_12 [1] : vector<16x32xf32> to vector<16xf32>
    %12 = vector.shape_cast %11 : vector<16xf32> to vector<16x1xf32>
    %cst_13 = arith.constant 3.200000e+01 : f32
    %13 = vector.broadcast %cst_13 : f32 to vector<16x1xf32>
    %14 = arith.divf %12, %13 : vector<16x1xf32>
    %15 = vector.broadcast %14 : vector<16x1xf32> to vector<16x32xf32>
    %16 = arith.subf %8, %15 : vector<16x32xf32>
    %17 = arith.mulf %16, %16 : vector<16x32xf32>
    %cst_14 = arith.constant dense<0.000000e+00> : vector<16xf32>
    %18 = vector.multi_reduction <add>, %17, %cst_14 [1] : vector<16x32xf32> to vector<16xf32>
    %19 = vector.shape_cast %18 : vector<16xf32> to vector<16x1xf32>
    %cst_15 = arith.constant 3.200000e+01 : f32
    %20 = vector.broadcast %cst_15 : f32 to vector<16x1xf32>
    %21 = arith.divf %19, %20 : vector<16x1xf32>
    %cst_16 = arith.constant 9.99999974E-6 : f32
    %22 = vector.broadcast %cst_16 : f32 to vector<16x1xf32>
    %23 = arith.addf %21, %22 : vector<16x1xf32>
    %24 = math.rsqrt %23 : vector<16x1xf32>
    %25 = vector.broadcast %24 : vector<16x1xf32> to vector<16x32xf32>
    %26 = arith.mulf %16, %25 : vector<16x32xf32>
    %27 = vector.broadcast %9 : vector<1x32xf32> to vector<16x32xf32>
    %28 = arith.mulf %26, %27 : vector<16x32xf32>
    %29 = vector.broadcast %10 : vector<1x32xf32> to vector<16x32xf32>
    %30 = arith.addf %28, %29 : vector<16x32xf32>
    %c0_17 = arith.constant 0 : index
    %c0_18 = arith.constant 0 : index
    %31 = vector.load %arg7[%c0_17, %c0_18] : memref<32x96xf32, #tpu.memory_space<vmem>>, vector<32x96xf32>
    %cst_19 = arith.constant dense<0.000000e+00> : vector<16x96xf32>
    %32 = tpu.matmul %30, %31, %cst_19 {dimension_numbers = #tpu.dot_dimension_numbers<[1], [0], [0], [1], [0, 0, 1, 1], [], []>} : vector<16x32xf32>, vector<32x96xf32>, vector<16x96xf32> -> vector<16x96xf32>
    %c0_20 = arith.constant 0 : index
    %c0_21 = arith.constant 0 : index
    %33 = vector.load %arg8[%c0_20, %c0_21] : memref<1x96xf32, #tpu.memory_space<vmem>>, vector<1x96xf32>
    %34 = vector.broadcast %33 : vector<1x96xf32> to vector<16x96xf32>
    %35 = arith.addf %32, %34 : vector<16x96xf32>
    %36 = vector.extract_strided_slice %35 {offsets = [0, 0], sizes = [16, 32], strides = [1, 1]} : vector<16x96xf32> to vector<16x32xf32>
    %37 = vector.extract_strided_slice %35 {offsets = [0, 32], sizes = [16, 32], strides = [1, 1]} : vector<16x96xf32> to vector<16x32xf32>
    %38 = vector.extract_strided_slice %35 {offsets = [0, 64], sizes = [16, 32], strides = [1, 1]} : vector<16x96xf32> to vector<16x32xf32>
    %c0_22 = arith.constant 0 : index
    %c0_23 = arith.constant 0 : index
    %39 = vector.load %arg9[%c0_22, %c0_23] : memref<32x32xf32, #tpu.memory_space<vmem>>, vector<32x32xf32>
    %cst_24 = arith.constant 0.000000e+00 : f32
    %40 = vector.broadcast %cst_24 : f32 to vector<16x32xf32>
    %41 = vector.extract_strided_slice %36 {offsets = [0, 0], sizes = [16, 8], strides = [1, 1]} : vector<16x32xf32> to vector<16x8xf32>
    %42 = vector.extract_strided_slice %37 {offsets = [0, 0], sizes = [16, 8], strides = [1, 1]} : vector<16x32xf32> to vector<16x8xf32>
    %43 = vector.extract_strided_slice %38 {offsets = [0, 0], sizes = [16, 8], strides = [1, 1]} : vector<16x32xf32> to vector<16x8xf32>
    %44 = tpu.transpose %42, [1, 0] : vector<16x8xf32> -> vector<8x16xf32>
    %cst_25 = arith.constant dense<0.000000e+00> : vector<16x16xf32>
    %45 = tpu.matmul %41, %44, %cst_25 {dimension_numbers = #tpu.dot_dimension_numbers<[1], [0], [0], [1], [0, 0, 1, 1], [], []>} : vector<16x8xf32>, vector<8x16xf32>, vector<16x16xf32> -> vector<16x16xf32>
    %cst_26 = arith.constant 0.353553385 : f32
    %46 = vector.broadcast %cst_26 : f32 to vector<16x16xf32>
    %47 = arith.mulf %45, %46 : vector<16x16xf32>
    %cst_27 = arith.constant dense<0xFF800000> : vector<16xf32>
    %48 = vector.multi_reduction <maximumf>, %47, %cst_27 [1] : vector<16x16xf32> to vector<16xf32>
    %49 = vector.shape_cast %48 : vector<16xf32> to vector<16x1xf32>
    %50 = vector.broadcast %49 : vector<16x1xf32> to vector<16x16xf32>
    %51 = arith.subf %47, %50 : vector<16x16xf32>
    %52 = math.exp %51 : vector<16x16xf32>
    %cst_28 = arith.constant dense<0.000000e+00> : vector<16xf32>
    %53 = vector.multi_reduction <add>, %52, %cst_28 [1] : vector<16x16xf32> to vector<16xf32>
    %54 = vector.shape_cast %53 : vector<16xf32> to vector<16x1xf32>
    %55 = tpu.reciprocal %54 {approx = true} : vector<16x1xf32> -> vector<16x1xf32>
    %56 = vector.broadcast %55 : vector<16x1xf32> to vector<16x16xf32>
    %57 = arith.mulf %52, %56 : vector<16x16xf32>
    %cst_29 = arith.constant dense<0.000000e+00> : vector<16x8xf32>
    %58 = tpu.matmul %57, %43, %cst_29 {dimension_numbers = #tpu.dot_dimension_numbers<[1], [0], [0], [1], [0, 0, 1, 1], [], []>} : vector<16x16xf32>, vector<16x8xf32>, vector<16x8xf32> -> vector<16x8xf32>
    %59 = vector.extract_strided_slice %39 {offsets = [0, 0], sizes = [8, 32], strides = [1, 1]} : vector<32x32xf32> to vector<8x32xf32>
    %cst_30 = arith.constant dense<0.000000e+00> : vector<16x32xf32>
    %60 = tpu.matmul %58, %59, %cst_30 {dimension_numbers = #tpu.dot_dimension_numbers<[1], [0], [0], [1], [0, 0, 1, 1], [], []>} : vector<16x8xf32>, vector<8x32xf32>, vector<16x32xf32> -> vector<16x32xf32>
    %61 = arith.addf %40, %60 : vector<16x32xf32>
    %62 = vector.extract_strided_slice %36 {offsets = [0, 8], sizes = [16, 8], strides = [1, 1]} : vector<16x32xf32> to vector<16x8xf32>
    %63 = vector.extract_strided_slice %37 {offsets = [0, 8], sizes = [16, 8], strides = [1, 1]} : vector<16x32xf32> to vector<16x8xf32>
    %64 = vector.extract_strided_slice %38 {offsets = [0, 8], sizes = [16, 8], strides = [1, 1]} : vector<16x32xf32> to vector<16x8xf32>
    %65 = tpu.transpose %63, [1, 0] : vector<16x8xf32> -> vector<8x16xf32>
    %cst_31 = arith.constant dense<0.000000e+00> : vector<16x16xf32>
    %66 = tpu.matmul %62, %65, %cst_31 {dimension_numbers = #tpu.dot_dimension_numbers<[1], [0], [0], [1], [0, 0, 1, 1], [], []>} : vector<16x8xf32>, vector<8x16xf32>, vector<16x16xf32> -> vector<16x16xf32>
    %cst_32 = arith.constant 0.353553385 : f32
    %67 = vector.broadcast %cst_32 : f32 to vector<16x16xf32>
    %68 = arith.mulf %66, %67 : vector<16x16xf32>
    %cst_33 = arith.constant dense<0xFF800000> : vector<16xf32>
    %69 = vector.multi_reduction <maximumf>, %68, %cst_33 [1] : vector<16x16xf32> to vector<16xf32>
    %70 = vector.shape_cast %69 : vector<16xf32> to vector<16x1xf32>
    %71 = vector.broadcast %70 : vector<16x1xf32> to vector<16x16xf32>
    %72 = arith.subf %68, %71 : vector<16x16xf32>
    %73 = math.exp %72 : vector<16x16xf32>
    %cst_34 = arith.constant dense<0.000000e+00> : vector<16xf32>
    %74 = vector.multi_reduction <add>, %73, %cst_34 [1] : vector<16x16xf32> to vector<16xf32>
    %75 = vector.shape_cast %74 : vector<16xf32> to vector<16x1xf32>
    %76 = tpu.reciprocal %75 {approx = true} : vector<16x1xf32> -> vector<16x1xf32>
    %77 = vector.broadcast %76 : vector<16x1xf32> to vector<16x16xf32>
    %78 = arith.mulf %73, %77 : vector<16x16xf32>
    %cst_35 = arith.constant dense<0.000000e+00> : vector<16x8xf32>
    %79 = tpu.matmul %78, %64, %cst_35 {dimension_numbers = #tpu.dot_dimension_numbers<[1], [0], [0], [1], [0, 0, 1, 1], [], []>} : vector<16x16xf32>, vector<16x8xf32>, vector<16x8xf32> -> vector<16x8xf32>
    %80 = vector.extract_strided_slice %39 {offsets = [8, 0], sizes = [8, 32], strides = [1, 1]} : vector<32x32xf32> to vector<8x32xf32>
    %cst_36 = arith.constant dense<0.000000e+00> : vector<16x32xf32>
    %81 = tpu.matmul %79, %80, %cst_36 {dimension_numbers = #tpu.dot_dimension_numbers<[1], [0], [0], [1], [0, 0, 1, 1], [], []>} : vector<16x8xf32>, vector<8x32xf32>, vector<16x32xf32> -> vector<16x32xf32>
    %82 = arith.addf %61, %81 : vector<16x32xf32>
    %83 = vector.extract_strided_slice %36 {offsets = [0, 16], sizes = [16, 8], strides = [1, 1]} : vector<16x32xf32> to vector<16x8xf32>
    %84 = vector.extract_strided_slice %37 {offsets = [0, 16], sizes = [16, 8], strides = [1, 1]} : vector<16x32xf32> to vector<16x8xf32>
    %85 = vector.extract_strided_slice %38 {offsets = [0, 16], sizes = [16, 8], strides = [1, 1]} : vector<16x32xf32> to vector<16x8xf32>
    %86 = tpu.transpose %84, [1, 0] : vector<16x8xf32> -> vector<8x16xf32>
    %cst_37 = arith.constant dense<0.000000e+00> : vector<16x16xf32>
    %87 = tpu.matmul %83, %86, %cst_37 {dimension_numbers = #tpu.dot_dimension_numbers<[1], [0], [0], [1], [0, 0, 1, 1], [], []>} : vector<16x8xf32>, vector<8x16xf32>, vector<16x16xf32> -> vector<16x16xf32>
    %cst_38 = arith.constant 0.353553385 : f32
    %88 = vector.broadcast %cst_38 : f32 to vector<16x16xf32>
    %89 = arith.mulf %87, %88 : vector<16x16xf32>
    %cst_39 = arith.constant dense<0xFF800000> : vector<16xf32>
    %90 = vector.multi_reduction <maximumf>, %89, %cst_39 [1] : vector<16x16xf32> to vector<16xf32>
    %91 = vector.shape_cast %90 : vector<16xf32> to vector<16x1xf32>
    %92 = vector.broadcast %91 : vector<16x1xf32> to vector<16x16xf32>
    %93 = arith.subf %89, %92 : vector<16x16xf32>
    %94 = math.exp %93 : vector<16x16xf32>
    %cst_40 = arith.constant dense<0.000000e+00> : vector<16xf32>
    %95 = vector.multi_reduction <add>, %94, %cst_40 [1] : vector<16x16xf32> to vector<16xf32>
    %96 = vector.shape_cast %95 : vector<16xf32> to vector<16x1xf32>
    %97 = tpu.reciprocal %96 {approx = true} : vector<16x1xf32> -> vector<16x1xf32>
    %98 = vector.broadcast %97 : vector<16x1xf32> to vector<16x16xf32>
    %99 = arith.mulf %94, %98 : vector<16x16xf32>
    %cst_41 = arith.constant dense<0.000000e+00> : vector<16x8xf32>
    %100 = tpu.matmul %99, %85, %cst_41 {dimension_numbers = #tpu.dot_dimension_numbers<[1], [0], [0], [1], [0, 0, 1, 1], [], []>} : vector<16x16xf32>, vector<16x8xf32>, vector<16x8xf32> -> vector<16x8xf32>
    %101 = vector.extract_strided_slice %39 {offsets = [16, 0], sizes = [8, 32], strides = [1, 1]} : vector<32x32xf32> to vector<8x32xf32>
    %cst_42 = arith.constant dense<0.000000e+00> : vector<16x32xf32>
    %102 = tpu.matmul %100, %101, %cst_42 {dimension_numbers = #tpu.dot_dimension_numbers<[1], [0], [0], [1], [0, 0, 1, 1], [], []>} : vector<16x8xf32>, vector<8x32xf32>, vector<16x32xf32> -> vector<16x32xf32>
    %103 = arith.addf %82, %102 : vector<16x32xf32>
    %104 = vector.extract_strided_slice %36 {offsets = [0, 24], sizes = [16, 8], strides = [1, 1]} : vector<16x32xf32> to vector<16x8xf32>
    %105 = vector.extract_strided_slice %37 {offsets = [0, 24], sizes = [16, 8], strides = [1, 1]} : vector<16x32xf32> to vector<16x8xf32>
    %106 = vector.extract_strided_slice %38 {offsets = [0, 24], sizes = [16, 8], strides = [1, 1]} : vector<16x32xf32> to vector<16x8xf32>
    %107 = tpu.transpose %105, [1, 0] : vector<16x8xf32> -> vector<8x16xf32>
    %cst_43 = arith.constant dense<0.000000e+00> : vector<16x16xf32>
    %108 = tpu.matmul %104, %107, %cst_43 {dimension_numbers = #tpu.dot_dimension_numbers<[1], [0], [0], [1], [0, 0, 1, 1], [], []>} : vector<16x8xf32>, vector<8x16xf32>, vector<16x16xf32> -> vector<16x16xf32>
    %cst_44 = arith.constant 0.353553385 : f32
    %109 = vector.broadcast %cst_44 : f32 to vector<16x16xf32>
    %110 = arith.mulf %108, %109 : vector<16x16xf32>
    %cst_45 = arith.constant dense<0xFF800000> : vector<16xf32>
    %111 = vector.multi_reduction <maximumf>, %110, %cst_45 [1] : vector<16x16xf32> to vector<16xf32>
    %112 = vector.shape_cast %111 : vector<16xf32> to vector<16x1xf32>
    %113 = vector.broadcast %112 : vector<16x1xf32> to vector<16x16xf32>
    %114 = arith.subf %110, %113 : vector<16x16xf32>
    %115 = math.exp %114 : vector<16x16xf32>
    %cst_46 = arith.constant dense<0.000000e+00> : vector<16xf32>
    %116 = vector.multi_reduction <add>, %115, %cst_46 [1] : vector<16x16xf32> to vector<16xf32>
    %117 = vector.shape_cast %116 : vector<16xf32> to vector<16x1xf32>
    %118 = tpu.reciprocal %117 {approx = true} : vector<16x1xf32> -> vector<16x1xf32>
    %119 = vector.broadcast %118 : vector<16x1xf32> to vector<16x16xf32>
    %120 = arith.mulf %115, %119 : vector<16x16xf32>
    %cst_47 = arith.constant dense<0.000000e+00> : vector<16x8xf32>
    %121 = tpu.matmul %120, %106, %cst_47 {dimension_numbers = #tpu.dot_dimension_numbers<[1], [0], [0], [1], [0, 0, 1, 1], [], []>} : vector<16x16xf32>, vector<16x8xf32>, vector<16x8xf32> -> vector<16x8xf32>
    %122 = vector.extract_strided_slice %39 {offsets = [24, 0], sizes = [8, 32], strides = [1, 1]} : vector<32x32xf32> to vector<8x32xf32>
    %cst_48 = arith.constant dense<0.000000e+00> : vector<16x32xf32>
    %123 = tpu.matmul %121, %122, %cst_48 {dimension_numbers = #tpu.dot_dimension_numbers<[1], [0], [0], [1], [0, 0, 1, 1], [], []>} : vector<16x8xf32>, vector<8x32xf32>, vector<16x32xf32> -> vector<16x32xf32>
    %124 = arith.addf %103, %123 : vector<16x32xf32>
    %125 = arith.addf %8, %124 : vector<16x32xf32>
    %c0_49 = arith.constant 0 : index
    %c0_50 = arith.constant 0 : index
    %126 = vector.load %arg10[%c0_49, %c0_50] : memref<1x32xf32, #tpu.memory_space<vmem>>, vector<1x32xf32>
    %127 = vector.broadcast %126 : vector<1x32xf32> to vector<16x32xf32>
    %128 = arith.addf %125, %127 : vector<16x32xf32>
    %c0_51 = arith.constant 0 : index
    %c0_52 = arith.constant 0 : index
    %129 = vector.load %arg11[%c0_51, %c0_52] : memref<1x32xf32, #tpu.memory_space<vmem>>, vector<1x32xf32>
    %c0_53 = arith.constant 0 : index
    %c0_54 = arith.constant 0 : index
    %130 = vector.load %arg12[%c0_53, %c0_54] : memref<1x32xf32, #tpu.memory_space<vmem>>, vector<1x32xf32>
    %cst_55 = arith.constant dense<0.000000e+00> : vector<16xf32>
    %131 = vector.multi_reduction <add>, %128, %cst_55 [1] : vector<16x32xf32> to vector<16xf32>
    %132 = vector.shape_cast %131 : vector<16xf32> to vector<16x1xf32>
    %cst_56 = arith.constant 3.200000e+01 : f32
    %133 = vector.broadcast %cst_56 : f32 to vector<16x1xf32>
    %134 = arith.divf %132, %133 : vector<16x1xf32>
    %135 = vector.broadcast %134 : vector<16x1xf32> to vector<16x32xf32>
    %136 = arith.subf %128, %135 : vector<16x32xf32>
    %137 = arith.mulf %136, %136 : vector<16x32xf32>
    %cst_57 = arith.constant dense<0.000000e+00> : vector<16xf32>
    %138 = vector.multi_reduction <add>, %137, %cst_57 [1] : vector<16x32xf32> to vector<16xf32>
    %139 = vector.shape_cast %138 : vector<16xf32> to vector<16x1xf32>
    %cst_58 = arith.constant 3.200000e+01 : f32
    %140 = vector.broadcast %cst_58 : f32 to vector<16x1xf32>
    %141 = arith.divf %139, %140 : vector<16x1xf32>
    %cst_59 = arith.constant 9.99999974E-6 : f32
    %142 = vector.broadcast %cst_59 : f32 to vector<16x1xf32>
    %143 = arith.addf %141, %142 : vector<16x1xf32>
    %144 = math.rsqrt %143 : vector<16x1xf32>
    %145 = vector.broadcast %144 : vector<16x1xf32> to vector<16x32xf32>
    %146 = arith.mulf %136, %145 : vector<16x32xf32>
    %147 = vector.broadcast %129 : vector<1x32xf32> to vector<16x32xf32>
    %148 = arith.mulf %146, %147 : vector<16x32xf32>
    %149 = vector.broadcast %130 : vector<1x32xf32> to vector<16x32xf32>
    %150 = arith.addf %148, %149 : vector<16x32xf32>
    %c0_60 = arith.constant 0 : index
    %c0_61 = arith.constant 0 : index
    %151 = vector.load %arg13[%c0_60, %c0_61] : memref<32x128xf32, #tpu.memory_space<vmem>>, vector<32x128xf32>
    %cst_62 = arith.constant dense<0.000000e+00> : vector<16x128xf32>
    %152 = tpu.matmul %150, %151, %cst_62 {dimension_numbers = #tpu.dot_dimension_numbers<[1], [0], [0], [1], [0, 0, 1, 1], [], []>} : vector<16x32xf32>, vector<32x128xf32>, vector<16x128xf32> -> vector<16x128xf32>
    %c0_63 = arith.constant 0 : index
    %c0_64 = arith.constant 0 : index
    %153 = vector.load %arg14[%c0_63, %c0_64] : memref<1x128xf32, #tpu.memory_space<vmem>>, vector<1x128xf32>
    %154 = vector.broadcast %153 : vector<1x128xf32> to vector<16x128xf32>
    %155 = arith.addf %152, %154 : vector<16x128xf32>
    %cst_65 = arith.constant 5.000000e-01 : f32
    %156 = vector.broadcast %cst_65 : f32 to vector<16x128xf32>
    %157 = arith.mulf %156, %155 : vector<16x128xf32>
    %cst_66 = arith.constant 0.707106769 : f32
    %158 = vector.broadcast %cst_66 : f32 to vector<16x128xf32>
    %159 = arith.mulf %155, %158 : vector<16x128xf32>
    %160 = math.erf %159 : vector<16x128xf32>
    %cst_67 = arith.constant 1.000000e+00 : f32
    %161 = vector.broadcast %cst_67 : f32 to vector<16x128xf32>
    %162 = arith.addf %161, %160 : vector<16x128xf32>
    %163 = arith.mulf %157, %162 : vector<16x128xf32>
    %c0_68 = arith.constant 0 : index
    %c0_69 = arith.constant 0 : index
    %164 = vector.load %arg15[%c0_68, %c0_69] : memref<128x32xf32, #tpu.memory_space<vmem>>, vector<128x32xf32>
    %cst_70 = arith.constant dense<0.000000e+00> : vector<16x32xf32>
    %165 = tpu.matmul %163, %164, %cst_70 {dimension_numbers = #tpu.dot_dimension_numbers<[1], [0], [0], [1], [0, 0, 1, 1], [], []>} : vector<16x128xf32>, vector<128x32xf32>, vector<16x32xf32> -> vector<16x32xf32>
    %166 = arith.addf %128, %165 : vector<16x32xf32>
    %c0_71 = arith.constant 0 : index
    %c0_72 = arith.constant 0 : index
    %167 = vector.load %arg16[%c0_71, %c0_72] : memref<1x32xf32, #tpu.memory_space<vmem>>, vector<1x32xf32>
    %168 = vector.broadcast %167 : vector<1x32xf32> to vector<16x32xf32>
    %169 = arith.addf %166, %168 : vector<16x32xf32>
    %c0_73 = arith.constant 0 : index
    %c0_74 = arith.constant 0 : index
    %170 = vector.load %arg17[%c0_73, %c0_74] : memref<1x32xf32, #tpu.memory_space<vmem>>, vector<1x32xf32>
    %c0_75 = arith.constant 0 : index
    %c0_76 = arith.constant 0 : index
    %171 = vector.load %arg18[%c0_75, %c0_76] : memref<1x32xf32, #tpu.memory_space<vmem>>, vector<1x32xf32>
    %cst_77 = arith.constant dense<0.000000e+00> : vector<16xf32>
    %172 = vector.multi_reduction <add>, %169, %cst_77 [1] : vector<16x32xf32> to vector<16xf32>
    %173 = vector.shape_cast %172 : vector<16xf32> to vector<16x1xf32>
    %cst_78 = arith.constant 3.200000e+01 : f32
    %174 = vector.broadcast %cst_78 : f32 to vector<16x1xf32>
    %175 = arith.divf %173, %174 : vector<16x1xf32>
    %176 = vector.broadcast %175 : vector<16x1xf32> to vector<16x32xf32>
    %177 = arith.subf %169, %176 : vector<16x32xf32>
    %178 = arith.mulf %177, %177 : vector<16x32xf32>
    %cst_79 = arith.constant dense<0.000000e+00> : vector<16xf32>
    %179 = vector.multi_reduction <add>, %178, %cst_79 [1] : vector<16x32xf32> to vector<16xf32>
    %180 = vector.shape_cast %179 : vector<16xf32> to vector<16x1xf32>
    %cst_80 = arith.constant 3.200000e+01 : f32
    %181 = vector.broadcast %cst_80 : f32 to vector<16x1xf32>
    %182 = arith.divf %180, %181 : vector<16x1xf32>
    %cst_81 = arith.constant 9.99999974E-6 : f32
    %183 = vector.broadcast %cst_81 : f32 to vector<16x1xf32>
    %184 = arith.addf %182, %183 : vector<16x1xf32>
    %185 = math.rsqrt %184 : vector<16x1xf32>
    %186 = vector.broadcast %185 : vector<16x1xf32> to vector<16x32xf32>
    %187 = arith.mulf %177, %186 : vector<16x32xf32>
    %188 = vector.broadcast %170 : vector<1x32xf32> to vector<16x32xf32>
    %189 = arith.mulf %187, %188 : vector<16x32xf32>
    %190 = vector.broadcast %171 : vector<1x32xf32> to vector<16x32xf32>
    %191 = arith.addf %189, %190 : vector<16x32xf32>
    %c0_82 = arith.constant 0 : index
    %c0_83 = arith.constant 0 : index
    %192 = vector.load %arg19[%c0_82, %c0_83] : memref<32x96xf32, #tpu.memory_space<vmem>>, vector<32x96xf32>
    %cst_84 = arith.constant dense<0.000000e+00> : vector<16x96xf32>
    %193 = tpu.matmul %191, %192, %cst_84 {dimension_numbers = #tpu.dot_dimension_numbers<[1], [0], [0], [1], [0, 0, 1, 1], [], []>} : vector<16x32xf32>, vector<32x96xf32>, vector<16x96xf32> -> vector<16x96xf32>
    %c0_85 = arith.constant 0 : index
    %c0_86 = arith.constant 0 : index
    %194 = vector.load %arg20[%c0_85, %c0_86] : memref<1x96xf32, #tpu.memory_space<vmem>>, vector<1x96xf32>
    %195 = vector.broadcast %194 : vector<1x96xf32> to vector<16x96xf32>
    %196 = arith.addf %193, %195 : vector<16x96xf32>
    %197 = vector.extract_strided_slice %196 {offsets = [0, 0], sizes = [16, 32], strides = [1, 1]} : vector<16x96xf32> to vector<16x32xf32>
    %198 = vector.extract_strided_slice %196 {offsets = [0, 32], sizes = [16, 32], strides = [1, 1]} : vector<16x96xf32> to vector<16x32xf32>
    %199 = vector.extract_strided_slice %196 {offsets = [0, 64], sizes = [16, 32], strides = [1, 1]} : vector<16x96xf32> to vector<16x32xf32>
    %c0_87 = arith.constant 0 : index
    %c0_88 = arith.constant 0 : index
    %200 = vector.load %arg21[%c0_87, %c0_88] : memref<32x32xf32, #tpu.memory_space<vmem>>, vector<32x32xf32>
    %cst_89 = arith.constant 0.000000e+00 : f32
    %201 = vector.broadcast %cst_89 : f32 to vector<16x32xf32>
    %202 = vector.extract_strided_slice %197 {offsets = [0, 0], sizes = [16, 8], strides = [1, 1]} : vector<16x32xf32> to vector<16x8xf32>
    %203 = vector.extract_strided_slice %198 {offsets = [0, 0], sizes = [16, 8], strides = [1, 1]} : vector<16x32xf32> to vector<16x8xf32>
    %204 = vector.extract_strided_slice %199 {offsets = [0, 0], sizes = [16, 8], strides = [1, 1]} : vector<16x32xf32> to vector<16x8xf32>
    %205 = tpu.transpose %203, [1, 0] : vector<16x8xf32> -> vector<8x16xf32>
    %cst_90 = arith.constant dense<0.000000e+00> : vector<16x16xf32>
    %206 = tpu.matmul %202, %205, %cst_90 {dimension_numbers = #tpu.dot_dimension_numbers<[1], [0], [0], [1], [0, 0, 1, 1], [], []>} : vector<16x8xf32>, vector<8x16xf32>, vector<16x16xf32> -> vector<16x16xf32>
    %cst_91 = arith.constant 0.353553385 : f32
    %207 = vector.broadcast %cst_91 : f32 to vector<16x16xf32>
    %208 = arith.mulf %206, %207 : vector<16x16xf32>
    %cst_92 = arith.constant dense<0xFF800000> : vector<16xf32>
    %209 = vector.multi_reduction <maximumf>, %208, %cst_92 [1] : vector<16x16xf32> to vector<16xf32>
    %210 = vector.shape_cast %209 : vector<16xf32> to vector<16x1xf32>
    %211 = vector.broadcast %210 : vector<16x1xf32> to vector<16x16xf32>
    %212 = arith.subf %208, %211 : vector<16x16xf32>
    %213 = math.exp %212 : vector<16x16xf32>
    %cst_93 = arith.constant dense<0.000000e+00> : vector<16xf32>
    %214 = vector.multi_reduction <add>, %213, %cst_93 [1] : vector<16x16xf32> to vector<16xf32>
    %215 = vector.shape_cast %214 : vector<16xf32> to vector<16x1xf32>
    %216 = tpu.reciprocal %215 {approx = true} : vector<16x1xf32> -> vector<16x1xf32>
    %217 = vector.broadcast %216 : vector<16x1xf32> to vector<16x16xf32>
    %218 = arith.mulf %213, %217 : vector<16x16xf32>
    %cst_94 = arith.constant dense<0.000000e+00> : vector<16x8xf32>
    %219 = tpu.matmul %218, %204, %cst_94 {dimension_numbers = #tpu.dot_dimension_numbers<[1], [0], [0], [1], [0, 0, 1, 1], [], []>} : vector<16x16xf32>, vector<16x8xf32>, vector<16x8xf32> -> vector<16x8xf32>
    %220 = vector.extract_strided_slice %200 {offsets = [0, 0], sizes = [8, 32], strides = [1, 1]} : vector<32x32xf32> to vector<8x32xf32>
    %cst_95 = arith.constant dense<0.000000e+00> : vector<16x32xf32>
    %221 = tpu.matmul %219, %220, %cst_95 {dimension_numbers = #tpu.dot_dimension_numbers<[1], [0], [0], [1], [0, 0, 1, 1], [], []>} : vector<16x8xf32>, vector<8x32xf32>, vector<16x32xf32> -> vector<16x32xf32>
    %222 = arith.addf %201, %221 : vector<16x32xf32>
    %223 = vector.extract_strided_slice %197 {offsets = [0, 8], sizes = [16, 8], strides = [1, 1]} : vector<16x32xf32> to vector<16x8xf32>
    %224 = vector.extract_strided_slice %198 {offsets = [0, 8], sizes = [16, 8], strides = [1, 1]} : vector<16x32xf32> to vector<16x8xf32>
    %225 = vector.extract_strided_slice %199 {offsets = [0, 8], sizes = [16, 8], strides = [1, 1]} : vector<16x32xf32> to vector<16x8xf32>
    %226 = tpu.transpose %224, [1, 0] : vector<16x8xf32> -> vector<8x16xf32>
    %cst_96 = arith.constant dense<0.000000e+00> : vector<16x16xf32>
    %227 = tpu.matmul %223, %226, %cst_96 {dimension_numbers = #tpu.dot_dimension_numbers<[1], [0], [0], [1], [0, 0, 1, 1], [], []>} : vector<16x8xf32>, vector<8x16xf32>, vector<16x16xf32> -> vector<16x16xf32>
    %cst_97 = arith.constant 0.353553385 : f32
    %228 = vector.broadcast %cst_97 : f32 to vector<16x16xf32>
    %229 = arith.mulf %227, %228 : vector<16x16xf32>
    %cst_98 = arith.constant dense<0xFF800000> : vector<16xf32>
    %230 = vector.multi_reduction <maximumf>, %229, %cst_98 [1] : vector<16x16xf32> to vector<16xf32>
    %231 = vector.shape_cast %230 : vector<16xf32> to vector<16x1xf32>
    %232 = vector.broadcast %231 : vector<16x1xf32> to vector<16x16xf32>
    %233 = arith.subf %229, %232 : vector<16x16xf32>
    %234 = math.exp %233 : vector<16x16xf32>
    %cst_99 = arith.constant dense<0.000000e+00> : vector<16xf32>
    %235 = vector.multi_reduction <add>, %234, %cst_99 [1] : vector<16x16xf32> to vector<16xf32>
    %236 = vector.shape_cast %235 : vector<16xf32> to vector<16x1xf32>
    %237 = tpu.reciprocal %236 {approx = true} : vector<16x1xf32> -> vector<16x1xf32>
    %238 = vector.broadcast %237 : vector<16x1xf32> to vector<16x16xf32>
    %239 = arith.mulf %234, %238 : vector<16x16xf32>
    %cst_100 = arith.constant dense<0.000000e+00> : vector<16x8xf32>
    %240 = tpu.matmul %239, %225, %cst_100 {dimension_numbers = #tpu.dot_dimension_numbers<[1], [0], [0], [1], [0, 0, 1, 1], [], []>} : vector<16x16xf32>, vector<16x8xf32>, vector<16x8xf32> -> vector<16x8xf32>
    %241 = vector.extract_strided_slice %200 {offsets = [8, 0], sizes = [8, 32], strides = [1, 1]} : vector<32x32xf32> to vector<8x32xf32>
    %cst_101 = arith.constant dense<0.000000e+00> : vector<16x32xf32>
    %242 = tpu.matmul %240, %241, %cst_101 {dimension_numbers = #tpu.dot_dimension_numbers<[1], [0], [0], [1], [0, 0, 1, 1], [], []>} : vector<16x8xf32>, vector<8x32xf32>, vector<16x32xf32> -> vector<16x32xf32>
    %243 = arith.addf %222, %242 : vector<16x32xf32>
    %244 = vector.extract_strided_slice %197 {offsets = [0, 16], sizes = [16, 8], strides = [1, 1]} : vector<16x32xf32> to vector<16x8xf32>
    %245 = vector.extract_strided_slice %198 {offsets = [0, 16], sizes = [16, 8], strides = [1, 1]} : vector<16x32xf32> to vector<16x8xf32>
    %246 = vector.extract_strided_slice %199 {offsets = [0, 16], sizes = [16, 8], strides = [1, 1]} : vector<16x32xf32> to vector<16x8xf32>
    %247 = tpu.transpose %245, [1, 0] : vector<16x8xf32> -> vector<8x16xf32>
    %cst_102 = arith.constant dense<0.000000e+00> : vector<16x16xf32>
    %248 = tpu.matmul %244, %247, %cst_102 {dimension_numbers = #tpu.dot_dimension_numbers<[1], [0], [0], [1], [0, 0, 1, 1], [], []>} : vector<16x8xf32>, vector<8x16xf32>, vector<16x16xf32> -> vector<16x16xf32>
    %cst_103 = arith.constant 0.353553385 : f32
    %249 = vector.broadcast %cst_103 : f32 to vector<16x16xf32>
    %250 = arith.mulf %248, %249 : vector<16x16xf32>
    %cst_104 = arith.constant dense<0xFF800000> : vector<16xf32>
    %251 = vector.multi_reduction <maximumf>, %250, %cst_104 [1] : vector<16x16xf32> to vector<16xf32>
    %252 = vector.shape_cast %251 : vector<16xf32> to vector<16x1xf32>
    %253 = vector.broadcast %252 : vector<16x1xf32> to vector<16x16xf32>
    %254 = arith.subf %250, %253 : vector<16x16xf32>
    %255 = math.exp %254 : vector<16x16xf32>
    %cst_105 = arith.constant dense<0.000000e+00> : vector<16xf32>
    %256 = vector.multi_reduction <add>, %255, %cst_105 [1] : vector<16x16xf32> to vector<16xf32>
    %257 = vector.shape_cast %256 : vector<16xf32> to vector<16x1xf32>
    %258 = tpu.reciprocal %257 {approx = true} : vector<16x1xf32> -> vector<16x1xf32>
    %259 = vector.broadcast %258 : vector<16x1xf32> to vector<16x16xf32>
    %260 = arith.mulf %255, %259 : vector<16x16xf32>
    %cst_106 = arith.constant dense<0.000000e+00> : vector<16x8xf32>
    %261 = tpu.matmul %260, %246, %cst_106 {dimension_numbers = #tpu.dot_dimension_numbers<[1], [0], [0], [1], [0, 0, 1, 1], [], []>} : vector<16x16xf32>, vector<16x8xf32>, vector<16x8xf32> -> vector<16x8xf32>
    %262 = vector.extract_strided_slice %200 {offsets = [16, 0], sizes = [8, 32], strides = [1, 1]} : vector<32x32xf32> to vector<8x32xf32>
    %cst_107 = arith.constant dense<0.000000e+00> : vector<16x32xf32>
    %263 = tpu.matmul %261, %262, %cst_107 {dimension_numbers = #tpu.dot_dimension_numbers<[1], [0], [0], [1], [0, 0, 1, 1], [], []>} : vector<16x8xf32>, vector<8x32xf32>, vector<16x32xf32> -> vector<16x32xf32>
    %264 = arith.addf %243, %263 : vector<16x32xf32>
    %265 = vector.extract_strided_slice %197 {offsets = [0, 24], sizes = [16, 8], strides = [1, 1]} : vector<16x32xf32> to vector<16x8xf32>
    %266 = vector.extract_strided_slice %198 {offsets = [0, 24], sizes = [16, 8], strides = [1, 1]} : vector<16x32xf32> to vector<16x8xf32>
    %267 = vector.extract_strided_slice %199 {offsets = [0, 24], sizes = [16, 8], strides = [1, 1]} : vector<16x32xf32> to vector<16x8xf32>
    %268 = tpu.transpose %266, [1, 0] : vector<16x8xf32> -> vector<8x16xf32>
    %cst_108 = arith.constant dense<0.000000e+00> : vector<16x16xf32>
    %269 = tpu.matmul %265, %268, %cst_108 {dimension_numbers = #tpu.dot_dimension_numbers<[1], [0], [0], [1], [0, 0, 1, 1], [], []>} : vector<16x8xf32>, vector<8x16xf32>, vector<16x16xf32> -> vector<16x16xf32>
    %cst_109 = arith.constant 0.353553385 : f32
    %270 = vector.broadcast %cst_109 : f32 to vector<16x16xf32>
    %271 = arith.mulf %269, %270 : vector<16x16xf32>
    %cst_110 = arith.constant dense<0xFF800000> : vector<16xf32>
    %272 = vector.multi_reduction <maximumf>, %271, %cst_110 [1] : vector<16x16xf32> to vector<16xf32>
    %273 = vector.shape_cast %272 : vector<16xf32> to vector<16x1xf32>
    %274 = vector.broadcast %273 : vector<16x1xf32> to vector<16x16xf32>
    %275 = arith.subf %271, %274 : vector<16x16xf32>
    %276 = math.exp %275 : vector<16x16xf32>
    %cst_111 = arith.constant dense<0.000000e+00> : vector<16xf32>
    %277 = vector.multi_reduction <add>, %276, %cst_111 [1] : vector<16x16xf32> to vector<16xf32>
    %278 = vector.shape_cast %277 : vector<16xf32> to vector<16x1xf32>
    %279 = tpu.reciprocal %278 {approx = true} : vector<16x1xf32> -> vector<16x1xf32>
    %280 = vector.broadcast %279 : vector<16x1xf32> to vector<16x16xf32>
    %281 = arith.mulf %276, %280 : vector<16x16xf32>
    %cst_112 = arith.constant dense<0.000000e+00> : vector<16x8xf32>
    %282 = tpu.matmul %281, %267, %cst_112 {dimension_numbers = #tpu.dot_dimension_numbers<[1], [0], [0], [1], [0, 0, 1, 1], [], []>} : vector<16x16xf32>, vector<16x8xf32>, vector<16x8xf32> -> vector<16x8xf32>
    %283 = vector.extract_strided_slice %200 {offsets = [24, 0], sizes = [8, 32], strides = [1, 1]} : vector<32x32xf32> to vector<8x32xf32>
    %cst_113 = arith.constant dense<0.000000e+00> : vector<16x32xf32>
    %284 = tpu.matmul %282, %283, %cst_113 {dimension_numbers = #tpu.dot_dimension_numbers<[1], [0], [0], [1], [0, 0, 1, 1], [], []>} : vector<16x8xf32>, vector<8x32xf32>, vector<16x32xf32> -> vector<16x32xf32>
    %285 = arith.addf %264, %284 : vector<16x32xf32>
    %286 = arith.addf %169, %285 : vector<16x32xf32>
    %c0_114 = arith.constant 0 : index
    %c0_115 = arith.constant 0 : index
    %287 = vector.load %arg22[%c0_114, %c0_115] : memref<1x32xf32, #tpu.memory_space<vmem>>, vector<1x32xf32>
    %288 = vector.broadcast %287 : vector<1x32xf32> to vector<16x32xf32>
    %289 = arith.addf %286, %288 : vector<16x32xf32>
    %c0_116 = arith.constant 0 : index
    %c0_117 = arith.constant 0 : index
    %290 = vector.load %arg23[%c0_116, %c0_117] : memref<1x32xf32, #tpu.memory_space<vmem>>, vector<1x32xf32>
    %c0_118 = arith.constant 0 : index
    %c0_119 = arith.constant 0 : index
    %291 = vector.load %arg24[%c0_118, %c0_119] : memref<1x32xf32, #tpu.memory_space<vmem>>, vector<1x32xf32>
    %cst_120 = arith.constant dense<0.000000e+00> : vector<16xf32>
    %292 = vector.multi_reduction <add>, %289, %cst_120 [1] : vector<16x32xf32> to vector<16xf32>
    %293 = vector.shape_cast %292 : vector<16xf32> to vector<16x1xf32>
    %cst_121 = arith.constant 3.200000e+01 : f32
    %294 = vector.broadcast %cst_121 : f32 to vector<16x1xf32>
    %295 = arith.divf %293, %294 : vector<16x1xf32>
    %296 = vector.broadcast %295 : vector<16x1xf32> to vector<16x32xf32>
    %297 = arith.subf %289, %296 : vector<16x32xf32>
    %298 = arith.mulf %297, %297 : vector<16x32xf32>
    %cst_122 = arith.constant dense<0.000000e+00> : vector<16xf32>
    %299 = vector.multi_reduction <add>, %298, %cst_122 [1] : vector<16x32xf32> to vector<16xf32>
    %300 = vector.shape_cast %299 : vector<16xf32> to vector<16x1xf32>
    %cst_123 = arith.constant 3.200000e+01 : f32
    %301 = vector.broadcast %cst_123 : f32 to vector<16x1xf32>
    %302 = arith.divf %300, %301 : vector<16x1xf32>
    %cst_124 = arith.constant 9.99999974E-6 : f32
    %303 = vector.broadcast %cst_124 : f32 to vector<16x1xf32>
    %304 = arith.addf %302, %303 : vector<16x1xf32>
    %305 = math.rsqrt %304 : vector<16x1xf32>
    %306 = vector.broadcast %305 : vector<16x1xf32> to vector<16x32xf32>
    %307 = arith.mulf %297, %306 : vector<16x32xf32>
    %308 = vector.broadcast %290 : vector<1x32xf32> to vector<16x32xf32>
    %309 = arith.mulf %307, %308 : vector<16x32xf32>
    %310 = vector.broadcast %291 : vector<1x32xf32> to vector<16x32xf32>
    %311 = arith.addf %309, %310 : vector<16x32xf32>
    %c0_125 = arith.constant 0 : index
    %c0_126 = arith.constant 0 : index
    %312 = vector.load %arg25[%c0_125, %c0_126] : memref<32x128xf32, #tpu.memory_space<vmem>>, vector<32x128xf32>
    %cst_127 = arith.constant dense<0.000000e+00> : vector<16x128xf32>
    %313 = tpu.matmul %311, %312, %cst_127 {dimension_numbers = #tpu.dot_dimension_numbers<[1], [0], [0], [1], [0, 0, 1, 1], [], []>} : vector<16x32xf32>, vector<32x128xf32>, vector<16x128xf32> -> vector<16x128xf32>
    %c0_128 = arith.constant 0 : index
    %c0_129 = arith.constant 0 : index
    %314 = vector.load %arg26[%c0_128, %c0_129] : memref<1x128xf32, #tpu.memory_space<vmem>>, vector<1x128xf32>
    %315 = vector.broadcast %314 : vector<1x128xf32> to vector<16x128xf32>
    %316 = arith.addf %313, %315 : vector<16x128xf32>
    %cst_130 = arith.constant 5.000000e-01 : f32
    %317 = vector.broadcast %cst_130 : f32 to vector<16x128xf32>
    %318 = arith.mulf %317, %316 : vector<16x128xf32>
    %cst_131 = arith.constant 0.707106769 : f32
    %319 = vector.broadcast %cst_131 : f32 to vector<16x128xf32>
    %320 = arith.mulf %316, %319 : vector<16x128xf32>
    %321 = math.erf %320 : vector<16x128xf32>
    %cst_132 = arith.constant 1.000000e+00 : f32
    %322 = vector.broadcast %cst_132 : f32 to vector<16x128xf32>
    %323 = arith.addf %322, %321 : vector<16x128xf32>
    %324 = arith.mulf %318, %323 : vector<16x128xf32>
    %c0_133 = arith.constant 0 : index
    %c0_134 = arith.constant 0 : index
    %325 = vector.load %arg27[%c0_133, %c0_134] : memref<128x32xf32, #tpu.memory_space<vmem>>, vector<128x32xf32>
    %cst_135 = arith.constant dense<0.000000e+00> : vector<16x32xf32>
    %326 = tpu.matmul %324, %325, %cst_135 {dimension_numbers = #tpu.dot_dimension_numbers<[1], [0], [0], [1], [0, 0, 1, 1], [], []>} : vector<16x128xf32>, vector<128x32xf32>, vector<16x32xf32> -> vector<16x32xf32>
    %327 = arith.addf %289, %326 : vector<16x32xf32>
    %c0_136 = arith.constant 0 : index
    %c0_137 = arith.constant 0 : index
    %328 = vector.load %arg28[%c0_136, %c0_137] : memref<1x32xf32, #tpu.memory_space<vmem>>, vector<1x32xf32>
    %329 = vector.broadcast %328 : vector<1x32xf32> to vector<16x32xf32>
    %330 = arith.addf %327, %329 : vector<16x32xf32>
    %c0_138 = arith.constant 0 : index
    %c0_139 = arith.constant 0 : index
    %331 = vector.load %arg29[%c0_138, %c0_139] : memref<1x32xf32, #tpu.memory_space<vmem>>, vector<1x32xf32>
    %c0_140 = arith.constant 0 : index
    %c0_141 = arith.constant 0 : index
    %332 = vector.load %arg30[%c0_140, %c0_141] : memref<1x32xf32, #tpu.memory_space<vmem>>, vector<1x32xf32>
    %cst_142 = arith.constant dense<0.000000e+00> : vector<16xf32>
    %333 = vector.multi_reduction <add>, %330, %cst_142 [1] : vector<16x32xf32> to vector<16xf32>
    %334 = vector.shape_cast %333 : vector<16xf32> to vector<16x1xf32>
    %cst_143 = arith.constant 3.200000e+01 : f32
    %335 = vector.broadcast %cst_143 : f32 to vector<16x1xf32>
    %336 = arith.divf %334, %335 : vector<16x1xf32>
    %337 = vector.broadcast %336 : vector<16x1xf32> to vector<16x32xf32>
    %338 = arith.subf %330, %337 : vector<16x32xf32>
    %339 = arith.mulf %338, %338 : vector<16x32xf32>
    %cst_144 = arith.constant dense<0.000000e+00> : vector<16xf32>
    %340 = vector.multi_reduction <add>, %339, %cst_144 [1] : vector<16x32xf32> to vector<16xf32>
    %341 = vector.shape_cast %340 : vector<16xf32> to vector<16x1xf32>
    %cst_145 = arith.constant 3.200000e+01 : f32
    %342 = vector.broadcast %cst_145 : f32 to vector<16x1xf32>
    %343 = arith.divf %341, %342 : vector<16x1xf32>
    %cst_146 = arith.constant 9.99999974E-6 : f32
    %344 = vector.broadcast %cst_146 : f32 to vector<16x1xf32>
    %345 = arith.addf %343, %344 : vector<16x1xf32>
    %346 = math.rsqrt %345 : vector<16x1xf32>
    %347 = vector.broadcast %346 : vector<16x1xf32> to vector<16x32xf32>
    %348 = arith.mulf %338, %347 : vector<16x32xf32>
    %349 = vector.broadcast %331 : vector<1x32xf32> to vector<16x32xf32>
    %350 = arith.mulf %348, %349 : vector<16x32xf32>
    %351 = vector.broadcast %332 : vector<1x32xf32> to vector<16x32xf32>
    %352 = arith.addf %350, %351 : vector<16x32xf32>
    %c0_147 = arith.constant 0 : index
    %c0_148 = arith.constant 0 : index
    %c0_149 = arith.constant 0 : index
    %353 = vector.load %arg60[%c0_147, %c0_148, %c0_149] : memref<1x16x32xf32, #tpu.memory_space<vmem>>, vector<1x16x32xf32>
    %354 = vector.shape_cast %353 : vector<1x16x32xf32> to vector<16x32xf32>
    %355 = vector.shape_cast %352 : vector<16x32xf32> to vector<1x16x32xf32>
    tpu.vector_store %arg60[%c0_147, %c0_148, %c0_149], %355 {strides = array<i32>} : memref<1x16x32xf32, #tpu.memory_space<vmem>>, vector<1x16x32xf32>,
    %c0_150 = arith.constant 0 : index
    %c0_151 = arith.constant 0 : index
    %356 = vector.load %arg31[%c0_150, %c0_151] : memref<32x64xf32, #tpu.memory_space<vmem>>, vector<32x64xf32>
    %cst_152 = arith.constant dense<0.000000e+00> : vector<16x64xf32>
    %357 = tpu.matmul %352, %356, %cst_152 {dimension_numbers = #tpu.dot_dimension_numbers<[1], [0], [0], [1], [0, 0, 1, 1], [], []>} : vector<16x32xf32>, vector<32x64xf32>, vector<16x64xf32> -> vector<16x64xf32>
    %c0_153 = arith.constant 0 : index
    %c0_154 = arith.constant 0 : index
    %358 = vector.load %arg32[%c0_153, %c0_154] : memref<1x64xf32, #tpu.memory_space<vmem>>, vector<1x64xf32>
    %359 = vector.broadcast %358 : vector<1x64xf32> to vector<16x64xf32>
    %360 = arith.addf %357, %359 : vector<16x64xf32>
    %c0_155 = arith.constant 0 : index
    %c0_156 = arith.constant 0 : index
    %361 = vector.load %arg33[%c0_155, %c0_156] : memref<64x64xf32, #tpu.memory_space<vmem>>, vector<64x64xf32>
    %cst_157 = arith.constant dense<0.000000e+00> : vector<16x64xf32>
    %362 = tpu.matmul %360, %361, %cst_157 {dimension_numbers = #tpu.dot_dimension_numbers<[1], [0], [0], [1], [0, 0, 1, 1], [], []>} : vector<16x64xf32>, vector<64x64xf32>, vector<16x64xf32> -> vector<16x64xf32>
    %c0_158 = arith.constant 0 : index
    %c0_159 = arith.constant 0 : index
    %363 = vector.load %arg34[%c0_158, %c0_159] : memref<1x64xf32, #tpu.memory_space<vmem>>, vector<1x64xf32>
    %364 = vector.broadcast %363 : vector<1x64xf32> to vector<16x64xf32>
    %365 = arith.addf %362, %364 : vector<16x64xf32>
    %cst_160 = arith.constant 5.000000e-01 : f32
    %366 = vector.broadcast %cst_160 : f32 to vector<16x64xf32>
    %367 = arith.mulf %366, %365 : vector<16x64xf32>
    %cst_161 = arith.constant 0.707106769 : f32
    %368 = vector.broadcast %cst_161 : f32 to vector<16x64xf32>
    %369 = arith.mulf %365, %368 : vector<16x64xf32>
    %370 = math.erf %369 : vector<16x64xf32>
    %cst_162 = arith.constant 1.000000e+00 : f32
    %371 = vector.broadcast %cst_162 : f32 to vector<16x64xf32>
    %372 = arith.addf %371, %370 : vector<16x64xf32>
    %373 = arith.mulf %367, %372 : vector<16x64xf32>
    %c0_163 = arith.constant 0 : index
    %c0_164 = arith.constant 0 : index
    %374 = vector.load %arg35[%c0_163, %c0_164] : memref<64x32xf32, #tpu.memory_space<vmem>>, vector<64x32xf32>
    %cst_165 = arith.constant dense<0.000000e+00> : vector<16x32xf32>
    %375 = tpu.matmul %373, %374, %cst_165 {dimension_numbers = #tpu.dot_dimension_numbers<[1], [0], [0], [1], [0, 0, 1, 1], [], []>} : vector<16x64xf32>, vector<64x32xf32>, vector<16x32xf32> -> vector<16x32xf32>
    %c0_166 = arith.constant 0 : index
    %c0_167 = arith.constant 0 : index
    %376 = vector.load %arg36[%c0_166, %c0_167] : memref<1x32xf32, #tpu.memory_space<vmem>>, vector<1x32xf32>
    %377 = vector.broadcast %376 : vector<1x32xf32> to vector<16x32xf32>
    %378 = arith.addf %375, %377 : vector<16x32xf32>
    %379 = arith.mulf %378, %378 : vector<16x32xf32>
    %cst_168 = arith.constant dense<0.000000e+00> : vector<16xf32>
    %380 = vector.multi_reduction <add>, %379, %cst_168 [1] : vector<16x32xf32> to vector<16xf32>
    %381 = vector.shape_cast %380 : vector<16xf32> to vector<16x1xf32>
    %382 = math.sqrt %381 : vector<16x1xf32>
    %cst_169 = arith.constant 9.99999996E-13 : f32
    %383 = vector.broadcast %cst_169 : f32 to vector<16x1xf32>
    %384 = arith.maximumf %382, %383 : vector<16x1xf32>
    %385 = tpu.reciprocal %384 {approx = true} : vector<16x1xf32> -> vector<16x1xf32>
    %386 = vector.broadcast %385 : vector<16x1xf32> to vector<16x32xf32>
    %387 = arith.mulf %378, %386 : vector<16x32xf32>
    %c0_170 = arith.constant 0 : index
    %c0_171 = arith.constant 0 : index
    %388 = vector.load %arg37[%c0_170, %c0_171] : memref<32x48xf32, #tpu.memory_space<vmem>>, vector<32x48xf32>
    %cst_172 = arith.constant dense<0.000000e+00> : vector<16x48xf32>
    %389 = tpu.matmul %387, %388, %cst_172 {dimension_numbers = #tpu.dot_dimension_numbers<[1], [0], [0], [1], [0, 0, 1, 1], [], []>} : vector<16x32xf32>, vector<32x48xf32>, vector<16x48xf32> -> vector<16x48xf32>
    %c0_173 = arith.constant 0 : index
    %c0_174 = arith.constant 0 : index
    %c0_175 = arith.constant 0 : index
    %390 = vector.load %arg59[%c0_173, %c0_174, %c0_175] : memref<1x16x48xf32, #tpu.memory_space<vmem>>, vector<1x16x48xf32>
    %391 = vector.shape_cast %390 : vector<1x16x48xf32> to vector<16x48xf32>
    %392 = vector.shape_cast %389 : vector<16x48xf32> to vector<1x16x48xf32>
    tpu.vector_store %arg59[%c0_173, %c0_174, %c0_175], %392 {strides = array<i32>} : memref<1x16x48xf32, #tpu.memory_space<vmem>>, vector<1x16x48xf32>,
    %c0_176 = arith.constant 0 : index
    %c0_177 = arith.constant 0 : index
    %393 = vector.load %arg38[%c0_176, %c0_177] : memref<1x32xf32, #tpu.memory_space<vmem>>, vector<1x32xf32>
    %c0_178 = arith.constant 0 : index
    %c0_179 = arith.constant 0 : index
    %394 = vector.load %arg39[%c0_178, %c0_179] : memref<1x32xf32, #tpu.memory_space<vmem>>, vector<1x32xf32>
    %cst_180 = arith.constant dense<0.000000e+00> : vector<16xf32>
    %395 = vector.multi_reduction <add>, %352, %cst_180 [1] : vector<16x32xf32> to vector<16xf32>
    %396 = vector.shape_cast %395 : vector<16xf32> to vector<16x1xf32>
    %cst_181 = arith.constant 3.200000e+01 : f32
    %397 = vector.broadcast %cst_181 : f32 to vector<16x1xf32>
    %398 = arith.divf %396, %397 : vector<16x1xf32>
    %399 = vector.broadcast %398 : vector<16x1xf32> to vector<16x32xf32>
    %400 = arith.subf %352, %399 : vector<16x32xf32>
    %401 = arith.mulf %400, %400 : vector<16x32xf32>
    %cst_182 = arith.constant dense<0.000000e+00> : vector<16xf32>
    %402 = vector.multi_reduction <add>, %401, %cst_182 [1] : vector<16x32xf32> to vector<16xf32>
    %403 = vector.shape_cast %402 : vector<16xf32> to vector<16x1xf32>
    %cst_183 = arith.constant 3.200000e+01 : f32
    %404 = vector.broadcast %cst_183 : f32 to vector<16x1xf32>
    %405 = arith.divf %403, %404 : vector<16x1xf32>
    %cst_184 = arith.constant 9.99999974E-6 : f32
    %406 = vector.broadcast %cst_184 : f32 to vector<16x1xf32>
    %407 = arith.addf %405, %406 : vector<16x1xf32>
    %408 = math.rsqrt %407 : vector<16x1xf32>
    %409 = vector.broadcast %408 : vector<16x1xf32> to vector<16x32xf32>
    %410 = arith.mulf %400, %409 : vector<16x32xf32>
    %411 = vector.broadcast %393 : vector<1x32xf32> to vector<16x32xf32>
    %412 = arith.mulf %410, %411 : vector<16x32xf32>
    %413 = vector.broadcast %394 : vector<1x32xf32> to vector<16x32xf32>
    %414 = arith.addf %412, %413 : vector<16x32xf32>
    %c0_185 = arith.constant 0 : index
    %c0_186 = arith.constant 0 : index
    %415 = vector.load %arg40[%c0_185, %c0_186] : memref<32x32xf32, #tpu.memory_space<vmem>>, vector<32x32xf32>
    %cst_187 = arith.constant dense<0.000000e+00> : vector<16x32xf32>
    %416 = tpu.matmul %414, %415, %cst_187 {dimension_numbers = #tpu.dot_dimension_numbers<[1], [0], [0], [1], [0, 0, 1, 1], [], []>} : vector<16x32xf32>, vector<32x32xf32>, vector<16x32xf32> -> vector<16x32xf32>
    %c0_188 = arith.constant 0 : index
    %c0_189 = arith.constant 0 : index
    %417 = vector.load %arg41[%c0_188, %c0_189] : memref<1x32xf32, #tpu.memory_space<vmem>>, vector<1x32xf32>
    %418 = vector.broadcast %417 : vector<1x32xf32> to vector<16x32xf32>
    %419 = arith.addf %416, %418 : vector<16x32xf32>
    %c0_190 = arith.constant 0 : index
    %c0_191 = arith.constant 0 : index
    %420 = vector.load %arg42[%c0_190, %c0_191] : memref<32x32xf32, #tpu.memory_space<vmem>>, vector<32x32xf32>
    %cst_192 = arith.constant dense<0.000000e+00> : vector<16x32xf32>
    %421 = tpu.matmul %414, %420, %cst_192 {dimension_numbers = #tpu.dot_dimension_numbers<[1], [0], [0], [1], [0, 0, 1, 1], [], []>} : vector<16x32xf32>, vector<32x32xf32>, vector<16x32xf32> -> vector<16x32xf32>
    %c0_193 = arith.constant 0 : index
    %c0_194 = arith.constant 0 : index
    %422 = vector.load %arg43[%c0_193, %c0_194] : memref<1x32xf32, #tpu.memory_space<vmem>>, vector<1x32xf32>
    %423 = vector.broadcast %422 : vector<1x32xf32> to vector<16x32xf32>
    %424 = arith.addf %421, %423 : vector<16x32xf32>
    %c0_195 = arith.constant 0 : index
    %c0_196 = arith.constant 0 : index
    %425 = vector.load %arg44[%c0_195, %c0_196] : memref<32x32xf32, #tpu.memory_space<vmem>>, vector<32x32xf32>
    %cst_197 = arith.constant dense<0.000000e+00> : vector<16x32xf32>
    %426 = tpu.matmul %414, %425, %cst_197 {dimension_numbers = #tpu.dot_dimension_numbers<[1], [0], [0], [1], [0, 0, 1, 1], [], []>} : vector<16x32xf32>, vector<32x32xf32>, vector<16x32xf32> -> vector<16x32xf32>
    %c0_198 = arith.constant 0 : index
    %c0_199 = arith.constant 0 : index
    %427 = vector.load %arg45[%c0_198, %c0_199] : memref<1x32xf32, #tpu.memory_space<vmem>>, vector<1x32xf32>
    %428 = vector.broadcast %427 : vector<1x32xf32> to vector<16x32xf32>
    %429 = arith.addf %426, %428 : vector<16x32xf32>
    %c0_200 = arith.constant 0 : index
    %c0_201 = arith.constant 0 : index
    %430 = vector.load %arg46[%c0_200, %c0_201] : memref<32x32xf32, #tpu.memory_space<vmem>>, vector<32x32xf32>
    %cst_202 = arith.constant 0.000000e+00 : f32
    %431 = vector.broadcast %cst_202 : f32 to vector<16x32xf32>
    %432 = vector.extract_strided_slice %419 {offsets = [0, 0], sizes = [16, 8], strides = [1, 1]} : vector<16x32xf32> to vector<16x8xf32>
    %433 = vector.extract_strided_slice %424 {offsets = [0, 0], sizes = [16, 8], strides = [1, 1]} : vector<16x32xf32> to vector<16x8xf32>
    %434 = vector.extract_strided_slice %429 {offsets = [0, 0], sizes = [16, 8], strides = [1, 1]} : vector<16x32xf32> to vector<16x8xf32>
    %435 = tpu.transpose %433, [1, 0] : vector<16x8xf32> -> vector<8x16xf32>
    %cst_203 = arith.constant dense<0.000000e+00> : vector<16x16xf32>
    %436 = tpu.matmul %432, %435, %cst_203 {dimension_numbers = #tpu.dot_dimension_numbers<[1], [0], [0], [1], [0, 0, 1, 1], [], []>} : vector<16x8xf32>, vector<8x16xf32>, vector<16x16xf32> -> vector<16x16xf32>
    %cst_204 = arith.constant 0.353553385 : f32
    %437 = vector.broadcast %cst_204 : f32 to vector<16x16xf32>
    %438 = arith.mulf %436, %437 : vector<16x16xf32>
    %cst_205 = arith.constant dense<0xFF800000> : vector<16xf32>
    %439 = vector.multi_reduction <maximumf>, %438, %cst_205 [1] : vector<16x16xf32> to vector<16xf32>
    %440 = vector.shape_cast %439 : vector<16xf32> to vector<16x1xf32>
    %441 = vector.broadcast %440 : vector<16x1xf32> to vector<16x16xf32>
    %442 = arith.subf %438, %441 : vector<16x16xf32>
    %443 = math.exp %442 : vector<16x16xf32>
    %cst_206 = arith.constant dense<0.000000e+00> : vector<16xf32>
    %444 = vector.multi_reduction <add>, %443, %cst_206 [1] : vector<16x16xf32> to vector<16xf32>
    %445 = vector.shape_cast %444 : vector<16xf32> to vector<16x1xf32>
    %446 = tpu.reciprocal %445 {approx = true} : vector<16x1xf32> -> vector<16x1xf32>
    %447 = vector.broadcast %446 : vector<16x1xf32> to vector<16x16xf32>
    %448 = arith.mulf %443, %447 : vector<16x16xf32>
    %cst_207 = arith.constant dense<0.000000e+00> : vector<16x8xf32>
    %449 = tpu.matmul %448, %434, %cst_207 {dimension_numbers = #tpu.dot_dimension_numbers<[1], [0], [0], [1], [0, 0, 1, 1], [], []>} : vector<16x16xf32>, vector<16x8xf32>, vector<16x8xf32> -> vector<16x8xf32>
    %450 = vector.extract_strided_slice %430 {offsets = [0, 0], sizes = [8, 32], strides = [1, 1]} : vector<32x32xf32> to vector<8x32xf32>
    %cst_208 = arith.constant dense<0.000000e+00> : vector<16x32xf32>
    %451 = tpu.matmul %449, %450, %cst_208 {dimension_numbers = #tpu.dot_dimension_numbers<[1], [0], [0], [1], [0, 0, 1, 1], [], []>} : vector<16x8xf32>, vector<8x32xf32>, vector<16x32xf32> -> vector<16x32xf32>
    %452 = arith.addf %431, %451 : vector<16x32xf32>
    %453 = vector.extract_strided_slice %419 {offsets = [0, 8], sizes = [16, 8], strides = [1, 1]} : vector<16x32xf32> to vector<16x8xf32>
    %454 = vector.extract_strided_slice %424 {offsets = [0, 8], sizes = [16, 8], strides = [1, 1]} : vector<16x32xf32> to vector<16x8xf32>
    %455 = vector.extract_strided_slice %429 {offsets = [0, 8], sizes = [16, 8], strides = [1, 1]} : vector<16x32xf32> to vector<16x8xf32>
    %456 = tpu.transpose %454, [1, 0] : vector<16x8xf32> -> vector<8x16xf32>
    %cst_209 = arith.constant dense<0.000000e+00> : vector<16x16xf32>
    %457 = tpu.matmul %453, %456, %cst_209 {dimension_numbers = #tpu.dot_dimension_numbers<[1], [0], [0], [1], [0, 0, 1, 1], [], []>} : vector<16x8xf32>, vector<8x16xf32>, vector<16x16xf32> -> vector<16x16xf32>
    %cst_210 = arith.constant 0.353553385 : f32
    %458 = vector.broadcast %cst_210 : f32 to vector<16x16xf32>
    %459 = arith.mulf %457, %458 : vector<16x16xf32>
    %cst_211 = arith.constant dense<0xFF800000> : vector<16xf32>
    %460 = vector.multi_reduction <maximumf>, %459, %cst_211 [1] : vector<16x16xf32> to vector<16xf32>
    %461 = vector.shape_cast %460 : vector<16xf32> to vector<16x1xf32>
    %462 = vector.broadcast %461 : vector<16x1xf32> to vector<16x16xf32>
    %463 = arith.subf %459, %462 : vector<16x16xf32>
    %464 = math.exp %463 : vector<16x16xf32>
    %cst_212 = arith.constant dense<0.000000e+00> : vector<16xf32>
    %465 = vector.multi_reduction <add>, %464, %cst_212 [1] : vector<16x16xf32> to vector<16xf32>
    %466 = vector.shape_cast %465 : vector<16xf32> to vector<16x1xf32>
    %467 = tpu.reciprocal %466 {approx = true} : vector<16x1xf32> -> vector<16x1xf32>
    %468 = vector.broadcast %467 : vector<16x1xf32> to vector<16x16xf32>
    %469 = arith.mulf %464, %468 : vector<16x16xf32>
    %cst_213 = arith.constant dense<0.000000e+00> : vector<16x8xf32>
    %470 = tpu.matmul %469, %455, %cst_213 {dimension_numbers = #tpu.dot_dimension_numbers<[1], [0], [0], [1], [0, 0, 1, 1], [], []>} : vector<16x16xf32>, vector<16x8xf32>, vector<16x8xf32> -> vector<16x8xf32>
    %471 = vector.extract_strided_slice %430 {offsets = [8, 0], sizes = [8, 32], strides = [1, 1]} : vector<32x32xf32> to vector<8x32xf32>
    %cst_214 = arith.constant dense<0.000000e+00> : vector<16x32xf32>
    %472 = tpu.matmul %470, %471, %cst_214 {dimension_numbers = #tpu.dot_dimension_numbers<[1], [0], [0], [1], [0, 0, 1, 1], [], []>} : vector<16x8xf32>, vector<8x32xf32>, vector<16x32xf32> -> vector<16x32xf32>
    %473 = arith.addf %452, %472 : vector<16x32xf32>
    %474 = vector.extract_strided_slice %419 {offsets = [0, 16], sizes = [16, 8], strides = [1, 1]} : vector<16x32xf32> to vector<16x8xf32>
    %475 = vector.extract_strided_slice %424 {offsets = [0, 16], sizes = [16, 8], strides = [1, 1]} : vector<16x32xf32> to vector<16x8xf32>
    %476 = vector.extract_strided_slice %429 {offsets = [0, 16], sizes = [16, 8], strides = [1, 1]} : vector<16x32xf32> to vector<16x8xf32>
    %477 = tpu.transpose %475, [1, 0] : vector<16x8xf32> -> vector<8x16xf32>
    %cst_215 = arith.constant dense<0.000000e+00> : vector<16x16xf32>
    %478 = tpu.matmul %474, %477, %cst_215 {dimension_numbers = #tpu.dot_dimension_numbers<[1], [0], [0], [1], [0, 0, 1, 1], [], []>} : vector<16x8xf32>, vector<8x16xf32>, vector<16x16xf32> -> vector<16x16xf32>
    %cst_216 = arith.constant 0.353553385 : f32
    %479 = vector.broadcast %cst_216 : f32 to vector<16x16xf32>
    %480 = arith.mulf %478, %479 : vector<16x16xf32>
    %cst_217 = arith.constant dense<0xFF800000> : vector<16xf32>
    %481 = vector.multi_reduction <maximumf>, %480, %cst_217 [1] : vector<16x16xf32> to vector<16xf32>
    %482 = vector.shape_cast %481 : vector<16xf32> to vector<16x1xf32>
    %483 = vector.broadcast %482 : vector<16x1xf32> to vector<16x16xf32>
    %484 = arith.subf %480, %483 : vector<16x16xf32>
    %485 = math.exp %484 : vector<16x16xf32>
    %cst_218 = arith.constant dense<0.000000e+00> : vector<16xf32>
    %486 = vector.multi_reduction <add>, %485, %cst_218 [1] : vector<16x16xf32> to vector<16xf32>
    %487 = vector.shape_cast %486 : vector<16xf32> to vector<16x1xf32>
    %488 = tpu.reciprocal %487 {approx = true} : vector<16x1xf32> -> vector<16x1xf32>
    %489 = vector.broadcast %488 : vector<16x1xf32> to vector<16x16xf32>
    %490 = arith.mulf %485, %489 : vector<16x16xf32>
    %cst_219 = arith.constant dense<0.000000e+00> : vector<16x8xf32>
    %491 = tpu.matmul %490, %476, %cst_219 {dimension_numbers = #tpu.dot_dimension_numbers<[1], [0], [0], [1], [0, 0, 1, 1], [], []>} : vector<16x16xf32>, vector<16x8xf32>, vector<16x8xf32> -> vector<16x8xf32>
    %492 = vector.extract_strided_slice %430 {offsets = [16, 0], sizes = [8, 32], strides = [1, 1]} : vector<32x32xf32> to vector<8x32xf32>
    %cst_220 = arith.constant dense<0.000000e+00> : vector<16x32xf32>
    %493 = tpu.matmul %491, %492, %cst_220 {dimension_numbers = #tpu.dot_dimension_numbers<[1], [0], [0], [1], [0, 0, 1, 1], [], []>} : vector<16x8xf32>, vector<8x32xf32>, vector<16x32xf32> -> vector<16x32xf32>
    %494 = arith.addf %473, %493 : vector<16x32xf32>
    %495 = vector.extract_strided_slice %419 {offsets = [0, 24], sizes = [16, 8], strides = [1, 1]} : vector<16x32xf32> to vector<16x8xf32>
    %496 = vector.extract_strided_slice %424 {offsets = [0, 24], sizes = [16, 8], strides = [1, 1]} : vector<16x32xf32> to vector<16x8xf32>
    %497 = vector.extract_strided_slice %429 {offsets = [0, 24], sizes = [16, 8], strides = [1, 1]} : vector<16x32xf32> to vector<16x8xf32>
    %498 = tpu.transpose %496, [1, 0] : vector<16x8xf32> -> vector<8x16xf32>
    %cst_221 = arith.constant dense<0.000000e+00> : vector<16x16xf32>
    %499 = tpu.matmul %495, %498, %cst_221 {dimension_numbers = #tpu.dot_dimension_numbers<[1], [0], [0], [1], [0, 0, 1, 1], [], []>} : vector<16x8xf32>, vector<8x16xf32>, vector<16x16xf32> -> vector<16x16xf32>
    %cst_222 = arith.constant 0.353553385 : f32
    %500 = vector.broadcast %cst_222 : f32 to vector<16x16xf32>
    %501 = arith.mulf %499, %500 : vector<16x16xf32>
    %cst_223 = arith.constant dense<0xFF800000> : vector<16xf32>
    %502 = vector.multi_reduction <maximumf>, %501, %cst_223 [1] : vector<16x16xf32> to vector<16xf32>
    %503 = vector.shape_cast %502 : vector<16xf32> to vector<16x1xf32>
    %504 = vector.broadcast %503 : vector<16x1xf32> to vector<16x16xf32>
    %505 = arith.subf %501, %504 : vector<16x16xf32>
    %506 = math.exp %505 : vector<16x16xf32>
    %cst_224 = arith.constant dense<0.000000e+00> : vector<16xf32>
    %507 = vector.multi_reduction <add>, %506, %cst_224 [1] : vector<16x16xf32> to vector<16xf32>
    %508 = vector.shape_cast %507 : vector<16xf32> to vector<16x1xf32>
    %509 = tpu.reciprocal %508 {approx = true} : vector<16x1xf32> -> vector<16x1xf32>
    %510 = vector.broadcast %509 : vector<16x1xf32> to vector<16x16xf32>
    %511 = arith.mulf %506, %510 : vector<16x16xf32>
    %cst_225 = arith.constant dense<0.000000e+00> : vector<16x8xf32>
    %512 = tpu.matmul %511, %497, %cst_225 {dimension_numbers = #tpu.dot_dimension_numbers<[1], [0], [0], [1], [0, 0, 1, 1], [], []>} : vector<16x16xf32>, vector<16x8xf32>, vector<16x8xf32> -> vector<16x8xf32>
    %513 = vector.extract_strided_slice %430 {offsets = [24, 0], sizes = [8, 32], strides = [1, 1]} : vector<32x32xf32> to vector<8x32xf32>
    %cst_226 = arith.constant dense<0.000000e+00> : vector<16x32xf32>
    %514 = tpu.matmul %512, %513, %cst_226 {dimension_numbers = #tpu.dot_dimension_numbers<[1], [0], [0], [1], [0, 0, 1, 1], [], []>} : vector<16x8xf32>, vector<8x32xf32>, vector<16x32xf32> -> vector<16x32xf32>
    %515 = arith.addf %494, %514 : vector<16x32xf32>
    %516 = arith.addf %352, %515 : vector<16x32xf32>
    %c0_227 = arith.constant 0 : index
    %c0_228 = arith.constant 0 : index
    %517 = vector.load %arg47[%c0_227, %c0_228] : memref<1x32xf32, #tpu.memory_space<vmem>>, vector<1x32xf32>
    %518 = vector.broadcast %517 : vector<1x32xf32> to vector<16x32xf32>
    %519 = arith.addf %516, %518 : vector<16x32xf32>
    %c0_229 = arith.constant 0 : index
    %c0_230 = arith.constant 0 : index
    %520 = vector.load %arg48[%c0_229, %c0_230] : memref<1x32xf32, #tpu.memory_space<vmem>>, vector<1x32xf32>
    %c0_231 = arith.constant 0 : index
    %c0_232 = arith.constant 0 : index
    %521 = vector.load %arg49[%c0_231, %c0_232] : memref<1x32xf32, #tpu.memory_space<vmem>>, vector<1x32xf32>
    %cst_233 = arith.constant dense<0.000000e+00> : vector<16xf32>
    %522 = vector.multi_reduction <add>, %519, %cst_233 [1] : vector<16x32xf32> to vector<16xf32>
    %523 = vector.shape_cast %522 : vector<16xf32> to vector<16x1xf32>
    %cst_234 = arith.constant 3.200000e+01 : f32
    %524 = vector.broadcast %cst_234 : f32 to vector<16x1xf32>
    %525 = arith.divf %523, %524 : vector<16x1xf32>
    %526 = vector.broadcast %525 : vector<16x1xf32> to vector<16x32xf32>
    %527 = arith.subf %519, %526 : vector<16x32xf32>
    %528 = arith.mulf %527, %527 : vector<16x32xf32>
    %cst_235 = arith.constant dense<0.000000e+00> : vector<16xf32>
    %529 = vector.multi_reduction <add>, %528, %cst_235 [1] : vector<16x32xf32> to vector<16xf32>
    %530 = vector.shape_cast %529 : vector<16xf32> to vector<16x1xf32>
    %cst_236 = arith.constant 3.200000e+01 : f32
    %531 = vector.broadcast %cst_236 : f32 to vector<16x1xf32>
    %532 = arith.divf %530, %531 : vector<16x1xf32>
    %cst_237 = arith.constant 9.99999974E-6 : f32
    %533 = vector.broadcast %cst_237 : f32 to vector<16x1xf32>
    %534 = arith.addf %532, %533 : vector<16x1xf32>
    %535 = math.rsqrt %534 : vector<16x1xf32>
    %536 = vector.broadcast %535 : vector<16x1xf32> to vector<16x32xf32>
    %537 = arith.mulf %527, %536 : vector<16x32xf32>
    %538 = vector.broadcast %520 : vector<1x32xf32> to vector<16x32xf32>
    %539 = arith.mulf %537, %538 : vector<16x32xf32>
    %540 = vector.broadcast %521 : vector<1x32xf32> to vector<16x32xf32>
    %541 = arith.addf %539, %540 : vector<16x32xf32>
    %c0_238 = arith.constant 0 : index
    %c0_239 = arith.constant 0 : index
    %542 = vector.load %arg50[%c0_238, %c0_239] : memref<32x128xf32, #tpu.memory_space<vmem>>, vector<32x128xf32>
    %cst_240 = arith.constant dense<0.000000e+00> : vector<16x128xf32>
    %543 = tpu.matmul %541, %542, %cst_240 {dimension_numbers = #tpu.dot_dimension_numbers<[1], [0], [0], [1], [0, 0, 1, 1], [], []>} : vector<16x32xf32>, vector<32x128xf32>, vector<16x128xf32> -> vector<16x128xf32>
    %c0_241 = arith.constant 0 : index
    %c0_242 = arith.constant 0 : index
    %544 = vector.load %arg51[%c0_241, %c0_242] : memref<1x128xf32, #tpu.memory_space<vmem>>, vector<1x128xf32>
    %545 = vector.broadcast %544 : vector<1x128xf32> to vector<16x128xf32>
    %546 = arith.addf %543, %545 : vector<16x128xf32>
    %cst_243 = arith.constant 5.000000e-01 : f32
    %547 = vector.broadcast %cst_243 : f32 to vector<16x128xf32>
    %548 = arith.mulf %547, %546 : vector<16x128xf32>
    %cst_244 = arith.constant 0.707106769 : f32
    %549 = vector.broadcast %cst_244 : f32 to vector<16x128xf32>
    %550 = arith.mulf %546, %549 : vector<16x128xf32>
    %551 = math.erf %550 : vector<16x128xf32>
    %cst_245 = arith.constant 1.000000e+00 : f32
    %552 = vector.broadcast %cst_245 : f32 to vector<16x128xf32>
    %553 = arith.addf %552, %551 : vector<16x128xf32>
    %554 = arith.mulf %548, %553 : vector<16x128xf32>
    %c0_246 = arith.constant 0 : index
    %c0_247 = arith.constant 0 : index
    %555 = vector.load %arg52[%c0_246, %c0_247] : memref<128x32xf32, #tpu.memory_space<vmem>>, vector<128x32xf32>
    %cst_248 = arith.constant dense<0.000000e+00> : vector<16x32xf32>
    %556 = tpu.matmul %554, %555, %cst_248 {dimension_numbers = #tpu.dot_dimension_numbers<[1], [0], [0], [1], [0, 0, 1, 1], [], []>} : vector<16x128xf32>, vector<128x32xf32>, vector<16x32xf32> -> vector<16x32xf32>
    %557 = arith.addf %519, %556 : vector<16x32xf32>
    %c0_249 = arith.constant 0 : index
    %c0_250 = arith.constant 0 : index
    %558 = vector.load %arg53[%c0_249, %c0_250] : memref<1x32xf32, #tpu.memory_space<vmem>>, vector<1x32xf32>
    %559 = vector.broadcast %558 : vector<1x32xf32> to vector<16x32xf32>
    %560 = arith.addf %557, %559 : vector<16x32xf32>
    %c0_251 = arith.constant 0 : index
    %c0_252 = arith.constant 0 : index
    %561 = vector.load %arg54[%c0_251, %c0_252] : memref<1x32xf32, #tpu.memory_space<vmem>>, vector<1x32xf32>
    %c0_253 = arith.constant 0 : index
    %c0_254 = arith.constant 0 : index
    %562 = vector.load %arg55[%c0_253, %c0_254] : memref<1x32xf32, #tpu.memory_space<vmem>>, vector<1x32xf32>
    %cst_255 = arith.constant dense<0.000000e+00> : vector<16xf32>
    %563 = vector.multi_reduction <add>, %560, %cst_255 [1] : vector<16x32xf32> to vector<16xf32>
    %564 = vector.shape_cast %563 : vector<16xf32> to vector<16x1xf32>
    %cst_256 = arith.constant 3.200000e+01 : f32
    %565 = vector.broadcast %cst_256 : f32 to vector<16x1xf32>
    %566 = arith.divf %564, %565 : vector<16x1xf32>
    %567 = vector.broadcast %566 : vector<16x1xf32> to vector<16x32xf32>
    %568 = arith.subf %560, %567 : vector<16x32xf32>
    %569 = arith.mulf %568, %568 : vector<16x32xf32>
    %cst_257 = arith.constant dense<0.000000e+00> : vector<16xf32>
    %570 = vector.multi_reduction <add>, %569, %cst_257 [1] : vector<16x32xf32> to vector<16xf32>
    %571 = vector.shape_cast %570 : vector<16xf32> to vector<16x1xf32>
    %cst_258 = arith.constant 3.200000e+01 : f32
    %572 = vector.broadcast %cst_258 : f32 to vector<16x1xf32>
    %573 = arith.divf %571, %572 : vector<16x1xf32>
    %cst_259 = arith.constant 9.99999974E-6 : f32
    %574 = vector.broadcast %cst_259 : f32 to vector<16x1xf32>
    %575 = arith.addf %573, %574 : vector<16x1xf32>
    %576 = math.rsqrt %575 : vector<16x1xf32>
    %577 = vector.broadcast %576 : vector<16x1xf32> to vector<16x32xf32>
    %578 = arith.mulf %568, %577 : vector<16x32xf32>
    %579 = vector.broadcast %561 : vector<1x32xf32> to vector<16x32xf32>
    %580 = arith.mulf %578, %579 : vector<16x32xf32>
    %581 = vector.broadcast %562 : vector<1x32xf32> to vector<16x32xf32>
    %582 = arith.addf %580, %581 : vector<16x32xf32>
    %c0_260 = arith.constant 0 : index
    %c0_261 = arith.constant 0 : index
    %583 = vector.load %arg56[%c0_260, %c0_261] : memref<32x16xf32, #tpu.memory_space<vmem>>, vector<32x16xf32>
    %cst_262 = arith.constant dense<0.000000e+00> : vector<16x16xf32>
    %584 = tpu.matmul %582, %583, %cst_262 {dimension_numbers = #tpu.dot_dimension_numbers<[1], [0], [0], [1], [0, 0, 1, 1], [], []>} : vector<16x32xf32>, vector<32x16xf32>, vector<16x16xf32> -> vector<16x16xf32>
    %c0_263 = arith.constant 0 : index
    %c0_264 = arith.constant 0 : index
    %585 = vector.load %arg57[%c0_263, %c0_264] : memref<1x16xf32, #tpu.memory_space<vmem>>, vector<1x16xf32>
    %586 = vector.broadcast %585 : vector<1x16xf32> to vector<16x16xf32>
    %587 = arith.addf %584, %586 : vector<16x16xf32>
    %c0_265 = arith.constant 0 : index
    %c0_266 = arith.constant 0 : index
    %c0_267 = arith.constant 0 : index
    %588 = vector.load %arg58[%c0_265, %c0_266, %c0_267] : memref<1x16x16xf32, #tpu.memory_space<vmem>>, vector<1x16x16xf32>
    %589 = vector.shape_cast %588 : vector<1x16x16xf32> to vector<16x16xf32>
    %590 = vector.shape_cast %587 : vector<16x16xf32> to vector<1x16x16xf32>
    tpu.vector_store %arg58[%c0_265, %c0_266, %c0_267], %590 {strides = array<i32>} : memref<1x16x16xf32, #tpu.memory_space<vmem>>, vector<1x16x16xf32>,
    return
  }
  func.func @transform_0(%arg0: i32) -> (i32, i32, i32) {
    %c0_i32 = arith.constant 0 : i32
    %c0_i32_0 = arith.constant 0 : i32
    %c0_i32_1 = arith.constant 0 : i32
    return %arg0, %c0_i32, %c0_i32_0 : i32, i32, i32
  }
  func.func @transform_1(%arg0: i32) -> (i32, i32) {
    %c0_i32 = arith.constant 0 : i32
    %c0_i32_0 = arith.constant 0 : i32
    %c0_i32_1 = arith.constant 0 : i32
    return %c0_i32, %c0_i32_0 : i32, i32
  }
  func.func @transform_2(%arg0: i32) -> (i32, i32) {
    %c0_i32 = arith.constant 0 : i32
    %c0_i32_0 = arith.constant 0 : i32
    %c0_i32_1 = arith.constant 0 : i32
    return %c0_i32, %c0_i32_0 : i32, i32
  }
  func.func @transform_3(%arg0: i32) -> (i32, i32) {
    %c0_i32 = arith.constant 0 : i32
    %c0_i32_0 = arith.constant 0 : i32
    %c0_i32_1 = arith.constant 0 : i32
    return %c0_i32, %c0_i32_0 : i32, i32
  }
  func.func @transform_4(%arg0: i32) -> (i32, i32) {
    %c0_i32 = arith.constant 0 : i32
    %c0_i32_0 = arith.constant 0 : i32
    %c0_i32_1 = arith.constant 0 : i32
    return %c0_i32, %c0_i32_0 : i32, i32
  }
  func.func @transform_5(%arg0: i32) -> (i32, i32) {
    %c0_i32 = arith.constant 0 : i32
    %c0_i32_0 = arith.constant 0 : i32
    %c0_i32_1 = arith.constant 0 : i32
    return %c0_i32, %c0_i32_0 : i32, i32
  }
  func.func @transform_6(%arg0: i32) -> (i32, i32) {
    %c0_i32 = arith.constant 0 : i32
    %c0_i32_0 = arith.constant 0 : i32
    %c0_i32_1 = arith.constant 0 : i32
    return %c0_i32, %c0_i32_0 : i32, i32
  }
  func.func @transform_7(%arg0: i32) -> (i32, i32) {
    %c0_i32 = arith.constant 0 : i32
    %c0_i32_0 = arith.constant 0 : i32
    %c0_i32_1 = arith.constant 0 : i32
    return %c0_i32, %c0_i32_0 : i32, i32
  }
  func.func @transform_8(%arg0: i32) -> (i32, i32) {
    %c0_i32 = arith.constant 0 : i32
    %c0_i32_0 = arith.constant 0 : i32
    %c0_i32_1 = arith.constant 0 : i32
    return %c0_i32, %c0_i32_0 : i32, i32
  }
  func.func @transform_9(%arg0: i32) -> (i32, i32) {
    %c0_i32 = arith.constant 0 : i32
    %c0_i32_0 = arith.constant 0 : i32
    %c0_i32_1 = arith.constant 0 : i32
    return %c0_i32, %c0_i32_0 : i32, i32
  }
  func.func @transform_10(%arg0: i32) -> (i32, i32) {
    %c0_i32 = arith.constant 0 : i32
    %c0_i32_0 = arith.constant 0 : i32
    %c0_i32_1 = arith.constant 0 : i32
    return %c0_i32, %c0_i32_0 : i32, i32
  }
  func.func @transform_11(%arg0: i32) -> (i32, i32) {
    %c0_i32 = arith.constant 0 : i32
    %c0_i32_0 = arith.constant 0 : i32
    %c0_i32_1 = arith.constant 0 : i32
    return %c0_i32, %c0_i32_0 : i32, i32
  }
  func.func @transform_12(%arg0: i32) -> (i32, i32) {
    %c0_i32 = arith.constant 0 : i32
    %c0_i32_0 = arith.constant 0 : i32
    %c0_i32_1 = arith.constant 0 : i32
    return %c0_i32, %c0_i32_0 : i32, i32
  }
  func.func @transform_13(%arg0: i32) -> (i32, i32) {
    %c0_i32 = arith.constant 0 : i32
    %c0_i32_0 = arith.constant 0 : i32
    %c0_i32_1 = arith.constant 0 : i32
    return %c0_i32, %c0_i32_0 : i32, i32
  }
  func.func @transform_14(%arg0: i32) -> (i32, i32) {
    %c0_i32 = arith.constant 0 : i32
    %c0_i32_0 = arith.constant 0 : i32
    %c0_i32_1 = arith.constant 0 : i32
    return %c0_i32, %c0_i32_0 : i32, i32
  }
  func.func @transform_15(%arg0: i32) -> (i32, i32) {
    %c0_i32 = arith.constant 0 : i32
    %c0_i32_0 = arith.constant 0 : i32
    %c0_i32_1 = arith.constant 0 : i32
    return %c0_i32, %c0_i32_0 : i32, i32
  }
  func.func @transform_16(%arg0: i32) -> (i32, i32) {
    %c0_i32 = arith.constant 0 : i32
    %c0_i32_0 = arith.constant 0 : i32
    %c0_i32_1 = arith.constant 0 : i32
    return %c0_i32, %c0_i32_0 : i32, i32
  }
  func.func @transform_17(%arg0: i32) -> (i32, i32) {
    %c0_i32 = arith.constant 0 : i32
    %c0_i32_0 = arith.constant 0 : i32
    %c0_i32_1 = arith.constant 0 : i32
    return %c0_i32, %c0_i32_0 : i32, i32
  }
  func.func @transform_18(%arg0: i32) -> (i32, i32) {
    %c0_i32 = arith.constant 0 : i32
    %c0_i32_0 = arith.constant 0 : i32
    %c0_i32_1 = arith.constant 0 : i32
    return %c0_i32, %c0_i32_0 : i32, i32
  }
  func.func @transform_19(%arg0: i32) -> (i32, i32) {
    %c0_i32 = arith.constant 0 : i32
    %c0_i32_0 = arith.constant 0 : i32
    %c0_i32_1 = arith.constant 0 : i32
    return %c0_i32, %c0_i32_0 : i32, i32
  }
  func.func @transform_20(%arg0: i32) -> (i32, i32) {
    %c0_i32 = arith.constant 0 : i32
    %c0_i32_0 = arith.constant 0 : i32
    %c0_i32_1 = arith.constant 0 : i32
    return %c0_i32, %c0_i32_0 : i32, i32
  }
  func.func @transform_21(%arg0: i32) -> (i32, i32) {
    %c0_i32 = arith.constant 0 : i32
    %c0_i32_0 = arith.constant 0 : i32
    %c0_i32_1 = arith.constant 0 : i32
    return %c0_i32, %c0_i32_0 : i32, i32
  }
  func.func @transform_22(%arg0: i32) -> (i32, i32) {
    %c0_i32 = arith.constant 0 : i32
    %c0_i32_0 = arith.constant 0 : i32
    %c0_i32_1 = arith.constant 0 : i32
    return %c0_i32, %c0_i32_0 : i32, i32
  }
  func.func @transform_23(%arg0: i32) -> (i32, i32) {
    %c0_i32 = arith.constant 0 : i32
    %c0_i32_0 = arith.constant 0 : i32
    %c0_i32_1 = arith.constant 0 : i32
    return %c0_i32, %c0_i32_0 : i32, i32
  }
  func.func @transform_24(%arg0: i32) -> (i32, i32) {
    %c0_i32 = arith.constant 0 : i32
    %c0_i32_0 = arith.constant 0 : i32
    %c0_i32_1 = arith.constant 0 : i32
    return %c0_i32, %c0_i32_0 : i32, i32
  }
  func.func @transform_25(%arg0: i32) -> (i32, i32) {
    %c0_i32 = arith.constant 0 : i32
    %c0_i32_0 = arith.constant 0 : i32
    %c0_i32_1 = arith.constant 0 : i32
    return %c0_i32, %c0_i32_0 : i32, i32
  }
  func.func @transform_26(%arg0: i32) -> (i32, i32) {
    %c0_i32 = arith.constant 0 : i32
    %c0_i32_0 = arith.constant 0 : i32
    %c0_i32_1 = arith.constant 0 : i32
    return %c0_i32, %c0_i32_0 : i32, i32
  }
  func.func @transform_27(%arg0: i32) -> (i32, i32) {
    %c0_i32 = arith.constant 0 : i32
    %c0_i32_0 = arith.constant 0 : i32
    %c0_i32_1 = arith.constant 0 : i32
    return %c0_i32, %c0_i32_0 : i32, i32
  }
  func.func @transform_28(%arg0: i32) -> (i32, i32) {
    %c0_i32 = arith.constant 0 : i32
    %c0_i32_0 = arith.constant 0 : i32
    %c0_i32_1 = arith.constant 0 : i32
    return %c0_i32, %c0_i32_0 : i32, i32
  }
  func.func @transform_29(%arg0: i32) -> (i32, i32) {
    %c0_i32 = arith.constant 0 : i32
    %c0_i32_0 = arith.constant 0 : i32
    %c0_i32_1 = arith.constant 0 : i32
    return %c0_i32, %c0_i32_0 : i32, i32
  }
  func.func @transform_30(%arg0: i32) -> (i32, i32) {
    %c0_i32 = arith.constant 0 : i32
    %c0_i32_0 = arith.constant 0 : i32
    %c0_i32_1 = arith.constant 0 : i32
    return %c0_i32, %c0_i32_0 : i32, i32
  }
  func.func @transform_31(%arg0: i32) -> (i32, i32) {
    %c0_i32 = arith.constant 0 : i32
    %c0_i32_0 = arith.constant 0 : i32
    %c0_i32_1 = arith.constant 0 : i32
    return %c0_i32, %c0_i32_0 : i32, i32
  }
  func.func @transform_32(%arg0: i32) -> (i32, i32) {
    %c0_i32 = arith.constant 0 : i32
    %c0_i32_0 = arith.constant 0 : i32
    %c0_i32_1 = arith.constant 0 : i32
    return %c0_i32, %c0_i32_0 : i32, i32
  }
  func.func @transform_33(%arg0: i32) -> (i32, i32) {
    %c0_i32 = arith.constant 0 : i32
    %c0_i32_0 = arith.constant 0 : i32
    %c0_i32_1 = arith.constant 0 : i32
    return %c0_i32, %c0_i32_0 : i32, i32
  }
  func.func @transform_34(%arg0: i32) -> (i32, i32) {
    %c0_i32 = arith.constant 0 : i32
    %c0_i32_0 = arith.constant 0 : i32
    %c0_i32_1 = arith.constant 0 : i32
    return %c0_i32, %c0_i32_0 : i32, i32
  }
  func.func @transform_35(%arg0: i32) -> (i32, i32) {
    %c0_i32 = arith.constant 0 : i32
    %c0_i32_0 = arith.constant 0 : i32
    %c0_i32_1 = arith.constant 0 : i32
    return %c0_i32, %c0_i32_0 : i32, i32
  }
  func.func @transform_36(%arg0: i32) -> (i32, i32) {
    %c0_i32 = arith.constant 0 : i32
    %c0_i32_0 = arith.constant 0 : i32
    %c0_i32_1 = arith.constant 0 : i32
    return %c0_i32, %c0_i32_0 : i32, i32
  }
  func.func @transform_37(%arg0: i32) -> (i32, i32) {
    %c0_i32 = arith.constant 0 : i32
    %c0_i32_0 = arith.constant 0 : i32
    %c0_i32_1 = arith.constant 0 : i32
    return %c0_i32, %c0_i32_0 : i32, i32
  }
  func.func @transform_38(%arg0: i32) -> (i32, i32) {
    %c0_i32 = arith.constant 0 : i32
    %c0_i32_0 = arith.constant 0 : i32
    %c0_i32_1 = arith.constant 0 : i32
    return %c0_i32, %c0_i32_0 : i32, i32
  }
  func.func @transform_39(%arg0: i32) -> (i32, i32) {
    %c0_i32 = arith.constant 0 : i32
    %c0_i32_0 = arith.constant 0 : i32
    %c0_i32_1 = arith.constant 0 : i32
    return %c0_i32, %c0_i32_0 : i32, i32
  }
  func.func @transform_40(%arg0: i32) -> (i32, i32) {
    %c0_i32 = arith.constant 0 : i32
    %c0_i32_0 = arith.constant 0 : i32
    %c0_i32_1 = arith.constant 0 : i32
    return %c0_i32, %c0_i32_0 : i32, i32
  }
  func.func @transform_41(%arg0: i32) -> (i32, i32) {
    %c0_i32 = arith.constant 0 : i32
    %c0_i32_0 = arith.constant 0 : i32
    %c0_i32_1 = arith.constant 0 : i32
    return %c0_i32, %c0_i32_0 : i32, i32
  }
  func.func @transform_42(%arg0: i32) -> (i32, i32) {
    %c0_i32 = arith.constant 0 : i32
    %c0_i32_0 = arith.constant 0 : i32
    %c0_i32_1 = arith.constant 0 : i32
    return %c0_i32, %c0_i32_0 : i32, i32
  }
  func.func @transform_43(%arg0: i32) -> (i32, i32) {
    %c0_i32 = arith.constant 0 : i32
    %c0_i32_0 = arith.constant 0 : i32
    %c0_i32_1 = arith.constant 0 : i32
    return %c0_i32, %c0_i32_0 : i32, i32
  }
  func.func @transform_44(%arg0: i32) -> (i32, i32) {
    %c0_i32 = arith.constant 0 : i32
    %c0_i32_0 = arith.constant 0 : i32
    %c0_i32_1 = arith.constant 0 : i32
    return %c0_i32, %c0_i32_0 : i32, i32
  }
  func.func @transform_45(%arg0: i32) -> (i32, i32) {
    %c0_i32 = arith.constant 0 : i32
    %c0_i32_0 = arith.constant 0 : i32
    %c0_i32_1 = arith.constant 0 : i32
    return %c0_i32, %c0_i32_0 : i32, i32
  }
  func.func @transform_46(%arg0: i32) -> (i32, i32) {
    %c0_i32 = arith.constant 0 : i32
    %c0_i32_0 = arith.constant 0 : i32
    %c0_i32_1 = arith.constant 0 : i32
    return %c0_i32, %c0_i32_0 : i32, i32
  }
  func.func @transform_47(%arg0: i32) -> (i32, i32) {
    %c0_i32 = arith.constant 0 : i32
    %c0_i32_0 = arith.constant 0 : i32
    %c0_i32_1 = arith.constant 0 : i32
    return %c0_i32, %c0_i32_0 : i32, i32
  }
  func.func @transform_48(%arg0: i32) -> (i32, i32) {
    %c0_i32 = arith.constant 0 : i32
    %c0_i32_0 = arith.constant 0 : i32
    %c0_i32_1 = arith.constant 0 : i32
    return %c0_i32, %c0_i32_0 : i32, i32
  }
  func.func @transform_49(%arg0: i32) -> (i32, i32) {
    %c0_i32 = arith.constant 0 : i32
    %c0_i32_0 = arith.constant 0 : i32
    %c0_i32_1 = arith.constant 0 : i32
    return %c0_i32, %c0_i32_0 : i32, i32
  }
  func.func @transform_50(%arg0: i32) -> (i32, i32) {
    %c0_i32 = arith.constant 0 : i32
    %c0_i32_0 = arith.constant 0 : i32
    %c0_i32_1 = arith.constant 0 : i32
    return %c0_i32, %c0_i32_0 : i32, i32
  }
  func.func @transform_51(%arg0: i32) -> (i32, i32) {
    %c0_i32 = arith.constant 0 : i32
    %c0_i32_0 = arith.constant 0 : i32
    %c0_i32_1 = arith.constant 0 : i32
    return %c0_i32, %c0_i32_0 : i32, i32
  }
  func.func @transform_52(%arg0: i32) -> (i32, i32) {
    %c0_i32 = arith.constant 0 : i32
    %c0_i32_0 = arith.constant 0 : i32
    %c0_i32_1 = arith.constant 0 : i32
    return %c0_i32, %c0_i32_0 : i32, i32
  }
  func.func @transform_53(%arg0: i32) -> (i32, i32) {
    %c0_i32 = arith.constant 0 : i32
    %c0_i32_0 = arith.constant 0 : i32
    %c0_i32_1 = arith.constant 0 : i32
    return %c0_i32, %c0_i32_0 : i32, i32
  }
  func.func @transform_54(%arg0: i32) -> (i32, i32) {
    %c0_i32 = arith.constant 0 : i32
    %c0_i32_0 = arith.constant 0 : i32
    %c0_i32_1 = arith.constant 0 : i32
    return %c0_i32, %c0_i32_0 : i32, i32
  }
  func.func @transform_55(%arg0: i32) -> (i32, i32) {
    %c0_i32 = arith.constant 0 : i32
    %c0_i32_0 = arith.constant 0 : i32
    %c0_i32_1 = arith.constant 0 : i32
    return %c0_i32, %c0_i32_0 : i32, i32
  }
  func.func @transform_56(%arg0: i32) -> (i32, i32) {
    %c0_i32 = arith.constant 0 : i32
    %c0_i32_0 = arith.constant 0 : i32
    %c0_i32_1 = arith.constant 0 : i32
    return %c0_i32, %c0_i32_0 : i32, i32
  }
  func.func @transform_57(%arg0: i32) -> (i32, i32, i32) {
    %c0_i32 = arith.constant 0 : i32
    %c0_i32_0 = arith.constant 0 : i32
    %c0_i32_1 = arith.constant 0 : i32
    return %arg0, %c0_i32, %c0_i32_0 : i32, i32, i32
  }
  func.func @transform_58(%arg0: i32) -> (i32, i32, i32) {
    %c0_i32 = arith.constant 0 : i32
    %c0_i32_0 = arith.constant 0 : i32
    %c0_i32_1 = arith.constant 0 : i32
    return %arg0, %c0_i32, %c0_i32_0 : i32, i32, i32
  }
  func.func @transform_59(%arg0: i32) -> (i32, i32, i32) {
    %c0_i32 = arith.constant 0 : i32
    %c0_i32_0 = arith.constant 0 : i32
    %c0_i32_1 = arith.constant 0 : i32
    return %arg0, %c0_i32, %c0_i32_0 : i32, i32, i32
  }
}

</mosaic_0001>

<llo_original>
// kernel: vit4loca_forward.1
$region0: #{vit4loca_forward.1}
  #allocation0 [shape = 'u32[]', space=smem, size = 0x4, offset = 0x4, fixed_abs, tag = 'smem constant byte address 0x4 - core index']
  #allocation1 [shape = 'u32[144,128]{1,0:T(1,128)}', space=vmem, size = 0x12000, scoped, tag = 'internal scratch']
  %s0 = inlined_call_operand.smem [shape: u32[60], index: -1, kind: input, shape index: {}]
  %s1 = sld [smem:[%s0]]
  %s2 = scalar_lea.smem %s0, 1
  %s3 = sld [smem:[%s2]]
  %s4 = scalar_lea.smem %s0, 2
  %s5 = sld [smem:[%s4]]
  %s6 = scalar_lea.smem %s0, 3
  %s7 = sld [smem:[%s6]]
  %s8 = scalar_lea.smem %s0, 4
  %s9 = sld [smem:[%s8]]
  %s10 = scalar_lea.smem %s0, 5
  %s11 = sld [smem:[%s10]]
  %s12 = scalar_lea.smem %s0, 6
  %s13 = sld [smem:[%s12]]
  %s14 = scalar_lea.smem %s0, 7
  %s15 = sld [smem:[%s14]]
  %s16 = scalar_lea.smem %s0, 8
  %s17 = sld [smem:[%s16]]
  %s18 = scalar_lea.smem %s0, 9
  %s19 = sld [smem:[%s18]]
  %s20 = scalar_lea.smem %s0, 10
  %s21 = sld [smem:[%s20]]
  %s22 = scalar_lea.smem %s0, 11
  %s23 = sld [smem:[%s22]]
  %s24 = scalar_lea.smem %s0, 12
  %s25 = sld [smem:[%s24]]
  %s26 = scalar_lea.smem %s0, 13
  %s27 = sld [smem:[%s26]]
  %s28 = scalar_lea.smem %s0, 14
  %s29 = sld [smem:[%s28]]
  %s30 = scalar_lea.smem %s0, 15
  %s31 = sld [smem:[%s30]]
  %s32 = scalar_lea.smem %s0, 16
  %s33 = sld [smem:[%s32]]
  %s34 = scalar_lea.smem %s0, 17
  %s35 = sld [smem:[%s34]]
  %s36 = scalar_lea.smem %s0, 18
  %s37 = sld [smem:[%s36]]
  %s38 = scalar_lea.smem %s0, 19
  %s39 = sld [smem:[%s38]]
  %s40 = scalar_lea.smem %s0, 20
  %s41 = sld [smem:[%s40]]
  %s42 = scalar_lea.smem %s0, 21
  %s43 = sld [smem:[%s42]]
  %s44 = scalar_lea.smem %s0, 22
  %s45 = sld [smem:[%s44]]
  %s46 = scalar_lea.smem %s0, 23
  %s47 = sld [smem:[%s46]]
  %s48 = scalar_lea.smem %s0, 24
  %s49 = sld [smem:[%s48]]
  %s50 = scalar_lea.smem %s0, 25
  %s51 = sld [smem:[%s50]]
  %s52 = scalar_lea.smem %s0, 26
  %s53 = sld [smem:[%s52]]
  %s54 = scalar_lea.smem %s0, 27
  %s55 = sld [smem:[%s54]]
  %s56 = scalar_lea.smem %s0, 28
  %s57 = sld [smem:[%s56]]
  %s58 = scalar_lea.smem %s0, 29
  %s59 = sld [smem:[%s58]]
  %s60 = scalar_lea.smem %s0, 30
  %s61 = sld [smem:[%s60]]
  %s62 = scalar_lea.smem %s0, 31
  %s63 = sld [smem:[%s62]]
  %s64 = scalar_lea.smem %s0, 32
  %s65 = sld [smem:[%s64]]
  %s66 = scalar_lea.smem %s0, 33
  %s67 = sld [smem:[%s66]]
  %s68 = scalar_lea.smem %s0, 34
  %s69 = sld [smem:[%s68]]
  %s70 = scalar_lea.smem %s0, 35
  %s71 = sld [smem:[%s70]]
  %s72 = scalar_lea.smem %s0, 36
  %s73 = sld [smem:[%s72]]
  %s74 = scalar_lea.smem %s0, 37
  %s75 = sld [smem:[%s74]]
  %s76 = scalar_lea.smem %s0, 38
  %s77 = sld [smem:[%s76]]
  %s78 = scalar_lea.smem %s0, 39
  %s79 = sld [smem:[%s78]]
  %s80 = scalar_lea.smem %s0, 40
  %s81 = sld [smem:[%s80]]
  %s82 = scalar_lea.smem %s0, 41
  %s83 = sld [smem:[%s82]]
  %s84 = scalar_lea.smem %s0, 42
  %s85 = sld [smem:[%s84]]
  %s86 = scalar_lea.smem %s0, 43
  %s87 = sld [smem:[%s86]]
  %s88 = scalar_lea.smem %s0, 44
  %s89 = sld [smem:[%s88]]
  %s90 = scalar_lea.smem %s0, 45
  %s91 = sld [smem:[%s90]]
  %s92 = scalar_lea.smem %s0, 46
  %s93 = sld [smem:[%s92]]
  %s94 = scalar_lea.smem %s0, 47
  %s95 = sld [smem:[%s94]]
  %s96 = scalar_lea.smem %s0, 48
  %s97 = sld [smem:[%s96]]
  %s98 = scalar_lea.smem %s0, 49
  %s99 = sld [smem:[%s98]]
  %s100 = scalar_lea.smem %s0, 50
  %s101 = sld [smem:[%s100]]
  %s102 = scalar_lea.smem %s0, 51
  %s103 = sld [smem:[%s102]]
  %s104 = scalar_lea.smem %s0, 52
  %s105 = sld [smem:[%s104]]
  %s106 = scalar_lea.smem %s0, 53
  %s107 = sld [smem:[%s106]]
  %s108 = scalar_lea.smem %s0, 54
  %s109 = sld [smem:[%s108]]
  %s110 = scalar_lea.smem %s0, 55
  %s111 = sld [smem:[%s110]]
  %s112 = scalar_lea.smem %s0, 56
  %s113 = sld [smem:[%s112]]
  %s114 = scalar_lea.smem %s0, 57
  %s115 = sld [smem:[%s114]]
  %s116 = scalar_lea.smem %s0, 58
  %s117 = sld [smem:[%s116]]
  %s118 = scalar_lea.smem %s0, 59
  %s119 = sld [smem:[%s118]]
  %120 = xla_tuple %s115, %s117, %s119
  %s121 = sld [smem:[#allocation0]]
  $region341: #{vit4loca_forward.1} parent=0
    _
  %s123 = ssub.s32 1, %s121
  %s124 = scalar_select 0, %s123, %s121
  $region1: #{vit4loca_forward.1} parent=0
    #allocation2 [shape = 'u8[512]{0}', space=vmem, size = 0x400, scoped, tag = 'input window, operand 31, single buffered']
    #allocation3 [shape = 's32[2]{0}', space=sflag, size = 0x8, scoped, tag = 'scoped memory for vit4loca_forward.1']
    #allocation4 [shape = 's32[2]{0}', space=sflag, size = 0x8, scoped, tag = 'scoped memory for vit4loca_forward.1']
    #allocation5 [shape = 'u8[512]{0}', space=vmem, size = 0x400, scoped, tag = 'input window, operand 33, single buffered']
    #allocation6 [shape = 's32[1]{0}', space=sflag, size = 0x4, scoped, tag = 'scoped memory for vit4loca_forward.1']
    #allocation7 [shape = 'u8[512]{0}', space=vmem, size = 0x400, scoped, tag = 'input window, operand 35, single buffered']
    #allocation8 [shape = 'u8[512]{0}', space=vmem, size = 0x400, scoped, tag = 'input window, operand 37, single buffered']
    #allocation9 [shape = 's32[1]{0}', space=sflag, size = 0x4, scoped, tag = 'scoped memory for vit4loca_forward.1']
    #allocation10 [shape = 'u8[512]{0}', space=vmem, size = 0x400, scoped, tag = 'input window, operand 38, single buffered']
    #allocation11 [shape = 'u8[512]{0}', space=vmem, size = 0x400, scoped, tag = 'input window, operand 40, single buffered']
    #allocation12 [shape = 's32[1]{0}', space=sflag, size = 0x4, scoped, tag = 'scoped memory for vit4loca_forward.1']
    #allocation13 [shape = 'u8[512]{0}', space=vmem, size = 0x400, scoped, tag = 'input window, operand 42, single buffered']
    #allocation14 [shape = 'u8[512]{0}', space=vmem, size = 0x400, scoped, tag = 'input window, operand 44, single buffered']
    #allocation15 [shape = 's32[1]{0}', space=sflag, size = 0x4, scoped, tag = 'scoped memory for vit4loca_forward.1']
    #allocation16 [shape = 'u8[512]{0}', space=vmem, size = 0x400, scoped, tag = 'input window, operand 46, single buffered']
    #allocation17 [shape = 'u8[512]{0}', space=vmem, size = 0x400, scoped, tag = 'input window, operand 47, single buffered']
    #allocation18 [shape = 's32[1]{0}', space=sflag, size = 0x4, scoped, tag = 'scoped memory for vit4loca_forward.1']
    #allocation19 [shape = 'u8[512]{0}', space=vmem, size = 0x400, scoped, tag = 'input window, operand 48, single buffered']
    #allocation20 [shape = 'u8[512]{0}', space=vmem, size = 0x400, scoped, tag = 'input window, operand 50, single buffered']
    #allocation21 [shape = 's32[1]{0}', space=sflag, size = 0x4, scoped, tag = 'scoped memory for vit4loca_forward.1']
    #allocation22 [shape = 'u8[512]{0}', space=vmem, size = 0x400, scoped, tag = 'input window, operand 52, single buffered']
    #allocation23 [shape = 'u8[512]{0}', space=vmem, size = 0x400, scoped, tag = 'input window, operand 53, single buffered']
    #allocation24 [shape = 's32[1]{0}', space=sflag, size = 0x4, scoped, tag = 'scoped memory for vit4loca_forward.1']
    #allocation25 [shape = 'u8[512]{0}', space=vmem, size = 0x400, scoped, tag = 'input window, operand 54, single buffered']
    #allocation26 [shape = 'u8[512]{0}', space=vmem, size = 0x400, scoped, tag = 'input window, operand 56, single buffered']
    #allocation27 [shape = 's32[1]{0}', space=sflag, size = 0x4, scoped, tag = 'scoped memory for vit4loca_forward.1']
    #allocation28 [shape = 'u8[16384]{0}', space=vmem, size = 0x4000, scoped, tag = 'output window, operand 0']
    #allocation29 [shape = 'u8[16384]{0}', space=vmem, size = 0x4000, scoped, tag = 'output window, operand 1']
    #allocation30 [shape = 's32[2]{0}', space=sflag, size = 0x8, scoped, tag = 'scoped memory for vit4loca_forward.1']
    #allocation31 [shape = 'u8[16384]{0}', space=vmem, size = 0x4000, scoped, tag = 'output window, operand 2']
    %125 = vsyncpa [#allocation3], 0
    %126 = vsyncpa [#allocation6], 0
    %127 = vsyncpa [#allocation9], 0
    %128 = vsyncpa [#allocation12], 0
    %129 = vsyncpa [#allocation15], 0
    %130 = vsyncpa [#allocation18], 0
    %131 = vsyncpa [#allocation21], 0
    %132 = vsyncpa [#allocation24], 0
    %133 = vsyncpa [#allocation27], 0
    %134 = vsyncpa [#allocation4], 0
    %s135 = scalar_lea.sflag [#allocation4], 1
    %136 = vsyncpa %s135, 0
    %137 = vsyncpa [#allocation30], 0
    %s138 = scalar_lea.sflag [#allocation30], 1
    %139 = vsyncpa %s138, 0
    loop: start=0, step=1, limit=4
    $region2: #{vit4loca_forward.1} parent=1 // loop_pre_header
      _
    $region3: #{vit4loca_forward.1} parent=1 // loop_header
      %s141 = sphi 0, %s145
      %p142 = scmp.ge.s32.totalorder %s141, 4
      %s151 = sphi 0, %s153
      %s154 = sphi 0, %s151
      %s155 = sphi 0, %s154
      %s171 = sphi 0, %s155
      %s175 = sphi 0, %s175
      %s177 = sphi 0, %s175
      %s178 = sphi 0, %s177
      %s192 = sphi 0, %s178
      %s196 = sphi 0, %s196
      %s198 = sphi 0, %s196
      %s199 = sphi 0, %s198
      %s213 = sphi 0, %s199
      %s217 = sphi 0, %s217
      %s219 = sphi 0, %s217
      %s220 = sphi 0, %s219
      %s234 = sphi 0, %s220
      %s238 = sphi 0, %s238
      %s240 = sphi 0, %s238
      %s241 = sphi 0, %s240
      %s255 = sphi 0, %s241
      %s259 = sphi 0, %s259
      %s261 = sphi 0, %s259
      %s262 = sphi 0, %s261
      %s276 = sphi 0, %s262
      %s280 = sphi 0, %s280
      %s282 = sphi 0, %s280
      %s283 = sphi 0, %s282
      %s297 = sphi 0, %s283
      %s301 = sphi 0, %s301
      %s303 = sphi 0, %s301
      %s304 = sphi 0, %s303
      %s318 = sphi 0, %s304
      %s322 = sphi 0, %s322
      %s324 = sphi 0, %s322
      %s325 = sphi 0, %s324
      %s339 = sphi 0, %s325
      %s343 = sphi 0, %s343
      %s345 = sphi 0, %s343
      %s346 = sphi 0, %s345
      %s360 = sphi 0, %s346
      %s364 = sphi 0, %s364
      %s366 = sphi 0, %s364
      %s367 = sphi 0, %s366
      %s381 = sphi 0, %s367
      %s385 = sphi 0, %s385
      %s387 = sphi 0, %s385
      %s388 = sphi 0, %s387
      %s402 = sphi 0, %s388
      %s406 = sphi 0, %s406
      %s408 = sphi 0, %s406
      %s409 = sphi 0, %s408
      %s423 = sphi 0, %s409
      %s427 = sphi 0, %s427
      %s429 = sphi 0, %s427
      %s430 = sphi 0, %s429
      %s444 = sphi 0, %s430
      %s448 = sphi 0, %s448
      %s450 = sphi 0, %s448
      %s451 = sphi 0, %s450
      %s465 = sphi 0, %s451
      %s469 = sphi 0, %s469
      %s471 = sphi 0, %s469
      %s472 = sphi 0, %s471
      %s486 = sphi 0, %s472
      %s490 = sphi 0, %s490
      %s492 = sphi 0, %s490
      %s493 = sphi 0, %s492
      %s507 = sphi 0, %s493
      %s511 = sphi 0, %s511
      %s513 = sphi 0, %s511
      %s514 = sphi 0, %s513
      %s528 = sphi 0, %s514
      %s532 = sphi 0, %s532
      %s534 = sphi 0, %s532
      %s535 = sphi 0, %s534
      %s549 = sphi 0, %s535
      %s553 = sphi 0, %s553
      %s555 = sphi 0, %s553
      %s556 = sphi 0, %s555
      %s570 = sphi 0, %s556
      %s574 = sphi 0, %s574
      %s576 = sphi 0, %s574
      %s577 = sphi 0, %s576
      %s591 = sphi 0, %s577
      %s595 = sphi 0, %s595
      %s597 = sphi 0, %s595
      %s598 = sphi 0, %s597
      %s612 = sphi 0, %s598
      %s616 = sphi 0, %s616
      %s618 = sphi 0, %s616
      %s619 = sphi 0, %s618
      %s633 = sphi 0, %s619
      %s637 = sphi 0, %s637
      %s639 = sphi 0, %s637
      %s640 = sphi 0, %s639
      %s654 = sphi 0, %s640
      %s658 = sphi 0, %s658
      %s660 = sphi 0, %s658
      %s661 = sphi 0, %s660
      %s675 = sphi 0, %s661
      %s679 = sphi 0, %s679
      %s681 = sphi 0, %s679
      %s682 = sphi 0, %s681
      %s696 = sphi 0, %s682
      %s700 = sphi 0, %s700
      %s702 = sphi 0, %s700
      %s703 = sphi 0, %s702
      %s717 = sphi 0, %s703
      %s721 = sphi 0, %s721
      %s723 = sphi 0, %s721
      %s724 = sphi 0, %s723
      %s738 = sphi 0, %s724
      %s742 = sphi 0, %s742
      %s744 = sphi 0, %s742
      %s745 = sphi 0, %s744
      %s759 = sphi 0, %s745
      %s763 = sphi 0, %s763
      %s765 = sphi 0, %s763
      %s766 = sphi 0, %s765
      %s780 = sphi 0, %s766
      %s784 = sphi 0, %s784
      %s786 = sphi 0, %s784
      %s787 = sphi 0, %s786
      %s801 = sphi 0, %s787
      %s805 = sphi 0, %s805
      %s807 = sphi 0, %s805
      %s808 = sphi 0, %s807
      %s822 = sphi 0, %s808
      %s826 = sphi 0, %s826
      %s828 = sphi 0, %s826
      %s829 = sphi 0, %s828
      %s843 = sphi 0, %s829
      %s847 = sphi 0, %s847
      %s849 = sphi 0, %s847
      %s850 = sphi 0, %s849
      %s864 = sphi 0, %s850
      %s868 = sphi 0, %s868
      %s870 = sphi 0, %s868
      %s871 = sphi 0, %s870
      %s885 = sphi 0, %s871
      %s889 = sphi 0, %s889
      %s891 = sphi 0, %s889
      %s892 = sphi 0, %s891
      %s906 = sphi 0, %s892
      %s910 = sphi 0, %s910
      %s912 = sphi 0, %s910
      %s913 = sphi 0, %s912
      %s927 = sphi 0, %s913
      %s931 = sphi 0, %s931
      %s933 = sphi 0, %s931
      %s934 = sphi 0, %s933
      %s948 = sphi 0, %s934
      %s952 = sphi 0, %s952
      %s954 = sphi 0, %s952
      %s955 = sphi 0, %s954
      %s969 = sphi 0, %s955
      %s973 = sphi 0, %s973
      %s975 = sphi 0, %s973
      %s976 = sphi 0, %s975
      %s990 = sphi 0, %s976
      %s994 = sphi 0, %s994
      %s996 = sphi 0, %s994
      %s997 = sphi 0, %s996
      %s1011 = sphi 0, %s997
      %s1015 = sphi 0, %s1015
      %s1017 = sphi 0, %s1015
      %s1018 = sphi 0, %s1017
      %s1032 = sphi 0, %s1018
      %s1036 = sphi 0, %s1036
      %s1038 = sphi 0, %s1036
      %s1039 = sphi 0, %s1038
      %s1053 = sphi 0, %s1039
      %s1057 = sphi 0, %s1057
      %s1059 = sphi 0, %s1057
      %s1060 = sphi 0, %s1059
      %s1074 = sphi 0, %s1060
      %s1078 = sphi 0, %s1078
      %s1080 = sphi 0, %s1078
      %s1081 = sphi 0, %s1080
      %s1095 = sphi 0, %s1081
      %s1099 = sphi 0, %s1099
      %s1101 = sphi 0, %s1099
      %s1102 = sphi 0, %s1101
      %s1116 = sphi 0, %s1102
      %s1120 = sphi 0, %s1120
      %s1122 = sphi 0, %s1120
      %s1123 = sphi 0, %s1122
      %s1137 = sphi 0, %s1123
      %s1141 = sphi 0, %s1141
      %s1143 = sphi 0, %s1141
      %s1144 = sphi 0, %s1143
      %s1158 = sphi 0, %s1144
      %s1162 = sphi 0, %s1162
      %s1164 = sphi 0, %s1162
      %s1165 = sphi 0, %s1164
      %s1179 = sphi 0, %s1165
      %s1183 = sphi 0, %s1183
      %s1185 = sphi 0, %s1183
      %s1186 = sphi 0, %s1185
      %s1200 = sphi 0, %s1186
      %s1204 = sphi 0, %s1204
      %s1206 = sphi 0, %s1204
      %s1207 = sphi 0, %s1206
      %s1221 = sphi 0, %s1207
      %s1225 = sphi 0, %s1225
      %s1227 = sphi 0, %s1225
      %s1228 = sphi 0, %s1227
      %s1242 = sphi 0, %s1228
      %s1246 = sphi 0, %s1246
      %s1248 = sphi 0, %s1246
      %s1249 = sphi 0, %s1248
      %s1263 = sphi 0, %s1249
      %s1267 = sphi 0, %s1267
      %s1269 = sphi 0, %s1267
      %s1270 = sphi 0, %s1269
      %s1284 = sphi 0, %s1270
      %s1288 = sphi 0, %s1288
      %s1290 = sphi 0, %s1288
      %s1291 = sphi 0, %s1290
      %s1305 = sphi 0, %s1291
      %s1309 = sphi 0, %s1309
      %s1311 = sphi 0, %s1309
      %s1312 = sphi 0, %s1311
      %s1326 = sphi 0, %s1312
      %s1330 = sphi 0, %s1330
      %s1332 = sphi 0, %s1330
      %s1333 = sphi 0, %s1332
      %s1347 = sphi 0, %s1333
      %s1353 = sphi 0, %s1355
      %s1356 = sphi 0, %s1353
      %s1357 = sphi 0, %s1356
      %s1373 = sphi 0, %s1357
      %s1379 = sphi 0, %s1381
      %s1382 = sphi 0, %s1379
      %s1383 = sphi 0, %s1382
      %s1399 = sphi 0, %s1383
      %s1405 = sphi 0, %s1407
      %s1408 = sphi 0, %s1405
      %s1409 = sphi 0, %s1408
      %s1425 = sphi 0, %s1409
    $region4: #{vit4loca_forward.1} parent=1 // loop_header_branch
      %144 = sbr.rel (%p142) target = $region8
    $region5: #{vit4loca_forward.1} parent=1 // loop_body
      %s146 = ssub.s32 %s141, 1
      %s147 = ssub.s32 %s141, 2
      %s148 = sadd.s32 %s141, 1
      %s149 = ssub.s32 %s141, %s148
      %p150 = scmp.eq.s32.totalorder %s149, 0
      %s152 = sadd.s32 %s151, 1
      %s153 = scalar_select %p150, %s151, %s152
      %p156 = pneg %p150
      %p157 = scmp.eq.s32.totalorder %s141, 1
      %p158 = por %p156, %p157
      %p159 = scmp.ne.s32.totalorder %s151, %s154
      %p160 = scmp.eq.s32.totalorder %s141, 0
      %p161 = por %p159, %p160
      %p162 = scmp.ne.s32.totalorder %s151, %s154
      %p163 = scmp.eq.s32.totalorder %s146, 1
      %p164 = por %p162, %p163
      %p165 = scmp.ne.s32.totalorder %s154, %s155
      %p166 = scmp.eq.s32.totalorder %s146, 0
      %p167 = por %p165, %p166
      %p168 = scmp.ne.s32.totalorder %s154, %s155
      %p169 = scmp.eq.s32.totalorder %s147, 1
      %p170 = por %p168, %p169
      %p172 = scmp.ne.s32.totalorder %s155, %s171
      %p173 = scmp.eq.s32.totalorder %s147, 0
      %p174 = por %p172, %p173
      %s176 = sadd.s32 %s175, 1
      %p179 = scmp.eq.s32.totalorder %s141, 1
      %p180 = scmp.ne.s32.totalorder %s175, %s177
      %p181 = scmp.eq.s32.totalorder %s141, 0
      %p182 = por %p180, %p181
      %p183 = scmp.ne.s32.totalorder %s175, %s177
      %p184 = scmp.eq.s32.totalorder %s146, 1
      %p185 = por %p183, %p184
      %p186 = scmp.ne.s32.totalorder %s177, %s178
      %p187 = scmp.eq.s32.totalorder %s146, 0
      %p188 = por %p186, %p187
      %p189 = scmp.ne.s32.totalorder %s177, %s178
      %p190 = scmp.eq.s32.totalorder %s147, 1
      %p191 = por %p189, %p190
      %p193 = scmp.ne.s32.totalorder %s178, %s192
      %p194 = scmp.eq.s32.totalorder %s147, 0
      %p195 = por %p193, %p194
      %s197 = sadd.s32 %s196, 1
      %p200 = scmp.eq.s32.totalorder %s141, 1
      %p201 = scmp.ne.s32.totalorder %s196, %s198
      %p202 = scmp.eq.s32.totalorder %s141, 0
      %p203 = por %p201, %p202
      %p204 = scmp.ne.s32.totalorder %s196, %s198
      %p205 = scmp.eq.s32.totalorder %s146, 1
      %p206 = por %p204, %p205
      %p207 = scmp.ne.s32.totalorder %s198, %s199
      %p208 = scmp.eq.s32.totalorder %s146, 0
      %p209 = por %p207, %p208
      %p210 = scmp.ne.s32.totalorder %s198, %s199
      %p211 = scmp.eq.s32.totalorder %s147, 1
      %p212 = por %p210, %p211
      %p214 = scmp.ne.s32.totalorder %s199, %s213
      %p215 = scmp.eq.s32.totalorder %s147, 0
      %p216 = por %p214, %p215
      %s218 = sadd.s32 %s217, 1
      %p221 = scmp.eq.s32.totalorder %s141, 1
      %p222 = scmp.ne.s32.totalorder %s217, %s219
      %p223 = scmp.eq.s32.totalorder %s141, 0
      %p224 = por %p222, %p223
      %p225 = scmp.ne.s32.totalorder %s217, %s219
      %p226 = scmp.eq.s32.totalorder %s146, 1
      %p227 = por %p225, %p226
      %p228 = scmp.ne.s32.totalorder %s219, %s220
      %p229 = scmp.eq.s32.totalorder %s146, 0
      %p230 = por %p228, %p229
      %p231 = scmp.ne.s32.totalorder %s219, %s220
      %p232 = scmp.eq.s32.totalorder %s147, 1
      %p233 = por %p231, %p232
      %p235 = scmp.ne.s32.totalorder %s220, %s234
      %p236 = scmp.eq.s32.totalorder %s147, 0
      %p237 = por %p235, %p236
      %s239 = sadd.s32 %s238, 1
      %p242 = scmp.eq.s32.totalorder %s141, 1
      %p243 = scmp.ne.s32.totalorder %s238, %s240
      %p244 = scmp.eq.s32.totalorder %s141, 0
      %p245 = por %p243, %p244
      %p246 = scmp.ne.s32.totalorder %s238, %s240
      %p247 = scmp.eq.s32.totalorder %s146, 1
      %p248 = por %p246, %p247
      %p249 = scmp.ne.s32.totalorder %s240, %s241
      %p250 = scmp.eq.s32.totalorder %s146, 0
      %p251 = por %p249, %p250
      %p252 = scmp.ne.s32.totalorder %s240, %s241
      %p253 = scmp.eq.s32.totalorder %s147, 1
      %p254 = por %p252, %p253
      %p256 = scmp.ne.s32.totalorder %s241, %s255
      %p257 = scmp.eq.s32.totalorder %s147, 0
      %p258 = por %p256, %p257
      %s260 = sadd.s32 %s259, 1
      %p263 = scmp.eq.s32.totalorder %s141, 1
      %p264 = scmp.ne.s32.totalorder %s259, %s261
      %p265 = scmp.eq.s32.totalorder %s141, 0
      %p266 = por %p264, %p265
      %p267 = scmp.ne.s32.totalorder %s259, %s261
      %p268 = scmp.eq.s32.totalorder %s146, 1
      %p269 = por %p267, %p268
      %p270 = scmp.ne.s32.totalorder %s261, %s262
      %p271 = scmp.eq.s32.totalorder %s146, 0
      %p272 = por %p270, %p271
      %p273 = scmp.ne.s32.totalorder %s261, %s262
      %p274 = scmp.eq.s32.totalorder %s147, 1
      %p275 = por %p273, %p274
      %p277 = scmp.ne.s32.totalorder %s262, %s276
      %p278 = scmp.eq.s32.totalorder %s147, 0
      %p279 = por %p277, %p278
      %s281 = sadd.s32 %s280, 1
      %p284 = scmp.eq.s32.totalorder %s141, 1
      %p285 = scmp.ne.s32.totalorder %s280, %s282
      %p286 = scmp.eq.s32.totalorder %s141, 0
      %p287 = por %p285, %p286
      %p288 = scmp.ne.s32.totalorder %s280, %s282
      %p289 = scmp.eq.s32.totalorder %s146, 1
      %p290 = por %p288, %p289
      %p291 = scmp.ne.s32.totalorder %s282, %s283
      %p292 = scmp.eq.s32.totalorder %s146, 0
      %p293 = por %p291, %p292
      %p294 = scmp.ne.s32.totalorder %s282, %s283
      %p295 = scmp.eq.s32.totalorder %s147, 1
      %p296 = por %p294, %p295
      %p298 = scmp.ne.s32.totalorder %s283, %s297
      %p299 = scmp.eq.s32.totalorder %s147, 0
      %p300 = por %p298, %p299
      %s302 = sadd.s32 %s301, 1
      %p305 = scmp.eq.s32.totalorder %s141, 1
      %p306 = scmp.ne.s32.totalorder %s301, %s303
      %p307 = scmp.eq.s32.totalorder %s141, 0
      %p308 = por %p306, %p307
      %p309 = scmp.ne.s32.totalorder %s301, %s303
      %p310 = scmp.eq.s32.totalorder %s146, 1
      %p311 = por %p309, %p310
      %p312 = scmp.ne.s32.totalorder %s303, %s304
      %p313 = scmp.eq.s32.totalorder %s146, 0
      %p314 = por %p312, %p313
      %p315 = scmp.ne.s32.totalorder %s303, %s304
      %p316 = scmp.eq.s32.totalorder %s147, 1
      %p317 = por %p315, %p316
      %p319 = scmp.ne.s32.totalorder %s304, %s318
      %p320 = scmp.eq.s32.totalorder %s147, 0
      %p321 = por %p319, %p320
      %s323 = sadd.s32 %s322, 1
      %p326 = scmp.eq.s32.totalorder %s141, 1
      %p327 = scmp.ne.s32.totalorder %s322, %s324
      %p328 = scmp.eq.s32.totalorder %s141, 0
      %p329 = por %p327, %p328
      %p330 = scmp.ne.s32.totalorder %s322, %s324
      %p331 = scmp.eq.s32.totalorder %s146, 1
      %p332 = por %p330, %p331
      %p333 = scmp.ne.s32.totalorder %s324, %s325
      %p334 = scmp.eq.s32.totalorder %s146, 0
      %p335 = por %p333, %p334
      %p336 = scmp.ne.s32.totalorder %s324, %s325
      %p337 = scmp.eq.s32.totalorder %s147, 1
      %p338 = por %p336, %p337
      %p340 = scmp.ne.s32.totalorder %s325, %s339
      %p341 = scmp.eq.s32.totalorder %s147, 0
      %p342 = por %p340, %p341
      %s344 = sadd.s32 %s343, 1
      %p347 = scmp.eq.s32.totalorder %s141, 1
      %p348 = scmp.ne.s32.totalorder %s343, %s345
      %p349 = scmp.eq.s32.totalorder %s141, 0
      %p350 = por %p348, %p349
      %p351 = scmp.ne.s32.totalorder %s343, %s345
      %p352 = scmp.eq.s32.totalorder %s146, 1
      %p353 = por %p351, %p352
      %p354 = scmp.ne.s32.totalorder %s345, %s346
      %p355 = scmp.eq.s32.totalorder %s146, 0
      %p356 = por %p354, %p355
      %p357 = scmp.ne.s32.totalorder %s345, %s346
      %p358 = scmp.eq.s32.totalorder %s147, 1
      %p359 = por %p357, %p358
      %p361 = scmp.ne.s32.totalorder %s346, %s360
      %p362 = scmp.eq.s32.totalorder %s147, 0
      %p363 = por %p361, %p362
      %s365 = sadd.s32 %s364, 1
      %p368 = scmp.eq.s32.totalorder %s141, 1
      %p369 = scmp.ne.s32.totalorder %s364, %s366
      %p370 = scmp.eq.s32.totalorder %s141, 0
      %p371 = por %p369, %p370
      %p372 = scmp.ne.s32.totalorder %s364, %s366
      %p373 = scmp.eq.s32.totalorder %s146, 1
      %p374 = por %p372, %p373
      %p375 = scmp.ne.s32.totalorder %s366, %s367
      %p376 = scmp.eq.s32.totalorder %s146, 0
      %p377 = por %p375, %p376
      %p378 = scmp.ne.s32.totalorder %s366, %s367
      %p379 = scmp.eq.s32.totalorder %s147, 1
      %p380 = por %p378, %p379
      %p382 = scmp.ne.s32.totalorder %s367, %s381
      %p383 = scmp.eq.s32.totalorder %s147, 0
      %p384 = por %p382, %p383
      %s386 = sadd.s32 %s385, 1
      %p389 = scmp.eq.s32.totalorder %s141, 1
      %p390 = scmp.ne.s32.totalorder %s385, %s387
      %p391 = scmp.eq.s32.totalorder %s141, 0
      %p392 = por %p390, %p391
      %p393 = scmp.ne.s32.totalorder %s385, %s387
      %p394 = scmp.eq.s32.totalorder %s146, 1
      %p395 = por %p393, %p394
      %p396 = scmp.ne.s32.totalorder %s387, %s388
      %p397 = scmp.eq.s32.totalorder %s146, 0
      %p398 = por %p396, %p397
      %p399 = scmp.ne.s32.totalorder %s387, %s388
      %p400 = scmp.eq.s32.totalorder %s147, 1
      %p401 = por %p399, %p400
      %p403 = scmp.ne.s32.totalorder %s388, %s402
      %p404 = scmp.eq.s32.totalorder %s147, 0
      %p405 = por %p403, %p404
      %s407 = sadd.s32 %s406, 1
      %p410 = scmp.eq.s32.totalorder %s141, 1
      %p411 = scmp.ne.s32.totalorder %s406, %s408
      %p412 = scmp.eq.s32.totalorder %s141, 0
      %p413 = por %p411, %p412
      %p414 = scmp.ne.s32.totalorder %s406, %s408
      %p415 = scmp.eq.s32.totalorder %s146, 1
      %p416 = por %p414, %p415
      %p417 = scmp.ne.s32.totalorder %s408, %s409
      %p418 = scmp.eq.s32.totalorder %s146, 0
      %p419 = por %p417, %p418
      %p420 = scmp.ne.s32.totalorder %s408, %s409
      %p421 = scmp.eq.s32.totalorder %s147, 1
      %p422 = por %p420, %p421
      %p424 = scmp.ne.s32.totalorder %s409, %s423
      %p425 = scmp.eq.s32.totalorder %s147, 0
      %p426 = por %p424, %p425
      %s428 = sadd.s32 %s427, 1
      %p431 = scmp.eq.s32.totalorder %s141, 1
      %p432 = scmp.ne.s32.totalorder %s427, %s429
      %p433 = scmp.eq.s32.totalorder %s141, 0
      %p434 = por %p432, %p433
      %p435 = scmp.ne.s32.totalorder %s427, %s429
      %p436 = scmp.eq.s32.totalorder %s146, 1
      %p437 = por %p435, %p436
      %p438 = scmp.ne.s32.totalorder %s429, %s430
      %p439 = scmp.eq.s32.totalorder %s146, 0
      %p440 = por %p438, %p439
      %p441 = scmp.ne.s32.totalorder %s429, %s430
      %p442 = scmp.eq.s32.totalorder %s147, 1
      %p443 = por %p441, %p442
      %p445 = scmp.ne.s32.totalorder %s430, %s444
      %p446 = scmp.eq.s32.totalorder %s147, 0
      %p447 = por %p445, %p446
      %s449 = sadd.s32 %s448, 1
      %p452 = scmp.eq.s32.totalorder %s141, 1
      %p453 = scmp.ne.s32.totalorder %s448, %s450
      %p454 = scmp.eq.s32.totalorder %s141, 0
      %p455 = por %p453, %p454
      %p456 = scmp.ne.s32.totalorder %s448, %s450
      %p457 = scmp.eq.s32.totalorder %s146, 1
      %p458 = por %p456, %p457
      %p459 = scmp.ne.s32.totalorder %s450, %s451
      %p460 = scmp.eq.s32.totalorder %s146, 0
      %p461 = por %p459, %p460
      %p462 = scmp.ne.s32.totalorder %s450, %s451
      %p463 = scmp.eq.s32.totalorder %s147, 1
      %p464 = por %p462, %p463
      %p466 = scmp.ne.s32.totalorder %s451, %s465
      %p467 = scmp.eq.s32.totalorder %s147, 0
      %p468 = por %p466, %p467
      %s470 = sadd.s32 %s469, 1
      %p473 = scmp.eq.s32.totalorder %s141, 1
      %p474 = scmp.ne.s32.totalorder %s469, %s471
      %p475 = scmp.eq.s32.totalorder %s141, 0
      %p476 = por %p474, %p475
      %p477 = scmp.ne.s32.totalorder %s469, %s471
      %p478 = scmp.eq.s32.totalorder %s146, 1
      %p479 = por %p477, %p478
      %p480 = scmp.ne.s32.totalorder %s471, %s472
      %p481 = scmp.eq.s32.totalorder %s146, 0
      %p482 = por %p480, %p481
      %p483 = scmp.ne.s32.totalorder %s471, %s472
      %p484 = scmp.eq.s32.totalorder %s147, 1
      %p485 = por %p483, %p484
      %p487 = scmp.ne.s32.totalorder %s472, %s486
      %p488 = scmp.eq.s32.totalorder %s147, 0
      %p489 = por %p487, %p488
      %s491 = sadd.s32 %s490, 1
      %p494 = scmp.eq.s32.totalorder %s141, 1
      %p495 = scmp.ne.s32.totalorder %s490, %s492
      %p496 = scmp.eq.s32.totalorder %s141, 0
      %p497 = por %p495, %p496
      %p498 = scmp.ne.s32.totalorder %s490, %s492
      %p499 = scmp.eq.s32.totalorder %s146, 1
      %p500 = por %p498, %p499
      %p501 = scmp.ne.s32.totalorder %s492, %s493
      %p502 = scmp.eq.s32.totalorder %s146, 0
      %p503 = por %p501, %p502
      %p504 = scmp.ne.s32.totalorder %s492, %s493
      %p505 = scmp.eq.s32.totalorder %s147, 1
      %p506 = por %p504, %p505
      %p508 = scmp.ne.s32.totalorder %s493, %s507
      %p509 = scmp.eq.s32.totalorder %s147, 0
      %p510 = por %p508, %p509
      %s512 = sadd.s32 %s511, 1
      %p515 = scmp.eq.s32.totalorder %s141, 1
      %p516 = scmp.ne.s32.totalorder %s511, %s513
      %p517 = scmp.eq.s32.totalorder %s141, 0
      %p518 = por %p516, %p517
      %p519 = scmp.ne.s32.totalorder %s511, %s513
      %p520 = scmp.eq.s32.totalorder %s146, 1
      %p521 = por %p519, %p520
      %p522 = scmp.ne.s32.totalorder %s513, %s514
      %p523 = scmp.eq.s32.totalorder %s146, 0
      %p524 = por %p522, %p523
      %p525 = scmp.ne.s32.totalorder %s513, %s514
      %p526 = scmp.eq.s32.totalorder %s147, 1
      %p527 = por %p525, %p526
      %p529 = scmp.ne.s32.totalorder %s514, %s528
      %p530 = scmp.eq.s32.totalorder %s147, 0
      %p531 = por %p529, %p530
      %s533 = sadd.s32 %s532, 1
      %p536 = scmp.eq.s32.totalorder %s141, 1
      %p537 = scmp.ne.s32.totalorder %s532, %s534
      %p538 = scmp.eq.s32.totalorder %s141, 0
      %p539 = por %p537, %p538
      %p540 = scmp.ne.s32.totalorder %s532, %s534
      %p541 = scmp.eq.s32.totalorder %s146, 1
      %p542 = por %p540, %p541
      %p543 = scmp.ne.s32.totalorder %s534, %s535
      %p544 = scmp.eq.s32.totalorder %s146, 0
      %p545 = por %p543, %p544
      %p546 = scmp.ne.s32.totalorder %s534, %s535
      %p547 = scmp.eq.s32.totalorder %s147, 1
      %p548 = por %p546, %p547
      %p550 = scmp.ne.s32.totalorder %s535, %s549
      %p551 = scmp.eq.s32.totalorder %s147, 0
      %p552 = por %p550, %p551
      %s554 = sadd.s32 %s553, 1
      %p557 = scmp.eq.s32.totalorder %s141, 1
      %p558 = scmp.ne.s32.totalorder %s553, %s555
      %p559 = scmp.eq.s32.totalorder %s141, 0
      %p560 = por %p558, %p559
      %p561 = scmp.ne.s32.totalorder %s553, %s555
      %p562 = scmp.eq.s32.totalorder %s146, 1
      %p563 = por %p561, %p562
      %p564 = scmp.ne.s32.totalorder %s555, %s556
      %p565 = scmp.eq.s32.totalorder %s146, 0
      %p566 = por %p564, %p565
      %p567 = scmp.ne.s32.totalorder %s555, %s556
      %p568 = scmp.eq.s32.totalorder %s147, 1
      %p569 = por %p567, %p568
      %p571 = scmp.ne.s32.totalorder %s556, %s570
      %p572 = scmp.eq.s32.totalorder %s147, 0
      %p573 = por %p571, %p572
      %s575 = sadd.s32 %s574, 1
      %p578 = scmp.eq.s32.totalorder %s141, 1
      %p579 = scmp.ne.s32.totalorder %s574, %s576
      %p580 = scmp.eq.s32.totalorder %s141, 0
      %p581 = por %p579, %p580
      %p582 = scmp.ne.s32.totalorder %s574, %s576
      %p583 = scmp.eq.s32.totalorder %s146, 1
      %p584 = por %p582, %p583
      %p585 = scmp.ne.s32.totalorder %s576, %s577
      %p586 = scmp.eq.s32.totalorder %s146, 0
      %p587 = por %p585, %p586
      %p588 = scmp.ne.s32.totalorder %s576, %s577
      %p589 = scmp.eq.s32.totalorder %s147, 1
      %p590 = por %p588, %p589
      %p592 = scmp.ne.s32.totalorder %s577, %s591
      %p593 = scmp.eq.s32.totalorder %s147, 0
      %p594 = por %p592, %p593
      %s596 = sadd.s32 %s595, 1
      %p599 = scmp.eq.s32.totalorder %s141, 1
      %p600 = scmp.ne.s32.totalorder %s595, %s597
      %p601 = scmp.eq.s32.totalorder %s141, 0
      %p602 = por %p600, %p601
      %p603 = scmp.ne.s32.totalorder %s595, %s597
      %p604 = scmp.eq.s32.totalorder %s146, 1
      %p605 = por %p603, %p604
      %p606 = scmp.ne.s32.totalorder %s597, %s598
      %p607 = scmp.eq.s32.totalorder %s146, 0
      %p608 = por %p606, %p607
      %p609 = scmp.ne.s32.totalorder %s597, %s598
      %p610 = scmp.eq.s32.totalorder %s147, 1
      %p611 = por %p609, %p610
      %p613 = scmp.ne.s32.totalorder %s598, %s612
      %p614 = scmp.eq.s32.totalorder %s147, 0
      %p615 = por %p613, %p614
      %s617 = sadd.s32 %s616, 1
      %p620 = scmp.eq.s32.totalorder %s141, 1
      %p621 = scmp.ne.s32.totalorder %s616, %s618
      %p622 = scmp.eq.s32.totalorder %s141, 0
      %p623 = por %p621, %p622
      %p624 = scmp.ne.s32.totalorder %s616, %s618
      %p625 = scmp.eq.s32.totalorder %s146, 1
      %p626 = por %p624, %p625
      %p627 = scmp.ne.s32.totalorder %s618, %s619
      %p628 = scmp.eq.s32.totalorder %s146, 0
      %p629 = por %p627, %p628
      %p630 = scmp.ne.s32.totalorder %s618, %s619
      %p631 = scmp.eq.s32.totalorder %s147, 1
      %p632 = por %p630, %p631
      %p634 = scmp.ne.s32.totalorder %s619, %s633
      %p635 = scmp.eq.s32.totalorder %s147, 0
      %p636 = por %p634, %p635
      %s638 = sadd.s32 %s637, 1
      %p641 = scmp.eq.s32.totalorder %s141, 1
      %p642 = scmp.ne.s32.totalorder %s637, %s639
      %p643 = scmp.eq.s32.totalorder %s141, 0
      %p644 = por %p642, %p643
      %p645 = scmp.ne.s32.totalorder %s637, %s639
      %p646 = scmp.eq.s32.totalorder %s146, 1
      %p647 = por %p645, %p646
      %p648 = scmp.ne.s32.totalorder %s639, %s640
      %p649 = scmp.eq.s32.totalorder %s146, 0
      %p650 = por %p648, %p649
      %p651 = scmp.ne.s32.totalorder %s639, %s640
      %p652 = scmp.eq.s32.totalorder %s147, 1
      %p653 = por %p651, %p652
      %p655 = scmp.ne.s32.totalorder %s640, %s654
      %p656 = scmp.eq.s32.totalorder %s147, 0
      %p657 = por %p655, %p656
      %s659 = sadd.s32 %s658, 1
      %p662 = scmp.eq.s32.totalorder %s141, 1
      %p663 = scmp.ne.s32.totalorder %s658, %s660
      %p664 = scmp.eq.s32.totalorder %s141, 0
      %p665 = por %p663, %p664
      %p666 = scmp.ne.s32.totalorder %s658, %s660
      %p667 = scmp.eq.s32.totalorder %s146, 1
      %p668 = por %p666, %p667
      %p669 = scmp.ne.s32.totalorder %s660, %s661
      %p670 = scmp.eq.s32.totalorder %s146, 0
      %p671 = por %p669, %p670
      %p672 = scmp.ne.s32.totalorder %s660, %s661
      %p673 = scmp.eq.s32.totalorder %s147, 1
      %p674 = por %p672, %p673
      %p676 = scmp.ne.s32.totalorder %s661, %s675
      %p677 = scmp.eq.s32.totalorder %s147, 0
      %p678 = por %p676, %p677
      %s680 = sadd.s32 %s679, 1
      %p683 = scmp.eq.s32.totalorder %s141, 1
      %p684 = scmp.ne.s32.totalorder %s679, %s681
      %p685 = scmp.eq.s32.totalorder %s141, 0
      %p686 = por %p684, %p685
      %p687 = scmp.ne.s32.totalorder %s679, %s681
      %p688 = scmp.eq.s32.totalorder %s146, 1
      %p689 = por %p687, %p688
      %p690 = scmp.ne.s32.totalorder %s681, %s682
      %p691 = scmp.eq.s32.totalorder %s146, 0
      %p692 = por %p690, %p691
      %p693 = scmp.ne.s32.totalorder %s681, %s682
      %p694 = scmp.eq.s32.totalorder %s147, 1
      %p695 = por %p693, %p694
      %p697 = scmp.ne.s32.totalorder %s682, %s696
      %p698 = scmp.eq.s32.totalorder %s147, 0
      %p699 = por %p697, %p698
      %s701 = sadd.s32 %s700, 1
      %p704 = scmp.eq.s32.totalorder %s141, 1
      %p705 = scmp.ne.s32.totalorder %s700, %s702
      %p706 = scmp.eq.s32.totalorder %s141, 0
      %p707 = por %p705, %p706
      %p708 = scmp.ne.s32.totalorder %s700, %s702
      %p709 = scmp.eq.s32.totalorder %s146, 1
      %p710 = por %p708, %p709
      %p711 = scmp.ne.s32.totalorder %s702, %s703
      %p712 = scmp.eq.s32.totalorder %s146, 0
      %p713 = por %p711, %p712
      %p714 = scmp.ne.s32.totalorder %s702, %s703
      %p715 = scmp.eq.s32.totalorder %s147, 1
      %p716 = por %p714, %p715
      %p718 = scmp.ne.s32.totalorder %s703, %s717
      %p719 = scmp.eq.s32.totalorder %s147, 0
      %p720 = por %p718, %p719
      %s722 = sadd.s32 %s721, 1
      %p725 = scmp.eq.s32.totalorder %s141, 1
      %p726 = scmp.ne.s32.totalorder %s721, %s723
      %p727 = scmp.eq.s32.totalorder %s141, 0
      %p728 = por %p726, %p727
      %p729 = scmp.ne.s32.totalorder %s721, %s723
      %p730 = scmp.eq.s32.totalorder %s146, 1
      %p731 = por %p729, %p730
      %p732 = scmp.ne.s32.totalorder %s723, %s724
      %p733 = scmp.eq.s32.totalorder %s146, 0
      %p734 = por %p732, %p733
      %p735 = scmp.ne.s32.totalorder %s723, %s724
      %p736 = scmp.eq.s32.totalorder %s147, 1
      %p737 = por %p735, %p736
      %p739 = scmp.ne.s32.totalorder %s724, %s738
      %p740 = scmp.eq.s32.totalorder %s147, 0
      %p741 = por %p739, %p740
      %s743 = sadd.s32 %s742, 1
      %p746 = scmp.eq.s32.totalorder %s141, 1
      %p747 = scmp.ne.s32.totalorder %s742, %s744
      %p748 = scmp.eq.s32.totalorder %s141, 0
      %p749 = por %p747, %p748
      %p750 = scmp.ne.s32.totalorder %s742, %s744
      %p751 = scmp.eq.s32.totalorder %s146, 1
      %p752 = por %p750, %p751
      %p753 = scmp.ne.s32.totalorder %s744, %s745
      %p754 = scmp.eq.s32.totalorder %s146, 0
      %p755 = por %p753, %p754
      %p756 = scmp.ne.s32.totalorder %s744, %s745
      %p757 = scmp.eq.s32.totalorder %s147, 1
      %p758 = por %p756, %p757
      %p760 = scmp.ne.s32.totalorder %s745, %s759
      %p761 = scmp.eq.s32.totalorder %s147, 0
      %p762 = por %p760, %p761
      %s764 = sadd.s32 %s763, 1
      %p767 = scmp.eq.s32.totalorder %s141, 1
      %p768 = scmp.ne.s32.totalorder %s763, %s765
      %p769 = scmp.eq.s32.totalorder %s141, 0
      %p770 = por %p768, %p769
      %p771 = scmp.ne.s32.totalorder %s763, %s765
      %p772 = scmp.eq.s32.totalorder %s146, 1
      %p773 = por %p771, %p772
      %p774 = scmp.ne.s32.totalorder %s765, %s766
      %p775 = scmp.eq.s32.totalorder %s146, 0
      %p776 = por %p774, %p775
      %p777 = scmp.ne.s32.totalorder %s765, %s766
      %p778 = scmp.eq.s32.totalorder %s147, 1
      %p779 = por %p777, %p778
      %p781 = scmp.ne.s32.totalorder %s766, %s780
      %p782 = scmp.eq.s32.totalorder %s147, 0
      %p783 = por %p781, %p782
      %s785 = sadd.s32 %s784, 1
      %p788 = scmp.eq.s32.totalorder %s141, 1
      %p789 = scmp.ne.s32.totalorder %s784, %s786
      %p790 = scmp.eq.s32.totalorder %s141, 0
      %p791 = por %p789, %p790
      %p792 = scmp.ne.s32.totalorder %s784, %s786
      %p793 = scmp.eq.s32.totalorder %s146, 1
      %p794 = por %p792, %p793
      %p795 = scmp.ne.s32.totalorder %s786, %s787
      %p796 = scmp.eq.s32.totalorder %s146, 0
      %p797 = por %p795, %p796
      %p798 = scmp.ne.s32.totalorder %s786, %s787
      %p799 = scmp.eq.s32.totalorder %s147, 1
      %p800 = por %p798, %p799
      %p802 = scmp.ne.s32.totalorder %s787, %s801
      %p803 = scmp.eq.s32.totalorder %s147, 0
      %p804 = por %p802, %p803
      %s806 = sadd.s32 %s805, 1
      %p809 = scmp.eq.s32.totalorder %s141, 1
      %p810 = scmp.ne.s32.totalorder %s805, %s807
      %p811 = scmp.eq.s32.totalorder %s141, 0
      %p812 = por %p810, %p811
      %p813 = scmp.ne.s32.totalorder %s805, %s807
      %p814 = scmp.eq.s32.totalorder %s146, 1
      %p815 = por %p813, %p814
      %p816 = scmp.ne.s32.totalorder %s807, %s808
      %p817 = scmp.eq.s32.totalorder %s146, 0
      %p818 = por %p816, %p817
      %p819 = scmp.ne.s32.totalorder %s807, %s808
      %p820 = scmp.eq.s32.totalorder %s147, 1
      %p821 = por %p819, %p820
      %p823 = scmp.ne.s32.totalorder %s808, %s822
      %p824 = scmp.eq.s32.totalorder %s147, 0
      %p825 = por %p823, %p824
      %s827 = sadd.s32 %s826, 1
      %p830 = scmp.eq.s32.totalorder %s141, 1
      %p831 = scmp.ne.s32.totalorder %s826, %s828
      %p832 = scmp.eq.s32.totalorder %s141, 0
      %p833 = por %p831, %p832
      %p834 = scmp.ne.s32.totalorder %s826, %s828
      %p835 = scmp.eq.s32.totalorder %s146, 1
      %p836 = por %p834, %p835
      %p837 = scmp.ne.s32.totalorder %s828, %s829
      %p838 = scmp.eq.s32.totalorder %s146, 0
      %p839 = por %p837, %p838
      %p840 = scmp.ne.s32.totalorder %s828, %s829
      %p841 = scmp.eq.s32.totalorder %s147, 1
      %p842 = por %p840, %p841
      %p844 = scmp.ne.s32.totalorder %s829, %s843
      %p845 = scmp.eq.s32.totalorder %s147, 0
      %p846 = por %p844, %p845
      %s848 = sadd.s32 %s847, 1
      %p851 = scmp.eq.s32.totalorder %s141, 1
      %p852 = scmp.ne.s32.totalorder %s847, %s849
      %p853 = scmp.eq.s32.totalorder %s141, 0
      %p854 = por %p852, %p853
      %p855 = scmp.ne.s32.totalorder %s847, %s849
      %p856 = scmp.eq.s32.totalorder %s146, 1
      %p857 = por %p855, %p856
      %p858 = scmp.ne.s32.totalorder %s849, %s850
      %p859 = scmp.eq.s32.totalorder %s146, 0
      %p860 = por %p858, %p859
      %p861 = scmp.ne.s32.totalorder %s849, %s850
      %p862 = scmp.eq.s32.totalorder %s147, 1
      %p863 = por %p861, %p862
      %p865 = scmp.ne.s32.totalorder %s850, %s864
      %p866 = scmp.eq.s32.totalorder %s147, 0
      %p867 = por %p865, %p866
      %s869 = sadd.s32 %s868, 1
      %p872 = scmp.eq.s32.totalorder %s141, 1
      %p873 = scmp.ne.s32.totalorder %s868, %s870
      %p874 = scmp.eq.s32.totalorder %s141, 0
      %p875 = por %p873, %p874
      %p876 = scmp.ne.s32.totalorder %s868, %s870
      %p877 = scmp.eq.s32.totalorder %s146, 1
      %p878 = por %p876, %p877
      %p879 = scmp.ne.s32.totalorder %s870, %s871
      %p880 = scmp.eq.s32.totalorder %s146, 0
      %p881 = por %p879, %p880
      %p882 = scmp.ne.s32.totalorder %s870, %s871
      %p883 = scmp.eq.s32.totalorder %s147, 1
      %p884 = por %p882, %p883
      %p886 = scmp.ne.s32.totalorder %s871, %s885
      %p887 = scmp.eq.s32.totalorder %s147, 0
      %p888 = por %p886, %p887
      %s890 = sadd.s32 %s889, 1
      %p893 = scmp.eq.s32.totalorder %s141, 1
      %p894 = scmp.ne.s32.totalorder %s889, %s891
      %p895 = scmp.eq.s32.totalorder %s141, 0
      %p896 = por %p894, %p895
      %p897 = scmp.ne.s32.totalorder %s889, %s891
      %p898 = scmp.eq.s32.totalorder %s146, 1
      %p899 = por %p897, %p898
      %p900 = scmp.ne.s32.totalorder %s891, %s892
      %p901 = scmp.eq.s32.totalorder %s146, 0
      %p902 = por %p900, %p901
      %p903 = scmp.ne.s32.totalorder %s891, %s892
      %p904 = scmp.eq.s32.totalorder %s147, 1
      %p905 = por %p903, %p904
      %p907 = scmp.ne.s32.totalorder %s892, %s906
      %p908 = scmp.eq.s32.totalorder %s147, 0
      %p909 = por %p907, %p908
      %s911 = sadd.s32 %s910, 1
      %p914 = scmp.eq.s32.totalorder %s141, 1
      %p915 = scmp.ne.s32.totalorder %s910, %s912
      %p916 = scmp.eq.s32.totalorder %s141, 0
      %p917 = por %p915, %p916
      %p918 = scmp.ne.s32.totalorder %s910, %s912
      %p919 = scmp.eq.s32.totalorder %s146, 1
      %p920 = por %p918, %p919
      %p921 = scmp.ne.s32.totalorder %s912, %s913
      %p922 = scmp.eq.s32.totalorder %s146, 0
      %p923 = por %p921, %p922
      %p924 = scmp.ne.s32.totalorder %s912, %s913
      %p925 = scmp.eq.s32.totalorder %s147, 1
      %p926 = por %p924, %p925
      %p928 = scmp.ne.s32.totalorder %s913, %s927
      %p929 = scmp.eq.s32.totalorder %s147, 0
      %p930 = por %p928, %p929
      %s932 = sadd.s32 %s931, 1
      %p935 = scmp.eq.s32.totalorder %s141, 1
      %p936 = scmp.ne.s32.totalorder %s931, %s933
      %p937 = scmp.eq.s32.totalorder %s141, 0
      %p938 = por %p936, %p937
      %p939 = scmp.ne.s32.totalorder %s931, %s933
      %p940 = scmp.eq.s32.totalorder %s146, 1
      %p941 = por %p939, %p940
      %p942 = scmp.ne.s32.totalorder %s933, %s934
      %p943 = scmp.eq.s32.totalorder %s146, 0
      %p944 = por %p942, %p943
      %p945 = scmp.ne.s32.totalorder %s933, %s934
      %p946 = scmp.eq.s32.totalorder %s147, 1
      %p947 = por %p945, %p946
      %p949 = scmp.ne.s32.totalorder %s934, %s948
      %p950 = scmp.eq.s32.totalorder %s147, 0
      %p951 = por %p949, %p950
      %s953 = sadd.s32 %s952, 1
      %p956 = scmp.eq.s32.totalorder %s141, 1
      %p957 = scmp.ne.s32.totalorder %s952, %s954
      %p958 = scmp.eq.s32.totalorder %s141, 0
      %p959 = por %p957, %p958
      %p960 = scmp.ne.s32.totalorder %s952, %s954
      %p961 = scmp.eq.s32.totalorder %s146, 1
      %p962 = por %p960, %p961
      %p963 = scmp.ne.s32.totalorder %s954, %s955
      %p964 = scmp.eq.s32.totalorder %s146, 0
      %p965 = por %p963, %p964
      %p966 = scmp.ne.s32.totalorder %s954, %s955
      %p967 = scmp.eq.s32.totalorder %s147, 1
      %p968 = por %p966, %p967
      %p970 = scmp.ne.s32.totalorder %s955, %s969
      %p971 = scmp.eq.s32.totalorder %s147, 0
      %p972 = por %p970, %p971
      %s974 = sadd.s32 %s973, 1
      %p977 = scmp.eq.s32.totalorder %s141, 1
      %p978 = scmp.ne.s32.totalorder %s973, %s975
      %p979 = scmp.eq.s32.totalorder %s141, 0
      %p980 = por %p978, %p979
      %p981 = scmp.ne.s32.totalorder %s973, %s975
      %p982 = scmp.eq.s32.totalorder %s146, 1
      %p983 = por %p981, %p982
      %p984 = scmp.ne.s32.totalorder %s975, %s976
      %p985 = scmp.eq.s32.totalorder %s146, 0
      %p986 = por %p984, %p985
      %p987 = scmp.ne.s32.totalorder %s975, %s976
      %p988 = scmp.eq.s32.totalorder %s147, 1
      %p989 = por %p987, %p988
      %p991 = scmp.ne.s32.totalorder %s976, %s990
      %p992 = scmp.eq.s32.totalorder %s147, 0
      %p993 = por %p991, %p992
      %s995 = sadd.s32 %s994, 1
      %p998 = scmp.eq.s32.totalorder %s141, 1
      %p999 = scmp.ne.s32.totalorder %s994, %s996
      %p1000 = scmp.eq.s32.totalorder %s141, 0
      %p1001 = por %p999, %p1000
      %p1002 = scmp.ne.s32.totalorder %s994, %s996
      %p1003 = scmp.eq.s32.totalorder %s146, 1
      %p1004 = por %p1002, %p1003
      %p1005 = scmp.ne.s32.totalorder %s996, %s997
      %p1006 = scmp.eq.s32.totalorder %s146, 0
      %p1007 = por %p1005, %p1006
      %p1008 = scmp.ne.s32.totalorder %s996, %s997
      %p1009 = scmp.eq.s32.totalorder %s147, 1
      %p1010 = por %p1008, %p1009
      %p1012 = scmp.ne.s32.totalorder %s997, %s1011
      %p1013 = scmp.eq.s32.totalorder %s147, 0
      %p1014 = por %p1012, %p1013
      %s1016 = sadd.s32 %s1015, 1
      %p1019 = scmp.eq.s32.totalorder %s141, 1
      %p1020 = scmp.ne.s32.totalorder %s1015, %s1017
      %p1021 = scmp.eq.s32.totalorder %s141, 0
      %p1022 = por %p1020, %p1021
      %p1023 = scmp.ne.s32.totalorder %s1015, %s1017
      %p1024 = scmp.eq.s32.totalorder %s146, 1
      %p1025 = por %p1023, %p1024
      %p1026 = scmp.ne.s32.totalorder %s1017, %s1018
      %p1027 = scmp.eq.s32.totalorder %s146, 0
      %p1028 = por %p1026, %p1027
      %p1029 = scmp.ne.s32.totalorder %s1017, %s1018
      %p1030 = scmp.eq.s32.totalorder %s147, 1
      %p1031 = por %p1029, %p1030
      %p1033 = scmp.ne.s32.totalorder %s1018, %s1032
      %p1034 = scmp.eq.s32.totalorder %s147, 0
      %p1035 = por %p1033, %p1034
      %s1037 = sadd.s32 %s1036, 1
      %p1040 = scmp.eq.s32.totalorder %s141, 1
      %p1041 = scmp.ne.s32.totalorder %s1036, %s1038
      %p1042 = scmp.eq.s32.totalorder %s141, 0
      %p1043 = por %p1041, %p1042
      %p1044 = scmp.ne.s32.totalorder %s1036, %s1038
      %p1045 = scmp.eq.s32.totalorder %s146, 1
      %p1046 = por %p1044, %p1045
      %p1047 = scmp.ne.s32.totalorder %s1038, %s1039
      %p1048 = scmp.eq.s32.totalorder %s146, 0
      %p1049 = por %p1047, %p1048
      %p1050 = scmp.ne.s32.totalorder %s1038, %s1039
      %p1051 = scmp.eq.s32.totalorder %s147, 1
      %p1052 = por %p1050, %p1051
      %p1054 = scmp.ne.s32.totalorder %s1039, %s1053
      %p1055 = scmp.eq.s32.totalorder %s147, 0
      %p1056 = por %p1054, %p1055
      %s1058 = sadd.s32 %s1057, 1
      %p1061 = scmp.eq.s32.totalorder %s141, 1
      %p1062 = scmp.ne.s32.totalorder %s1057, %s1059
      %p1063 = scmp.eq.s32.totalorder %s141, 0
      %p1064 = por %p1062, %p1063
      %p1065 = scmp.ne.s32.totalorder %s1057, %s1059
      %p1066 = scmp.eq.s32.totalorder %s146, 1
      %p1067 = por %p1065, %p1066
      %p1068 = scmp.ne.s32.totalorder %s1059, %s1060
      %p1069 = scmp.eq.s32.totalorder %s146, 0
      %p1070 = por %p1068, %p1069
      %p1071 = scmp.ne.s32.totalorder %s1059, %s1060
      %p1072 = scmp.eq.s32.totalorder %s147, 1
      %p1073 = por %p1071, %p1072
      %p1075 = scmp.ne.s32.totalorder %s1060, %s1074
      %p1076 = scmp.eq.s32.totalorder %s147, 0
      %p1077 = por %p1075, %p1076
      %s1079 = sadd.s32 %s1078, 1
      %p1082 = scmp.eq.s32.totalorder %s141, 1
      %p1083 = scmp.ne.s32.totalorder %s1078, %s1080
      %p1084 = scmp.eq.s32.totalorder %s141, 0
      %p1085 = por %p1083, %p1084
      %p1086 = scmp.ne.s32.totalorder %s1078, %s1080
      %p1087 = scmp.eq.s32.totalorder %s146, 1
      %p1088 = por %p1086, %p1087
      %p1089 = scmp.ne.s32.totalorder %s1080, %s1081
      %p1090 = scmp.eq.s32.totalorder %s146, 0
      %p1091 = por %p1089, %p1090
      %p1092 = scmp.ne.s32.totalorder %s1080, %s1081
      %p1093 = scmp.eq.s32.totalorder %s147, 1
      %p1094 = por %p1092, %p1093
      %p1096 = scmp.ne.s32.totalorder %s1081, %s1095
      %p1097 = scmp.eq.s32.totalorder %s147, 0
      %p1098 = por %p1096, %p1097
      %s1100 = sadd.s32 %s1099, 1
      %p1103 = scmp.eq.s32.totalorder %s141, 1
      %p1104 = scmp.ne.s32.totalorder %s1099, %s1101
      %p1105 = scmp.eq.s32.totalorder %s141, 0
      %p1106 = por %p1104, %p1105
      %p1107 = scmp.ne.s32.totalorder %s1099, %s1101
      %p1108 = scmp.eq.s32.totalorder %s146, 1
      %p1109 = por %p1107, %p1108
      %p1110 = scmp.ne.s32.totalorder %s1101, %s1102
      %p1111 = scmp.eq.s32.totalorder %s146, 0
      %p1112 = por %p1110, %p1111
      %p1113 = scmp.ne.s32.totalorder %s1101, %s1102
      %p1114 = scmp.eq.s32.totalorder %s147, 1
      %p1115 = por %p1113, %p1114
      %p1117 = scmp.ne.s32.totalorder %s1102, %s1116
      %p1118 = scmp.eq.s32.totalorder %s147, 0
      %p1119 = por %p1117, %p1118
      %s1121 = sadd.s32 %s1120, 1
      %p1124 = scmp.eq.s32.totalorder %s141, 1
      %p1125 = scmp.ne.s32.totalorder %s1120, %s1122
      %p1126 = scmp.eq.s32.totalorder %s141, 0
      %p1127 = por %p1125, %p1126
      %p1128 = scmp.ne.s32.totalorder %s1120, %s1122
      %p1129 = scmp.eq.s32.totalorder %s146, 1
      %p1130 = por %p1128, %p1129
      %p1131 = scmp.ne.s32.totalorder %s1122, %s1123
      %p1132 = scmp.eq.s32.totalorder %s146, 0
      %p1133 = por %p1131, %p1132
      %p1134 = scmp.ne.s32.totalorder %s1122, %s1123
      %p1135 = scmp.eq.s32.totalorder %s147, 1
      %p1136 = por %p1134, %p1135
      %p1138 = scmp.ne.s32.totalorder %s1123, %s1137
      %p1139 = scmp.eq.s32.totalorder %s147, 0
      %p1140 = por %p1138, %p1139
      %s1142 = sadd.s32 %s1141, 1
      %p1145 = scmp.eq.s32.totalorder %s141, 1
      %p1146 = scmp.ne.s32.totalorder %s1141, %s1143
      %p1147 = scmp.eq.s32.totalorder %s141, 0
      %p1148 = por %p1146, %p1147
      %p1149 = scmp.ne.s32.totalorder %s1141, %s1143
      %p1150 = scmp.eq.s32.totalorder %s146, 1
      %p1151 = por %p1149, %p1150
      %p1152 = scmp.ne.s32.totalorder %s1143, %s1144
      %p1153 = scmp.eq.s32.totalorder %s146, 0
      %p1154 = por %p1152, %p1153
      %p1155 = scmp.ne.s32.totalorder %s1143, %s1144
      %p1156 = scmp.eq.s32.totalorder %s147, 1
      %p1157 = por %p1155, %p1156
      %p1159 = scmp.ne.s32.totalorder %s1144, %s1158
      %p1160 = scmp.eq.s32.totalorder %s147, 0
      %p1161 = por %p1159, %p1160
      %s1163 = sadd.s32 %s1162, 1
      %p1166 = scmp.eq.s32.totalorder %s141, 1
      %p1167 = scmp.ne.s32.totalorder %s1162, %s1164
      %p1168 = scmp.eq.s32.totalorder %s141, 0
      %p1169 = por %p1167, %p1168
      %p1170 = scmp.ne.s32.totalorder %s1162, %s1164
      %p1171 = scmp.eq.s32.totalorder %s146, 1
      %p1172 = por %p1170, %p1171
      %p1173 = scmp.ne.s32.totalorder %s1164, %s1165
      %p1174 = scmp.eq.s32.totalorder %s146, 0
      %p1175 = por %p1173, %p1174
      %p1176 = scmp.ne.s32.totalorder %s1164, %s1165
      %p1177 = scmp.eq.s32.totalorder %s147, 1
      %p1178 = por %p1176, %p1177
      %p1180 = scmp.ne.s32.totalorder %s1165, %s1179
      %p1181 = scmp.eq.s32.totalorder %s147, 0
      %p1182 = por %p1180, %p1181
      %s1184 = sadd.s32 %s1183, 1
      %p1187 = scmp.eq.s32.totalorder %s141, 1
      %p1188 = scmp.ne.s32.totalorder %s1183, %s1185
      %p1189 = scmp.eq.s32.totalorder %s141, 0
      %p1190 = por %p1188, %p1189
      %p1191 = scmp.ne.s32.totalorder %s1183, %s1185
      %p1192 = scmp.eq.s32.totalorder %s146, 1
      %p1193 = por %p1191, %p1192
      %p1194 = scmp.ne.s32.totalorder %s1185, %s1186
      %p1195 = scmp.eq.s32.totalorder %s146, 0
      %p1196 = por %p1194, %p1195
      %p1197 = scmp.ne.s32.totalorder %s1185, %s1186
      %p1198 = scmp.eq.s32.totalorder %s147, 1
      %p1199 = por %p1197, %p1198
      %p1201 = scmp.ne.s32.totalorder %s1186, %s1200
      %p1202 = scmp.eq.s32.totalorder %s147, 0
      %p1203 = por %p1201, %p1202
      %s1205 = sadd.s32 %s1204, 1
      %p1208 = scmp.eq.s32.totalorder %s141, 1
      %p1209 = scmp.ne.s32.totalorder %s1204, %s1206
      %p1210 = scmp.eq.s32.totalorder %s141, 0
      %p1211 = por %p1209, %p1210
      %p1212 = scmp.ne.s32.totalorder %s1204, %s1206
      %p1213 = scmp.eq.s32.totalorder %s146, 1
      %p1214 = por %p1212, %p1213
      %p1215 = scmp.ne.s32.totalorder %s1206, %s1207
      %p1216 = scmp.eq.s32.totalorder %s146, 0
      %p1217 = por %p1215, %p1216
      %p1218 = scmp.ne.s32.totalorder %s1206, %s1207
      %p1219 = scmp.eq.s32.totalorder %s147, 1
      %p1220 = por %p1218, %p1219
      %p1222 = scmp.ne.s32.totalorder %s1207, %s1221
      %p1223 = scmp.eq.s32.totalorder %s147, 0
      %p1224 = por %p1222, %p1223
      %s1226 = sadd.s32 %s1225, 1
      %p1229 = scmp.eq.s32.totalorder %s141, 1
      %p1230 = scmp.ne.s32.totalorder %s1225, %s1227
      %p1231 = scmp.eq.s32.totalorder %s141, 0
      %p1232 = por %p1230, %p1231
      %p1233 = scmp.ne.s32.totalorder %s1225, %s1227
      %p1234 = scmp.eq.s32.totalorder %s146, 1
      %p1235 = por %p1233, %p1234
      %p1236 = scmp.ne.s32.totalorder %s1227, %s1228
      %p1237 = scmp.eq.s32.totalorder %s146, 0
      %p1238 = por %p1236, %p1237
      %p1239 = scmp.ne.s32.totalorder %s1227, %s1228
      %p1240 = scmp.eq.s32.totalorder %s147, 1
      %p1241 = por %p1239, %p1240
      %p1243 = scmp.ne.s32.totalorder %s1228, %s1242
      %p1244 = scmp.eq.s32.totalorder %s147, 0
      %p1245 = por %p1243, %p1244
      %s1247 = sadd.s32 %s1246, 1
      %p1250 = scmp.eq.s32.totalorder %s141, 1
      %p1251 = scmp.ne.s32.totalorder %s1246, %s1248
      %p1252 = scmp.eq.s32.totalorder %s141, 0
      %p1253 = por %p1251, %p1252
      %p1254 = scmp.ne.s32.totalorder %s1246, %s1248
      %p1255 = scmp.eq.s32.totalorder %s146, 1
      %p1256 = por %p1254, %p1255
      %p1257 = scmp.ne.s32.totalorder %s1248, %s1249
      %p1258 = scmp.eq.s32.totalorder %s146, 0
      %p1259 = por %p1257, %p1258
      %p1260 = scmp.ne.s32.totalorder %s1248, %s1249
      %p1261 = scmp.eq.s32.totalorder %s147, 1
      %p1262 = por %p1260, %p1261
      %p1264 = scmp.ne.s32.totalorder %s1249, %s1263
      %p1265 = scmp.eq.s32.totalorder %s147, 0
      %p1266 = por %p1264, %p1265
      %s1268 = sadd.s32 %s1267, 1
      %p1271 = scmp.eq.s32.totalorder %s141, 1
      %p1272 = scmp.ne.s32.totalorder %s1267, %s1269
      %p1273 = scmp.eq.s32.totalorder %s141, 0
      %p1274 = por %p1272, %p1273
      %p1275 = scmp.ne.s32.totalorder %s1267, %s1269
      %p1276 = scmp.eq.s32.totalorder %s146, 1
      %p1277 = por %p1275, %p1276
      %p1278 = scmp.ne.s32.totalorder %s1269, %s1270
      %p1279 = scmp.eq.s32.totalorder %s146, 0
      %p1280 = por %p1278, %p1279
      %p1281 = scmp.ne.s32.totalorder %s1269, %s1270
      %p1282 = scmp.eq.s32.totalorder %s147, 1
      %p1283 = por %p1281, %p1282
      %p1285 = scmp.ne.s32.totalorder %s1270, %s1284
      %p1286 = scmp.eq.s32.totalorder %s147, 0
      %p1287 = por %p1285, %p1286
      %s1289 = sadd.s32 %s1288, 1
      %p1292 = scmp.eq.s32.totalorder %s141, 1
      %p1293 = scmp.ne.s32.totalorder %s1288, %s1290
      %p1294 = scmp.eq.s32.totalorder %s141, 0
      %p1295 = por %p1293, %p1294
      %p1296 = scmp.ne.s32.totalorder %s1288, %s1290
      %p1297 = scmp.eq.s32.totalorder %s146, 1
      %p1298 = por %p1296, %p1297
      %p1299 = scmp.ne.s32.totalorder %s1290, %s1291
      %p1300 = scmp.eq.s32.totalorder %s146, 0
      %p1301 = por %p1299, %p1300
      %p1302 = scmp.ne.s32.totalorder %s1290, %s1291
      %p1303 = scmp.eq.s32.totalorder %s147, 1
      %p1304 = por %p1302, %p1303
      %p1306 = scmp.ne.s32.totalorder %s1291, %s1305
      %p1307 = scmp.eq.s32.totalorder %s147, 0
      %p1308 = por %p1306, %p1307
      %s1310 = sadd.s32 %s1309, 1
      %p1313 = scmp.eq.s32.totalorder %s141, 1
      %p1314 = scmp.ne.s32.totalorder %s1309, %s1311
      %p1315 = scmp.eq.s32.totalorder %s141, 0
      %p1316 = por %p1314, %p1315
      %p1317 = scmp.ne.s32.totalorder %s1309, %s1311
      %p1318 = scmp.eq.s32.totalorder %s146, 1
      %p1319 = por %p1317, %p1318
      %p1320 = scmp.ne.s32.totalorder %s1311, %s1312
      %p1321 = scmp.eq.s32.totalorder %s146, 0
      %p1322 = por %p1320, %p1321
      %p1323 = scmp.ne.s32.totalorder %s1311, %s1312
      %p1324 = scmp.eq.s32.totalorder %s147, 1
      %p1325 = por %p1323, %p1324
      %p1327 = scmp.ne.s32.totalorder %s1312, %s1326
      %p1328 = scmp.eq.s32.totalorder %s147, 0
      %p1329 = por %p1327, %p1328
      %s1331 = sadd.s32 %s1330, 1
      %p1334 = scmp.eq.s32.totalorder %s141, 1
      %p1335 = scmp.ne.s32.totalorder %s1330, %s1332
      %p1336 = scmp.eq.s32.totalorder %s141, 0
      %p1337 = por %p1335, %p1336
      %p1338 = scmp.ne.s32.totalorder %s1330, %s1332
      %p1339 = scmp.eq.s32.totalorder %s146, 1
      %p1340 = por %p1338, %p1339
      %p1341 = scmp.ne.s32.totalorder %s1332, %s1333
      %p1342 = scmp.eq.s32.totalorder %s146, 0
      %p1343 = por %p1341, %p1342
      %p1344 = scmp.ne.s32.totalorder %s1332, %s1333
      %p1345 = scmp.eq.s32.totalorder %s147, 1
      %p1346 = por %p1344, %p1345
      %p1348 = scmp.ne.s32.totalorder %s1333, %s1347
      %p1349 = scmp.eq.s32.totalorder %s147, 0
      %p1350 = por %p1348, %p1349
      %s1351 = ssub.s32 %s141, %s148
      %p1352 = scmp.eq.s32.totalorder %s1351, 0
      %s1354 = sadd.s32 %s1353, 1
      %s1355 = scalar_select %p1352, %s1353, %s1354
      %p1358 = pneg %p1352
      %p1359 = scmp.eq.s32.totalorder %s141, 1
      %p1360 = por %p1358, %p1359
      %p1361 = scmp.ne.s32.totalorder %s1353, %s1356
      %p1362 = scmp.eq.s32.totalorder %s141, 0
      %p1363 = por %p1361, %p1362
      %p1364 = scmp.ne.s32.totalorder %s1353, %s1356
      %p1365 = scmp.eq.s32.totalorder %s146, 1
      %p1366 = por %p1364, %p1365
      %p1367 = scmp.ne.s32.totalorder %s1356, %s1357
      %p1368 = scmp.eq.s32.totalorder %s146, 0
      %p1369 = por %p1367, %p1368
      %p1370 = scmp.ne.s32.totalorder %s1356, %s1357
      %p1371 = scmp.eq.s32.totalorder %s147, 1
      %p1372 = por %p1370, %p1371
      %p1374 = scmp.ne.s32.totalorder %s1357, %s1373
      %p1375 = scmp.eq.s32.totalorder %s147, 0
      %p1376 = por %p1374, %p1375
      %s1377 = ssub.s32 %s141, %s148
      %p1378 = scmp.eq.s32.totalorder %s1377, 0
      %s1380 = sadd.s32 %s1379, 1
      %s1381 = scalar_select %p1378, %s1379, %s1380
      %p1384 = pneg %p1378
      %p1385 = scmp.eq.s32.totalorder %s141, 1
      %p1386 = por %p1384, %p1385
      %p1387 = scmp.ne.s32.totalorder %s1379, %s1382
      %p1388 = scmp.eq.s32.totalorder %s141, 0
      %p1389 = por %p1387, %p1388
      %p1390 = scmp.ne.s32.totalorder %s1379, %s1382
      %p1391 = scmp.eq.s32.totalorder %s146, 1
      %p1392 = por %p1390, %p1391
      %p1393 = scmp.ne.s32.totalorder %s1382, %s1383
      %p1394 = scmp.eq.s32.totalorder %s146, 0
      %p1395 = por %p1393, %p1394
      %p1396 = scmp.ne.s32.totalorder %s1382, %s1383
      %p1397 = scmp.eq.s32.totalorder %s147, 1
      %p1398 = por %p1396, %p1397
      %p1400 = scmp.ne.s32.totalorder %s1383, %s1399
      %p1401 = scmp.eq.s32.totalorder %s147, 0
      %p1402 = por %p1400, %p1401
      %s1403 = ssub.s32 %s141, %s148
      %p1404 = scmp.eq.s32.totalorder %s1403, 0
      %s1406 = sadd.s32 %s1405, 1
      %s1407 = scalar_select %p1404, %s1405, %s1406
      %p1410 = pneg %p1404
      %p1411 = scmp.eq.s32.totalorder %s141, 1
      %p1412 = por %p1410, %p1411
      %p1413 = scmp.ne.s32.totalorder %s1405, %s1408
      %p1414 = scmp.eq.s32.totalorder %s141, 0
      %p1415 = por %p1413, %p1414
      %p1416 = scmp.ne.s32.totalorder %s1405, %s1408
      %p1417 = scmp.eq.s32.totalorder %s146, 1
      %p1418 = por %p1416, %p1417
      %p1419 = scmp.ne.s32.totalorder %s1408, %s1409
      %p1420 = scmp.eq.s32.totalorder %s146, 0
      %p1421 = por %p1419, %p1420
      %p1422 = scmp.ne.s32.totalorder %s1408, %s1409
      %p1423 = scmp.eq.s32.totalorder %s147, 1
      %p1424 = por %p1422, %p1423
      %p1426 = scmp.ne.s32.totalorder %s1409, %s1425
      %p1427 = scmp.eq.s32.totalorder %s147, 0
      %p1428 = por %p1426, %p1427
      %p1429 = scmp.le.s32.totalorder 1, %s141
      %p1430 = scmp.lt.s32.totalorder %s141, 3
      %p1431 = pnand %p1429, %p1430
      %p1432 = pneg %p1431
      // Predicated region
      $region9: #{vit4loca_forward.1} parent=5 // pred_check
        _
      $region10: #{vit4loca_forward.1} parent=5 // pred_check_branch
        %1434 = sbr.rel (%p1431) target = $region12
      $region11: #{vit4loca_forward.1} parent=5 // pred_region
        %s1435 = ssub.s32 %s141, 1
        // Predicated region
        $region13: #{vit4loca_forward.1} parent=11 // pred_check
          %p1436 = pneg %p188
        $region14: #{vit4loca_forward.1} parent=11 // pred_check_branch
          %1438 = sbr.rel (%p1436) target = $region16
        $region15: #{vit4loca_forward.1} parent=11 // pred_region
          _
        $region16: #{vit4loca_forward.1} parent=11 // pred_fallthru
          _
        // Predicated region
        $region17: #{vit4loca_forward.1} parent=11 // pred_check
          %p1439 = pneg %p209
        $region18: #{vit4loca_forward.1} parent=11 // pred_check_branch
          %1441 = sbr.rel (%p1439) target = $region20
        $region19: #{vit4loca_forward.1} parent=11 // pred_region
          _
        $region20: #{vit4loca_forward.1} parent=11 // pred_fallthru
          _
        // Predicated region
        $region21: #{vit4loca_forward.1} parent=11 // pred_check
          %p1442 = pneg %p230
        $region22: #{vit4loca_forward.1} parent=11 // pred_check_branch
          %1444 = sbr.rel (%p1442) target = $region24
        $region23: #{vit4loca_forward.1} parent=11 // pred_region
          _
        $region24: #{vit4loca_forward.1} parent=11 // pred_fallthru
          _
        // Predicated region
        $region25: #{vit4loca_forward.1} parent=11 // pred_check
          %p1445 = pneg %p251
        $region26: #{vit4loca_forward.1} parent=11 // pred_check_branch
          %1447 = sbr.rel (%p1445) target = $region28
        $region27: #{vit4loca_forward.1} parent=11 // pred_region
          _
        $region28: #{vit4loca_forward.1} parent=11 // pred_fallthru
          _
        // Predicated region
        $region29: #{vit4loca_forward.1} parent=11 // pred_check
          %p1448 = pneg %p272
        $region30: #{vit4loca_forward.1} parent=11 // pred_check_branch
          %1450 = sbr.rel (%p1448) target = $region32
        $region31: #{vit4loca_forward.1} parent=11 // pred_region
          _
        $region32: #{vit4loca_forward.1} parent=11 // pred_fallthru
          _
        // Predicated region
        $region33: #{vit4loca_forward.1} parent=11 // pred_check
          %p1451 = pneg %p293
        $region34: #{vit4loca_forward.1} parent=11 // pred_check_branch
          %1453 = sbr.rel (%p1451) target = $region36
        $region35: #{vit4loca_forward.1} parent=11 // pred_region
          _
        $region36: #{vit4loca_forward.1} parent=11 // pred_fallthru
          _
        // Predicated region
        $region37: #{vit4loca_forward.1} parent=11 // pred_check
          %p1454 = pneg %p314
        $region38: #{vit4loca_forward.1} parent=11 // pred_check_branch
          %1456 = sbr.rel (%p1454) target = $region40
        $region39: #{vit4loca_forward.1} parent=11 // pred_region
          _
        $region40: #{vit4loca_forward.1} parent=11 // pred_fallthru
          _
        // Predicated region
        $region41: #{vit4loca_forward.1} parent=11 // pred_check
          %p1457 = pneg %p335
        $region42: #{vit4loca_forward.1} parent=11 // pred_check_branch
          %1459 = sbr.rel (%p1457) target = $region44
        $region43: #{vit4loca_forward.1} parent=11 // pred_region
          _
        $region44: #{vit4loca_forward.1} parent=11 // pred_fallthru
          _
        // Predicated region
        $region45: #{vit4loca_forward.1} parent=11 // pred_check
          %p1460 = pneg %p356
        $region46: #{vit4loca_forward.1} parent=11 // pred_check_branch
          %1462 = sbr.rel (%p1460) target = $region48
        $region47: #{vit4loca_forward.1} parent=11 // pred_region
          _
        $region48: #{vit4loca_forward.1} parent=11 // pred_fallthru
          _
        // Predicated region
        $region49: #{vit4loca_forward.1} parent=11 // pred_check
          %p1463 = pneg %p377
        $region50: #{vit4loca_forward.1} parent=11 // pred_check_branch
          %1465 = sbr.rel (%p1463) target = $region52
        $region51: #{vit4loca_forward.1} parent=11 // pred_region
          _
        $region52: #{vit4loca_forward.1} parent=11 // pred_fallthru
          _
        // Predicated region
        $region53: #{vit4loca_forward.1} parent=11 // pred_check
          %p1466 = pneg %p398
        $region54: #{vit4loca_forward.1} parent=11 // pred_check_branch
          %1468 = sbr.rel (%p1466) target = $region56
        $region55: #{vit4loca_forward.1} parent=11 // pred_region
          _
        $region56: #{vit4loca_forward.1} parent=11 // pred_fallthru
          _
        // Predicated region
        $region57: #{vit4loca_forward.1} parent=11 // pred_check
          %p1469 = pneg %p419
        $region58: #{vit4loca_forward.1} parent=11 // pred_check_branch
          %1471 = sbr.rel (%p1469) target = $region60
        $region59: #{vit4loca_forward.1} parent=11 // pred_region
          _
        $region60: #{vit4loca_forward.1} parent=11 // pred_fallthru
          _
        // Predicated region
        $region61: #{vit4loca_forward.1} parent=11 // pred_check
          %p1472 = pneg %p440
        $region62: #{vit4loca_forward.1} parent=11 // pred_check_branch
          %1474 = sbr.rel (%p1472) target = $region64
        $region63: #{vit4loca_forward.1} parent=11 // pred_region
          _
        $region64: #{vit4loca_forward.1} parent=11 // pred_fallthru
          _
        // Predicated region
        $region65: #{vit4loca_forward.1} parent=11 // pred_check
          %p1475 = pneg %p461
        $region66: #{vit4loca_forward.1} parent=11 // pred_check_branch
          %1477 = sbr.rel (%p1475) target = $region68
        $region67: #{vit4loca_forward.1} parent=11 // pred_region
          _
        $region68: #{vit4loca_forward.1} parent=11 // pred_fallthru
          _
        // Predicated region
        $region69: #{vit4loca_forward.1} parent=11 // pred_check
          %p1478 = pneg %p482
        $region70: #{vit4loca_forward.1} parent=11 // pred_check_branch
          %1480 = sbr.rel (%p1478) target = $region72
        $region71: #{vit4loca_forward.1} parent=11 // pred_region
          _
        $region72: #{vit4loca_forward.1} parent=11 // pred_fallthru
          _
        // Predicated region
        $region73: #{vit4loca_forward.1} parent=11 // pred_check
          %p1481 = pneg %p503
        $region74: #{vit4loca_forward.1} parent=11 // pred_check_branch
          %1483 = sbr.rel (%p1481) target = $region76
        $region75: #{vit4loca_forward.1} parent=11 // pred_region
          _
        $region76: #{vit4loca_forward.1} parent=11 // pred_fallthru
          _
        // Predicated region
        $region77: #{vit4loca_forward.1} parent=11 // pred_check
          %p1484 = pneg %p524
        $region78: #{vit4loca_forward.1} parent=11 // pred_check_branch
          %1486 = sbr.rel (%p1484) target = $region80
        $region79: #{vit4loca_forward.1} parent=11 // pred_region
          _
        $region80: #{vit4loca_forward.1} parent=11 // pred_fallthru
          _
        // Predicated region
        $region81: #{vit4loca_forward.1} parent=11 // pred_check
          %p1487 = pneg %p545
        $region82: #{vit4loca_forward.1} parent=11 // pred_check_branch
          %1489 = sbr.rel (%p1487) target = $region84
        $region83: #{vit4loca_forward.1} parent=11 // pred_region
          _
        $region84: #{vit4loca_forward.1} parent=11 // pred_fallthru
          _
        // Predicated region
        $region85: #{vit4loca_forward.1} parent=11 // pred_check
          %p1490 = pneg %p566
        $region86: #{vit4loca_forward.1} parent=11 // pred_check_branch
          %1492 = sbr.rel (%p1490) target = $region88
        $region87: #{vit4loca_forward.1} parent=11 // pred_region
          _
        $region88: #{vit4loca_forward.1} parent=11 // pred_fallthru
          _
        // Predicated region
        $region89: #{vit4loca_forward.1} parent=11 // pred_check
          %p1493 = pneg %p587
        $region90: #{vit4loca_forward.1} parent=11 // pred_check_branch
          %1495 = sbr.rel (%p1493) target = $region92
        $region91: #{vit4loca_forward.1} parent=11 // pred_region
          _
        $region92: #{vit4loca_forward.1} parent=11 // pred_fallthru
          _
        // Predicated region
        $region93: #{vit4loca_forward.1} parent=11 // pred_check
          %p1496 = pneg %p608
        $region94: #{vit4loca_forward.1} parent=11 // pred_check_branch
          %1498 = sbr.rel (%p1496) target = $region96
        $region95: #{vit4loca_forward.1} parent=11 // pred_region
          _
        $region96: #{vit4loca_forward.1} parent=11 // pred_fallthru
          _
        // Predicated region
        $region97: #{vit4loca_forward.1} parent=11 // pred_check
          %p1499 = pneg %p629
        $region98: #{vit4loca_forward.1} parent=11 // pred_check_branch
          %1501 = sbr.rel (%p1499) target = $region100
        $region99: #{vit4loca_forward.1} parent=11 // pred_region
          _
        $region100: #{vit4loca_forward.1} parent=11 // pred_fallthru
          _
        // Predicated region
        $region101: #{vit4loca_forward.1} parent=11 // pred_check
          %p1502 = pneg %p650
        $region102: #{vit4loca_forward.1} parent=11 // pred_check_branch
          %1504 = sbr.rel (%p1502) target = $region104
        $region103: #{vit4loca_forward.1} parent=11 // pred_region
          _
        $region104: #{vit4loca_forward.1} parent=11 // pred_fallthru
          _
        // Predicated region
        $region105: #{vit4loca_forward.1} parent=11 // pred_check
          %p1505 = pneg %p671
        $region106: #{vit4loca_forward.1} parent=11 // pred_check_branch
          %1507 = sbr.rel (%p1505) target = $region108
        $region107: #{vit4loca_forward.1} parent=11 // pred_region
          _
        $region108: #{vit4loca_forward.1} parent=11 // pred_fallthru
          _
        // Predicated region
        $region109: #{vit4loca_forward.1} parent=11 // pred_check
          %p1508 = pneg %p692
        $region110: #{vit4loca_forward.1} parent=11 // pred_check_branch
          %1510 = sbr.rel (%p1508) target = $region112
        $region111: #{vit4loca_forward.1} parent=11 // pred_region
          _
        $region112: #{vit4loca_forward.1} parent=11 // pred_fallthru
          _
        // Predicated region
        $region113: #{vit4loca_forward.1} parent=11 // pred_check
          %p1511 = pneg %p713
        $region114: #{vit4loca_forward.1} parent=11 // pred_check_branch
          %1513 = sbr.rel (%p1511) target = $region116
        $region115: #{vit4loca_forward.1} parent=11 // pred_region
          _
        $region116: #{vit4loca_forward.1} parent=11 // pred_fallthru
          _
        // Predicated region
        $region117: #{vit4loca_forward.1} parent=11 // pred_check
          %p1514 = pneg %p734
        $region118: #{vit4loca_forward.1} parent=11 // pred_check_branch
          %1516 = sbr.rel (%p1514) target = $region120
        $region119: #{vit4loca_forward.1} parent=11 // pred_region
          _
        $region120: #{vit4loca_forward.1} parent=11 // pred_fallthru
          _
        // Predicated region
        $region121: #{vit4loca_forward.1} parent=11 // pred_check
          %p1517 = pneg %p755
        $region122: #{vit4loca_forward.1} parent=11 // pred_check_branch
          %1519 = sbr.rel (%p1517) target = $region124
        $region123: #{vit4loca_forward.1} parent=11 // pred_region
          _
        $region124: #{vit4loca_forward.1} parent=11 // pred_fallthru
          _
        // Predicated region
        $region125: #{vit4loca_forward.1} parent=11 // pred_check
          %p1520 = pneg %p776
        $region126: #{vit4loca_forward.1} parent=11 // pred_check_branch
          %1522 = sbr.rel (%p1520) target = $region128
        $region127: #{vit4loca_forward.1} parent=11 // pred_region
          _
        $region128: #{vit4loca_forward.1} parent=11 // pred_fallthru
          _
        // Predicated region
        $region129: #{vit4loca_forward.1} parent=11 // pred_check
          %p1523 = pneg %p797
        $region130: #{vit4loca_forward.1} parent=11 // pred_check_branch
          %1525 = sbr.rel (%p1523) target = $region132
        $region131: #{vit4loca_forward.1} parent=11 // pred_region
          _
        $region132: #{vit4loca_forward.1} parent=11 // pred_fallthru
          _
        // Predicated region
        $region133: #{vit4loca_forward.1} parent=11 // pred_check
          %p1526 = pneg %p818
        $region134: #{vit4loca_forward.1} parent=11 // pred_check_branch
          %1528 = sbr.rel (%p1526) target = $region136
        $region135: #{vit4loca_forward.1} parent=11 // pred_region
          %s1530 = ssub.s32 16, 16
          %1531 = vsyncadd [#allocation3], %s1530
          %s1533 = sshll.u32 [#allocation2], 4
          %s1534 = int_to_ptr.vmem [resolvable:$true] %s1533
          %1536 = dma.hbm_to_vmem [thread:$0]  %s63, 16, %s1534, [#allocation3]
        $region136: #{vit4loca_forward.1} parent=11 // pred_fallthru
          _
        // Predicated region
        $region137: #{vit4loca_forward.1} parent=11 // pred_check
          %p1537 = pneg %p839
        $region138: #{vit4loca_forward.1} parent=11 // pred_check_branch
          %1539 = sbr.rel (%p1537) target = $region140
        $region139: #{vit4loca_forward.1} parent=11 // pred_region
          _
        $region140: #{vit4loca_forward.1} parent=11 // pred_fallthru
          _
        // Predicated region
        $region141: #{vit4loca_forward.1} parent=11 // pred_check
          %p1540 = pneg %p860
        $region142: #{vit4loca_forward.1} parent=11 // pred_check_branch
          %1542 = sbr.rel (%p1540) target = $region144
        $region143: #{vit4loca_forward.1} parent=11 // pred_region
          %s1544 = ssub.s32 16, 16
          %1545 = vsyncadd [#allocation6], %s1544
          %s1547 = sshll.u32 [#allocation5], 4
          %s1548 = int_to_ptr.vmem [resolvable:$true] %s1547
          %1550 = dma.hbm_to_vmem [thread:$0]  %s67, 16, %s1548, [#allocation6]
        $region144: #{vit4loca_forward.1} parent=11 // pred_fallthru
          _
        // Predicated region
        $region145: #{vit4loca_forward.1} parent=11 // pred_check
          %p1551 = pneg %p881
        $region146: #{vit4loca_forward.1} parent=11 // pred_check_branch
          %1553 = sbr.rel (%p1551) target = $region148
        $region147: #{vit4loca_forward.1} parent=11 // pred_region
          _
        $region148: #{vit4loca_forward.1} parent=11 // pred_fallthru
          _
        // Predicated region
        $region149: #{vit4loca_forward.1} parent=11 // pred_check
          %p1554 = pneg %p902
        $region150: #{vit4loca_forward.1} parent=11 // pred_check_branch
          %1556 = sbr.rel (%p1554) target = $region152
        $region151: #{vit4loca_forward.1} parent=11 // pred_region
          %s1558 = ssub.s32 16, 16
          %1559 = vsyncadd [#allocation6], %s1558
          %s1561 = sshll.u32 [#allocation7], 4
          %s1562 = int_to_ptr.vmem [resolvable:$true] %s1561
          %1564 = dma.hbm_to_vmem [thread:$0]  %s71, 16, %s1562, [#allocation6]
        $region152: #{vit4loca_forward.1} parent=11 // pred_fallthru
          _
        // Predicated region
        $region153: #{vit4loca_forward.1} parent=11 // pred_check
          %p1565 = pneg %p923
        $region154: #{vit4loca_forward.1} parent=11 // pred_check_branch
          %1567 = sbr.rel (%p1565) target = $region156
        $region155: #{vit4loca_forward.1} parent=11 // pred_region
          _
        $region156: #{vit4loca_forward.1} parent=11 // pred_fallthru
          _
        // Predicated region
        $region157: #{vit4loca_forward.1} parent=11 // pred_check
          %p1568 = pneg %p944
        $region158: #{vit4loca_forward.1} parent=11 // pred_check_branch
          %1570 = sbr.rel (%p1568) target = $region160
        $region159: #{vit4loca_forward.1} parent=11 // pred_region
          %s1572 = ssub.s32 16, 16
          %1573 = vsyncadd [#allocation9], %s1572
          %s1575 = sshll.u32 [#allocation8], 4
          %s1576 = int_to_ptr.vmem [resolvable:$true] %s1575
          %1578 = dma.hbm_to_vmem [thread:$0]  %s75, 16, %s1576, [#allocation9]
        $region160: #{vit4loca_forward.1} parent=11 // pred_fallthru
          _
        // Predicated region
        $region161: #{vit4loca_forward.1} parent=11 // pred_check
          %p1579 = pneg %p965
        $region162: #{vit4loca_forward.1} parent=11 // pred_check_branch
          %1581 = sbr.rel (%p1579) target = $region164
        $region163: #{vit4loca_forward.1} parent=11 // pred_region
          %s1583 = ssub.s32 16, 16
          %1584 = vsyncadd [#allocation9], %s1583
          %s1586 = sshll.u32 [#allocation10], 4
          %s1587 = int_to_ptr.vmem [resolvable:$true] %s1586
          %1589 = dma.hbm_to_vmem [thread:$0]  %s77, 16, %s1587, [#allocation9]
        $region164: #{vit4loca_forward.1} parent=11 // pred_fallthru
          _
        // Predicated region
        $region165: #{vit4loca_forward.1} parent=11 // pred_check
          %p1590 = pneg %p986
        $region166: #{vit4loca_forward.1} parent=11 // pred_check_branch
          %1592 = sbr.rel (%p1590) target = $region168
        $region167: #{vit4loca_forward.1} parent=11 // pred_region
          _
        $region168: #{vit4loca_forward.1} parent=11 // pred_fallthru
          _
        // Predicated region
        $region169: #{vit4loca_forward.1} parent=11 // pred_check
          %p1593 = pneg %p1007
        $region170: #{vit4loca_forward.1} parent=11 // pred_check_branch
          %1595 = sbr.rel (%p1593) target = $region172
        $region171: #{vit4loca_forward.1} parent=11 // pred_region
          %s1597 = ssub.s32 16, 16
          %1598 = vsyncadd [#allocation12], %s1597
          %s1600 = sshll.u32 [#allocation11], 4
          %s1601 = int_to_ptr.vmem [resolvable:$true] %s1600
          %1603 = dma.hbm_to_vmem [thread:$0]  %s81, 16, %s1601, [#allocation12]
        $region172: #{vit4loca_forward.1} parent=11 // pred_fallthru
          _
        // Predicated region
        $region173: #{vit4loca_forward.1} parent=11 // pred_check
          %p1604 = pneg %p1028
        $region174: #{vit4loca_forward.1} parent=11 // pred_check_branch
          %1606 = sbr.rel (%p1604) target = $region176
        $region175: #{vit4loca_forward.1} parent=11 // pred_region
          _
        $region176: #{vit4loca_forward.1} parent=11 // pred_fallthru
          _
        // Predicated region
        $region177: #{vit4loca_forward.1} parent=11 // pred_check
          %p1607 = pneg %p1049
        $region178: #{vit4loca_forward.1} parent=11 // pred_check_branch
          %1609 = sbr.rel (%p1607) target = $region180
        $region179: #{vit4loca_forward.1} parent=11 // pred_region
          %s1611 = ssub.s32 16, 16
          %1612 = vsyncadd [#allocation12], %s1611
          %s1614 = sshll.u32 [#allocation13], 4
          %s1615 = int_to_ptr.vmem [resolvable:$true] %s1614
          %1617 = dma.hbm_to_vmem [thread:$0]  %s85, 16, %s1615, [#allocation12]
        $region180: #{vit4loca_forward.1} parent=11 // pred_fallthru
          _
        // Predicated region
        $region181: #{vit4loca_forward.1} parent=11 // pred_check
          %p1618 = pneg %p1070
        $region182: #{vit4loca_forward.1} parent=11 // pred_check_branch
          %1620 = sbr.rel (%p1618) target = $region184
        $region183: #{vit4loca_forward.1} parent=11 // pred_region
          _
        $region184: #{vit4loca_forward.1} parent=11 // pred_fallthru
          _
        // Predicated region
        $region185: #{vit4loca_forward.1} parent=11 // pred_check
          %p1621 = pneg %p1091
        $region186: #{vit4loca_forward.1} parent=11 // pred_check_branch
          %1623 = sbr.rel (%p1621) target = $region188
        $region187: #{vit4loca_forward.1} parent=11 // pred_region
          %s1625 = ssub.s32 16, 16
          %1626 = vsyncadd [#allocation15], %s1625
          %s1628 = sshll.u32 [#allocation14], 4
          %s1629 = int_to_ptr.vmem [resolvable:$true] %s1628
          %1631 = dma.hbm_to_vmem [thread:$0]  %s89, 16, %s1629, [#allocation15]
        $region188: #{vit4loca_forward.1} parent=11 // pred_fallthru
          _
        // Predicated region
        $region189: #{vit4loca_forward.1} parent=11 // pred_check
          %p1632 = pneg %p1112
        $region190: #{vit4loca_forward.1} parent=11 // pred_check_branch
          %1634 = sbr.rel (%p1632) target = $region192
        $region191: #{vit4loca_forward.1} parent=11 // pred_region
          _
        $region192: #{vit4loca_forward.1} parent=11 // pred_fallthru
          _
        // Predicated region
        $region193: #{vit4loca_forward.1} parent=11 // pred_check
          %p1635 = pneg %p1133
        $region194: #{vit4loca_forward.1} parent=11 // pred_check_branch
          %1637 = sbr.rel (%p1635) target = $region196
        $region195: #{vit4loca_forward.1} parent=11 // pred_region
          %s1639 = ssub.s32 16, 16
          %1640 = vsyncadd [#allocation15], %s1639
          %s1642 = sshll.u32 [#allocation16], 4
          %s1643 = int_to_ptr.vmem [resolvable:$true] %s1642
          %1645 = dma.hbm_to_vmem [thread:$0]  %s93, 16, %s1643, [#allocation15]
        $region196: #{vit4loca_forward.1} parent=11 // pred_fallthru
          _
        // Predicated region
        $region197: #{vit4loca_forward.1} parent=11 // pred_check
          %p1646 = pneg %p1154
        $region198: #{vit4loca_forward.1} parent=11 // pred_check_branch
          %1648 = sbr.rel (%p1646) target = $region200
        $region199: #{vit4loca_forward.1} parent=11 // pred_region
          %s1650 = ssub.s32 16, 16
          %1651 = vsyncadd [#allocation18], %s1650
          %s1653 = sshll.u32 [#allocation17], 4
          %s1654 = int_to_ptr.vmem [resolvable:$true] %s1653
          %1656 = dma.hbm_to_vmem [thread:$0]  %s95, 16, %s1654, [#allocation18]
        $region200: #{vit4loca_forward.1} parent=11 // pred_fallthru
          _
        // Predicated region
        $region201: #{vit4loca_forward.1} parent=11 // pred_check
          %p1657 = pneg %p1175
        $region202: #{vit4loca_forward.1} parent=11 // pred_check_branch
          %1659 = sbr.rel (%p1657) target = $region204
        $region203: #{vit4loca_forward.1} parent=11 // pred_region
          %s1661 = ssub.s32 16, 16
          %1662 = vsyncadd [#allocation18], %s1661
          %s1664 = sshll.u32 [#allocation19], 4
          %s1665 = int_to_ptr.vmem [resolvable:$true] %s1664
          %1667 = dma.hbm_to_vmem [thread:$0]  %s97, 16, %s1665, [#allocation18]
        $region204: #{vit4loca_forward.1} parent=11 // pred_fallthru
          _
        // Predicated region
        $region205: #{vit4loca_forward.1} parent=11 // pred_check
          %p1668 = pneg %p1196
        $region206: #{vit4loca_forward.1} parent=11 // pred_check_branch
          %1670 = sbr.rel (%p1668) target = $region208
        $region207: #{vit4loca_forward.1} parent=11 // pred_region
          _
        $region208: #{vit4loca_forward.1} parent=11 // pred_fallthru
          _
        // Predicated region
        $region209: #{vit4loca_forward.1} parent=11 // pred_check
          %p1671 = pneg %p1217
        $region210: #{vit4loca_forward.1} parent=11 // pred_check_branch
          %1673 = sbr.rel (%p1671) target = $region212
        $region211: #{vit4loca_forward.1} parent=11 // pred_region
          %s1675 = ssub.s32 16, 16
          %1676 = vsyncadd [#allocation21], %s1675
          %s1678 = sshll.u32 [#allocation20], 4
          %s1679 = int_to_ptr.vmem [resolvable:$true] %s1678
          %1681 = dma.hbm_to_vmem [thread:$0]  %s101, 16, %s1679, [#allocation21]
        $region212: #{vit4loca_forward.1} parent=11 // pred_fallthru
          _
        // Predicated region
        $region213: #{vit4loca_forward.1} parent=11 // pred_check
          %p1682 = pneg %p1238
        $region214: #{vit4loca_forward.1} parent=11 // pred_check_branch
          %1684 = sbr.rel (%p1682) target = $region216
        $region215: #{vit4loca_forward.1} parent=11 // pred_region
          _
        $region216: #{vit4loca_forward.1} parent=11 // pred_fallthru
          _
        // Predicated region
        $region217: #{vit4loca_forward.1} parent=11 // pred_check
          %p1685 = pneg %p1259
        $region218: #{vit4loca_forward.1} parent=11 // pred_check_branch
          %1687 = sbr.rel (%p1685) target = $region220
        $region219: #{vit4loca_forward.1} parent=11 // pred_region
          %s1689 = ssub.s32 16, 16
          %1690 = vsyncadd [#allocation21], %s1689
          %s1692 = sshll.u32 [#allocation22], 4
          %s1693 = int_to_ptr.vmem [resolvable:$true] %s1692
          %1695 = dma.hbm_to_vmem [thread:$0]  %s105, 16, %s1693, [#allocation21]
        $region220: #{vit4loca_forward.1} parent=11 // pred_fallthru
          _
        // Predicated region
        $region221: #{vit4loca_forward.1} parent=11 // pred_check
          %p1696 = pneg %p1280
        $region222: #{vit4loca_forward.1} parent=11 // pred_check_branch
          %1698 = sbr.rel (%p1696) target = $region224
        $region223: #{vit4loca_forward.1} parent=11 // pred_region
          %s1700 = ssub.s32 16, 16
          %1701 = vsyncadd [#allocation24], %s1700
          %s1703 = sshll.u32 [#allocation23], 4
          %s1704 = int_to_ptr.vmem [resolvable:$true] %s1703
          %1706 = dma.hbm_to_vmem [thread:$0]  %s107, 16, %s1704, [#allocation24]
        $region224: #{vit4loca_forward.1} parent=11 // pred_fallthru
          _
        // Predicated region
        $region225: #{vit4loca_forward.1} parent=11 // pred_check
          %p1707 = pneg %p1301
        $region226: #{vit4loca_forward.1} parent=11 // pred_check_branch
          %1709 = sbr.rel (%p1707) target = $region228
        $region227: #{vit4loca_forward.1} parent=11 // pred_region
          %s1711 = ssub.s32 16, 16
          %1712 = vsyncadd [#allocation24], %s1711
          %s1714 = sshll.u32 [#allocation25], 4
          %s1715 = int_to_ptr.vmem [resolvable:$true] %s1714
          %1717 = dma.hbm_to_vmem [thread:$0]  %s109, 16, %s1715, [#allocation24]
        $region228: #{vit4loca_forward.1} parent=11 // pred_fallthru
          _
        // Predicated region
        $region229: #{vit4loca_forward.1} parent=11 // pred_check
          %p1718 = pneg %p1322
        $region230: #{vit4loca_forward.1} parent=11 // pred_check_branch
          %1720 = sbr.rel (%p1718) target = $region232
        $region231: #{vit4loca_forward.1} parent=11 // pred_region
          _
        $region232: #{vit4loca_forward.1} parent=11 // pred_fallthru
          _
        // Predicated region
        $region233: #{vit4loca_forward.1} parent=11 // pred_check
          %p1721 = pneg %p1343
        $region234: #{vit4loca_forward.1} parent=11 // pred_check_branch
          %1723 = sbr.rel (%p1721) target = $region236
        $region235: #{vit4loca_forward.1} parent=11 // pred_region
          %s1725 = ssub.s32 16, 16
          %1726 = vsyncadd [#allocation27], %s1725
          %s1728 = sshll.u32 [#allocation26], 4
          %s1729 = int_to_ptr.vmem [resolvable:$true] %s1728
          %1731 = dma.hbm_to_vmem [thread:$0]  %s113, 16, %s1729, [#allocation27]
        $region236: #{vit4loca_forward.1} parent=11 // pred_fallthru
          _
      $region12: #{vit4loca_forward.1} parent=5 // pred_fallthru
        _
      %p1732 = scmp.lt.s32.totalorder %s141, 2
      // Predicated region
      $region237: #{vit4loca_forward.1} parent=5 // pred_check
        %p1733 = pneg %p1732
      $region238: #{vit4loca_forward.1} parent=5 // pred_check_branch
        %1735 = sbr.rel (%p1733) target = $region240
      $region239: #{vit4loca_forward.1} parent=5 // pred_region
        // Predicated region
        $region241: #{vit4loca_forward.1} parent=239 // pred_check
          %p1736 = pneg %p161
        $region242: #{vit4loca_forward.1} parent=239 // pred_check_branch
          %1738 = sbr.rel (%p1736) target = $region244
        $region243: #{vit4loca_forward.1} parent=239 // pred_region
          %p1739 = scmp.lt.s32.totalorder %s141, 1
          %s1740 = scalar_select %p1739, %s141, 1
          %s1741 = smul.addr %s1740, 2
          %s1742 = smul.addr %s1741, 8
          %s1743 = scalar_lea.vmem %s1, %s1742
        $region244: #{vit4loca_forward.1} parent=239 // pred_fallthru
          _
      $region240: #{vit4loca_forward.1} parent=5 // pred_fallthru
        _
      %p1744 = scmp.le.s32.totalorder 1, %s141
      %p1745 = scmp.lt.s32.totalorder %s141, 3
      %p1746 = pnand %p1744, %p1745
      %p1747 = pneg %p1746
      // Predicated region
      $region245: #{vit4loca_forward.1} parent=5 // pred_check
        _
      $region246: #{vit4loca_forward.1} parent=5 // pred_check_branch
        %1749 = sbr.rel (%p1746) target = $region248
      $region247: #{vit4loca_forward.1} parent=5 // pred_region
        %s1750 = ssub.s32 %s141, 1
        // Predicated region
        $region249: #{vit4loca_forward.1} parent=247 // pred_check
          %p1751 = pneg %p818
        $region250: #{vit4loca_forward.1} parent=247 // pred_check_branch
          %1753 = sbr.rel (%p1751) target = $region252
        $region251: #{vit4loca_forward.1} parent=247 // pred_region
          %1754 = dma.done [#allocation3], 16
        $region252: #{vit4loca_forward.1} parent=247 // pred_fallthru
          _
        // Predicated region
        $region253: #{vit4loca_forward.1} parent=247 // pred_check
          %p1755 = pneg %p860
        $region254: #{vit4loca_forward.1} parent=247 // pred_check_branch
          %1757 = sbr.rel (%p1755) target = $region256
        $region255: #{vit4loca_forward.1} parent=247 // pred_region
          %1758 = dma.done [#allocation6], 16
        $region256: #{vit4loca_forward.1} parent=247 // pred_fallthru
          _
        // Predicated region
        $region257: #{vit4loca_forward.1} parent=247 // pred_check
          %p1759 = pneg %p902
        $region258: #{vit4loca_forward.1} parent=247 // pred_check_branch
          %1761 = sbr.rel (%p1759) target = $region260
        $region259: #{vit4loca_forward.1} parent=247 // pred_region
          %1762 = dma.done [#allocation6], 16
        $region260: #{vit4loca_forward.1} parent=247 // pred_fallthru
          _
        // Predicated region
        $region261: #{vit4loca_forward.1} parent=247 // pred_check
          %p1763 = pneg %p944
        $region262: #{vit4loca_forward.1} parent=247 // pred_check_branch
          %1765 = sbr.rel (%p1763) target = $region264
        $region263: #{vit4loca_forward.1} parent=247 // pred_region
          %1766 = dma.done [#allocation9], 16
        $region264: #{vit4loca_forward.1} parent=247 // pred_fallthru
          _
        // Predicated region
        $region265: #{vit4loca_forward.1} parent=247 // pred_check
          %p1767 = pneg %p965
        $region266: #{vit4loca_forward.1} parent=247 // pred_check_branch
          %1769 = sbr.rel (%p1767) target = $region268
        $region267: #{vit4loca_forward.1} parent=247 // pred_region
          %1770 = dma.done [#allocation9], 16
        $region268: #{vit4loca_forward.1} parent=247 // pred_fallthru
          _
        // Predicated region
        $region269: #{vit4loca_forward.1} parent=247 // pred_check
          %p1771 = pneg %p1007
        $region270: #{vit4loca_forward.1} parent=247 // pred_check_branch
          %1773 = sbr.rel (%p1771) target = $region272
        $region271: #{vit4loca_forward.1} parent=247 // pred_region
          %1774 = dma.done [#allocation12], 16
        $region272: #{vit4loca_forward.1} parent=247 // pred_fallthru
          _
        // Predicated region
        $region273: #{vit4loca_forward.1} parent=247 // pred_check
          %p1775 = pneg %p1049
        $region274: #{vit4loca_forward.1} parent=247 // pred_check_branch
          %1777 = sbr.rel (%p1775) target = $region276
        $region275: #{vit4loca_forward.1} parent=247 // pred_region
          %1778 = dma.done [#allocation12], 16
        $region276: #{vit4loca_forward.1} parent=247 // pred_fallthru
          _
        // Predicated region
        $region277: #{vit4loca_forward.1} parent=247 // pred_check
          %p1779 = pneg %p1091
        $region278: #{vit4loca_forward.1} parent=247 // pred_check_branch
          %1781 = sbr.rel (%p1779) target = $region280
        $region279: #{vit4loca_forward.1} parent=247 // pred_region
          %1782 = dma.done [#allocation15], 16
        $region280: #{vit4loca_forward.1} parent=247 // pred_fallthru
          _
        // Predicated region
        $region281: #{vit4loca_forward.1} parent=247 // pred_check
          %p1783 = pneg %p1133
        $region282: #{vit4loca_forward.1} parent=247 // pred_check_branch
          %1785 = sbr.rel (%p1783) target = $region284
        $region283: #{vit4loca_forward.1} parent=247 // pred_region
          %1786 = dma.done [#allocation15], 16
        $region284: #{vit4loca_forward.1} parent=247 // pred_fallthru
          _
        // Predicated region
        $region285: #{vit4loca_forward.1} parent=247 // pred_check
          %p1787 = pneg %p1154
        $region286: #{vit4loca_forward.1} parent=247 // pred_check_branch
          %1789 = sbr.rel (%p1787) target = $region288
        $region287: #{vit4loca_forward.1} parent=247 // pred_region
          %1790 = dma.done [#allocation18], 16
        $region288: #{vit4loca_forward.1} parent=247 // pred_fallthru
          _
        // Predicated region
        $region289: #{vit4loca_forward.1} parent=247 // pred_check
          %p1791 = pneg %p1175
        $region290: #{vit4loca_forward.1} parent=247 // pred_check_branch
          %1793 = sbr.rel (%p1791) target = $region292
        $region291: #{vit4loca_forward.1} parent=247 // pred_region
          %1794 = dma.done [#allocation18], 16
        $region292: #{vit4loca_forward.1} parent=247 // pred_fallthru
          _
        // Predicated region
        $region293: #{vit4loca_forward.1} parent=247 // pred_check
          %p1795 = pneg %p1217
        $region294: #{vit4loca_forward.1} parent=247 // pred_check_branch
          %1797 = sbr.rel (%p1795) target = $region296
        $region295: #{vit4loca_forward.1} parent=247 // pred_region
          %1798 = dma.done [#allocation21], 16
        $region296: #{vit4loca_forward.1} parent=247 // pred_fallthru
          _
        // Predicated region
        $region297: #{vit4loca_forward.1} parent=247 // pred_check
          %p1799 = pneg %p1259
        $region298: #{vit4loca_forward.1} parent=247 // pred_check_branch
          %1801 = sbr.rel (%p1799) target = $region300
        $region299: #{vit4loca_forward.1} parent=247 // pred_region
          %1802 = dma.done [#allocation21], 16
        $region300: #{vit4loca_forward.1} parent=247 // pred_fallthru
          _
        // Predicated region
        $region301: #{vit4loca_forward.1} parent=247 // pred_check
          %p1803 = pneg %p1280
        $region302: #{vit4loca_forward.1} parent=247 // pred_check_branch
          %1805 = sbr.rel (%p1803) target = $region304
        $region303: #{vit4loca_forward.1} parent=247 // pred_region
          %1806 = dma.done [#allocation24], 16
        $region304: #{vit4loca_forward.1} parent=247 // pred_fallthru
          _
        // Predicated region
        $region305: #{vit4loca_forward.1} parent=247 // pred_check
          %p1807 = pneg %p1301
        $region306: #{vit4loca_forward.1} parent=247 // pred_check_branch
          %1809 = sbr.rel (%p1807) target = $region308
        $region307: #{vit4loca_forward.1} parent=247 // pred_region
          %1810 = dma.done [#allocation24], 16
        $region308: #{vit4loca_forward.1} parent=247 // pred_fallthru
          _
        // Predicated region
        $region309: #{vit4loca_forward.1} parent=247 // pred_check
          %p1811 = pneg %p1343
        $region310: #{vit4loca_forward.1} parent=247 // pred_check_branch
          %1813 = sbr.rel (%p1811) target = $region312
        $region311: #{vit4loca_forward.1} parent=247 // pred_region
          %1814 = dma.done [#allocation27], 16
        $region312: #{vit4loca_forward.1} parent=247 // pred_fallthru
          _
        %p1815 = scmp.lt.s32.totalorder %s146, 1
        %s1816 = scalar_select %p1815, %s146, 1
        %s1817 = smul.addr %s1816, 2
        %s1818 = smul.addr %s1817, 8
        %s1819 = scalar_lea.vmem %s1, %s1818
        %p1820 = pneg %p167
        %p1821 = pneg %p164
        %p1822 = pneg %p188
        %p1823 = pneg %p185
        %p1824 = pneg %p209
        %p1825 = pneg %p206
        %p1826 = pneg %p230
        %p1827 = pneg %p227
        %p1828 = pneg %p251
        %p1829 = pneg %p248
        %p1830 = pneg %p272
        %p1831 = pneg %p269
        %p1832 = pneg %p293
        %p1833 = pneg %p290
        %p1834 = pneg %p314
        %p1835 = pneg %p311
        %p1836 = pneg %p335
        %p1837 = pneg %p332
        %p1838 = pneg %p356
        %p1839 = pneg %p353
        %p1840 = pneg %p377
        %p1841 = pneg %p374
        %p1842 = pneg %p398
        %p1843 = pneg %p395
        %p1844 = pneg %p419
        %p1845 = pneg %p416
        %p1846 = pneg %p440
        %p1847 = pneg %p437
        %p1848 = pneg %p461
        %p1849 = pneg %p458
        %p1850 = pneg %p482
        %p1851 = pneg %p479
        %p1852 = pneg %p503
        %p1853 = pneg %p500
        %p1854 = pneg %p524
        %p1855 = pneg %p521
        %p1856 = pneg %p545
        %p1857 = pneg %p542
        %p1858 = pneg %p566
        %p1859 = pneg %p563
        %p1860 = pneg %p587
        %p1861 = pneg %p584
        %p1862 = pneg %p608
        %p1863 = pneg %p605
        %p1864 = pneg %p629
        %p1865 = pneg %p626
        %p1866 = pneg %p650
        %p1867 = pneg %p647
        %p1868 = pneg %p671
        %p1869 = pneg %p668
        %p1870 = pneg %p692
        %p1871 = pneg %p689
        %p1872 = pneg %p713
        %p1873 = pneg %p710
        %p1874 = pneg %p734
        %p1875 = pneg %p731
        %p1876 = pneg %p755
        %p1877 = pneg %p752
        %p1878 = pneg %p776
        %p1879 = pneg %p773
        %p1880 = pneg %p797
        %p1881 = pneg %p794
        %p1882 = pneg %p818
        %p1883 = pneg %p815
        %p1884 = pneg %p839
        %p1885 = pneg %p836
        %p1886 = pneg %p860
        %p1887 = pneg %p857
        %p1888 = pneg %p881
        %p1889 = pneg %p878
        %p1890 = pneg %p902
        %p1891 = pneg %p899
        %p1892 = pneg %p923
        %p1893 = pneg %p920
        %p1894 = pneg %p944
        %p1895 = pneg %p941
        %p1896 = pneg %p965
        %p1897 = pneg %p962
        %p1898 = pneg %p986
        %p1899 = pneg %p983
        %p1900 = pneg %p1007
        %p1901 = pneg %p1004
        %p1902 = pneg %p1028
        %p1903 = pneg %p1025
        %p1904 = pneg %p1049
        %p1905 = pneg %p1046
        %p1906 = pneg %p1070
        %p1907 = pneg %p1067
        %p1908 = pneg %p1091
        %p1909 = pneg %p1088
        %p1910 = pneg %p1112
        %p1911 = pneg %p1109
        %p1912 = pneg %p1133
        %p1913 = pneg %p1130
        %p1914 = pneg %p1154
        %p1915 = pneg %p1151
        %p1916 = pneg %p1175
        %p1917 = pneg %p1172
        %p1918 = pneg %p1196
        %p1919 = pneg %p1193
        %p1920 = pneg %p1217
        %p1921 = pneg %p1214
        %p1922 = pneg %p1238
        %p1923 = pneg %p1235
        %p1924 = pneg %p1259
        %p1925 = pneg %p1256
        %p1926 = pneg %p1280
        %p1927 = pneg %p1277
        %p1928 = pneg %p1301
        %p1929 = pneg %p1298
        %p1930 = pneg %p1322
        %p1931 = pneg %p1319
        %p1932 = pneg %p1343
        %p1933 = pneg %p1340
        %p1934 = pneg %p1369
        %p1935 = pneg %p1366
        %s1936 = sand.u32 %s1356, 1
        %s1937 = scalar_lea.sflag [#allocation4], %s1936
        %s1938 = sand.u32 %s1356, 1
        %s1939 = smul.addr %s1938, 16
        %s1940 = scalar_lea.vmem [#allocation28], %s1939
        %p1941 = pneg %p1395
        %p1942 = pneg %p1392
        %s1943 = sand.u32 %s146, 1
        %s1944 = scalar_lea.sflag [#allocation30], %s1943
        %s1945 = sand.u32 %s1382, 1
        %s1946 = smul.addr %s1945, 16
        %s1947 = scalar_lea.vmem [#allocation29], %s1946
        %p1948 = pneg %p1421
        %p1949 = pneg %p1418
        %s1950 = sand.u32 %s146, 1
        %s1951 = scalar_lea.sflag [#allocation30], %s1950
        %s1952 = sand.u32 %s1408, 1
        %s1953 = smul.addr %s1952, 16
        %s1954 = scalar_lea.vmem [#allocation31], %s1953
        %p1955 = scmp.lt.s32.totalorder %s146, 1
        %s1956 = scalar_select %p1955, %s146, 1
        %s1957 = smul.addr %s1956, 2
        %s1958 = smul.addr %s1957, 8
        %s1959 = scalar_lea.vmem %s1, %s1958
        %v1960 = vld [vmem:[%s1959] sm:$0xff]
        %v1961 = vld [vmem:[%s1959 + $0x8] sm:$0xff]
        %v1962 = vld [vmem:[%s3] sm:$0xff]
        %v1963 = vld [vmem:[%s3 + $0x8] sm:$0xff]
        %v1964 = vld [vmem:[%s3 + $0x10] sm:$0xff]
        %v1965 = vld [vmem:[%s3 + $0x18] sm:$0xff]
        %v1966 = vld [vmem:[%s3 + $0x20] sm:$0xff]
        %v1967 = vld [vmem:[%s3 + $0x28] sm:$0xff]
        %v1968 = vld [vmem:[%s5] sm:$0x1]
        %v1970 = vlaneseq
        %v1971 = vshrl.u32 %v1970, 7
        %v1972 = vsub.s32 0, %v1971
        %v1973 = vrot.slane %v1968, %v1972
        %vm1975 = vcmask 392192
        %v1977 = vsel %vm1975, %v1960, 0
        %v1980 = vsel %vm1975, %v1961, 0
        %1982 = vmatprep.subr.mxu0 0.0
        %1983 = vmatpush1.msra.mxu0 0.0
        %1984 = vmatprep.subr.mxu0 0.0
        %1985 = vmatpush1.msra.mxu0 0.0
        %1986 = vmatprep.subr.mxu0 0.0
        %1987 = vmatpush1.msra.mxu0 0.0
        %1988 = vmatprep.subr.mxu0 0.0
        %1989 = vmatpush1.msra.mxu0 0.0
        %1990 = vmatprep.subr.mxu0 0.0
        %1991 = vmatpush1.msra.mxu0 0.0
        %1992 = vmatprep.subr.mxu0 0.0
        %1993 = vmatpush1.msra.mxu0 0.0
        %1994 = vmatprep.subr.mxu0 0.0
        %1995 = vmatpush1.msra.mxu0 0.0
        %1996 = vmatprep.subr.mxu0 0.0
        %1997 = vmatpush1.msra.mxu0 0.0
        %1998 = vmatprep.subr.mxu0 0.0
        %1999 = vmatpush1.msra.mxu0 0.0
        %2000 = vmatprep.subr.mxu0 0.0
        %2001 = vmatpush1.msra.mxu0 0.0
        %2002 = vmatprep.subr.mxu0 0.0
        %2003 = vmatpush1.msra.mxu0 %v1967
        %2004 = vmatprep.subr.mxu0 0.0
        %2005 = vmatpush1.msra.mxu0 %v1966
        %2006 = vmatprep.subr.mxu0 0.0
        %2007 = vmatpush1.msra.mxu0 %v1965
        %2008 = vmatprep.subr.mxu0 0.0
        %2009 = vmatpush1.msra.mxu0 %v1964
        %2010 = vmatprep.subr.mxu0 0.0
        %2011 = vmatpush1.msra.mxu0 %v1963
        %2012 = vmatprep.subr.mxu0 0.0
        %2013 = vmatpush1.msra.mxu0 %v1962
        %2014 = vmatprep.subr.mxu0 0.0
        %2015 = vmatpush2.msra.mxu0 0.0
        %2016 = vmatprep.subr.mxu0 0.0
        %2017 = vmatpush2.msra.mxu0 0.0
        %2018 = vmatprep.subr.mxu0 0.0
        %2019 = vmatpush2.msra.mxu0 0.0
        %2020 = vmatprep.subr.mxu0 0.0
        %2021 = vmatpush2.msra.mxu0 0.0
        %2022 = vmatprep.subr.mxu0 0.0
        %2023 = vmatpush2.msra.mxu0 0.0
        %2024 = vmatprep.subr.mxu0 0.0
        %2025 = vmatpush2.msra.mxu0 0.0
        %2026 = vmatprep.subr.mxu0 0.0
        %2027 = vmatpush2.msra.mxu0 0.0
        %2028 = vmatprep.subr.mxu0 0.0
        %2029 = vmatpush2.msra.mxu0 0.0
        %2030 = vmatprep.subr.mxu0 0.0
        %2031 = vmatpush2.msra.mxu0 0.0
        %2032 = vmatprep.subr.mxu0 0.0
        %2033 = vmatpush2.msra.mxu0 0.0
        %2034 = vmatprep.subr.mxu0 0.0
        %2035 = vmatpush2.msra.mxu0 0.0
        %2036 = vmatprep.subr.mxu0 0.0
        %2037 = vmatpush2.msra.mxu0 0.0
        %2038 = vmatprep.subr.mxu0 0.0
        %2039 = vmatpush2.msra.mxu0 0.0
        %2040 = vmatprep.subr.mxu0 0.0
        %2041 = vmatpush2.msra.mxu0 0.0
        %2042 = vmatprep.subr.mxu0 0.0
        %2043 = vmatpush2.msra.mxu0 0.0
        %2044 = vmatprep.subr.mxu0 0.0
        %2045 = vmatpush2.msra.mxu0 0.0
        %2046 = vmatprep.mubr.f32.mxu0 0.0
        %2047 = vmatmul.mubr.f32.gmra.mxu0 %v1977
        %v2048 = vpop.f32.mrf.mxu0
        %v2049 = vadd.f32 %v1973, %v2048
        %v2050 = vpop.f32.mrf.mxu0
        %2051 = vmatprep.mubr.f32.mxu0 0.0
        %2052 = vmatmul.mubr.f32.gmra.mxu0 %v1980
        %v2053 = vpop.f32.mrf.mxu0
        %v2054 = vadd.f32 %v1973, %v2053
        %v2055 = vpop.f32.mrf.mxu0
        %2056 = vdwg.mxu0
        %v2057 = vld [vmem:[%s7] sm:$0xff]
        %v2058 = vld [vmem:[%s7 + $0x8] sm:$0xff]
        %v2059 = vadd.f32 %v2049, %v2057
        %v2060 = vadd.f32 %v2054, %v2058
        %v2061 = vld [vmem:[%s9] sm:$0x1]
        %v2062 = vld [vmem:[%s11] sm:$0x1]
        %vm2063 = vcmask 261120
        %v2064 = vsel %vm2063, %v2059, 0.0
        %2065 = vadd.xlane.f32.xlu0 %v2064
        %v2066 = vpop.xlane.xlu0 %2065
        %v2067 = vsel %vm2063, %v2060, 0.0
        %2068 = vadd.xlane.f32.xlu0 %v2067
        %v2069 = vpop.xlane.xlu0 %2068
        %v2070 = vrcp.pop 32.0
        %v2071 = vmul.f32 %v2066, %v2070
        %v2072 = vmul.f32 %v2069, %v2070
        %v2073 = vsub.f32 %v2059, %v2071
        %v2074 = vsub.f32 %v2060, %v2072
        %v2075 = vmul.f32 %v2073, %v2073
        %v2076 = vmul.f32 %v2074, %v2074
        %v2077 = vsel %vm2063, %v2075, 0.0
        %2078 = vadd.xlane.f32.xlu0 %v2077
        %v2079 = vpop.xlane.xlu0 %2078
        %v2080 = vsel %vm2063, %v2076, 0.0
        %2081 = vadd.xlane.f32.xlu0 %v2080
        %v2082 = vpop.xlane.xlu0 %2081
        %v2083 = vmul.f32 %v2079, %v2070
        %v2084 = vmul.f32 %v2082, %v2070
        %v2085 = vadd.f32 %v2083, 1e-05
        %v2086 = vadd.f32 %v2084, 1e-05
        %v2087 = vrsqrt.pop %v2085
        %v2088 = vrsqrt.pop %v2086
        %v2089 = vmul.f32 %v2073, %v2087
        %v2090 = vmul.f32 %v2074, %v2088
        %v2092 = vlaneseq
        %v2093 = vshrl.u32 %v2092, 7
        %v2094 = vsub.s32 0, %v2093
        %v2095 = vrot.slane %v2061, %v2094
        %v2097 = vmul.f32 %v2089, %v2095
        %v2098 = vmul.f32 %v2090, %v2095
        %v2100 = vlaneseq
        %v2101 = vshrl.u32 %v2100, 7
        %v2102 = vsub.s32 0, %v2101
        %v2103 = vrot.slane %v2062, %v2102
        %v2105 = vadd.f32 %v2097, %v2103
        %v2106 = vadd.f32 %v2098, %v2103
        %v2107 = vld [vmem:[%s13] sm:$0xff]
        %v2108 = vld [vmem:[%s13 + $0x8] sm:$0xff]
        %v2109 = vld [vmem:[%s13 + $0x10] sm:$0xff]
        %v2110 = vld [vmem:[%s13 + $0x18] sm:$0xff]
        %v2111 = vld [vmem:[%s15] sm:$0x1]
        %v2113 = vlaneseq
        %v2114 = vshrl.u32 %v2113, 7
        %v2115 = vsub.s32 0, %v2114
        %v2116 = vrot.slane %v2111, %v2115
        %v2119 = vsel %vm2063, %v2105, 0
        %v2122 = vsel %vm2063, %v2106, 0
        %2124 = vmatprep.subr.mxu0 0.0
        %2125 = vmatpush1.msra.mxu0 0.0
        %2126 = vmatprep.subr.mxu0 0.0
        %2127 = vmatpush1.msra.mxu0 0.0
        %2128 = vmatprep.subr.mxu0 0.0
        %2129 = vmatpush1.msra.mxu0 0.0
        %2130 = vmatprep.subr.mxu0 0.0
        %2131 = vmatpush1.msra.mxu0 0.0
        %2132 = vmatprep.subr.mxu0 0.0
        %2133 = vmatpush1.msra.mxu0 0.0
        %2134 = vmatprep.subr.mxu0 0.0
        %2135 = vmatpush1.msra.mxu0 0.0
        %2136 = vmatprep.subr.mxu0 0.0
        %2137 = vmatpush1.msra.mxu0 0.0
        %2138 = vmatprep.subr.mxu0 0.0
        %2139 = vmatpush1.msra.mxu0 0.0
        %2140 = vmatprep.subr.mxu0 0.0
        %2141 = vmatpush1.msra.mxu0 0.0
        %2142 = vmatprep.subr.mxu0 0.0
        %2143 = vmatpush1.msra.mxu0 0.0
        %2144 = vmatprep.subr.mxu0 0.0
        %2145 = vmatpush1.msra.mxu0 0.0
        %2146 = vmatprep.subr.mxu0 0.0
        %2147 = vmatpush1.msra.mxu0 0.0
        %2148 = vmatprep.subr.mxu0 0.0
        %2149 = vmatpush1.msra.mxu0 %v2110
        %2150 = vmatprep.subr.mxu0 0.0
        %2151 = vmatpush1.msra.mxu0 %v2109
        %2152 = vmatprep.subr.mxu0 0.0
        %2153 = vmatpush1.msra.mxu0 %v2108
        %2154 = vmatprep.subr.mxu0 0.0
        %2155 = vmatpush1.msra.mxu0 %v2107
        %2156 = vmatprep.subr.mxu0 0.0
        %2157 = vmatpush2.msra.mxu0 0.0
        %2158 = vmatprep.subr.mxu0 0.0
        %2159 = vmatpush2.msra.mxu0 0.0
        %2160 = vmatprep.subr.mxu0 0.0
        %2161 = vmatpush2.msra.mxu0 0.0
        %2162 = vmatprep.subr.mxu0 0.0
        %2163 = vmatpush2.msra.mxu0 0.0
        %2164 = vmatprep.subr.mxu0 0.0
        %2165 = vmatpush2.msra.mxu0 0.0
        %2166 = vmatprep.subr.mxu0 0.0
        %2167 = vmatpush2.msra.mxu0 0.0
        %2168 = vmatprep.subr.mxu0 0.0
        %2169 = vmatpush2.msra.mxu0 0.0
        %2170 = vmatprep.subr.mxu0 0.0
        %2171 = vmatpush2.msra.mxu0 0.0
        %2172 = vmatprep.subr.mxu0 0.0
        %2173 = vmatpush2.msra.mxu0 0.0
        %2174 = vmatprep.subr.mxu0 0.0
        %2175 = vmatpush2.msra.mxu0 0.0
        %2176 = vmatprep.subr.mxu0 0.0
        %2177 = vmatpush2.msra.mxu0 0.0
        %2178 = vmatprep.subr.mxu0 0.0
        %2179 = vmatpush2.msra.mxu0 0.0
        %2180 = vmatprep.subr.mxu0 0.0
        %2181 = vmatpush2.msra.mxu0 0.0
        %2182 = vmatprep.subr.mxu0 0.0
        %2183 = vmatpush2.msra.mxu0 0.0
        %2184 = vmatprep.subr.mxu0 0.0
        %2185 = vmatpush2.msra.mxu0 0.0
        %2186 = vmatprep.subr.mxu0 0.0
        %2187 = vmatpush2.msra.mxu0 0.0
        %2188 = vmatprep.mubr.f32.mxu0 0.0
        %2189 = vmatmul.mubr.f32.gmra.mxu0 %v2119
        %v2190 = vpop.f32.mrf.mxu0
        %v2191 = vadd.f32 %v2116, %v2190
        %v2192 = vpop.f32.mrf.mxu0
        %2193 = vmatprep.mubr.f32.mxu0 0.0
        %2194 = vmatmul.mubr.f32.gmra.mxu0 %v2122
        %v2195 = vpop.f32.mrf.mxu0
        %v2196 = vadd.f32 %v2116, %v2195
        %v2197 = vpop.f32.mrf.mxu0
        %2198 = vdwg.mxu0
        %v2199 = vld [vmem:[%s17] sm:$0xff]
        %v2200 = vld [vmem:[%s17 + $0x8] sm:$0xff]
        %v2201 = vld [vmem:[%s17 + $0x10] sm:$0xff]
        %v2202 = vld [vmem:[%s17 + $0x18] sm:$0xff]
        %2205 = vrot.lane.b32.xlu0 %v2191, 96
        %v2206 = vpop.permute.xlu0 %2205
        %2207 = vrot.lane.b32.xlu0 %v2196, 96
        %v2208 = vpop.permute.xlu0 %2207
        %vm2209 = vcmask 64512
        %v2210 = vsel %vm2209, %v2191, 0
        %v2212 = vsel %vm2209, %v2196, 0
        %v2214 = vsel %vm2209, %v2206, 0
        %v2216 = vsel %vm2209, %v2208, 0
        %2218 = vmatprep.subr.mxu0 0.0
        %2219 = vmatpush1.xpose.msra.mxu0 0.0
        %2220 = vmatprep.subr.mxu0 0.0
        %2221 = vmatpush1.xpose.msra.mxu0 0.0
        %2222 = vmatprep.subr.mxu0 0.0
        %2223 = vmatpush1.xpose.msra.mxu0 0.0
        %2224 = vmatprep.subr.mxu0 0.0
        %2225 = vmatpush1.xpose.msra.mxu0 0.0
        %2226 = vmatprep.subr.mxu0 0.0
        %2227 = vmatpush1.xpose.msra.mxu0 0.0
        %2228 = vmatprep.subr.mxu0 0.0
        %2229 = vmatpush1.xpose.msra.mxu0 0.0
        %2230 = vmatprep.subr.mxu0 0.0
        %2231 = vmatpush1.xpose.msra.mxu0 0.0
        %2232 = vmatprep.subr.mxu0 0.0
        %2233 = vmatpush1.xpose.msra.mxu0 0.0
        %2234 = vmatprep.subr.mxu0 0.0
        %2235 = vmatpush1.xpose.msra.mxu0 0.0
        %2236 = vmatprep.subr.mxu0 0.0
        %2237 = vmatpush1.xpose.msra.mxu0 0.0
        %2238 = vmatprep.subr.mxu0 0.0
        %2239 = vmatpush1.xpose.msra.mxu0 0.0
        %2240 = vmatprep.subr.mxu0 0.0
        %2241 = vmatpush1.xpose.msra.mxu0 0.0
        %2242 = vmatprep.subr.mxu0 0.0
        %2243 = vmatpush1.xpose.msra.mxu0 0.0
        %2244 = vmatprep.subr.mxu0 0.0
        %2245 = vmatpush1.xpose.msra.mxu0 0.0
        %2246 = vmatprep.subr.mxu0 0.0
        %2247 = vmatpush1.xpose.msra.mxu0 %v2216
        %2248 = vmatprep.subr.mxu0 0.0
        %2249 = vmatpush1.xpose.msra.mxu0 %v2214
        %2250 = vmatprep.subr.mxu0 0.0
        %2251 = vmatpush2.xpose.msra.mxu0 0.0
        %2252 = vmatprep.subr.mxu0 0.0
        %2253 = vmatpush2.xpose.msra.mxu0 0.0
        %2254 = vmatprep.subr.mxu0 0.0
        %2255 = vmatpush2.xpose.msra.mxu0 0.0
        %2256 = vmatprep.subr.mxu0 0.0
        %2257 = vmatpush2.xpose.msra.mxu0 0.0
        %2258 = vmatprep.subr.mxu0 0.0
        %2259 = vmatpush2.xpose.msra.mxu0 0.0
        %2260 = vmatprep.subr.mxu0 0.0
        %2261 = vmatpush2.xpose.msra.mxu0 0.0
        %2262 = vmatprep.subr.mxu0 0.0
        %2263 = vmatpush2.xpose.msra.mxu0 0.0
        %2264 = vmatprep.subr.mxu0 0.0
        %2265 = vmatpush2.xpose.msra.mxu0 0.0
        %2266 = vmatprep.subr.mxu0 0.0
        %2267 = vmatpush2.xpose.msra.mxu0 0.0
        %2268 = vmatprep.subr.mxu0 0.0
        %2269 = vmatpush2.xpose.msra.mxu0 0.0
        %2270 = vmatprep.subr.mxu0 0.0
        %2271 = vmatpush2.xpose.msra.mxu0 0.0
        %2272 = vmatprep.subr.mxu0 0.0
        %2273 = vmatpush2.xpose.msra.mxu0 0.0
        %2274 = vmatprep.subr.mxu0 0.0
        %2275 = vmatpush2.xpose.msra.mxu0 0.0
        %2276 = vmatprep.subr.mxu0 0.0
        %2277 = vmatpush2.xpose.msra.mxu0 0.0
        %2278 = vmatprep.subr.mxu0 0.0
        %2279 = vmatpush2.xpose.msra.mxu0 0.0
        %2280 = vmatprep.subr.mxu0 0.0
        %2281 = vmatpush2.xpose.msra.mxu0 0.0
        %2282 = vmatprep.mubr.f32.mxu0 0.0
        %2283 = vmatmul.mubr.f32.gmra.mxu0 %v2210
        %v2284 = vpop.f32.mrf.mxu0
        %v2285 = vadd.f32 0.0, %v2284
        %v2286 = vpop.f32.mrf.mxu0
        %2287 = vmatprep.mubr.f32.mxu0 0.0
        %2288 = vmatmul.mubr.f32.gmra.mxu0 %v2212
        %v2289 = vpop.f32.mrf.mxu0
        %v2290 = vadd.f32 0.0, %v2289
        %v2291 = vpop.f32.mrf.mxu0
        %2292 = vdwg.mxu0
        %v2293 = vmul.f32 %v2285, 0.35355338
        %v2294 = vmul.f32 %v2290, 0.35355338
        %vm2295 = vcmask 130048
        %v2296 = vsel %vm2295, %v2293, -inf
        %2297 = vmax.xlane.f32.xlu0 %v2296
        %v2298 = vpop.xlane.xlu0 %2297
        %v2299 = vsel %vm2295, %v2294, -inf
        %2300 = vmax.xlane.f32.xlu0 %v2299
        %v2301 = vpop.xlane.xlu0 %2300
        %v2302 = vsub.f32 %v2293, %v2298
        %v2303 = vsub.f32 %v2294, %v2301
        %v2304 = vmul.f32 %v2302, 1.442695
        %v2305 = vpow.pop %v2304
        %v2306 = vmul.f32 %v2303, 1.442695
        %v2307 = vpow.pop %v2306
        %v2308 = vsel %vm2295, %v2305, 0.0
        %2309 = vadd.xlane.f32.xlu0 %v2308
        %v2310 = vpop.xlane.xlu0 %2309
        %v2311 = vsel %vm2295, %v2307, 0.0
        %2312 = vadd.xlane.f32.xlu0 %v2311
        %v2313 = vpop.xlane.xlu0 %2312
        %v2314 = vrcp.pop %v2310
        %v2315 = vrcp.pop %v2313
        %v2316 = vmul.f32 %v2305, %v2314
        %v2317 = vmul.f32 %v2307, %v2315
        %2318 = vrot.lane.b32.xlu0 %v2191, 64
        %v2319 = vpop.permute.xlu0 %2318
        %2320 = vrot.lane.b32.xlu0 %v2196, 64
        %v2321 = vpop.permute.xlu0 %2320
        %v2325 = vsel %vm2295, %v2316, 0
        %v2328 = vsel %vm2295, %v2317, 0
        %2330 = vmatprep.subr.mxu0 0.0
        %2331 = vmatpush1.msra.mxu0 0.0
        %2332 = vmatprep.subr.mxu0 0.0
        %2333 = vmatpush1.msra.mxu0 0.0
        %2334 = vmatprep.subr.mxu0 0.0
        %2335 = vmatpush1.msra.mxu0 0.0
        %2336 = vmatprep.subr.mxu0 0.0
        %2337 = vmatpush1.msra.mxu0 0.0
        %2338 = vmatprep.subr.mxu0 0.0
        %2339 = vmatpush1.msra.mxu0 0.0
        %2340 = vmatprep.subr.mxu0 0.0
        %2341 = vmatpush1.msra.mxu0 0.0
        %2342 = vmatprep.subr.mxu0 0.0
        %2343 = vmatpush1.msra.mxu0 0.0
        %2344 = vmatprep.subr.mxu0 0.0
        %2345 = vmatpush1.msra.mxu0 0.0
        %2346 = vmatprep.subr.mxu0 0.0
        %2347 = vmatpush1.msra.mxu0 0.0
        %2348 = vmatprep.subr.mxu0 0.0
        %2349 = vmatpush1.msra.mxu0 0.0
        %2350 = vmatprep.subr.mxu0 0.0
        %2351 = vmatpush1.msra.mxu0 0.0
        %2352 = vmatprep.subr.mxu0 0.0
        %2353 = vmatpush1.msra.mxu0 0.0
        %2354 = vmatprep.subr.mxu0 0.0
        %2355 = vmatpush1.msra.mxu0 0.0
        %2356 = vmatprep.subr.mxu0 0.0
        %2357 = vmatpush1.msra.mxu0 0.0
        %2358 = vmatprep.subr.mxu0 0.0
        %2359 = vmatpush1.msra.mxu0 %v2321
        %2360 = vmatprep.subr.mxu0 0.0
        %2361 = vmatpush1.msra.mxu0 %v2319
        %2362 = vmatprep.subr.mxu0 0.0
        %2363 = vmatpush2.msra.mxu0 0.0
        %2364 = vmatprep.subr.mxu0 0.0
        %2365 = vmatpush2.msra.mxu0 0.0
        %2366 = vmatprep.subr.mxu0 0.0
        %2367 = vmatpush2.msra.mxu0 0.0
        %2368 = vmatprep.subr.mxu0 0.0
        %2369 = vmatpush2.msra.mxu0 0.0
        %2370 = vmatprep.subr.mxu0 0.0
        %2371 = vmatpush2.msra.mxu0 0.0
        %2372 = vmatprep.subr.mxu0 0.0
        %2373 = vmatpush2.msra.mxu0 0.0
        %2374 = vmatprep.subr.mxu0 0.0
        %2375 = vmatpush2.msra.mxu0 0.0
        %2376 = vmatprep.subr.mxu0 0.0
        %2377 = vmatpush2.msra.mxu0 0.0
        %2378 = vmatprep.subr.mxu0 0.0
        %2379 = vmatpush2.msra.mxu0 0.0
        %2380 = vmatprep.subr.mxu0 0.0
        %2381 = vmatpush2.msra.mxu0 0.0
        %2382 = vmatprep.subr.mxu0 0.0
        %2383 = vmatpush2.msra.mxu0 0.0
        %2384 = vmatprep.subr.mxu0 0.0
        %2385 = vmatpush2.msra.mxu0 0.0
        %2386 = vmatprep.subr.mxu0 0.0
        %2387 = vmatpush2.msra.mxu0 0.0
        %2388 = vmatprep.subr.mxu0 0.0
        %2389 = vmatpush2.msra.mxu0 0.0
        %2390 = vmatprep.subr.mxu0 0.0
        %2391 = vmatpush2.msra.mxu0 0.0
        %2392 = vmatprep.subr.mxu0 0.0
        %2393 = vmatpush2.msra.mxu0 0.0
        %2394 = vmatprep.mubr.f32.mxu0 0.0
        %2395 = vmatmul.mubr.f32.gmra.mxu0 %v2325
        %v2396 = vpop.f32.mrf.mxu0
        %v2397 = vadd.f32 0.0, %v2396
        %v2398 = vpop.f32.mrf.mxu0
        %2399 = vmatprep.mubr.f32.mxu0 0.0
        %2400 = vmatmul.mubr.f32.gmra.mxu0 %v2328
        %v2401 = vpop.f32.mrf.mxu0
        %v2402 = vadd.f32 0.0, %v2401
        %v2403 = vpop.f32.mrf.mxu0
        %2404 = vdwg.mxu0
        %2405 = vrot.lane.b32.xlu0 %v2191, 120
        %v2406 = vpop.permute.xlu0 %2405
        %2407 = vrot.lane.b32.xlu0 %v2196, 120
        %v2408 = vpop.permute.xlu0 %2407
        %2409 = vrot.lane.b32.xlu0 %v2191, 88
        %v2410 = vpop.permute.xlu0 %2409
        %2411 = vrot.lane.b32.xlu0 %v2196, 88
        %v2412 = vpop.permute.xlu0 %2411
        %v2413 = vsel %vm2209, %v2406, 0
        %v2415 = vsel %vm2209, %v2408, 0
        %v2417 = vsel %vm2209, %v2410, 0
        %v2419 = vsel %vm2209, %v2412, 0
        %2421 = vmatprep.subr.mxu0 0.0
        %2422 = vmatpush1.xpose.msra.mxu0 0.0
        %2423 = vmatprep.subr.mxu0 0.0
        %2424 = vmatpush1.xpose.msra.mxu0 0.0
        %2425 = vmatprep.subr.mxu0 0.0
        %2426 = vmatpush1.xpose.msra.mxu0 0.0
        %2427 = vmatprep.subr.mxu0 0.0
        %2428 = vmatpush1.xpose.msra.mxu0 0.0
        %2429 = vmatprep.subr.mxu0 0.0
        %2430 = vmatpush1.xpose.msra.mxu0 0.0
        %2431 = vmatprep.subr.mxu0 0.0
        %2432 = vmatpush1.xpose.msra.mxu0 0.0
        %2433 = vmatprep.subr.mxu0 0.0
        %2434 = vmatpush1.xpose.msra.mxu0 0.0
        %2435 = vmatprep.subr.mxu0 0.0
        %2436 = vmatpush1.xpose.msra.mxu0 0.0
        %2437 = vmatprep.subr.mxu0 0.0
        %2438 = vmatpush1.xpose.msra.mxu0 0.0
        %2439 = vmatprep.subr.mxu0 0.0
        %2440 = vmatpush1.xpose.msra.mxu0 0.0
        %2441 = vmatprep.subr.mxu0 0.0
        %2442 = vmatpush1.xpose.msra.mxu0 0.0
        %2443 = vmatprep.subr.mxu0 0.0
        %2444 = vmatpush1.xpose.msra.mxu0 0.0
        %2445 = vmatprep.subr.mxu0 0.0
        %2446 = vmatpush1.xpose.msra.mxu0 0.0
        %2447 = vmatprep.subr.mxu0 0.0
        %2448 = vmatpush1.xpose.msra.mxu0 0.0
        %2449 = vmatprep.subr.mxu0 0.0
        %2450 = vmatpush1.xpose.msra.mxu0 %v2419
        %2451 = vmatprep.subr.mxu0 0.0
        %2452 = vmatpush1.xpose.msra.mxu0 %v2417
        %2453 = vmatprep.subr.mxu0 0.0
        %2454 = vmatpush2.xpose.msra.mxu0 0.0
        %2455 = vmatprep.subr.mxu0 0.0
        %2456 = vmatpush2.xpose.msra.mxu0 0.0
        %2457 = vmatprep.subr.mxu0 0.0
        %2458 = vmatpush2.xpose.msra.mxu0 0.0
        %2459 = vmatprep.subr.mxu0 0.0
        %2460 = vmatpush2.xpose.msra.mxu0 0.0
        %2461 = vmatprep.subr.mxu0 0.0
        %2462 = vmatpush2.xpose.msra.mxu0 0.0
        %2463 = vmatprep.subr.mxu0 0.0
        %2464 = vmatpush2.xpose.msra.mxu0 0.0
        %2465 = vmatprep.subr.mxu0 0.0
        %2466 = vmatpush2.xpose.msra.mxu0 0.0
        %2467 = vmatprep.subr.mxu0 0.0
        %2468 = vmatpush2.xpose.msra.mxu0 0.0
        %2469 = vmatprep.subr.mxu0 0.0
        %2470 = vmatpush2.xpose.msra.mxu0 0.0
        %2471 = vmatprep.subr.mxu0 0.0
        %2472 = vmatpush2.xpose.msra.mxu0 0.0
        %2473 = vmatprep.subr.mxu0 0.0
        %2474 = vmatpush2.xpose.msra.mxu0 0.0
        %2475 = vmatprep.subr.mxu0 0.0
        %2476 = vmatpush2.xpose.msra.mxu0 0.0
        %2477 = vmatprep.subr.mxu0 0.0
        %2478 = vmatpush2.xpose.msra.mxu0 0.0
        %2479 = vmatprep.subr.mxu0 0.0
        %2480 = vmatpush2.xpose.msra.mxu0 0.0
        %2481 = vmatprep.subr.mxu0 0.0
        %2482 = vmatpush2.xpose.msra.mxu0 0.0
        %2483 = vmatprep.subr.mxu0 0.0
        %2484 = vmatpush2.xpose.msra.mxu0 0.0
        %2485 = vmatprep.mubr.f32.mxu0 0.0
        %2486 = vmatmul.mubr.f32.gmra.mxu0 %v2413
        %v2487 = vpop.f32.mrf.mxu0
        %v2488 = vadd.f32 0.0, %v2487
        %v2489 = vpop.f32.mrf.mxu0
        %2490 = vmatprep.mubr.f32.mxu0 0.0
        %2491 = vmatmul.mubr.f32.gmra.mxu0 %v2415
        %v2492 = vpop.f32.mrf.mxu0
        %v2493 = vadd.f32 0.0, %v2492
        %v2494 = vpop.f32.mrf.mxu0
        %2495 = vdwg.mxu0
        %v2496 = vmul.f32 %v2488, 0.35355338
        %v2497 = vmul.f32 %v2493, 0.35355338
        %v2498 = vsel %vm2295, %v2496, -inf
        %2499 = vmax.xlane.f32.xlu0 %v2498
        %v2500 = vpop.xlane.xlu0 %2499
        %v2501 = vsel %vm2295, %v2497, -inf
        %2502 = vmax.xlane.f32.xlu0 %v2501
        %v2503 = vpop.xlane.xlu0 %2502
        %v2504 = vsub.f32 %v2496, %v2500
        %v2505 = vsub.f32 %v2497, %v2503
        %v2506 = vmul.f32 %v2504, 1.442695
        %v2507 = vpow.pop %v2506
        %v2508 = vmul.f32 %v2505, 1.442695
        %v2509 = vpow.pop %v2508
        %v2510 = vsel %vm2295, %v2507, 0.0
        %2511 = vadd.xlane.f32.xlu0 %v2510
        %v2512 = vpop.xlane.xlu0 %2511
        %v2513 = vsel %vm2295, %v2509, 0.0
        %2514 = vadd.xlane.f32.xlu0 %v2513
        %v2515 = vpop.xlane.xlu0 %2514
        %v2516 = vrcp.pop %v2512
        %v2517 = vrcp.pop %v2515
        %v2518 = vmul.f32 %v2507, %v2516
        %v2519 = vmul.f32 %v2509, %v2517
        %2520 = vrot.lane.b32.xlu0 %v2191, 56
        %v2521 = vpop.permute.xlu0 %2520
        %2522 = vrot.lane.b32.xlu0 %v2196, 56
        %v2523 = vpop.permute.xlu0 %2522
        %v2527 = vsel %vm2295, %v2518, 0
        %v2530 = vsel %vm2295, %v2519, 0
        %2532 = vmatprep.subr.mxu0 0.0
        %2533 = vmatpush1.msra.mxu0 0.0
        %2534 = vmatprep.subr.mxu0 0.0
        %2535 = vmatpush1.msra.mxu0 0.0
        %2536 = vmatprep.subr.mxu0 0.0
        %2537 = vmatpush1.msra.mxu0 0.0
        %2538 = vmatprep.subr.mxu0 0.0
        %2539 = vmatpush1.msra.mxu0 0.0
        %2540 = vmatprep.subr.mxu0 0.0
        %2541 = vmatpush1.msra.mxu0 0.0
        %2542 = vmatprep.subr.mxu0 0.0
        %2543 = vmatpush1.msra.mxu0 0.0
        %2544 = vmatprep.subr.mxu0 0.0
        %2545 = vmatpush1.msra.mxu0 0.0
        %2546 = vmatprep.subr.mxu0 0.0
        %2547 = vmatpush1.msra.mxu0 0.0
        %2548 = vmatprep.subr.mxu0 0.0
        %2549 = vmatpush1.msra.mxu0 0.0
        %2550 = vmatprep.subr.mxu0 0.0
        %2551 = vmatpush1.msra.mxu0 0.0
        %2552 = vmatprep.subr.mxu0 0.0
        %2553 = vmatpush1.msra.mxu0 0.0
        %2554 = vmatprep.subr.mxu0 0.0
        %2555 = vmatpush1.msra.mxu0 0.0
        %2556 = vmatprep.subr.mxu0 0.0
        %2557 = vmatpush1.msra.mxu0 0.0
        %2558 = vmatprep.subr.mxu0 0.0
        %2559 = vmatpush1.msra.mxu0 0.0
        %2560 = vmatprep.subr.mxu0 0.0
        %2561 = vmatpush1.msra.mxu0 %v2523
        %2562 = vmatprep.subr.mxu0 0.0
        %2563 = vmatpush1.msra.mxu0 %v2521
        %2564 = vmatprep.subr.mxu0 0.0
        %2565 = vmatpush2.msra.mxu0 0.0
        %2566 = vmatprep.subr.mxu0 0.0
        %2567 = vmatpush2.msra.mxu0 0.0
        %2568 = vmatprep.subr.mxu0 0.0
        %2569 = vmatpush2.msra.mxu0 0.0
        %2570 = vmatprep.subr.mxu0 0.0
        %2571 = vmatpush2.msra.mxu0 0.0
        %2572 = vmatprep.subr.mxu0 0.0
        %2573 = vmatpush2.msra.mxu0 0.0
        %2574 = vmatprep.subr.mxu0 0.0
        %2575 = vmatpush2.msra.mxu0 0.0
        %2576 = vmatprep.subr.mxu0 0.0
        %2577 = vmatpush2.msra.mxu0 0.0
        %2578 = vmatprep.subr.mxu0 0.0
        %2579 = vmatpush2.msra.mxu0 0.0
        %2580 = vmatprep.subr.mxu0 0.0
        %2581 = vmatpush2.msra.mxu0 0.0
        %2582 = vmatprep.subr.mxu0 0.0
        %2583 = vmatpush2.msra.mxu0 0.0
        %2584 = vmatprep.subr.mxu0 0.0
        %2585 = vmatpush2.msra.mxu0 0.0
        %2586 = vmatprep.subr.mxu0 0.0
        %2587 = vmatpush2.msra.mxu0 0.0
        %2588 = vmatprep.subr.mxu0 0.0
        %2589 = vmatpush2.msra.mxu0 0.0
        %2590 = vmatprep.subr.mxu0 0.0
        %2591 = vmatpush2.msra.mxu0 0.0
        %2592 = vmatprep.subr.mxu0 0.0
        %2593 = vmatpush2.msra.mxu0 0.0
        %2594 = vmatprep.subr.mxu0 0.0
        %2595 = vmatpush2.msra.mxu0 0.0
        %2596 = vmatprep.mubr.f32.mxu0 0.0
        %2597 = vmatmul.mubr.f32.gmra.mxu0 %v2527
        %v2598 = vpop.f32.mrf.mxu0
        %v2599 = vadd.f32 0.0, %v2598
        %v2600 = vpop.f32.mrf.mxu0
        %2601 = vmatprep.mubr.f32.mxu0 0.0
        %2602 = vmatmul.mubr.f32.gmra.mxu0 %v2530
        %v2603 = vpop.f32.mrf.mxu0
        %v2604 = vadd.f32 0.0, %v2603
        %v2605 = vpop.f32.mrf.mxu0
        %2606 = vdwg.mxu0
        %v2608 = vsel %vm2209, %v2599, 0
        %v2611 = vsel %vm2209, %v2604, 0
        %2613 = vmatprep.subr.mxu0 0.0
        %2614 = vmatpush1.msra.mxu0 0.0
        %2615 = vmatprep.subr.mxu0 0.0
        %2616 = vmatpush1.msra.mxu0 0.0
        %2617 = vmatprep.subr.mxu0 0.0
        %2618 = vmatpush1.msra.mxu0 0.0
        %2619 = vmatprep.subr.mxu0 0.0
        %2620 = vmatpush1.msra.mxu0 0.0
        %2621 = vmatprep.subr.mxu0 0.0
        %2622 = vmatpush1.msra.mxu0 0.0
        %2623 = vmatprep.subr.mxu0 0.0
        %2624 = vmatpush1.msra.mxu0 0.0
        %2625 = vmatprep.subr.mxu0 0.0
        %2626 = vmatpush1.msra.mxu0 0.0
        %2627 = vmatprep.subr.mxu0 0.0
        %2628 = vmatpush1.msra.mxu0 0.0
        %2629 = vmatprep.subr.mxu0 0.0
        %2630 = vmatpush1.msra.mxu0 0.0
        %2631 = vmatprep.subr.mxu0 0.0
        %2632 = vmatpush1.msra.mxu0 0.0
        %2633 = vmatprep.subr.mxu0 0.0
        %2634 = vmatpush1.msra.mxu0 0.0
        %2635 = vmatprep.subr.mxu0 0.0
        %2636 = vmatpush1.msra.mxu0 0.0
        %2637 = vmatprep.subr.mxu0 0.0
        %2638 = vmatpush1.msra.mxu0 0.0
        %2639 = vmatprep.subr.mxu0 0.0
        %2640 = vmatpush1.msra.mxu0 0.0
        %2641 = vmatprep.subr.mxu0 0.0
        %2642 = vmatpush1.msra.mxu0 0.0
        %2643 = vmatprep.subr.mxu0 0.0
        %2644 = vmatpush1.msra.mxu0 %v2200
        %2645 = vmatprep.subr.mxu0 0.0
        %2646 = vmatpush2.msra.mxu0 0.0
        %2647 = vmatprep.subr.mxu0 0.0
        %2648 = vmatpush2.msra.mxu0 0.0
        %2649 = vmatprep.subr.mxu0 0.0
        %2650 = vmatpush2.msra.mxu0 0.0
        %2651 = vmatprep.subr.mxu0 0.0
        %2652 = vmatpush2.msra.mxu0 0.0
        %2653 = vmatprep.subr.mxu0 0.0
        %2654 = vmatpush2.msra.mxu0 0.0
        %2655 = vmatprep.subr.mxu0 0.0
        %2656 = vmatpush2.msra.mxu0 0.0
        %2657 = vmatprep.subr.mxu0 0.0
        %2658 = vmatpush2.msra.mxu0 0.0
        %2659 = vmatprep.subr.mxu0 0.0
        %2660 = vmatpush2.msra.mxu0 0.0
        %2661 = vmatprep.subr.mxu0 0.0
        %2662 = vmatpush2.msra.mxu0 0.0
        %2663 = vmatprep.subr.mxu0 0.0
        %2664 = vmatpush2.msra.mxu0 0.0
        %2665 = vmatprep.subr.mxu0 0.0
        %2666 = vmatpush2.msra.mxu0 0.0
        %2667 = vmatprep.subr.mxu0 0.0
        %2668 = vmatpush2.msra.mxu0 0.0
        %2669 = vmatprep.subr.mxu0 0.0
        %2670 = vmatpush2.msra.mxu0 0.0
        %2671 = vmatprep.subr.mxu0 0.0
        %2672 = vmatpush2.msra.mxu0 0.0
        %2673 = vmatprep.subr.mxu0 0.0
        %2674 = vmatpush2.msra.mxu0 0.0
        %2675 = vmatprep.subr.mxu0 0.0
        %2676 = vmatpush2.msra.mxu0 0.0
        %2677 = vmatprep.mubr.f32.mxu0 0.0
        %2678 = vmatmul.mubr.f32.gmra.mxu0 %v2608
        %v2679 = vpop.f32.mrf.mxu0
        %v2680 = vadd.f32 0.0, %v2679
        %v2681 = vpop.f32.mrf.mxu0
        %2682 = vmatprep.mubr.f32.mxu0 0.0
        %2683 = vmatmul.mubr.f32.gmra.mxu0 %v2611
        %v2684 = vpop.f32.mrf.mxu0
        %v2685 = vadd.f32 0.0, %v2684
        %v2686 = vpop.f32.mrf.mxu0
        %2687 = vdwg.mxu0
        %v2689 = vsel %vm2209, %v2397, 0
        %v2692 = vsel %vm2209, %v2402, 0
        %2694 = vmatprep.subr.mxu0 0.0
        %2695 = vmatpush1.msra.mxu0 0.0
        %2696 = vmatprep.subr.mxu0 0.0
        %2697 = vmatpush1.msra.mxu0 0.0
        %2698 = vmatprep.subr.mxu0 0.0
        %2699 = vmatpush1.msra.mxu0 0.0
        %2700 = vmatprep.subr.mxu0 0.0
        %2701 = vmatpush1.msra.mxu0 0.0
        %2702 = vmatprep.subr.mxu0 0.0
        %2703 = vmatpush1.msra.mxu0 0.0
        %2704 = vmatprep.subr.mxu0 0.0
        %2705 = vmatpush1.msra.mxu0 0.0
        %2706 = vmatprep.subr.mxu0 0.0
        %2707 = vmatpush1.msra.mxu0 0.0
        %2708 = vmatprep.subr.mxu0 0.0
        %2709 = vmatpush1.msra.mxu0 0.0
        %2710 = vmatprep.subr.mxu0 0.0
        %2711 = vmatpush1.msra.mxu0 0.0
        %2712 = vmatprep.subr.mxu0 0.0
        %2713 = vmatpush1.msra.mxu0 0.0
        %2714 = vmatprep.subr.mxu0 0.0
        %2715 = vmatpush1.msra.mxu0 0.0
        %2716 = vmatprep.subr.mxu0 0.0
        %2717 = vmatpush1.msra.mxu0 0.0
        %2718 = vmatprep.subr.mxu0 0.0
        %2719 = vmatpush1.msra.mxu0 0.0
        %2720 = vmatprep.subr.mxu0 0.0
        %2721 = vmatpush1.msra.mxu0 0.0
        %2722 = vmatprep.subr.mxu0 0.0
        %2723 = vmatpush1.msra.mxu0 0.0
        %2724 = vmatprep.subr.mxu0 0.0
        %2725 = vmatpush1.msra.mxu0 %v2199
        %2726 = vmatprep.subr.mxu0 0.0
        %2727 = vmatpush2.msra.mxu0 0.0
        %2728 = vmatprep.subr.mxu0 0.0
        %2729 = vmatpush2.msra.mxu0 0.0
        %2730 = vmatprep.subr.mxu0 0.0
        %2731 = vmatpush2.msra.mxu0 0.0
        %2732 = vmatprep.subr.mxu0 0.0
        %2733 = vmatpush2.msra.mxu0 0.0
        %2734 = vmatprep.subr.mxu0 0.0
        %2735 = vmatpush2.msra.mxu0 0.0
        %2736 = vmatprep.subr.mxu0 0.0
        %2737 = vmatpush2.msra.mxu0 0.0
        %2738 = vmatprep.subr.mxu0 0.0
        %2739 = vmatpush2.msra.mxu0 0.0
        %2740 = vmatprep.subr.mxu0 0.0
        %2741 = vmatpush2.msra.mxu0 0.0
        %2742 = vmatprep.subr.mxu0 0.0
        %2743 = vmatpush2.msra.mxu0 0.0
        %2744 = vmatprep.subr.mxu0 0.0
        %2745 = vmatpush2.msra.mxu0 0.0
        %2746 = vmatprep.subr.mxu0 0.0
        %2747 = vmatpush2.msra.mxu0 0.0
        %2748 = vmatprep.subr.mxu0 0.0
        %2749 = vmatpush2.msra.mxu0 0.0
        %2750 = vmatprep.subr.mxu0 0.0
        %2751 = vmatpush2.msra.mxu0 0.0
        %2752 = vmatprep.subr.mxu0 0.0
        %2753 = vmatpush2.msra.mxu0 0.0
        %2754 = vmatprep.subr.mxu0 0.0
        %2755 = vmatpush2.msra.mxu0 0.0
        %2756 = vmatprep.subr.mxu0 0.0
        %2757 = vmatpush2.msra.mxu0 0.0
        %2758 = vmatprep.mubr.f32.mxu0 0.0
        %2759 = vmatmul.mubr.f32.gmra.mxu0 %v2689
        %v2760 = vpop.f32.mrf.mxu0
        %v2761 = vadd.f32 %v2680, %v2760
        %v2762 = vpop.f32.mrf.mxu0
        %2763 = vmatprep.mubr.f32.mxu0 0.0
        %2764 = vmatmul.mubr.f32.gmra.mxu0 %v2692
        %v2765 = vpop.f32.mrf.mxu0
        %v2766 = vadd.f32 %v2685, %v2765
        %v2767 = vpop.f32.mrf.mxu0
        %2768 = vdwg.mxu0
        %2769 = vrot.lane.b32.xlu0 %v2191, 112
        %v2770 = vpop.permute.xlu0 %2769
        %2771 = vrot.lane.b32.xlu0 %v2196, 112
        %v2772 = vpop.permute.xlu0 %2771
        %2773 = vrot.lane.b32.xlu0 %v2191, 80
        %v2774 = vpop.permute.xlu0 %2773
        %2775 = vrot.lane.b32.xlu0 %v2196, 80
        %v2776 = vpop.permute.xlu0 %2775
        %v2777 = vsel %vm2209, %v2770, 0
        %v2779 = vsel %vm2209, %v2772, 0
        %v2781 = vsel %vm2209, %v2774, 0
        %v2783 = vsel %vm2209, %v2776, 0
        %2785 = vmatprep.subr.mxu0 0.0
        %2786 = vmatpush1.xpose.msra.mxu0 0.0
        %2787 = vmatprep.subr.mxu0 0.0
        %2788 = vmatpush1.xpose.msra.mxu0 0.0
        %2789 = vmatprep.subr.mxu0 0.0
        %2790 = vmatpush1.xpose.msra.mxu0 0.0
        %2791 = vmatprep.subr.mxu0 0.0
        %2792 = vmatpush1.xpose.msra.mxu0 0.0
        %2793 = vmatprep.subr.mxu0 0.0
        %2794 = vmatpush1.xpose.msra.mxu0 0.0
        %2795 = vmatprep.subr.mxu0 0.0
        %2796 = vmatpush1.xpose.msra.mxu0 0.0
        %2797 = vmatprep.subr.mxu0 0.0
        %2798 = vmatpush1.xpose.msra.mxu0 0.0
        %2799 = vmatprep.subr.mxu0 0.0
        %2800 = vmatpush1.xpose.msra.mxu0 0.0
        %2801 = vmatprep.subr.mxu0 0.0
        %2802 = vmatpush1.xpose.msra.mxu0 0.0
        %2803 = vmatprep.subr.mxu0 0.0
        %2804 = vmatpush1.xpose.msra.mxu0 0.0
        %2805 = vmatprep.subr.mxu0 0.0
        %2806 = vmatpush1.xpose.msra.mxu0 0.0
        %2807 = vmatprep.subr.mxu0 0.0
        %2808 = vmatpush1.xpose.msra.mxu0 0.0
        %2809 = vmatprep.subr.mxu0 0.0
        %2810 = vmatpush1.xpose.msra.mxu0 0.0
        %2811 = vmatprep.subr.mxu0 0.0
        %2812 = vmatpush1.xpose.msra.mxu0 0.0
        %2813 = vmatprep.subr.mxu0 0.0
        %2814 = vmatpush1.xpose.msra.mxu0 %v2783
        %2815 = vmatprep.subr.mxu0 0.0
        %2816 = vmatpush1.xpose.msra.mxu0 %v2781
        %2817 = vmatprep.subr.mxu0 0.0
        %2818 = vmatpush2.xpose.msra.mxu0 0.0
        %2819 = vmatprep.subr.mxu0 0.0
        %2820 = vmatpush2.xpose.msra.mxu0 0.0
        %2821 = vmatprep.subr.mxu0 0.0
        %2822 = vmatpush2.xpose.msra.mxu0 0.0
        %2823 = vmatprep.subr.mxu0 0.0
        %2824 = vmatpush2.xpose.msra.mxu0 0.0
        %2825 = vmatprep.subr.mxu0 0.0
        %2826 = vmatpush2.xpose.msra.mxu0 0.0
        %2827 = vmatprep.subr.mxu0 0.0
        %2828 = vmatpush2.xpose.msra.mxu0 0.0
        %2829 = vmatprep.subr.mxu0 0.0
        %2830 = vmatpush2.xpose.msra.mxu0 0.0
        %2831 = vmatprep.subr.mxu0 0.0
        %2832 = vmatpush2.xpose.msra.mxu0 0.0
        %2833 = vmatprep.subr.mxu0 0.0
        %2834 = vmatpush2.xpose.msra.mxu0 0.0
        %2835 = vmatprep.subr.mxu0 0.0
        %2836 = vmatpush2.xpose.msra.mxu0 0.0
        %2837 = vmatprep.subr.mxu0 0.0
        %2838 = vmatpush2.xpose.msra.mxu0 0.0
        %2839 = vmatprep.subr.mxu0 0.0
        %2840 = vmatpush2.xpose.msra.mxu0 0.0
        %2841 = vmatprep.subr.mxu0 0.0
        %2842 = vmatpush2.xpose.msra.mxu0 0.0
        %2843 = vmatprep.subr.mxu0 0.0
        %2844 = vmatpush2.xpose.msra.mxu0 0.0
        %2845 = vmatprep.subr.mxu0 0.0
        %2846 = vmatpush2.xpose.msra.mxu0 0.0
        %2847 = vmatprep.subr.mxu0 0.0
        %2848 = vmatpush2.xpose.msra.mxu0 0.0
        %2849 = vmatprep.mubr.f32.mxu0 0.0
        %2850 = vmatmul.mubr.f32.gmra.mxu0 %v2777
        %v2851 = vpop.f32.mrf.mxu0
        %v2852 = vadd.f32 0.0, %v2851
        %v2853 = vpop.f32.mrf.mxu0
        %2854 = vmatprep.mubr.f32.mxu0 0.0
        %2855 = vmatmul.mubr.f32.gmra.mxu0 %v2779
        %v2856 = vpop.f32.mrf.mxu0
        %v2857 = vadd.f32 0.0, %v2856
        %v2858 = vpop.f32.mrf.mxu0
        %2859 = vdwg.mxu0
        %v2860 = vmul.f32 %v2852, 0.35355338
        %v2861 = vmul.f32 %v2857, 0.35355338
        %v2862 = vsel %vm2295, %v2860, -inf
        %2863 = vmax.xlane.f32.xlu0 %v2862
        %v2864 = vpop.xlane.xlu0 %2863
        %v2865 = vsel %vm2295, %v2861, -inf
        %2866 = vmax.xlane.f32.xlu0 %v2865
        %v2867 = vpop.xlane.xlu0 %2866
        %v2868 = vsub.f32 %v2860, %v2864
        %v2869 = vsub.f32 %v2861, %v2867
        %v2870 = vmul.f32 %v2868, 1.442695
        %v2871 = vpow.pop %v2870
        %v2872 = vmul.f32 %v2869, 1.442695
        %v2873 = vpow.pop %v2872
        %v2874 = vsel %vm2295, %v2871, 0.0
        %2875 = vadd.xlane.f32.xlu0 %v2874
        %v2876 = vpop.xlane.xlu0 %2875
        %v2877 = vsel %vm2295, %v2873, 0.0
        %2878 = vadd.xlane.f32.xlu0 %v2877
        %v2879 = vpop.xlane.xlu0 %2878
        %v2880 = vrcp.pop %v2876
        %v2881 = vrcp.pop %v2879
        %v2882 = vmul.f32 %v2871, %v2880
        %v2883 = vmul.f32 %v2873, %v2881
        %2884 = vrot.lane.b32.xlu0 %v2191, 48
        %v2885 = vpop.permute.xlu0 %2884
        %2886 = vrot.lane.b32.xlu0 %v2196, 48
        %v2887 = vpop.permute.xlu0 %2886
        %v2891 = vsel %vm2295, %v2882, 0
        %v2894 = vsel %vm2295, %v2883, 0
        %2896 = vmatprep.subr.mxu0 0.0
        %2897 = vmatpush1.msra.mxu0 0.0
        %2898 = vmatprep.subr.mxu0 0.0
        %2899 = vmatpush1.msra.mxu0 0.0
        %2900 = vmatprep.subr.mxu0 0.0
        %2901 = vmatpush1.msra.mxu0 0.0
        %2902 = vmatprep.subr.mxu0 0.0
        %2903 = vmatpush1.msra.mxu0 0.0
        %2904 = vmatprep.subr.mxu0 0.0
        %2905 = vmatpush1.msra.mxu0 0.0
        %2906 = vmatprep.subr.mxu0 0.0
        %2907 = vmatpush1.msra.mxu0 0.0
        %2908 = vmatprep.subr.mxu0 0.0
        %2909 = vmatpush1.msra.mxu0 0.0
        %2910 = vmatprep.subr.mxu0 0.0
        %2911 = vmatpush1.msra.mxu0 0.0
        %2912 = vmatprep.subr.mxu0 0.0
        %2913 = vmatpush1.msra.mxu0 0.0
        %2914 = vmatprep.subr.mxu0 0.0
        %2915 = vmatpush1.msra.mxu0 0.0
        %2916 = vmatprep.subr.mxu0 0.0
        %2917 = vmatpush1.msra.mxu0 0.0
        %2918 = vmatprep.subr.mxu0 0.0
        %2919 = vmatpush1.msra.mxu0 0.0
        %2920 = vmatprep.subr.mxu0 0.0
        %2921 = vmatpush1.msra.mxu0 0.0
        %2922 = vmatprep.subr.mxu0 0.0
        %2923 = vmatpush1.msra.mxu0 0.0
        %2924 = vmatprep.subr.mxu0 0.0
        %2925 = vmatpush1.msra.mxu0 %v2887
        %2926 = vmatprep.subr.mxu0 0.0
        %2927 = vmatpush1.msra.mxu0 %v2885
        %2928 = vmatprep.subr.mxu0 0.0
        %2929 = vmatpush2.msra.mxu0 0.0
        %2930 = vmatprep.subr.mxu0 0.0
        %2931 = vmatpush2.msra.mxu0 0.0
        %2932 = vmatprep.subr.mxu0 0.0
        %2933 = vmatpush2.msra.mxu0 0.0
        %2934 = vmatprep.subr.mxu0 0.0
        %2935 = vmatpush2.msra.mxu0 0.0
        %2936 = vmatprep.subr.mxu0 0.0
        %2937 = vmatpush2.msra.mxu0 0.0
        %2938 = vmatprep.subr.mxu0 0.0
        %2939 = vmatpush2.msra.mxu0 0.0
        %2940 = vmatprep.subr.mxu0 0.0
        %2941 = vmatpush2.msra.mxu0 0.0
        %2942 = vmatprep.subr.mxu0 0.0
        %2943 = vmatpush2.msra.mxu0 0.0
        %2944 = vmatprep.subr.mxu0 0.0
        %2945 = vmatpush2.msra.mxu0 0.0
        %2946 = vmatprep.subr.mxu0 0.0
        %2947 = vmatpush2.msra.mxu0 0.0
        %2948 = vmatprep.subr.mxu0 0.0
        %2949 = vmatpush2.msra.mxu0 0.0
        %2950 = vmatprep.subr.mxu0 0.0
        %2951 = vmatpush2.msra.mxu0 0.0
        %2952 = vmatprep.subr.mxu0 0.0
        %2953 = vmatpush2.msra.mxu0 0.0
        %2954 = vmatprep.subr.mxu0 0.0
        %2955 = vmatpush2.msra.mxu0 0.0
        %2956 = vmatprep.subr.mxu0 0.0
        %2957 = vmatpush2.msra.mxu0 0.0
        %2958 = vmatprep.subr.mxu0 0.0
        %2959 = vmatpush2.msra.mxu0 0.0
        %2960 = vmatprep.mubr.f32.mxu0 0.0
        %2961 = vmatmul.mubr.f32.gmra.mxu0 %v2891
        %v2962 = vpop.f32.mrf.mxu0
        %v2963 = vadd.f32 0.0, %v2962
        %v2964 = vpop.f32.mrf.mxu0
        %2965 = vmatprep.mubr.f32.mxu0 0.0
        %2966 = vmatmul.mubr.f32.gmra.mxu0 %v2894
        %v2967 = vpop.f32.mrf.mxu0
        %v2968 = vadd.f32 0.0, %v2967
        %v2969 = vpop.f32.mrf.mxu0
        %2970 = vdwg.mxu0
        %v2972 = vsel %vm2209, %v2963, 0
        %v2975 = vsel %vm2209, %v2968, 0
        %2977 = vmatprep.subr.mxu0 0.0
        %2978 = vmatpush1.msra.mxu0 0.0
        %2979 = vmatprep.subr.mxu0 0.0
        %2980 = vmatpush1.msra.mxu0 0.0
        %2981 = vmatprep.subr.mxu0 0.0
        %2982 = vmatpush1.msra.mxu0 0.0
        %2983 = vmatprep.subr.mxu0 0.0
        %2984 = vmatpush1.msra.mxu0 0.0
        %2985 = vmatprep.subr.mxu0 0.0
        %2986 = vmatpush1.msra.mxu0 0.0
        %2987 = vmatprep.subr.mxu0 0.0
        %2988 = vmatpush1.msra.mxu0 0.0
        %2989 = vmatprep.subr.mxu0 0.0
        %2990 = vmatpush1.msra.mxu0 0.0
        %2991 = vmatprep.subr.mxu0 0.0
        %2992 = vmatpush1.msra.mxu0 0.0
        %2993 = vmatprep.subr.mxu0 0.0
        %2994 = vmatpush1.msra.mxu0 0.0
        %2995 = vmatprep.subr.mxu0 0.0
        %2996 = vmatpush1.msra.mxu0 0.0
        %2997 = vmatprep.subr.mxu0 0.0
        %2998 = vmatpush1.msra.mxu0 0.0
        %2999 = vmatprep.subr.mxu0 0.0
        %3000 = vmatpush1.msra.mxu0 0.0
        %3001 = vmatprep.subr.mxu0 0.0
        %3002 = vmatpush1.msra.mxu0 0.0
        %3003 = vmatprep.subr.mxu0 0.0
        %3004 = vmatpush1.msra.mxu0 0.0
        %3005 = vmatprep.subr.mxu0 0.0
        %3006 = vmatpush1.msra.mxu0 0.0
        %3007 = vmatprep.subr.mxu0 0.0
        %3008 = vmatpush1.msra.mxu0 %v2201
        %3009 = vmatprep.subr.mxu0 0.0
        %3010 = vmatpush2.msra.mxu0 0.0
        %3011 = vmatprep.subr.mxu0 0.0
        %3012 = vmatpush2.msra.mxu0 0.0
        %3013 = vmatprep.subr.mxu0 0.0
        %3014 = vmatpush2.msra.mxu0 0.0
        %3015 = vmatprep.subr.mxu0 0.0
        %3016 = vmatpush2.msra.mxu0 0.0
        %3017 = vmatprep.subr.mxu0 0.0
        %3018 = vmatpush2.msra.mxu0 0.0
        %3019 = vmatprep.subr.mxu0 0.0
        %3020 = vmatpush2.msra.mxu0 0.0
        %3021 = vmatprep.subr.mxu0 0.0
        %3022 = vmatpush2.msra.mxu0 0.0
        %3023 = vmatprep.subr.mxu0 0.0
        %3024 = vmatpush2.msra.mxu0 0.0
        %3025 = vmatprep.subr.mxu0 0.0
        %3026 = vmatpush2.msra.mxu0 0.0
        %3027 = vmatprep.subr.mxu0 0.0
        %3028 = vmatpush2.msra.mxu0 0.0
        %3029 = vmatprep.subr.mxu0 0.0
        %3030 = vmatpush2.msra.mxu0 0.0
        %3031 = vmatprep.subr.mxu0 0.0
        %3032 = vmatpush2.msra.mxu0 0.0
        %3033 = vmatprep.subr.mxu0 0.0
        %3034 = vmatpush2.msra.mxu0 0.0
        %3035 = vmatprep.subr.mxu0 0.0
        %3036 = vmatpush2.msra.mxu0 0.0
        %3037 = vmatprep.subr.mxu0 0.0
        %3038 = vmatpush2.msra.mxu0 0.0
        %3039 = vmatprep.subr.mxu0 0.0
        %3040 = vmatpush2.msra.mxu0 0.0
        %3041 = vmatprep.mubr.f32.mxu0 0.0
        %3042 = vmatmul.mubr.f32.gmra.mxu0 %v2972
        %v3043 = vpop.f32.mrf.mxu0
        %v3044 = vadd.f32 0.0, %v3043
        %v3045 = vpop.f32.mrf.mxu0
        %3046 = vmatprep.mubr.f32.mxu0 0.0
        %3047 = vmatmul.mubr.f32.gmra.mxu0 %v2975
        %v3048 = vpop.f32.mrf.mxu0
        %v3049 = vadd.f32 0.0, %v3048
        %v3050 = vpop.f32.mrf.mxu0
        %3051 = vdwg.mxu0
        %v3052 = vadd.f32 %v2761, %v3044
        %v3053 = vadd.f32 %v2766, %v3049
        %3054 = vrot.lane.b32.xlu0 %v2191, 104
        %v3055 = vpop.permute.xlu0 %3054
        %3056 = vrot.lane.b32.xlu0 %v2196, 104
        %v3057 = vpop.permute.xlu0 %3056
        %3058 = vrot.lane.b32.xlu0 %v2191, 72
        %v3059 = vpop.permute.xlu0 %3058
        %3060 = vrot.lane.b32.xlu0 %v2196, 72
        %v3061 = vpop.permute.xlu0 %3060
        %v3062 = vsel %vm2209, %v3055, 0
        %v3064 = vsel %vm2209, %v3057, 0
        %v3066 = vsel %vm2209, %v3059, 0
        %v3068 = vsel %vm2209, %v3061, 0
        %3070 = vmatprep.subr.mxu0 0.0
        %3071 = vmatpush1.xpose.msra.mxu0 0.0
        %3072 = vmatprep.subr.mxu0 0.0
        %3073 = vmatpush1.xpose.msra.mxu0 0.0
        %3074 = vmatprep.subr.mxu0 0.0
        %3075 = vmatpush1.xpose.msra.mxu0 0.0
        %3076 = vmatprep.subr.mxu0 0.0
        %3077 = vmatpush1.xpose.msra.mxu0 0.0
        %3078 = vmatprep.subr.mxu0 0.0
        %3079 = vmatpush1.xpose.msra.mxu0 0.0
        %3080 = vmatprep.subr.mxu0 0.0
        %3081 = vmatpush1.xpose.msra.mxu0 0.0
        %3082 = vmatprep.subr.mxu0 0.0
        %3083 = vmatpush1.xpose.msra.mxu0 0.0
        %3084 = vmatprep.subr.mxu0 0.0
        %3085 = vmatpush1.xpose.msra.mxu0 0.0
        %3086 = vmatprep.subr.mxu0 0.0
        %3087 = vmatpush1.xpose.msra.mxu0 0.0
        %3088 = vmatprep.subr.mxu0 0.0
        %3089 = vmatpush1.xpose.msra.mxu0 0.0
        %3090 = vmatprep.subr.mxu0 0.0
        %3091 = vmatpush1.xpose.msra.mxu0 0.0
        %3092 = vmatprep.subr.mxu0 0.0
        %3093 = vmatpush1.xpose.msra.mxu0 0.0
        %3094 = vmatprep.subr.mxu0 0.0
        %3095 = vmatpush1.xpose.msra.mxu0 0.0
        %3096 = vmatprep.subr.mxu0 0.0
        %3097 = vmatpush1.xpose.msra.mxu0 0.0
        %3098 = vmatprep.subr.mxu0 0.0
        %3099 = vmatpush1.xpose.msra.mxu0 %v3068
        %3100 = vmatprep.subr.mxu0 0.0
        %3101 = vmatpush1.xpose.msra.mxu0 %v3066
        %3102 = vmatprep.subr.mxu0 0.0
        %3103 = vmatpush2.xpose.msra.mxu0 0.0
        %3104 = vmatprep.subr.mxu0 0.0
        %3105 = vmatpush2.xpose.msra.mxu0 0.0
        %3106 = vmatprep.subr.mxu0 0.0
        %3107 = vmatpush2.xpose.msra.mxu0 0.0
        %3108 = vmatprep.subr.mxu0 0.0
        %3109 = vmatpush2.xpose.msra.mxu0 0.0
        %3110 = vmatprep.subr.mxu0 0.0
        %3111 = vmatpush2.xpose.msra.mxu0 0.0
        %3112 = vmatprep.subr.mxu0 0.0
        %3113 = vmatpush2.xpose.msra.mxu0 0.0
        %3114 = vmatprep.subr.mxu0 0.0
        %3115 = vmatpush2.xpose.msra.mxu0 0.0
        %3116 = vmatprep.subr.mxu0 0.0
        %3117 = vmatpush2.xpose.msra.mxu0 0.0
        %3118 = vmatprep.subr.mxu0 0.0
        %3119 = vmatpush2.xpose.msra.mxu0 0.0
        %3120 = vmatprep.subr.mxu0 0.0
        %3121 = vmatpush2.xpose.msra.mxu0 0.0
        %3122 = vmatprep.subr.mxu0 0.0
        %3123 = vmatpush2.xpose.msra.mxu0 0.0
        %3124 = vmatprep.subr.mxu0 0.0
        %3125 = vmatpush2.xpose.msra.mxu0 0.0
        %3126 = vmatprep.subr.mxu0 0.0
        %3127 = vmatpush2.xpose.msra.mxu0 0.0
        %3128 = vmatprep.subr.mxu0 0.0
        %3129 = vmatpush2.xpose.msra.mxu0 0.0
        %3130 = vmatprep.subr.mxu0 0.0
        %3131 = vmatpush2.xpose.msra.mxu0 0.0
        %3132 = vmatprep.subr.mxu0 0.0
        %3133 = vmatpush2.xpose.msra.mxu0 0.0
        %3134 = vmatprep.mubr.f32.mxu0 0.0
        %3135 = vmatmul.mubr.f32.gmra.mxu0 %v3062
        %v3136 = vpop.f32.mrf.mxu0
        %v3137 = vadd.f32 0.0, %v3136
        %v3138 = vpop.f32.mrf.mxu0
        %3139 = vmatprep.mubr.f32.mxu0 0.0
        %3140 = vmatmul.mubr.f32.gmra.mxu0 %v3064
        %v3141 = vpop.f32.mrf.mxu0
        %v3142 = vadd.f32 0.0, %v3141
        %v3143 = vpop.f32.mrf.mxu0
        %3144 = vdwg.mxu0
        %v3145 = vmul.f32 %v3137, 0.35355338
        %v3146 = vmul.f32 %v3142, 0.35355338
        %v3147 = vsel %vm2295, %v3145, -inf
        %3148 = vmax.xlane.f32.xlu0 %v3147
        %v3149 = vpop.xlane.xlu0 %3148
        %v3150 = vsel %vm2295, %v3146, -inf
        %3151 = vmax.xlane.f32.xlu0 %v3150
        %v3152 = vpop.xlane.xlu0 %3151
        %v3153 = vsub.f32 %v3145, %v3149
        %v3154 = vsub.f32 %v3146, %v3152
        %v3155 = vmul.f32 %v3153, 1.442695
        %v3156 = vpow.pop %v3155
        %v3157 = vmul.f32 %v3154, 1.442695
        %v3158 = vpow.pop %v3157
        %v3159 = vsel %vm2295, %v3156, 0.0
        %3160 = vadd.xlane.f32.xlu0 %v3159
        %v3161 = vpop.xlane.xlu0 %3160
        %v3162 = vsel %vm2295, %v3158, 0.0
        %3163 = vadd.xlane.f32.xlu0 %v3162
        %v3164 = vpop.xlane.xlu0 %3163
        %v3165 = vrcp.pop %v3161
        %v3166 = vrcp.pop %v3164
        %v3167 = vmul.f32 %v3156, %v3165
        %v3168 = vmul.f32 %v3158, %v3166
        %3169 = vrot.lane.b32.xlu0 %v2191, 40
        %v3170 = vpop.permute.xlu0 %3169
        %3171 = vrot.lane.b32.xlu0 %v2196, 40
        %v3172 = vpop.permute.xlu0 %3171
        %v3176 = vsel %vm2295, %v3167, 0
        %v3179 = vsel %vm2295, %v3168, 0
        %3181 = vmatprep.subr.mxu0 0.0
        %3182 = vmatpush1.msra.mxu0 0.0
        %3183 = vmatprep.subr.mxu0 0.0
        %3184 = vmatpush1.msra.mxu0 0.0
        %3185 = vmatprep.subr.mxu0 0.0
        %3186 = vmatpush1.msra.mxu0 0.0
        %3187 = vmatprep.subr.mxu0 0.0
        %3188 = vmatpush1.msra.mxu0 0.0
        %3189 = vmatprep.subr.mxu0 0.0
        %3190 = vmatpush1.msra.mxu0 0.0
        %3191 = vmatprep.subr.mxu0 0.0
        %3192 = vmatpush1.msra.mxu0 0.0
        %3193 = vmatprep.subr.mxu0 0.0
        %3194 = vmatpush1.msra.mxu0 0.0
        %3195 = vmatprep.subr.mxu0 0.0
        %3196 = vmatpush1.msra.mxu0 0.0
        %3197 = vmatprep.subr.mxu0 0.0
        %3198 = vmatpush1.msra.mxu0 0.0
        %3199 = vmatprep.subr.mxu0 0.0
        %3200 = vmatpush1.msra.mxu0 0.0
        %3201 = vmatprep.subr.mxu0 0.0
        %3202 = vmatpush1.msra.mxu0 0.0
        %3203 = vmatprep.subr.mxu0 0.0
        %3204 = vmatpush1.msra.mxu0 0.0
        %3205 = vmatprep.subr.mxu0 0.0
        %3206 = vmatpush1.msra.mxu0 0.0
        %3207 = vmatprep.subr.mxu0 0.0
        %3208 = vmatpush1.msra.mxu0 0.0
        %3209 = vmatprep.subr.mxu0 0.0
        %3210 = vmatpush1.msra.mxu0 %v3172
        %3211 = vmatprep.subr.mxu0 0.0
        %3212 = vmatpush1.msra.mxu0 %v3170
        %3213 = vmatprep.subr.mxu0 0.0
        %3214 = vmatpush2.msra.mxu0 0.0
        %3215 = vmatprep.subr.mxu0 0.0
        %3216 = vmatpush2.msra.mxu0 0.0
        %3217 = vmatprep.subr.mxu0 0.0
        %3218 = vmatpush2.msra.mxu0 0.0
        %3219 = vmatprep.subr.mxu0 0.0
        %3220 = vmatpush2.msra.mxu0 0.0
        %3221 = vmatprep.subr.mxu0 0.0
        %3222 = vmatpush2.msra.mxu0 0.0
        %3223 = vmatprep.subr.mxu0 0.0
        %3224 = vmatpush2.msra.mxu0 0.0
        %3225 = vmatprep.subr.mxu0 0.0
        %3226 = vmatpush2.msra.mxu0 0.0
        %3227 = vmatprep.subr.mxu0 0.0
        %3228 = vmatpush2.msra.mxu0 0.0
        %3229 = vmatprep.subr.mxu0 0.0
        %3230 = vmatpush2.msra.mxu0 0.0
        %3231 = vmatprep.subr.mxu0 0.0
        %3232 = vmatpush2.msra.mxu0 0.0
        %3233 = vmatprep.subr.mxu0 0.0
        %3234 = vmatpush2.msra.mxu0 0.0
        %3235 = vmatprep.subr.mxu0 0.0
        %3236 = vmatpush2.msra.mxu0 0.0
        %3237 = vmatprep.subr.mxu0 0.0
        %3238 = vmatpush2.msra.mxu0 0.0
        %3239 = vmatprep.subr.mxu0 0.0
        %3240 = vmatpush2.msra.mxu0 0.0
        %3241 = vmatprep.subr.mxu0 0.0
        %3242 = vmatpush2.msra.mxu0 0.0
        %3243 = vmatprep.subr.mxu0 0.0
        %3244 = vmatpush2.msra.mxu0 0.0
        %3245 = vmatprep.mubr.f32.mxu0 0.0
        %3246 = vmatmul.mubr.f32.gmra.mxu0 %v3176
        %v3247 = vpop.f32.mrf.mxu0
        %v3248 = vadd.f32 0.0, %v3247
        %v3249 = vpop.f32.mrf.mxu0
        %3250 = vmatprep.mubr.f32.mxu0 0.0
        %3251 = vmatmul.mubr.f32.gmra.mxu0 %v3179
        %v3252 = vpop.f32.mrf.mxu0
        %v3253 = vadd.f32 0.0, %v3252
        %v3254 = vpop.f32.mrf.mxu0
        %3255 = vdwg.mxu0
        %v3257 = vsel %vm2209, %v3248, 0
        %v3260 = vsel %vm2209, %v3253, 0
        %3262 = vmatprep.subr.mxu0 0.0
        %3263 = vmatpush1.msra.mxu0 0.0
        %3264 = vmatprep.subr.mxu0 0.0
        %3265 = vmatpush1.msra.mxu0 0.0
        %3266 = vmatprep.subr.mxu0 0.0
        %3267 = vmatpush1.msra.mxu0 0.0
        %3268 = vmatprep.subr.mxu0 0.0
        %3269 = vmatpush1.msra.mxu0 0.0
        %3270 = vmatprep.subr.mxu0 0.0
        %3271 = vmatpush1.msra.mxu0 0.0
        %3272 = vmatprep.subr.mxu0 0.0
        %3273 = vmatpush1.msra.mxu0 0.0
        %3274 = vmatprep.subr.mxu0 0.0
        %3275 = vmatpush1.msra.mxu0 0.0
        %3276 = vmatprep.subr.mxu0 0.0
        %3277 = vmatpush1.msra.mxu0 0.0
        %3278 = vmatprep.subr.mxu0 0.0
        %3279 = vmatpush1.msra.mxu0 0.0
        %3280 = vmatprep.subr.mxu0 0.0
        %3281 = vmatpush1.msra.mxu0 0.0
        %3282 = vmatprep.subr.mxu0 0.0
        %3283 = vmatpush1.msra.mxu0 0.0
        %3284 = vmatprep.subr.mxu0 0.0
        %3285 = vmatpush1.msra.mxu0 0.0
        %3286 = vmatprep.subr.mxu0 0.0
        %3287 = vmatpush1.msra.mxu0 0.0
        %3288 = vmatprep.subr.mxu0 0.0
        %3289 = vmatpush1.msra.mxu0 0.0
        %3290 = vmatprep.subr.mxu0 0.0
        %3291 = vmatpush1.msra.mxu0 0.0
        %3292 = vmatprep.subr.mxu0 0.0
        %3293 = vmatpush1.msra.mxu0 %v2202
        %3294 = vmatprep.subr.mxu0 0.0
        %3295 = vmatpush2.msra.mxu0 0.0
        %3296 = vmatprep.subr.mxu0 0.0
        %3297 = vmatpush2.msra.mxu0 0.0
        %3298 = vmatprep.subr.mxu0 0.0
        %3299 = vmatpush2.msra.mxu0 0.0
        %3300 = vmatprep.subr.mxu0 0.0
        %3301 = vmatpush2.msra.mxu0 0.0
        %3302 = vmatprep.subr.mxu0 0.0
        %3303 = vmatpush2.msra.mxu0 0.0
        %3304 = vmatprep.subr.mxu0 0.0
        %3305 = vmatpush2.msra.mxu0 0.0
        %3306 = vmatprep.subr.mxu0 0.0
        %3307 = vmatpush2.msra.mxu0 0.0
        %3308 = vmatprep.subr.mxu0 0.0
        %3309 = vmatpush2.msra.mxu0 0.0
        %3310 = vmatprep.subr.mxu0 0.0
        %3311 = vmatpush2.msra.mxu0 0.0
        %3312 = vmatprep.subr.mxu0 0.0
        %3313 = vmatpush2.msra.mxu0 0.0
        %3314 = vmatprep.subr.mxu0 0.0
        %3315 = vmatpush2.msra.mxu0 0.0
        %3316 = vmatprep.subr.mxu0 0.0
        %3317 = vmatpush2.msra.mxu0 0.0
        %3318 = vmatprep.subr.mxu0 0.0
        %3319 = vmatpush2.msra.mxu0 0.0
        %3320 = vmatprep.subr.mxu0 0.0
        %3321 = vmatpush2.msra.mxu0 0.0
        %3322 = vmatprep.subr.mxu0 0.0
        %3323 = vmatpush2.msra.mxu0 0.0
        %3324 = vmatprep.subr.mxu0 0.0
        %3325 = vmatpush2.msra.mxu0 0.0
        %3326 = vmatprep.mubr.f32.mxu0 0.0
        %3327 = vmatmul.mubr.f32.gmra.mxu0 %v3257
        %v3328 = vpop.f32.mrf.mxu0
        %v3329 = vadd.f32 0.0, %v3328
        %v3330 = vpop.f32.mrf.mxu0
        %3331 = vmatprep.mubr.f32.mxu0 0.0
        %3332 = vmatmul.mubr.f32.gmra.mxu0 %v3260
        %v3333 = vpop.f32.mrf.mxu0
        %v3334 = vadd.f32 0.0, %v3333
        %v3335 = vpop.f32.mrf.mxu0
        %3336 = vdwg.mxu0
        %v3337 = vadd.f32 %v3052, %v3329
        %v3338 = vadd.f32 %v3053, %v3334
        %v3339 = vadd.f32 %v2059, %v3337
        %v3340 = vadd.f32 %v2060, %v3338
        %v3341 = vld [vmem:[%s19] sm:$0x1]
        %v3343 = vlaneseq
        %v3344 = vshrl.u32 %v3343, 7
        %v3345 = vsub.s32 0, %v3344
        %v3346 = vrot.slane %v3341, %v3345
        %v3348 = vadd.f32 %v3339, %v3346
        %v3349 = vadd.f32 %v3340, %v3346
        %v3350 = vld [vmem:[%s21] sm:$0x1]
        %v3351 = vld [vmem:[%s23] sm:$0x1]
        %v3352 = vsel %vm2063, %v3348, 0.0
        %3353 = vadd.xlane.f32.xlu0 %v3352
        %v3354 = vpop.xlane.xlu0 %3353
        %v3355 = vsel %vm2063, %v3349, 0.0
        %3356 = vadd.xlane.f32.xlu0 %v3355
        %v3357 = vpop.xlane.xlu0 %3356
        %v3358 = vmul.f32 %v3354, %v2070
        %v3359 = vmul.f32 %v3357, %v2070
        %v3360 = vsub.f32 %v3348, %v3358
        %v3361 = vsub.f32 %v3349, %v3359
        %v3362 = vmul.f32 %v3360, %v3360
        %v3363 = vmul.f32 %v3361, %v3361
        %v3364 = vsel %vm2063, %v3362, 0.0
        %3365 = vadd.xlane.f32.xlu0 %v3364
        %v3366 = vpop.xlane.xlu0 %3365
        %v3367 = vsel %vm2063, %v3363, 0.0
        %3368 = vadd.xlane.f32.xlu0 %v3367
        %v3369 = vpop.xlane.xlu0 %3368
        %v3370 = vmul.f32 %v3366, %v2070
        %v3371 = vmul.f32 %v3369, %v2070
        %v3372 = vadd.f32 %v3370, 1e-05
        %v3373 = vadd.f32 %v3371, 1e-05
        %v3374 = vrsqrt.pop %v3372
        %v3375 = vrsqrt.pop %v3373
        %v3376 = vmul.f32 %v3360, %v3374
        %v3377 = vmul.f32 %v3361, %v3375
        %v3379 = vlaneseq
        %v3380 = vshrl.u32 %v3379, 7
        %v3381 = vsub.s32 0, %v3380
        %v3382 = vrot.slane %v3350, %v3381
        %v3384 = vmul.f32 %v3376, %v3382
        %v3385 = vmul.f32 %v3377, %v3382
        %v3387 = vlaneseq
        %v3388 = vshrl.u32 %v3387, 7
        %v3389 = vsub.s32 0, %v3388
        %v3390 = vrot.slane %v3351, %v3389
        %v3392 = vadd.f32 %v3384, %v3390
        %v3393 = vadd.f32 %v3385, %v3390
        %v3394 = vld [vmem:[%s25] sm:$0xff]
        %v3395 = vld [vmem:[%s25 + $0x8] sm:$0xff]
        %v3396 = vld [vmem:[%s25 + $0x10] sm:$0xff]
        %v3397 = vld [vmem:[%s25 + $0x18] sm:$0xff]
        %v3398 = vld [vmem:[%s27] sm:$0x1]
        %v3400 = vlaneseq
        %v3401 = vshrl.u32 %v3400, 7
        %v3402 = vsub.s32 0, %v3401
        %v3403 = vrot.slane %v3398, %v3402
        %v3406 = vsel %vm2063, %v3392, 0
        %v3409 = vsel %vm2063, %v3393, 0
        %3411 = vmatprep.subr.mxu0 0.0
        %3412 = vmatpush1.msra.mxu0 0.0
        %3413 = vmatprep.subr.mxu0 0.0
        %3414 = vmatpush1.msra.mxu0 0.0
        %3415 = vmatprep.subr.mxu0 0.0
        %3416 = vmatpush1.msra.mxu0 0.0
        %3417 = vmatprep.subr.mxu0 0.0
        %3418 = vmatpush1.msra.mxu0 0.0
        %3419 = vmatprep.subr.mxu0 0.0
        %3420 = vmatpush1.msra.mxu0 0.0
        %3421 = vmatprep.subr.mxu0 0.0
        %3422 = vmatpush1.msra.mxu0 0.0
        %3423 = vmatprep.subr.mxu0 0.0
        %3424 = vmatpush1.msra.mxu0 0.0
        %3425 = vmatprep.subr.mxu0 0.0
        %3426 = vmatpush1.msra.mxu0 0.0
        %3427 = vmatprep.subr.mxu0 0.0
        %3428 = vmatpush1.msra.mxu0 0.0
        %3429 = vmatprep.subr.mxu0 0.0
        %3430 = vmatpush1.msra.mxu0 0.0
        %3431 = vmatprep.subr.mxu0 0.0
        %3432 = vmatpush1.msra.mxu0 0.0
        %3433 = vmatprep.subr.mxu0 0.0
        %3434 = vmatpush1.msra.mxu0 0.0
        %3435 = vmatprep.subr.mxu0 0.0
        %3436 = vmatpush1.msra.mxu0 %v3397
        %3437 = vmatprep.subr.mxu0 0.0
        %3438 = vmatpush1.msra.mxu0 %v3396
        %3439 = vmatprep.subr.mxu0 0.0
        %3440 = vmatpush1.msra.mxu0 %v3395
        %3441 = vmatprep.subr.mxu0 0.0
        %3442 = vmatpush1.msra.mxu0 %v3394
        %3443 = vmatprep.subr.mxu0 0.0
        %3444 = vmatpush2.msra.mxu0 0.0
        %3445 = vmatprep.subr.mxu0 0.0
        %3446 = vmatpush2.msra.mxu0 0.0
        %3447 = vmatprep.subr.mxu0 0.0
        %3448 = vmatpush2.msra.mxu0 0.0
        %3449 = vmatprep.subr.mxu0 0.0
        %3450 = vmatpush2.msra.mxu0 0.0
        %3451 = vmatprep.subr.mxu0 0.0
        %3452 = vmatpush2.msra.mxu0 0.0
        %3453 = vmatprep.subr.mxu0 0.0
        %3454 = vmatpush2.msra.mxu0 0.0
        %3455 = vmatprep.subr.mxu0 0.0
        %3456 = vmatpush2.msra.mxu0 0.0
        %3457 = vmatprep.subr.mxu0 0.0
        %3458 = vmatpush2.msra.mxu0 0.0
        %3459 = vmatprep.subr.mxu0 0.0
        %3460 = vmatpush2.msra.mxu0 0.0
        %3461 = vmatprep.subr.mxu0 0.0
        %3462 = vmatpush2.msra.mxu0 0.0
        %3463 = vmatprep.subr.mxu0 0.0
        %3464 = vmatpush2.msra.mxu0 0.0
        %3465 = vmatprep.subr.mxu0 0.0
        %3466 = vmatpush2.msra.mxu0 0.0
        %3467 = vmatprep.subr.mxu0 0.0
        %3468 = vmatpush2.msra.mxu0 0.0
        %3469 = vmatprep.subr.mxu0 0.0
        %3470 = vmatpush2.msra.mxu0 0.0
        %3471 = vmatprep.subr.mxu0 0.0
        %3472 = vmatpush2.msra.mxu0 0.0
        %3473 = vmatprep.subr.mxu0 0.0
        %3474 = vmatpush2.msra.mxu0 0.0
        %3475 = vmatprep.mubr.f32.mxu0 0.0
        %3476 = vmatmul.mubr.f32.gmra.mxu0 %v3406
        %v3477 = vpop.f32.mrf.mxu0
        %v3478 = vadd.f32 %v3403, %v3477
        %v3479 = vpop.f32.mrf.mxu0
        %3480 = vmatprep.mubr.f32.mxu0 0.0
        %3481 = vmatmul.mubr.f32.gmra.mxu0 %v3409
        %v3482 = vpop.f32.mrf.mxu0
        %v3483 = vadd.f32 %v3403, %v3482
        %v3484 = vpop.f32.mrf.mxu0
        %3485 = vdwg.mxu0
        %v3486 = vmul.f32 %v3478, 0.5
        %v3487 = vmul.f32 %v3483, 0.5
        %v3488 = vmul.f32 %v3478, 0.70710677
        %v3489 = vmul.f32 %v3483, 0.70710677
        %v3490 = verf.f32.pop %v3488
        %v3491 = verf.f32.pop %v3489
        %v3492 = vadd.f32 %v3490, 1.0
        %v3493 = vadd.f32 %v3491, 1.0
        %v3494 = vmul.f32 %v3486, %v3492
        %v3495 = vmul.f32 %v3487, %v3493
        %v3496 = vld [vmem:[%s29] sm:$0xff]
        %v3497 = vld [vmem:[%s29 + $0x8] sm:$0xff]
        %v3498 = vld [vmem:[%s29 + $0x10] sm:$0xff]
        %v3499 = vld [vmem:[%s29 + $0x18] sm:$0xff]
        %v3500 = vld [vmem:[%s29 + $0x20] sm:$0xff]
        %v3501 = vld [vmem:[%s29 + $0x28] sm:$0xff]
        %v3502 = vld [vmem:[%s29 + $0x30] sm:$0xff]
        %v3503 = vld [vmem:[%s29 + $0x38] sm:$0xff]
        %v3504 = vld [vmem:[%s29 + $0x40] sm:$0xff]
        %v3505 = vld [vmem:[%s29 + $0x48] sm:$0xff]
        %v3506 = vld [vmem:[%s29 + $0x50] sm:$0xff]
        %v3507 = vld [vmem:[%s29 + $0x58] sm:$0xff]
        %v3508 = vld [vmem:[%s29 + $0x60] sm:$0xff]
        %v3509 = vld [vmem:[%s29 + $0x68] sm:$0xff]
        %v3510 = vld [vmem:[%s29 + $0x70] sm:$0xff]
        %v3511 = vld [vmem:[%s29 + $0x78] sm:$0xff]
        %3512 = vmatprep.subr.mxu0 0.0
        %3513 = vmatpush1.msra.mxu0 %v3511
        %3514 = vmatprep.subr.mxu0 0.0
        %3515 = vmatpush1.msra.mxu0 %v3510
        %3516 = vmatprep.subr.mxu0 0.0
        %3517 = vmatpush1.msra.mxu0 %v3509
        %3518 = vmatprep.subr.mxu0 0.0
        %3519 = vmatpush1.msra.mxu0 %v3508
        %3520 = vmatprep.subr.mxu0 0.0
        %3521 = vmatpush1.msra.mxu0 %v3507
        %3522 = vmatprep.subr.mxu0 0.0
        %3523 = vmatpush1.msra.mxu0 %v3506
        %3524 = vmatprep.subr.mxu0 0.0
        %3525 = vmatpush1.msra.mxu0 %v3505
        %3526 = vmatprep.subr.mxu0 0.0
        %3527 = vmatpush1.msra.mxu0 %v3504
        %3528 = vmatprep.subr.mxu0 0.0
        %3529 = vmatpush1.msra.mxu0 %v3503
        %3530 = vmatprep.subr.mxu0 0.0
        %3531 = vmatpush1.msra.mxu0 %v3502
        %3532 = vmatprep.subr.mxu0 0.0
        %3533 = vmatpush1.msra.mxu0 %v3501
        %3534 = vmatprep.subr.mxu0 0.0
        %3535 = vmatpush1.msra.mxu0 %v3500
        %3536 = vmatprep.subr.mxu0 0.0
        %3537 = vmatpush1.msra.mxu0 %v3499
        %3538 = vmatprep.subr.mxu0 0.0
        %3539 = vmatpush1.msra.mxu0 %v3498
        %3540 = vmatprep.subr.mxu0 0.0
        %3541 = vmatpush1.msra.mxu0 %v3497
        %3542 = vmatprep.subr.mxu0 0.0
        %3543 = vmatpush1.msra.mxu0 %v3496
        %3544 = vmatprep.subr.mxu0 0.0
        %3545 = vmatpush2.msra.mxu0 0.0
        %3546 = vmatprep.subr.mxu0 0.0
        %3547 = vmatpush2.msra.mxu0 0.0
        %3548 = vmatprep.subr.mxu0 0.0
        %3549 = vmatpush2.msra.mxu0 0.0
        %3550 = vmatprep.subr.mxu0 0.0
        %3551 = vmatpush2.msra.mxu0 0.0
        %3552 = vmatprep.subr.mxu0 0.0
        %3553 = vmatpush2.msra.mxu0 0.0
        %3554 = vmatprep.subr.mxu0 0.0
        %3555 = vmatpush2.msra.mxu0 0.0
        %3556 = vmatprep.subr.mxu0 0.0
        %3557 = vmatpush2.msra.mxu0 0.0
        %3558 = vmatprep.subr.mxu0 0.0
        %3559 = vmatpush2.msra.mxu0 0.0
        %3560 = vmatprep.subr.mxu0 0.0
        %3561 = vmatpush2.msra.mxu0 0.0
        %3562 = vmatprep.subr.mxu0 0.0
        %3563 = vmatpush2.msra.mxu0 0.0
        %3564 = vmatprep.subr.mxu0 0.0
        %3565 = vmatpush2.msra.mxu0 0.0
        %3566 = vmatprep.subr.mxu0 0.0
        %3567 = vmatpush2.msra.mxu0 0.0
        %3568 = vmatprep.subr.mxu0 0.0
        %3569 = vmatpush2.msra.mxu0 0.0
        %3570 = vmatprep.subr.mxu0 0.0
        %3571 = vmatpush2.msra.mxu0 0.0
        %3572 = vmatprep.subr.mxu0 0.0
        %3573 = vmatpush2.msra.mxu0 0.0
        %3574 = vmatprep.subr.mxu0 0.0
        %3575 = vmatpush2.msra.mxu0 0.0
        %3576 = vmatprep.mubr.f32.mxu0 0.0
        %3577 = vmatmul.mubr.f32.gmra.mxu0 %v3494
        %v3578 = vpop.f32.mrf.mxu0
        %v3579 = vadd.f32 0.0, %v3578
        %v3580 = vpop.f32.mrf.mxu0
        %3581 = vmatprep.mubr.f32.mxu0 0.0
        %3582 = vmatmul.mubr.f32.gmra.mxu0 %v3495
        %v3583 = vpop.f32.mrf.mxu0
        %v3584 = vadd.f32 0.0, %v3583
        %v3585 = vpop.f32.mrf.mxu0
        %3586 = vdwg.mxu0
        %v3587 = vadd.f32 %v3348, %v3579
        %v3588 = vadd.f32 %v3349, %v3584
        %v3589 = vld [vmem:[%s31] sm:$0x1]
        %v3591 = vlaneseq
        %v3592 = vshrl.u32 %v3591, 7
        %v3593 = vsub.s32 0, %v3592
        %v3594 = vrot.slane %v3589, %v3593
        %v3596 = vadd.f32 %v3587, %v3594
        %v3597 = vadd.f32 %v3588, %v3594
        %v3598 = vld [vmem:[%s33] sm:$0x1]
        %v3599 = vld [vmem:[%s35] sm:$0x1]
        %v3600 = vsel %vm2063, %v3596, 0.0
        %3601 = vadd.xlane.f32.xlu0 %v3600
        %v3602 = vpop.xlane.xlu0 %3601
        %v3603 = vsel %vm2063, %v3597, 0.0
        %3604 = vadd.xlane.f32.xlu0 %v3603
        %v3605 = vpop.xlane.xlu0 %3604
        %v3606 = vmul.f32 %v3602, %v2070
        %v3607 = vmul.f32 %v3605, %v2070
        %v3608 = vsub.f32 %v3596, %v3606
        %v3609 = vsub.f32 %v3597, %v3607
        %v3610 = vmul.f32 %v3608, %v3608
        %v3611 = vmul.f32 %v3609, %v3609
        %v3612 = vsel %vm2063, %v3610, 0.0
        %3613 = vadd.xlane.f32.xlu0 %v3612
        %v3614 = vpop.xlane.xlu0 %3613
        %v3615 = vsel %vm2063, %v3611, 0.0
        %3616 = vadd.xlane.f32.xlu0 %v3615
        %v3617 = vpop.xlane.xlu0 %3616
        %v3618 = vmul.f32 %v3614, %v2070
        %v3619 = vmul.f32 %v3617, %v2070
        %v3620 = vadd.f32 %v3618, 1e-05
        %v3621 = vadd.f32 %v3619, 1e-05
        %v3622 = vrsqrt.pop %v3620
        %v3623 = vrsqrt.pop %v3621
        %v3624 = vmul.f32 %v3608, %v3622
        %v3625 = vmul.f32 %v3609, %v3623
        %v3627 = vlaneseq
        %v3628 = vshrl.u32 %v3627, 7
        %v3629 = vsub.s32 0, %v3628
        %v3630 = vrot.slane %v3598, %v3629
        %v3632 = vmul.f32 %v3624, %v3630
        %v3633 = vmul.f32 %v3625, %v3630
        %v3635 = vlaneseq
        %v3636 = vshrl.u32 %v3635, 7
        %v3637 = vsub.s32 0, %v3636
        %v3638 = vrot.slane %v3599, %v3637
        %v3640 = vadd.f32 %v3632, %v3638
        %v3641 = vadd.f32 %v3633, %v3638
        %v3642 = vld [vmem:[%s37] sm:$0xff]
        %v3643 = vld [vmem:[%s37 + $0x8] sm:$0xff]
        %v3644 = vld [vmem:[%s37 + $0x10] sm:$0xff]
        %v3645 = vld [vmem:[%s37 + $0x18] sm:$0xff]
        %v3646 = vld [vmem:[%s39] sm:$0x1]
        %v3648 = vlaneseq
        %v3649 = vshrl.u32 %v3648, 7
        %v3650 = vsub.s32 0, %v3649
        %v3651 = vrot.slane %v3646, %v3650
        %v3654 = vsel %vm2063, %v3640, 0
        %v3657 = vsel %vm2063, %v3641, 0
        %3659 = vmatprep.subr.mxu0 0.0
        %3660 = vmatpush1.msra.mxu0 0.0
        %3661 = vmatprep.subr.mxu0 0.0
        %3662 = vmatpush1.msra.mxu0 0.0
        %3663 = vmatprep.subr.mxu0 0.0
        %3664 = vmatpush1.msra.mxu0 0.0
        %3665 = vmatprep.subr.mxu0 0.0
        %3666 = vmatpush1.msra.mxu0 0.0
        %3667 = vmatprep.subr.mxu0 0.0
        %3668 = vmatpush1.msra.mxu0 0.0
        %3669 = vmatprep.subr.mxu0 0.0
        %3670 = vmatpush1.msra.mxu0 0.0
        %3671 = vmatprep.subr.mxu0 0.0
        %3672 = vmatpush1.msra.mxu0 0.0
        %3673 = vmatprep.subr.mxu0 0.0
        %3674 = vmatpush1.msra.mxu0 0.0
        %3675 = vmatprep.subr.mxu0 0.0
        %3676 = vmatpush1.msra.mxu0 0.0
        %3677 = vmatprep.subr.mxu0 0.0
        %3678 = vmatpush1.msra.mxu0 0.0
        %3679 = vmatprep.subr.mxu0 0.0
        %3680 = vmatpush1.msra.mxu0 0.0
        %3681 = vmatprep.subr.mxu0 0.0
        %3682 = vmatpush1.msra.mxu0 0.0
        %3683 = vmatprep.subr.mxu0 0.0
        %3684 = vmatpush1.msra.mxu0 %v3645
        %3685 = vmatprep.subr.mxu0 0.0
        %3686 = vmatpush1.msra.mxu0 %v3644
        %3687 = vmatprep.subr.mxu0 0.0
        %3688 = vmatpush1.msra.mxu0 %v3643
        %3689 = vmatprep.subr.mxu0 0.0
        %3690 = vmatpush1.msra.mxu0 %v3642
        %3691 = vmatprep.subr.mxu0 0.0
        %3692 = vmatpush2.msra.mxu0 0.0
        %3693 = vmatprep.subr.mxu0 0.0
        %3694 = vmatpush2.msra.mxu0 0.0
        %3695 = vmatprep.subr.mxu0 0.0
        %3696 = vmatpush2.msra.mxu0 0.0
        %3697 = vmatprep.subr.mxu0 0.0
        %3698 = vmatpush2.msra.mxu0 0.0
        %3699 = vmatprep.subr.mxu0 0.0
        %3700 = vmatpush2.msra.mxu0 0.0
        %3701 = vmatprep.subr.mxu0 0.0
        %3702 = vmatpush2.msra.mxu0 0.0
        %3703 = vmatprep.subr.mxu0 0.0
        %3704 = vmatpush2.msra.mxu0 0.0
        %3705 = vmatprep.subr.mxu0 0.0
        %3706 = vmatpush2.msra.mxu0 0.0
        %3707 = vmatprep.subr.mxu0 0.0
        %3708 = vmatpush2.msra.mxu0 0.0
        %3709 = vmatprep.subr.mxu0 0.0
        %3710 = vmatpush2.msra.mxu0 0.0
        %3711 = vmatprep.subr.mxu0 0.0
        %3712 = vmatpush2.msra.mxu0 0.0
        %3713 = vmatprep.subr.mxu0 0.0
        %3714 = vmatpush2.msra.mxu0 0.0
        %3715 = vmatprep.subr.mxu0 0.0
        %3716 = vmatpush2.msra.mxu0 0.0
        %3717 = vmatprep.subr.mxu0 0.0
        %3718 = vmatpush2.msra.mxu0 0.0
        %3719 = vmatprep.subr.mxu0 0.0
        %3720 = vmatpush2.msra.mxu0 0.0
        %3721 = vmatprep.subr.mxu0 0.0
        %3722 = vmatpush2.msra.mxu0 0.0
        %3723 = vmatprep.mubr.f32.mxu0 0.0
        %3724 = vmatmul.mubr.f32.gmra.mxu0 %v3654
        %v3725 = vpop.f32.mrf.mxu0
        %v3726 = vadd.f32 %v3651, %v3725
        %v3727 = vpop.f32.mrf.mxu0
        %3728 = vmatprep.mubr.f32.mxu0 0.0
        %3729 = vmatmul.mubr.f32.gmra.mxu0 %v3657
        %v3730 = vpop.f32.mrf.mxu0
        %v3731 = vadd.f32 %v3651, %v3730
        %v3732 = vpop.f32.mrf.mxu0
        %3733 = vdwg.mxu0
        %v3734 = vld [vmem:[%s41] sm:$0xff]
        %v3735 = vld [vmem:[%s41 + $0x8] sm:$0xff]
        %v3736 = vld [vmem:[%s41 + $0x10] sm:$0xff]
        %v3737 = vld [vmem:[%s41 + $0x18] sm:$0xff]
        %3740 = vrot.lane.b32.xlu0 %v3726, 96
        %v3741 = vpop.permute.xlu0 %3740
        %3742 = vrot.lane.b32.xlu0 %v3731, 96
        %v3743 = vpop.permute.xlu0 %3742
        %v3744 = vsel %vm2209, %v3726, 0
        %v3746 = vsel %vm2209, %v3731, 0
        %v3748 = vsel %vm2209, %v3741, 0
        %v3750 = vsel %vm2209, %v3743, 0
        %3752 = vmatprep.subr.mxu0 0.0
        %3753 = vmatpush1.xpose.msra.mxu0 0.0
        %3754 = vmatprep.subr.mxu0 0.0
        %3755 = vmatpush1.xpose.msra.mxu0 0.0
        %3756 = vmatprep.subr.mxu0 0.0
        %3757 = vmatpush1.xpose.msra.mxu0 0.0
        %3758 = vmatprep.subr.mxu0 0.0
        %3759 = vmatpush1.xpose.msra.mxu0 0.0
        %3760 = vmatprep.subr.mxu0 0.0
        %3761 = vmatpush1.xpose.msra.mxu0 0.0
        %3762 = vmatprep.subr.mxu0 0.0
        %3763 = vmatpush1.xpose.msra.mxu0 0.0
        %3764 = vmatprep.subr.mxu0 0.0
        %3765 = vmatpush1.xpose.msra.mxu0 0.0
        %3766 = vmatprep.subr.mxu0 0.0
        %3767 = vmatpush1.xpose.msra.mxu0 0.0
        %3768 = vmatprep.subr.mxu0 0.0
        %3769 = vmatpush1.xpose.msra.mxu0 0.0
        %3770 = vmatprep.subr.mxu0 0.0
        %3771 = vmatpush1.xpose.msra.mxu0 0.0
        %3772 = vmatprep.subr.mxu0 0.0
        %3773 = vmatpush1.xpose.msra.mxu0 0.0
        %3774 = vmatprep.subr.mxu0 0.0
        %3775 = vmatpush1.xpose.msra.mxu0 0.0
        %3776 = vmatprep.subr.mxu0 0.0
        %3777 = vmatpush1.xpose.msra.mxu0 0.0
        %3778 = vmatprep.subr.mxu0 0.0
        %3779 = vmatpush1.xpose.msra.mxu0 0.0
        %3780 = vmatprep.subr.mxu0 0.0
        %3781 = vmatpush1.xpose.msra.mxu0 %v3750
        %3782 = vmatprep.subr.mxu0 0.0
        %3783 = vmatpush1.xpose.msra.mxu0 %v3748
        %3784 = vmatprep.subr.mxu0 0.0
        %3785 = vmatpush2.xpose.msra.mxu0 0.0
        %3786 = vmatprep.subr.mxu0 0.0
        %3787 = vmatpush2.xpose.msra.mxu0 0.0
        %3788 = vmatprep.subr.mxu0 0.0
        %3789 = vmatpush2.xpose.msra.mxu0 0.0
        %3790 = vmatprep.subr.mxu0 0.0
        %3791 = vmatpush2.xpose.msra.mxu0 0.0
        %3792 = vmatprep.subr.mxu0 0.0
        %3793 = vmatpush2.xpose.msra.mxu0 0.0
        %3794 = vmatprep.subr.mxu0 0.0
        %3795 = vmatpush2.xpose.msra.mxu0 0.0
        %3796 = vmatprep.subr.mxu0 0.0
        %3797 = vmatpush2.xpose.msra.mxu0 0.0
        %3798 = vmatprep.subr.mxu0 0.0
        %3799 = vmatpush2.xpose.msra.mxu0 0.0
        %3800 = vmatprep.subr.mxu0 0.0
        %3801 = vmatpush2.xpose.msra.mxu0 0.0
        %3802 = vmatprep.subr.mxu0 0.0
        %3803 = vmatpush2.xpose.msra.mxu0 0.0
        %3804 = vmatprep.subr.mxu0 0.0
        %3805 = vmatpush2.xpose.msra.mxu0 0.0
        %3806 = vmatprep.subr.mxu0 0.0
        %3807 = vmatpush2.xpose.msra.mxu0 0.0
        %3808 = vmatprep.subr.mxu0 0.0
        %3809 = vmatpush2.xpose.msra.mxu0 0.0
        %3810 = vmatprep.subr.mxu0 0.0
        %3811 = vmatpush2.xpose.msra.mxu0 0.0
        %3812 = vmatprep.subr.mxu0 0.0
        %3813 = vmatpush2.xpose.msra.mxu0 0.0
        %3814 = vmatprep.subr.mxu0 0.0
        %3815 = vmatpush2.xpose.msra.mxu0 0.0
        %3816 = vmatprep.mubr.f32.mxu0 0.0
        %3817 = vmatmul.mubr.f32.gmra.mxu0 %v3744
        %v3818 = vpop.f32.mrf.mxu0
        %v3819 = vadd.f32 0.0, %v3818
        %v3820 = vpop.f32.mrf.mxu0
        %3821 = vmatprep.mubr.f32.mxu0 0.0
        %3822 = vmatmul.mubr.f32.gmra.mxu0 %v3746
        %v3823 = vpop.f32.mrf.mxu0
        %v3824 = vadd.f32 0.0, %v3823
        %v3825 = vpop.f32.mrf.mxu0
        %3826 = vdwg.mxu0
        %v3827 = vmul.f32 %v3819, 0.35355338
        %v3828 = vmul.f32 %v3824, 0.35355338
        %v3829 = vsel %vm2295, %v3827, -inf
        %3830 = vmax.xlane.f32.xlu0 %v3829
        %v3831 = vpop.xlane.xlu0 %3830
        %v3832 = vsel %vm2295, %v3828, -inf
        %3833 = vmax.xlane.f32.xlu0 %v3832
        %v3834 = vpop.xlane.xlu0 %3833
        %v3835 = vsub.f32 %v3827, %v3831
        %v3836 = vsub.f32 %v3828, %v3834
        %v3837 = vmul.f32 %v3835, 1.442695
        %v3838 = vpow.pop %v3837
        %v3839 = vmul.f32 %v3836, 1.442695
        %v3840 = vpow.pop %v3839
        %v3841 = vsel %vm2295, %v3838, 0.0
        %3842 = vadd.xlane.f32.xlu0 %v3841
        %v3843 = vpop.xlane.xlu0 %3842
        %v3844 = vsel %vm2295, %v3840, 0.0
        %3845 = vadd.xlane.f32.xlu0 %v3844
        %v3846 = vpop.xlane.xlu0 %3845
        %v3847 = vrcp.pop %v3843
        %v3848 = vrcp.pop %v3846
        %v3849 = vmul.f32 %v3838, %v3847
        %v3850 = vmul.f32 %v3840, %v3848
        %3851 = vrot.lane.b32.xlu0 %v3726, 64
        %v3852 = vpop.permute.xlu0 %3851
        %3853 = vrot.lane.b32.xlu0 %v3731, 64
        %v3854 = vpop.permute.xlu0 %3853
        %v3858 = vsel %vm2295, %v3849, 0
        %v3861 = vsel %vm2295, %v3850, 0
        %3863 = vmatprep.subr.mxu0 0.0
        %3864 = vmatpush1.msra.mxu0 0.0
        %3865 = vmatprep.subr.mxu0 0.0
        %3866 = vmatpush1.msra.mxu0 0.0
        %3867 = vmatprep.subr.mxu0 0.0
        %3868 = vmatpush1.msra.mxu0 0.0
        %3869 = vmatprep.subr.mxu0 0.0
        %3870 = vmatpush1.msra.mxu0 0.0
        %3871 = vmatprep.subr.mxu0 0.0
        %3872 = vmatpush1.msra.mxu0 0.0
        %3873 = vmatprep.subr.mxu0 0.0
        %3874 = vmatpush1.msra.mxu0 0.0
        %3875 = vmatprep.subr.mxu0 0.0
        %3876 = vmatpush1.msra.mxu0 0.0
        %3877 = vmatprep.subr.mxu0 0.0
        %3878 = vmatpush1.msra.mxu0 0.0
        %3879 = vmatprep.subr.mxu0 0.0
        %3880 = vmatpush1.msra.mxu0 0.0
        %3881 = vmatprep.subr.mxu0 0.0
        %3882 = vmatpush1.msra.mxu0 0.0
        %3883 = vmatprep.subr.mxu0 0.0
        %3884 = vmatpush1.msra.mxu0 0.0
        %3885 = vmatprep.subr.mxu0 0.0
        %3886 = vmatpush1.msra.mxu0 0.0
        %3887 = vmatprep.subr.mxu0 0.0
        %3888 = vmatpush1.msra.mxu0 0.0
        %3889 = vmatprep.subr.mxu0 0.0
        %3890 = vmatpush1.msra.mxu0 0.0
        %3891 = vmatprep.subr.mxu0 0.0
        %3892 = vmatpush1.msra.mxu0 %v3854
        %3893 = vmatprep.subr.mxu0 0.0
        %3894 = vmatpush1.msra.mxu0 %v3852
        %3895 = vmatprep.subr.mxu0 0.0
        %3896 = vmatpush2.msra.mxu0 0.0
        %3897 = vmatprep.subr.mxu0 0.0
        %3898 = vmatpush2.msra.mxu0 0.0
        %3899 = vmatprep.subr.mxu0 0.0
        %3900 = vmatpush2.msra.mxu0 0.0
        %3901 = vmatprep.subr.mxu0 0.0
        %3902 = vmatpush2.msra.mxu0 0.0
        %3903 = vmatprep.subr.mxu0 0.0
        %3904 = vmatpush2.msra.mxu0 0.0
        %3905 = vmatprep.subr.mxu0 0.0
        %3906 = vmatpush2.msra.mxu0 0.0
        %3907 = vmatprep.subr.mxu0 0.0
        %3908 = vmatpush2.msra.mxu0 0.0
        %3909 = vmatprep.subr.mxu0 0.0
        %3910 = vmatpush2.msra.mxu0 0.0
        %3911 = vmatprep.subr.mxu0 0.0
        %3912 = vmatpush2.msra.mxu0 0.0
        %3913 = vmatprep.subr.mxu0 0.0
        %3914 = vmatpush2.msra.mxu0 0.0
        %3915 = vmatprep.subr.mxu0 0.0
        %3916 = vmatpush2.msra.mxu0 0.0
        %3917 = vmatprep.subr.mxu0 0.0
        %3918 = vmatpush2.msra.mxu0 0.0
        %3919 = vmatprep.subr.mxu0 0.0
        %3920 = vmatpush2.msra.mxu0 0.0
        %3921 = vmatprep.subr.mxu0 0.0
        %3922 = vmatpush2.msra.mxu0 0.0
        %3923 = vmatprep.subr.mxu0 0.0
        %3924 = vmatpush2.msra.mxu0 0.0
        %3925 = vmatprep.subr.mxu0 0.0
        %3926 = vmatpush2.msra.mxu0 0.0
        %3927 = vmatprep.mubr.f32.mxu0 0.0
        %3928 = vmatmul.mubr.f32.gmra.mxu0 %v3858
        %v3929 = vpop.f32.mrf.mxu0
        %v3930 = vadd.f32 0.0, %v3929
        %v3931 = vpop.f32.mrf.mxu0
        %3932 = vmatprep.mubr.f32.mxu0 0.0
        %3933 = vmatmul.mubr.f32.gmra.mxu0 %v3861
        %v3934 = vpop.f32.mrf.mxu0
        %v3935 = vadd.f32 0.0, %v3934
        %v3936 = vpop.f32.mrf.mxu0
        %3937 = vdwg.mxu0
        %3938 = vrot.lane.b32.xlu0 %v3726, 120
        %v3939 = vpop.permute.xlu0 %3938
        %3940 = vrot.lane.b32.xlu0 %v3731, 120
        %v3941 = vpop.permute.xlu0 %3940
        %3942 = vrot.lane.b32.xlu0 %v3726, 88
        %v3943 = vpop.permute.xlu0 %3942
        %3944 = vrot.lane.b32.xlu0 %v3731, 88
        %v3945 = vpop.permute.xlu0 %3944
        %v3946 = vsel %vm2209, %v3939, 0
        %v3948 = vsel %vm2209, %v3941, 0
        %v3950 = vsel %vm2209, %v3943, 0
        %v3952 = vsel %vm2209, %v3945, 0
        %3954 = vmatprep.subr.mxu0 0.0
        %3955 = vmatpush1.xpose.msra.mxu0 0.0
        %3956 = vmatprep.subr.mxu0 0.0
        %3957 = vmatpush1.xpose.msra.mxu0 0.0
        %3958 = vmatprep.subr.mxu0 0.0
        %3959 = vmatpush1.xpose.msra.mxu0 0.0
        %3960 = vmatprep.subr.mxu0 0.0
        %3961 = vmatpush1.xpose.msra.mxu0 0.0
        %3962 = vmatprep.subr.mxu0 0.0
        %3963 = vmatpush1.xpose.msra.mxu0 0.0
        %3964 = vmatprep.subr.mxu0 0.0
        %3965 = vmatpush1.xpose.msra.mxu0 0.0
        %3966 = vmatprep.subr.mxu0 0.0
        %3967 = vmatpush1.xpose.msra.mxu0 0.0
        %3968 = vmatprep.subr.mxu0 0.0
        %3969 = vmatpush1.xpose.msra.mxu0 0.0
        %3970 = vmatprep.subr.mxu0 0.0
        %3971 = vmatpush1.xpose.msra.mxu0 0.0
        %3972 = vmatprep.subr.mxu0 0.0
        %3973 = vmatpush1.xpose.msra.mxu0 0.0
        %3974 = vmatprep.subr.mxu0 0.0
        %3975 = vmatpush1.xpose.msra.mxu0 0.0
        %3976 = vmatprep.subr.mxu0 0.0
        %3977 = vmatpush1.xpose.msra.mxu0 0.0
        %3978 = vmatprep.subr.mxu0 0.0
        %3979 = vmatpush1.xpose.msra.mxu0 0.0
        %3980 = vmatprep.subr.mxu0 0.0
        %3981 = vmatpush1.xpose.msra.mxu0 0.0
        %3982 = vmatprep.subr.mxu0 0.0
        %3983 = vmatpush1.xpose.msra.mxu0 %v3952
        %3984 = vmatprep.subr.mxu0 0.0
        %3985 = vmatpush1.xpose.msra.mxu0 %v3950
        %3986 = vmatprep.subr.mxu0 0.0
        %3987 = vmatpush2.xpose.msra.mxu0 0.0
        %3988 = vmatprep.subr.mxu0 0.0
        %3989 = vmatpush2.xpose.msra.mxu0 0.0
        %3990 = vmatprep.subr.mxu0 0.0
        %3991 = vmatpush2.xpose.msra.mxu0 0.0
        %3992 = vmatprep.subr.mxu0 0.0
        %3993 = vmatpush2.xpose.msra.mxu0 0.0
        %3994 = vmatprep.subr.mxu0 0.0
        %3995 = vmatpush2.xpose.msra.mxu0 0.0
        %3996 = vmatprep.subr.mxu0 0.0
        %3997 = vmatpush2.xpose.msra.mxu0 0.0
        %3998 = vmatprep.subr.mxu0 0.0
        %3999 = vmatpush2.xpose.msra.mxu0 0.0
        %4000 = vmatprep.subr.mxu0 0.0
        %4001 = vmatpush2.xpose.msra.mxu0 0.0
        %4002 = vmatprep.subr.mxu0 0.0
        %4003 = vmatpush2.xpose.msra.mxu0 0.0
        %4004 = vmatprep.subr.mxu0 0.0
        %4005 = vmatpush2.xpose.msra.mxu0 0.0
        %4006 = vmatprep.subr.mxu0 0.0
        %4007 = vmatpush2.xpose.msra.mxu0 0.0
        %4008 = vmatprep.subr.mxu0 0.0
        %4009 = vmatpush2.xpose.msra.mxu0 0.0
        %4010 = vmatprep.subr.mxu0 0.0
        %4011 = vmatpush2.xpose.msra.mxu0 0.0
        %4012 = vmatprep.subr.mxu0 0.0
        %4013 = vmatpush2.xpose.msra.mxu0 0.0
        %4014 = vmatprep.subr.mxu0 0.0
        %4015 = vmatpush2.xpose.msra.mxu0 0.0
        %4016 = vmatprep.subr.mxu0 0.0
        %4017 = vmatpush2.xpose.msra.mxu0 0.0
        %4018 = vmatprep.mubr.f32.mxu0 0.0
        %4019 = vmatmul.mubr.f32.gmra.mxu0 %v3946
        %v4020 = vpop.f32.mrf.mxu0
        %v4021 = vadd.f32 0.0, %v4020
        %v4022 = vpop.f32.mrf.mxu0
        %4023 = vmatprep.mubr.f32.mxu0 0.0
        %4024 = vmatmul.mubr.f32.gmra.mxu0 %v3948
        %v4025 = vpop.f32.mrf.mxu0
        %v4026 = vadd.f32 0.0, %v4025
        %v4027 = vpop.f32.mrf.mxu0
        %4028 = vdwg.mxu0
        %v4029 = vmul.f32 %v4021, 0.35355338
        %v4030 = vmul.f32 %v4026, 0.35355338
        %v4031 = vsel %vm2295, %v4029, -inf
        %4032 = vmax.xlane.f32.xlu0 %v4031
        %v4033 = vpop.xlane.xlu0 %4032
        %v4034 = vsel %vm2295, %v4030, -inf
        %4035 = vmax.xlane.f32.xlu0 %v4034
        %v4036 = vpop.xlane.xlu0 %4035
        %v4037 = vsub.f32 %v4029, %v4033
        %v4038 = vsub.f32 %v4030, %v4036
        %v4039 = vmul.f32 %v4037, 1.442695
        %v4040 = vpow.pop %v4039
        %v4041 = vmul.f32 %v4038, 1.442695
        %v4042 = vpow.pop %v4041
        %v4043 = vsel %vm2295, %v4040, 0.0
        %4044 = vadd.xlane.f32.xlu0 %v4043
        %v4045 = vpop.xlane.xlu0 %4044
        %v4046 = vsel %vm2295, %v4042, 0.0
        %4047 = vadd.xlane.f32.xlu0 %v4046
        %v4048 = vpop.xlane.xlu0 %4047
        %v4049 = vrcp.pop %v4045
        %v4050 = vrcp.pop %v4048
        %v4051 = vmul.f32 %v4040, %v4049
        %v4052 = vmul.f32 %v4042, %v4050
        %4053 = vrot.lane.b32.xlu0 %v3726, 56
        %v4054 = vpop.permute.xlu0 %4053
        %4055 = vrot.lane.b32.xlu0 %v3731, 56
        %v4056 = vpop.permute.xlu0 %4055
        %v4060 = vsel %vm2295, %v4051, 0
        %v4063 = vsel %vm2295, %v4052, 0
        %4065 = vmatprep.subr.mxu0 0.0
        %4066 = vmatpush1.msra.mxu0 0.0
        %4067 = vmatprep.subr.mxu0 0.0
        %4068 = vmatpush1.msra.mxu0 0.0
        %4069 = vmatprep.subr.mxu0 0.0
        %4070 = vmatpush1.msra.mxu0 0.0
        %4071 = vmatprep.subr.mxu0 0.0
        %4072 = vmatpush1.msra.mxu0 0.0
        %4073 = vmatprep.subr.mxu0 0.0
        %4074 = vmatpush1.msra.mxu0 0.0
        %4075 = vmatprep.subr.mxu0 0.0
        %4076 = vmatpush1.msra.mxu0 0.0
        %4077 = vmatprep.subr.mxu0 0.0
        %4078 = vmatpush1.msra.mxu0 0.0
        %4079 = vmatprep.subr.mxu0 0.0
        %4080 = vmatpush1.msra.mxu0 0.0
        %4081 = vmatprep.subr.mxu0 0.0
        %4082 = vmatpush1.msra.mxu0 0.0
        %4083 = vmatprep.subr.mxu0 0.0
        %4084 = vmatpush1.msra.mxu0 0.0
        %4085 = vmatprep.subr.mxu0 0.0
        %4086 = vmatpush1.msra.mxu0 0.0
        %4087 = vmatprep.subr.mxu0 0.0
        %4088 = vmatpush1.msra.mxu0 0.0
        %4089 = vmatprep.subr.mxu0 0.0
        %4090 = vmatpush1.msra.mxu0 0.0
        %4091 = vmatprep.subr.mxu0 0.0
        %4092 = vmatpush1.msra.mxu0 0.0
        %4093 = vmatprep.subr.mxu0 0.0
        %4094 = vmatpush1.msra.mxu0 %v4056
        %4095 = vmatprep.subr.mxu0 0.0
        %4096 = vmatpush1.msra.mxu0 %v4054
        %4097 = vmatprep.subr.mxu0 0.0
        %4098 = vmatpush2.msra.mxu0 0.0
        %4099 = vmatprep.subr.mxu0 0.0
        %4100 = vmatpush2.msra.mxu0 0.0
        %4101 = vmatprep.subr.mxu0 0.0
        %4102 = vmatpush2.msra.mxu0 0.0
        %4103 = vmatprep.subr.mxu0 0.0
        %4104 = vmatpush2.msra.mxu0 0.0
        %4105 = vmatprep.subr.mxu0 0.0
        %4106 = vmatpush2.msra.mxu0 0.0
        %4107 = vmatprep.subr.mxu0 0.0
        %4108 = vmatpush2.msra.mxu0 0.0
        %4109 = vmatprep.subr.mxu0 0.0
        %4110 = vmatpush2.msra.mxu0 0.0
        %4111 = vmatprep.subr.mxu0 0.0
        %4112 = vmatpush2.msra.mxu0 0.0
        %4113 = vmatprep.subr.mxu0 0.0
        %4114 = vmatpush2.msra.mxu0 0.0
        %4115 = vmatprep.subr.mxu0 0.0
        %4116 = vmatpush2.msra.mxu0 0.0
        %4117 = vmatprep.subr.mxu0 0.0
        %4118 = vmatpush2.msra.mxu0 0.0
        %4119 = vmatprep.subr.mxu0 0.0
        %4120 = vmatpush2.msra.mxu0 0.0
        %4121 = vmatprep.subr.mxu0 0.0
        %4122 = vmatpush2.msra.mxu0 0.0
        %4123 = vmatprep.subr.mxu0 0.0
        %4124 = vmatpush2.msra.mxu0 0.0
        %4125 = vmatprep.subr.mxu0 0.0
        %4126 = vmatpush2.msra.mxu0 0.0
        %4127 = vmatprep.subr.mxu0 0.0
        %4128 = vmatpush2.msra.mxu0 0.0
        %4129 = vmatprep.mubr.f32.mxu0 0.0
        %4130 = vmatmul.mubr.f32.gmra.mxu0 %v4060
        %v4131 = vpop.f32.mrf.mxu0
        %v4132 = vadd.f32 0.0, %v4131
        %v4133 = vpop.f32.mrf.mxu0
        %4134 = vmatprep.mubr.f32.mxu0 0.0
        %4135 = vmatmul.mubr.f32.gmra.mxu0 %v4063
        %v4136 = vpop.f32.mrf.mxu0
        %v4137 = vadd.f32 0.0, %v4136
        %v4138 = vpop.f32.mrf.mxu0
        %4139 = vdwg.mxu0
        %v4141 = vsel %vm2209, %v4132, 0
        %v4144 = vsel %vm2209, %v4137, 0
        %4146 = vmatprep.subr.mxu0 0.0
        %4147 = vmatpush1.msra.mxu0 0.0
        %4148 = vmatprep.subr.mxu0 0.0
        %4149 = vmatpush1.msra.mxu0 0.0
        %4150 = vmatprep.subr.mxu0 0.0
        %4151 = vmatpush1.msra.mxu0 0.0
        %4152 = vmatprep.subr.mxu0 0.0
        %4153 = vmatpush1.msra.mxu0 0.0
        %4154 = vmatprep.subr.mxu0 0.0
        %4155 = vmatpush1.msra.mxu0 0.0
        %4156 = vmatprep.subr.mxu0 0.0
        %4157 = vmatpush1.msra.mxu0 0.0
        %4158 = vmatprep.subr.mxu0 0.0
        %4159 = vmatpush1.msra.mxu0 0.0
        %4160 = vmatprep.subr.mxu0 0.0
        %4161 = vmatpush1.msra.mxu0 0.0
        %4162 = vmatprep.subr.mxu0 0.0
        %4163 = vmatpush1.msra.mxu0 0.0
        %4164 = vmatprep.subr.mxu0 0.0
        %4165 = vmatpush1.msra.mxu0 0.0
        %4166 = vmatprep.subr.mxu0 0.0
        %4167 = vmatpush1.msra.mxu0 0.0
        %4168 = vmatprep.subr.mxu0 0.0
        %4169 = vmatpush1.msra.mxu0 0.0
        %4170 = vmatprep.subr.mxu0 0.0
        %4171 = vmatpush1.msra.mxu0 0.0
        %4172 = vmatprep.subr.mxu0 0.0
        %4173 = vmatpush1.msra.mxu0 0.0
        %4174 = vmatprep.subr.mxu0 0.0
        %4175 = vmatpush1.msra.mxu0 0.0
        %4176 = vmatprep.subr.mxu0 0.0
        %4177 = vmatpush1.msra.mxu0 %v3735
        %4178 = vmatprep.subr.mxu0 0.0
        %4179 = vmatpush2.msra.mxu0 0.0
        %4180 = vmatprep.subr.mxu0 0.0
        %4181 = vmatpush2.msra.mxu0 0.0
        %4182 = vmatprep.subr.mxu0 0.0
        %4183 = vmatpush2.msra.mxu0 0.0
        %4184 = vmatprep.subr.mxu0 0.0
        %4185 = vmatpush2.msra.mxu0 0.0
        %4186 = vmatprep.subr.mxu0 0.0
        %4187 = vmatpush2.msra.mxu0 0.0
        %4188 = vmatprep.subr.mxu0 0.0
        %4189 = vmatpush2.msra.mxu0 0.0
        %4190 = vmatprep.subr.mxu0 0.0
        %4191 = vmatpush2.msra.mxu0 0.0
        %4192 = vmatprep.subr.mxu0 0.0
        %4193 = vmatpush2.msra.mxu0 0.0
        %4194 = vmatprep.subr.mxu0 0.0
        %4195 = vmatpush2.msra.mxu0 0.0
        %4196 = vmatprep.subr.mxu0 0.0
        %4197 = vmatpush2.msra.mxu0 0.0
        %4198 = vmatprep.subr.mxu0 0.0
        %4199 = vmatpush2.msra.mxu0 0.0
        %4200 = vmatprep.subr.mxu0 0.0
        %4201 = vmatpush2.msra.mxu0 0.0
        %4202 = vmatprep.subr.mxu0 0.0
        %4203 = vmatpush2.msra.mxu0 0.0
        %4204 = vmatprep.subr.mxu0 0.0
        %4205 = vmatpush2.msra.mxu0 0.0
        %4206 = vmatprep.subr.mxu0 0.0
        %4207 = vmatpush2.msra.mxu0 0.0
        %4208 = vmatprep.subr.mxu0 0.0
        %4209 = vmatpush2.msra.mxu0 0.0
        %4210 = vmatprep.mubr.f32.mxu0 0.0
        %4211 = vmatmul.mubr.f32.gmra.mxu0 %v4141
        %v4212 = vpop.f32.mrf.mxu0
        %v4213 = vadd.f32 0.0, %v4212
        %v4214 = vpop.f32.mrf.mxu0
        %4215 = vmatprep.mubr.f32.mxu0 0.0
        %4216 = vmatmul.mubr.f32.gmra.mxu0 %v4144
        %v4217 = vpop.f32.mrf.mxu0
        %v4218 = vadd.f32 0.0, %v4217
        %v4219 = vpop.f32.mrf.mxu0
        %4220 = vdwg.mxu0
        %v4222 = vsel %vm2209, %v3930, 0
        %v4225 = vsel %vm2209, %v3935, 0
        %4227 = vmatprep.subr.mxu0 0.0
        %4228 = vmatpush1.msra.mxu0 0.0
        %4229 = vmatprep.subr.mxu0 0.0
        %4230 = vmatpush1.msra.mxu0 0.0
        %4231 = vmatprep.subr.mxu0 0.0
        %4232 = vmatpush1.msra.mxu0 0.0
        %4233 = vmatprep.subr.mxu0 0.0
        %4234 = vmatpush1.msra.mxu0 0.0
        %4235 = vmatprep.subr.mxu0 0.0
        %4236 = vmatpush1.msra.mxu0 0.0
        %4237 = vmatprep.subr.mxu0 0.0
        %4238 = vmatpush1.msra.mxu0 0.0
        %4239 = vmatprep.subr.mxu0 0.0
        %4240 = vmatpush1.msra.mxu0 0.0
        %4241 = vmatprep.subr.mxu0 0.0
        %4242 = vmatpush1.msra.mxu0 0.0
        %4243 = vmatprep.subr.mxu0 0.0
        %4244 = vmatpush1.msra.mxu0 0.0
        %4245 = vmatprep.subr.mxu0 0.0
        %4246 = vmatpush1.msra.mxu0 0.0
        %4247 = vmatprep.subr.mxu0 0.0
        %4248 = vmatpush1.msra.mxu0 0.0
        %4249 = vmatprep.subr.mxu0 0.0
        %4250 = vmatpush1.msra.mxu0 0.0
        %4251 = vmatprep.subr.mxu0 0.0
        %4252 = vmatpush1.msra.mxu0 0.0
        %4253 = vmatprep.subr.mxu0 0.0
        %4254 = vmatpush1.msra.mxu0 0.0
        %4255 = vmatprep.subr.mxu0 0.0
        %4256 = vmatpush1.msra.mxu0 0.0
        %4257 = vmatprep.subr.mxu0 0.0
        %4258 = vmatpush1.msra.mxu0 %v3734
        %4259 = vmatprep.subr.mxu0 0.0
        %4260 = vmatpush2.msra.mxu0 0.0
        %4261 = vmatprep.subr.mxu0 0.0
        %4262 = vmatpush2.msra.mxu0 0.0
        %4263 = vmatprep.subr.mxu0 0.0
        %4264 = vmatpush2.msra.mxu0 0.0
        %4265 = vmatprep.subr.mxu0 0.0
        %4266 = vmatpush2.msra.mxu0 0.0
        %4267 = vmatprep.subr.mxu0 0.0
        %4268 = vmatpush2.msra.mxu0 0.0
        %4269 = vmatprep.subr.mxu0 0.0
        %4270 = vmatpush2.msra.mxu0 0.0
        %4271 = vmatprep.subr.mxu0 0.0
        %4272 = vmatpush2.msra.mxu0 0.0
        %4273 = vmatprep.subr.mxu0 0.0
        %4274 = vmatpush2.msra.mxu0 0.0
        %4275 = vmatprep.subr.mxu0 0.0
        %4276 = vmatpush2.msra.mxu0 0.0
        %4277 = vmatprep.subr.mxu0 0.0
        %4278 = vmatpush2.msra.mxu0 0.0
        %4279 = vmatprep.subr.mxu0 0.0
        %4280 = vmatpush2.msra.mxu0 0.0
        %4281 = vmatprep.subr.mxu0 0.0
        %4282 = vmatpush2.msra.mxu0 0.0
        %4283 = vmatprep.subr.mxu0 0.0
        %4284 = vmatpush2.msra.mxu0 0.0
        %4285 = vmatprep.subr.mxu0 0.0
        %4286 = vmatpush2.msra.mxu0 0.0
        %4287 = vmatprep.subr.mxu0 0.0
        %4288 = vmatpush2.msra.mxu0 0.0
        %4289 = vmatprep.subr.mxu0 0.0
        %4290 = vmatpush2.msra.mxu0 0.0
        %4291 = vmatprep.mubr.f32.mxu0 0.0
        %4292 = vmatmul.mubr.f32.gmra.mxu0 %v4222
        %v4293 = vpop.f32.mrf.mxu0
        %v4294 = vadd.f32 %v4213, %v4293
        %v4295 = vpop.f32.mrf.mxu0
        %4296 = vmatprep.mubr.f32.mxu0 0.0
        %4297 = vmatmul.mubr.f32.gmra.mxu0 %v4225
        %v4298 = vpop.f32.mrf.mxu0
        %v4299 = vadd.f32 %v4218, %v4298
        %v4300 = vpop.f32.mrf.mxu0
        %4301 = vdwg.mxu0
        %4302 = vrot.lane.b32.xlu0 %v3726, 112
        %v4303 = vpop.permute.xlu0 %4302
        %4304 = vrot.lane.b32.xlu0 %v3731, 112
        %v4305 = vpop.permute.xlu0 %4304
        %4306 = vrot.lane.b32.xlu0 %v3726, 80
        %v4307 = vpop.permute.xlu0 %4306
        %4308 = vrot.lane.b32.xlu0 %v3731, 80
        %v4309 = vpop.permute.xlu0 %4308
        %v4310 = vsel %vm2209, %v4303, 0
        %v4312 = vsel %vm2209, %v4305, 0
        %v4314 = vsel %vm2209, %v4307, 0
        %v4316 = vsel %vm2209, %v4309, 0
        %4318 = vmatprep.subr.mxu0 0.0
        %4319 = vmatpush1.xpose.msra.mxu0 0.0
        %4320 = vmatprep.subr.mxu0 0.0
        %4321 = vmatpush1.xpose.msra.mxu0 0.0
        %4322 = vmatprep.subr.mxu0 0.0
        %4323 = vmatpush1.xpose.msra.mxu0 0.0
        %4324 = vmatprep.subr.mxu0 0.0
        %4325 = vmatpush1.xpose.msra.mxu0 0.0
        %4326 = vmatprep.subr.mxu0 0.0
        %4327 = vmatpush1.xpose.msra.mxu0 0.0
        %4328 = vmatprep.subr.mxu0 0.0
        %4329 = vmatpush1.xpose.msra.mxu0 0.0
        %4330 = vmatprep.subr.mxu0 0.0
        %4331 = vmatpush1.xpose.msra.mxu0 0.0
        %4332 = vmatprep.subr.mxu0 0.0
        %4333 = vmatpush1.xpose.msra.mxu0 0.0
        %4334 = vmatprep.subr.mxu0 0.0
        %4335 = vmatpush1.xpose.msra.mxu0 0.0
        %4336 = vmatprep.subr.mxu0 0.0
        %4337 = vmatpush1.xpose.msra.mxu0 0.0
        %4338 = vmatprep.subr.mxu0 0.0
        %4339 = vmatpush1.xpose.msra.mxu0 0.0
        %4340 = vmatprep.subr.mxu0 0.0
        %4341 = vmatpush1.xpose.msra.mxu0 0.0
        %4342 = vmatprep.subr.mxu0 0.0
        %4343 = vmatpush1.xpose.msra.mxu0 0.0
        %4344 = vmatprep.subr.mxu0 0.0
        %4345 = vmatpush1.xpose.msra.mxu0 0.0
        %4346 = vmatprep.subr.mxu0 0.0
        %4347 = vmatpush1.xpose.msra.mxu0 %v4316
        %4348 = vmatprep.subr.mxu0 0.0
        %4349 = vmatpush1.xpose.msra.mxu0 %v4314
        %4350 = vmatprep.subr.mxu0 0.0
        %4351 = vmatpush2.xpose.msra.mxu0 0.0
        %4352 = vmatprep.subr.mxu0 0.0
        %4353 = vmatpush2.xpose.msra.mxu0 0.0
        %4354 = vmatprep.subr.mxu0 0.0
        %4355 = vmatpush2.xpose.msra.mxu0 0.0
        %4356 = vmatprep.subr.mxu0 0.0
        %4357 = vmatpush2.xpose.msra.mxu0 0.0
        %4358 = vmatprep.subr.mxu0 0.0
        %4359 = vmatpush2.xpose.msra.mxu0 0.0
        %4360 = vmatprep.subr.mxu0 0.0
        %4361 = vmatpush2.xpose.msra.mxu0 0.0
        %4362 = vmatprep.subr.mxu0 0.0
        %4363 = vmatpush2.xpose.msra.mxu0 0.0
        %4364 = vmatprep.subr.mxu0 0.0
        %4365 = vmatpush2.xpose.msra.mxu0 0.0
        %4366 = vmatprep.subr.mxu0 0.0
        %4367 = vmatpush2.xpose.msra.mxu0 0.0
        %4368 = vmatprep.subr.mxu0 0.0
        %4369 = vmatpush2.xpose.msra.mxu0 0.0
        %4370 = vmatprep.subr.mxu0 0.0
        %4371 = vmatpush2.xpose.msra.mxu0 0.0
        %4372 = vmatprep.subr.mxu0 0.0
        %4373 = vmatpush2.xpose.msra.mxu0 0.0
        %4374 = vmatprep.subr.mxu0 0.0
        %4375 = vmatpush2.xpose.msra.mxu0 0.0
        %4376 = vmatprep.subr.mxu0 0.0
        %4377 = vmatpush2.xpose.msra.mxu0 0.0
        %4378 = vmatprep.subr.mxu0 0.0
        %4379 = vmatpush2.xpose.msra.mxu0 0.0
        %4380 = vmatprep.subr.mxu0 0.0
        %4381 = vmatpush2.xpose.msra.mxu0 0.0
        %4382 = vmatprep.mubr.f32.mxu0 0.0
        %4383 = vmatmul.mubr.f32.gmra.mxu0 %v4310
        %v4384 = vpop.f32.mrf.mxu0
        %v4385 = vadd.f32 0.0, %v4384
        %v4386 = vpop.f32.mrf.mxu0
        %4387 = vmatprep.mubr.f32.mxu0 0.0
        %4388 = vmatmul.mubr.f32.gmra.mxu0 %v4312
        %v4389 = vpop.f32.mrf.mxu0
        %v4390 = vadd.f32 0.0, %v4389
        %v4391 = vpop.f32.mrf.mxu0
        %4392 = vdwg.mxu0
        %v4393 = vmul.f32 %v4385, 0.35355338
        %v4394 = vmul.f32 %v4390, 0.35355338
        %v4395 = vsel %vm2295, %v4393, -inf
        %4396 = vmax.xlane.f32.xlu0 %v4395
        %v4397 = vpop.xlane.xlu0 %4396
        %v4398 = vsel %vm2295, %v4394, -inf
        %4399 = vmax.xlane.f32.xlu0 %v4398
        %v4400 = vpop.xlane.xlu0 %4399
        %v4401 = vsub.f32 %v4393, %v4397
        %v4402 = vsub.f32 %v4394, %v4400
        %v4403 = vmul.f32 %v4401, 1.442695
        %v4404 = vpow.pop %v4403
        %v4405 = vmul.f32 %v4402, 1.442695
        %v4406 = vpow.pop %v4405
        %v4407 = vsel %vm2295, %v4404, 0.0
        %4408 = vadd.xlane.f32.xlu0 %v4407
        %v4409 = vpop.xlane.xlu0 %4408
        %v4410 = vsel %vm2295, %v4406, 0.0
        %4411 = vadd.xlane.f32.xlu0 %v4410
        %v4412 = vpop.xlane.xlu0 %4411
        %v4413 = vrcp.pop %v4409
        %v4414 = vrcp.pop %v4412
        %v4415 = vmul.f32 %v4404, %v4413
        %v4416 = vmul.f32 %v4406, %v4414
        %4417 = vrot.lane.b32.xlu0 %v3726, 48
        %v4418 = vpop.permute.xlu0 %4417
        %4419 = vrot.lane.b32.xlu0 %v3731, 48
        %v4420 = vpop.permute.xlu0 %4419
        %v4424 = vsel %vm2295, %v4415, 0
        %v4427 = vsel %vm2295, %v4416, 0
        %4429 = vmatprep.subr.mxu0 0.0
        %4430 = vmatpush1.msra.mxu0 0.0
        %4431 = vmatprep.subr.mxu0 0.0
        %4432 = vmatpush1.msra.mxu0 0.0
        %4433 = vmatprep.subr.mxu0 0.0
        %4434 = vmatpush1.msra.mxu0 0.0
        %4435 = vmatprep.subr.mxu0 0.0
        %4436 = vmatpush1.msra.mxu0 0.0
        %4437 = vmatprep.subr.mxu0 0.0
        %4438 = vmatpush1.msra.mxu0 0.0
        %4439 = vmatprep.subr.mxu0 0.0
        %4440 = vmatpush1.msra.mxu0 0.0
        %4441 = vmatprep.subr.mxu0 0.0
        %4442 = vmatpush1.msra.mxu0 0.0
        %4443 = vmatprep.subr.mxu0 0.0
        %4444 = vmatpush1.msra.mxu0 0.0
        %4445 = vmatprep.subr.mxu0 0.0
        %4446 = vmatpush1.msra.mxu0 0.0
        %4447 = vmatprep.subr.mxu0 0.0
        %4448 = vmatpush1.msra.mxu0 0.0
        %4449 = vmatprep.subr.mxu0 0.0
        %4450 = vmatpush1.msra.mxu0 0.0
        %4451 = vmatprep.subr.mxu0 0.0
        %4452 = vmatpush1.msra.mxu0 0.0
        %4453 = vmatprep.subr.mxu0 0.0
        %4454 = vmatpush1.msra.mxu0 0.0
        %4455 = vmatprep.subr.mxu0 0.0
        %4456 = vmatpush1.msra.mxu0 0.0
        %4457 = vmatprep.subr.mxu0 0.0
        %4458 = vmatpush1.msra.mxu0 %v4420
        %4459 = vmatprep.subr.mxu0 0.0
        %4460 = vmatpush1.msra.mxu0 %v4418
        %4461 = vmatprep.subr.mxu0 0.0
        %4462 = vmatpush2.msra.mxu0 0.0
        %4463 = vmatprep.subr.mxu0 0.0
        %4464 = vmatpush2.msra.mxu0 0.0
        %4465 = vmatprep.subr.mxu0 0.0
        %4466 = vmatpush2.msra.mxu0 0.0
        %4467 = vmatprep.subr.mxu0 0.0
        %4468 = vmatpush2.msra.mxu0 0.0
        %4469 = vmatprep.subr.mxu0 0.0
        %4470 = vmatpush2.msra.mxu0 0.0
        %4471 = vmatprep.subr.mxu0 0.0
        %4472 = vmatpush2.msra.mxu0 0.0
        %4473 = vmatprep.subr.mxu0 0.0
        %4474 = vmatpush2.msra.mxu0 0.0
        %4475 = vmatprep.subr.mxu0 0.0
        %4476 = vmatpush2.msra.mxu0 0.0
        %4477 = vmatprep.subr.mxu0 0.0
        %4478 = vmatpush2.msra.mxu0 0.0
        %4479 = vmatprep.subr.mxu0 0.0
        %4480 = vmatpush2.msra.mxu0 0.0
        %4481 = vmatprep.subr.mxu0 0.0
        %4482 = vmatpush2.msra.mxu0 0.0
        %4483 = vmatprep.subr.mxu0 0.0
        %4484 = vmatpush2.msra.mxu0 0.0
        %4485 = vmatprep.subr.mxu0 0.0
        %4486 = vmatpush2.msra.mxu0 0.0
        %4487 = vmatprep.subr.mxu0 0.0
        %4488 = vmatpush2.msra.mxu0 0.0
        %4489 = vmatprep.subr.mxu0 0.0
        %4490 = vmatpush2.msra.mxu0 0.0
        %4491 = vmatprep.subr.mxu0 0.0
        %4492 = vmatpush2.msra.mxu0 0.0
        %4493 = vmatprep.mubr.f32.mxu0 0.0
        %4494 = vmatmul.mubr.f32.gmra.mxu0 %v4424
        %v4495 = vpop.f32.mrf.mxu0
        %v4496 = vadd.f32 0.0, %v4495
        %v4497 = vpop.f32.mrf.mxu0
        %4498 = vmatprep.mubr.f32.mxu0 0.0
        %4499 = vmatmul.mubr.f32.gmra.mxu0 %v4427
        %v4500 = vpop.f32.mrf.mxu0
        %v4501 = vadd.f32 0.0, %v4500
        %v4502 = vpop.f32.mrf.mxu0
        %4503 = vdwg.mxu0
        %v4505 = vsel %vm2209, %v4496, 0
        %v4508 = vsel %vm2209, %v4501, 0
        %4510 = vmatprep.subr.mxu0 0.0
        %4511 = vmatpush1.msra.mxu0 0.0
        %4512 = vmatprep.subr.mxu0 0.0
        %4513 = vmatpush1.msra.mxu0 0.0
        %4514 = vmatprep.subr.mxu0 0.0
        %4515 = vmatpush1.msra.mxu0 0.0
        %4516 = vmatprep.subr.mxu0 0.0
        %4517 = vmatpush1.msra.mxu0 0.0
        %4518 = vmatprep.subr.mxu0 0.0
        %4519 = vmatpush1.msra.mxu0 0.0
        %4520 = vmatprep.subr.mxu0 0.0
        %4521 = vmatpush1.msra.mxu0 0.0
        %4522 = vmatprep.subr.mxu0 0.0
        %4523 = vmatpush1.msra.mxu0 0.0
        %4524 = vmatprep.subr.mxu0 0.0
        %4525 = vmatpush1.msra.mxu0 0.0
        %4526 = vmatprep.subr.mxu0 0.0
        %4527 = vmatpush1.msra.mxu0 0.0
        %4528 = vmatprep.subr.mxu0 0.0
        %4529 = vmatpush1.msra.mxu0 0.0
        %4530 = vmatprep.subr.mxu0 0.0
        %4531 = vmatpush1.msra.mxu0 0.0
        %4532 = vmatprep.subr.mxu0 0.0
        %4533 = vmatpush1.msra.mxu0 0.0
        %4534 = vmatprep.subr.mxu0 0.0
        %4535 = vmatpush1.msra.mxu0 0.0
        %4536 = vmatprep.subr.mxu0 0.0
        %4537 = vmatpush1.msra.mxu0 0.0
        %4538 = vmatprep.subr.mxu0 0.0
        %4539 = vmatpush1.msra.mxu0 0.0
        %4540 = vmatprep.subr.mxu0 0.0
        %4541 = vmatpush1.msra.mxu0 %v3736
        %4542 = vmatprep.subr.mxu0 0.0
        %4543 = vmatpush2.msra.mxu0 0.0
        %4544 = vmatprep.subr.mxu0 0.0
        %4545 = vmatpush2.msra.mxu0 0.0
        %4546 = vmatprep.subr.mxu0 0.0
        %4547 = vmatpush2.msra.mxu0 0.0
        %4548 = vmatprep.subr.mxu0 0.0
        %4549 = vmatpush2.msra.mxu0 0.0
        %4550 = vmatprep.subr.mxu0 0.0
        %4551 = vmatpush2.msra.mxu0 0.0
        %4552 = vmatprep.subr.mxu0 0.0
        %4553 = vmatpush2.msra.mxu0 0.0
        %4554 = vmatprep.subr.mxu0 0.0
        %4555 = vmatpush2.msra.mxu0 0.0
        %4556 = vmatprep.subr.mxu0 0.0
        %4557 = vmatpush2.msra.mxu0 0.0
        %4558 = vmatprep.subr.mxu0 0.0
        %4559 = vmatpush2.msra.mxu0 0.0
        %4560 = vmatprep.subr.mxu0 0.0
        %4561 = vmatpush2.msra.mxu0 0.0
        %4562 = vmatprep.subr.mxu0 0.0
        %4563 = vmatpush2.msra.mxu0 0.0
        %4564 = vmatprep.subr.mxu0 0.0
        %4565 = vmatpush2.msra.mxu0 0.0
        %4566 = vmatprep.subr.mxu0 0.0
        %4567 = vmatpush2.msra.mxu0 0.0
        %4568 = vmatprep.subr.mxu0 0.0
        %4569 = vmatpush2.msra.mxu0 0.0
        %4570 = vmatprep.subr.mxu0 0.0
        %4571 = vmatpush2.msra.mxu0 0.0
        %4572 = vmatprep.subr.mxu0 0.0
        %4573 = vmatpush2.msra.mxu0 0.0
        %4574 = vmatprep.mubr.f32.mxu0 0.0
        %4575 = vmatmul.mubr.f32.gmra.mxu0 %v4505
        %v4576 = vpop.f32.mrf.mxu0
        %v4577 = vadd.f32 0.0, %v4576
        %v4578 = vpop.f32.mrf.mxu0
        %4579 = vmatprep.mubr.f32.mxu0 0.0
        %4580 = vmatmul.mubr.f32.gmra.mxu0 %v4508
        %v4581 = vpop.f32.mrf.mxu0
        %v4582 = vadd.f32 0.0, %v4581
        %v4583 = vpop.f32.mrf.mxu0
        %4584 = vdwg.mxu0
        %v4585 = vadd.f32 %v4294, %v4577
        %v4586 = vadd.f32 %v4299, %v4582
        %4587 = vrot.lane.b32.xlu0 %v3726, 104
        %v4588 = vpop.permute.xlu0 %4587
        %4589 = vrot.lane.b32.xlu0 %v3731, 104
        %v4590 = vpop.permute.xlu0 %4589
        %4591 = vrot.lane.b32.xlu0 %v3726, 72
        %v4592 = vpop.permute.xlu0 %4591
        %4593 = vrot.lane.b32.xlu0 %v3731, 72
        %v4594 = vpop.permute.xlu0 %4593
        %v4595 = vsel %vm2209, %v4588, 0
        %v4597 = vsel %vm2209, %v4590, 0
        %v4599 = vsel %vm2209, %v4592, 0
        %v4601 = vsel %vm2209, %v4594, 0
        %4603 = vmatprep.subr.mxu0 0.0
        %4604 = vmatpush1.xpose.msra.mxu0 0.0
        %4605 = vmatprep.subr.mxu0 0.0
        %4606 = vmatpush1.xpose.msra.mxu0 0.0
        %4607 = vmatprep.subr.mxu0 0.0
        %4608 = vmatpush1.xpose.msra.mxu0 0.0
        %4609 = vmatprep.subr.mxu0 0.0
        %4610 = vmatpush1.xpose.msra.mxu0 0.0
        %4611 = vmatprep.subr.mxu0 0.0
        %4612 = vmatpush1.xpose.msra.mxu0 0.0
        %4613 = vmatprep.subr.mxu0 0.0
        %4614 = vmatpush1.xpose.msra.mxu0 0.0
        %4615 = vmatprep.subr.mxu0 0.0
        %4616 = vmatpush1.xpose.msra.mxu0 0.0
        %4617 = vmatprep.subr.mxu0 0.0
        %4618 = vmatpush1.xpose.msra.mxu0 0.0
        %4619 = vmatprep.subr.mxu0 0.0
        %4620 = vmatpush1.xpose.msra.mxu0 0.0
        %4621 = vmatprep.subr.mxu0 0.0
        %4622 = vmatpush1.xpose.msra.mxu0 0.0
        %4623 = vmatprep.subr.mxu0 0.0
        %4624 = vmatpush1.xpose.msra.mxu0 0.0
        %4625 = vmatprep.subr.mxu0 0.0
        %4626 = vmatpush1.xpose.msra.mxu0 0.0
        %4627 = vmatprep.subr.mxu0 0.0
        %4628 = vmatpush1.xpose.msra.mxu0 0.0
        %4629 = vmatprep.subr.mxu0 0.0
        %4630 = vmatpush1.xpose.msra.mxu0 0.0
        %4631 = vmatprep.subr.mxu0 0.0
        %4632 = vmatpush1.xpose.msra.mxu0 %v4601
        %4633 = vmatprep.subr.mxu0 0.0
        %4634 = vmatpush1.xpose.msra.mxu0 %v4599
        %4635 = vmatprep.subr.mxu0 0.0
        %4636 = vmatpush2.xpose.msra.mxu0 0.0
        %4637 = vmatprep.subr.mxu0 0.0
        %4638 = vmatpush2.xpose.msra.mxu0 0.0
        %4639 = vmatprep.subr.mxu0 0.0
        %4640 = vmatpush2.xpose.msra.mxu0 0.0
        %4641 = vmatprep.subr.mxu0 0.0
        %4642 = vmatpush2.xpose.msra.mxu0 0.0
        %4643 = vmatprep.subr.mxu0 0.0
        %4644 = vmatpush2.xpose.msra.mxu0 0.0
        %4645 = vmatprep.subr.mxu0 0.0
        %4646 = vmatpush2.xpose.msra.mxu0 0.0
        %4647 = vmatprep.subr.mxu0 0.0
        %4648 = vmatpush2.xpose.msra.mxu0 0.0
        %4649 = vmatprep.subr.mxu0 0.0
        %4650 = vmatpush2.xpose.msra.mxu0 0.0
        %4651 = vmatprep.subr.mxu0 0.0
        %4652 = vmatpush2.xpose.msra.mxu0 0.0
        %4653 = vmatprep.subr.mxu0 0.0
        %4654 = vmatpush2.xpose.msra.mxu0 0.0
        %4655 = vmatprep.subr.mxu0 0.0
        %4656 = vmatpush2.xpose.msra.mxu0 0.0
        %4657 = vmatprep.subr.mxu0 0.0
        %4658 = vmatpush2.xpose.msra.mxu0 0.0
        %4659 = vmatprep.subr.mxu0 0.0
        %4660 = vmatpush2.xpose.msra.mxu0 0.0
        %4661 = vmatprep.subr.mxu0 0.0
        %4662 = vmatpush2.xpose.msra.mxu0 0.0
        %4663 = vmatprep.subr.mxu0 0.0
        %4664 = vmatpush2.xpose.msra.mxu0 0.0
        %4665 = vmatprep.subr.mxu0 0.0
        %4666 = vmatpush2.xpose.msra.mxu0 0.0
        %4667 = vmatprep.mubr.f32.mxu0 0.0
        %4668 = vmatmul.mubr.f32.gmra.mxu0 %v4595
        %v4669 = vpop.f32.mrf.mxu0
        %v4670 = vadd.f32 0.0, %v4669
        %v4671 = vpop.f32.mrf.mxu0
        %4672 = vmatprep.mubr.f32.mxu0 0.0
        %4673 = vmatmul.mubr.f32.gmra.mxu0 %v4597
        %v4674 = vpop.f32.mrf.mxu0
        %v4675 = vadd.f32 0.0, %v4674
        %v4676 = vpop.f32.mrf.mxu0
        %4677 = vdwg.mxu0
        %v4678 = vmul.f32 %v4670, 0.35355338
        %v4679 = vmul.f32 %v4675, 0.35355338
        %v4680 = vsel %vm2295, %v4678, -inf
        %4681 = vmax.xlane.f32.xlu0 %v4680
        %v4682 = vpop.xlane.xlu0 %4681
        %v4683 = vsel %vm2295, %v4679, -inf
        %4684 = vmax.xlane.f32.xlu0 %v4683
        %v4685 = vpop.xlane.xlu0 %4684
        %v4686 = vsub.f32 %v4678, %v4682
        %v4687 = vsub.f32 %v4679, %v4685
        %v4688 = vmul.f32 %v4686, 1.442695
        %v4689 = vpow.pop %v4688
        %v4690 = vmul.f32 %v4687, 1.442695
        %v4691 = vpow.pop %v4690
        %v4692 = vsel %vm2295, %v4689, 0.0
        %4693 = vadd.xlane.f32.xlu0 %v4692
        %v4694 = vpop.xlane.xlu0 %4693
        %v4695 = vsel %vm2295, %v4691, 0.0
        %4696 = vadd.xlane.f32.xlu0 %v4695
        %v4697 = vpop.xlane.xlu0 %4696
        %v4698 = vrcp.pop %v4694
        %v4699 = vrcp.pop %v4697
        %v4700 = vmul.f32 %v4689, %v4698
        %v4701 = vmul.f32 %v4691, %v4699
        %4702 = vrot.lane.b32.xlu0 %v3726, 40
        %v4703 = vpop.permute.xlu0 %4702
        %4704 = vrot.lane.b32.xlu0 %v3731, 40
        %v4705 = vpop.permute.xlu0 %4704
        %v4709 = vsel %vm2295, %v4700, 0
        %v4712 = vsel %vm2295, %v4701, 0
        %4714 = vmatprep.subr.mxu0 0.0
        %4715 = vmatpush1.msra.mxu0 0.0
        %4716 = vmatprep.subr.mxu0 0.0
        %4717 = vmatpush1.msra.mxu0 0.0
        %4718 = vmatprep.subr.mxu0 0.0
        %4719 = vmatpush1.msra.mxu0 0.0
        %4720 = vmatprep.subr.mxu0 0.0
        %4721 = vmatpush1.msra.mxu0 0.0
        %4722 = vmatprep.subr.mxu0 0.0
        %4723 = vmatpush1.msra.mxu0 0.0
        %4724 = vmatprep.subr.mxu0 0.0
        %4725 = vmatpush1.msra.mxu0 0.0
        %4726 = vmatprep.subr.mxu0 0.0
        %4727 = vmatpush1.msra.mxu0 0.0
        %4728 = vmatprep.subr.mxu0 0.0
        %4729 = vmatpush1.msra.mxu0 0.0
        %4730 = vmatprep.subr.mxu0 0.0
        %4731 = vmatpush1.msra.mxu0 0.0
        %4732 = vmatprep.subr.mxu0 0.0
        %4733 = vmatpush1.msra.mxu0 0.0
        %4734 = vmatprep.subr.mxu0 0.0
        %4735 = vmatpush1.msra.mxu0 0.0
        %4736 = vmatprep.subr.mxu0 0.0
        %4737 = vmatpush1.msra.mxu0 0.0
        %4738 = vmatprep.subr.mxu0 0.0
        %4739 = vmatpush1.msra.mxu0 0.0
        %4740 = vmatprep.subr.mxu0 0.0
        %4741 = vmatpush1.msra.mxu0 0.0
        %4742 = vmatprep.subr.mxu0 0.0
        %4743 = vmatpush1.msra.mxu0 %v4705
        %4744 = vmatprep.subr.mxu0 0.0
        %4745 = vmatpush1.msra.mxu0 %v4703
        %4746 = vmatprep.subr.mxu0 0.0
        %4747 = vmatpush2.msra.mxu0 0.0
        %4748 = vmatprep.subr.mxu0 0.0
        %4749 = vmatpush2.msra.mxu0 0.0
        %4750 = vmatprep.subr.mxu0 0.0
        %4751 = vmatpush2.msra.mxu0 0.0
        %4752 = vmatprep.subr.mxu0 0.0
        %4753 = vmatpush2.msra.mxu0 0.0
        %4754 = vmatprep.subr.mxu0 0.0
        %4755 = vmatpush2.msra.mxu0 0.0
        %4756 = vmatprep.subr.mxu0 0.0
        %4757 = vmatpush2.msra.mxu0 0.0
        %4758 = vmatprep.subr.mxu0 0.0
        %4759 = vmatpush2.msra.mxu0 0.0
        %4760 = vmatprep.subr.mxu0 0.0
        %4761 = vmatpush2.msra.mxu0 0.0
        %4762 = vmatprep.subr.mxu0 0.0
        %4763 = vmatpush2.msra.mxu0 0.0
        %4764 = vmatprep.subr.mxu0 0.0
        %4765 = vmatpush2.msra.mxu0 0.0
        %4766 = vmatprep.subr.mxu0 0.0
        %4767 = vmatpush2.msra.mxu0 0.0
        %4768 = vmatprep.subr.mxu0 0.0
        %4769 = vmatpush2.msra.mxu0 0.0
        %4770 = vmatprep.subr.mxu0 0.0
        %4771 = vmatpush2.msra.mxu0 0.0
        %4772 = vmatprep.subr.mxu0 0.0
        %4773 = vmatpush2.msra.mxu0 0.0
        %4774 = vmatprep.subr.mxu0 0.0
        %4775 = vmatpush2.msra.mxu0 0.0
        %4776 = vmatprep.subr.mxu0 0.0
        %4777 = vmatpush2.msra.mxu0 0.0
        %4778 = vmatprep.mubr.f32.mxu0 0.0
        %4779 = vmatmul.mubr.f32.gmra.mxu0 %v4709
        %v4780 = vpop.f32.mrf.mxu0
        %v4781 = vadd.f32 0.0, %v4780
        %v4782 = vpop.f32.mrf.mxu0
        %4783 = vmatprep.mubr.f32.mxu0 0.0
        %4784 = vmatmul.mubr.f32.gmra.mxu0 %v4712
        %v4785 = vpop.f32.mrf.mxu0
        %v4786 = vadd.f32 0.0, %v4785
        %v4787 = vpop.f32.mrf.mxu0
        %4788 = vdwg.mxu0
        %v4790 = vsel %vm2209, %v4781, 0
        %v4793 = vsel %vm2209, %v4786, 0
        %4795 = vmatprep.subr.mxu0 0.0
        %4796 = vmatpush1.msra.mxu0 0.0
        %4797 = vmatprep.subr.mxu0 0.0
        %4798 = vmatpush1.msra.mxu0 0.0
        %4799 = vmatprep.subr.mxu0 0.0
        %4800 = vmatpush1.msra.mxu0 0.0
        %4801 = vmatprep.subr.mxu0 0.0
        %4802 = vmatpush1.msra.mxu0 0.0
        %4803 = vmatprep.subr.mxu0 0.0
        %4804 = vmatpush1.msra.mxu0 0.0
        %4805 = vmatprep.subr.mxu0 0.0
        %4806 = vmatpush1.msra.mxu0 0.0
        %4807 = vmatprep.subr.mxu0 0.0
        %4808 = vmatpush1.msra.mxu0 0.0
        %4809 = vmatprep.subr.mxu0 0.0
        %4810 = vmatpush1.msra.mxu0 0.0
        %4811 = vmatprep.subr.mxu0 0.0
        %4812 = vmatpush1.msra.mxu0 0.0
        %4813 = vmatprep.subr.mxu0 0.0
        %4814 = vmatpush1.msra.mxu0 0.0
        %4815 = vmatprep.subr.mxu0 0.0
        %4816 = vmatpush1.msra.mxu0 0.0
        %4817 = vmatprep.subr.mxu0 0.0
        %4818 = vmatpush1.msra.mxu0 0.0
        %4819 = vmatprep.subr.mxu0 0.0
        %4820 = vmatpush1.msra.mxu0 0.0
        %4821 = vmatprep.subr.mxu0 0.0
        %4822 = vmatpush1.msra.mxu0 0.0
        %4823 = vmatprep.subr.mxu0 0.0
        %4824 = vmatpush1.msra.mxu0 0.0
        %4825 = vmatprep.subr.mxu0 0.0
        %4826 = vmatpush1.msra.mxu0 %v3737
        %4827 = vmatprep.subr.mxu0 0.0
        %4828 = vmatpush2.msra.mxu0 0.0
        %4829 = vmatprep.subr.mxu0 0.0
        %4830 = vmatpush2.msra.mxu0 0.0
        %4831 = vmatprep.subr.mxu0 0.0
        %4832 = vmatpush2.msra.mxu0 0.0
        %4833 = vmatprep.subr.mxu0 0.0
        %4834 = vmatpush2.msra.mxu0 0.0
        %4835 = vmatprep.subr.mxu0 0.0
        %4836 = vmatpush2.msra.mxu0 0.0
        %4837 = vmatprep.subr.mxu0 0.0
        %4838 = vmatpush2.msra.mxu0 0.0
        %4839 = vmatprep.subr.mxu0 0.0
        %4840 = vmatpush2.msra.mxu0 0.0
        %4841 = vmatprep.subr.mxu0 0.0
        %4842 = vmatpush2.msra.mxu0 0.0
        %4843 = vmatprep.subr.mxu0 0.0
        %4844 = vmatpush2.msra.mxu0 0.0
        %4845 = vmatprep.subr.mxu0 0.0
        %4846 = vmatpush2.msra.mxu0 0.0
        %4847 = vmatprep.subr.mxu0 0.0
        %4848 = vmatpush2.msra.mxu0 0.0
        %4849 = vmatprep.subr.mxu0 0.0
        %4850 = vmatpush2.msra.mxu0 0.0
        %4851 = vmatprep.subr.mxu0 0.0
        %4852 = vmatpush2.msra.mxu0 0.0
        %4853 = vmatprep.subr.mxu0 0.0
        %4854 = vmatpush2.msra.mxu0 0.0
        %4855 = vmatprep.subr.mxu0 0.0
        %4856 = vmatpush2.msra.mxu0 0.0
        %4857 = vmatprep.subr.mxu0 0.0
        %4858 = vmatpush2.msra.mxu0 0.0
        %4859 = vmatprep.mubr.f32.mxu0 0.0
        %4860 = vmatmul.mubr.f32.gmra.mxu0 %v4790
        %v4861 = vpop.f32.mrf.mxu0
        %v4862 = vadd.f32 0.0, %v4861
        %v4863 = vpop.f32.mrf.mxu0
        %4864 = vmatprep.mubr.f32.mxu0 0.0
        %4865 = vmatmul.mubr.f32.gmra.mxu0 %v4793
        %v4866 = vpop.f32.mrf.mxu0
        %v4867 = vadd.f32 0.0, %v4866
        %v4868 = vpop.f32.mrf.mxu0
        %4869 = vdwg.mxu0
        %v4870 = vadd.f32 %v4585, %v4862
        %v4871 = vadd.f32 %v4586, %v4867
        %v4872 = vadd.f32 %v3596, %v4870
        %v4873 = vadd.f32 %v3597, %v4871
        %v4874 = vld [vmem:[%s43] sm:$0x1]
        %v4876 = vlaneseq
        %v4877 = vshrl.u32 %v4876, 7
        %v4878 = vsub.s32 0, %v4877
        %v4879 = vrot.slane %v4874, %v4878
        %v4881 = vadd.f32 %v4872, %v4879
        %v4882 = vadd.f32 %v4873, %v4879
        %v4883 = vld [vmem:[%s45] sm:$0x1]
        %v4884 = vld [vmem:[%s47] sm:$0x1]
        %v4885 = vsel %vm2063, %v4881, 0.0
        %4886 = vadd.xlane.f32.xlu0 %v4885
        %v4887 = vpop.xlane.xlu0 %4886
        %v4888 = vsel %vm2063, %v4882, 0.0
        %4889 = vadd.xlane.f32.xlu0 %v4888
        %v4890 = vpop.xlane.xlu0 %4889
        %v4891 = vmul.f32 %v4887, %v2070
        %v4892 = vmul.f32 %v4890, %v2070
        %v4893 = vsub.f32 %v4881, %v4891
        %v4894 = vsub.f32 %v4882, %v4892
        %v4895 = vmul.f32 %v4893, %v4893
        %v4896 = vmul.f32 %v4894, %v4894
        %v4897 = vsel %vm2063, %v4895, 0.0
        %4898 = vadd.xlane.f32.xlu0 %v4897
        %v4899 = vpop.xlane.xlu0 %4898
        %v4900 = vsel %vm2063, %v4896, 0.0
        %4901 = vadd.xlane.f32.xlu0 %v4900
        %v4902 = vpop.xlane.xlu0 %4901
        %v4903 = vmul.f32 %v4899, %v2070
        %v4904 = vmul.f32 %v4902, %v2070
        %v4905 = vadd.f32 %v4903, 1e-05
        %v4906 = vadd.f32 %v4904, 1e-05
        %v4907 = vrsqrt.pop %v4905
        %v4908 = vrsqrt.pop %v4906
        %v4909 = vmul.f32 %v4893, %v4907
        %v4910 = vmul.f32 %v4894, %v4908
        %v4912 = vlaneseq
        %v4913 = vshrl.u32 %v4912, 7
        %v4914 = vsub.s32 0, %v4913
        %v4915 = vrot.slane %v4883, %v4914
        %v4917 = vmul.f32 %v4909, %v4915
        %v4918 = vmul.f32 %v4910, %v4915
        %v4920 = vlaneseq
        %v4921 = vshrl.u32 %v4920, 7
        %v4922 = vsub.s32 0, %v4921
        %v4923 = vrot.slane %v4884, %v4922
        %v4925 = vadd.f32 %v4917, %v4923
        %v4926 = vadd.f32 %v4918, %v4923
        %v4927 = vld [vmem:[%s49] sm:$0xff]
        %v4928 = vld [vmem:[%s49 + $0x8] sm:$0xff]
        %v4929 = vld [vmem:[%s49 + $0x10] sm:$0xff]
        %v4930 = vld [vmem:[%s49 + $0x18] sm:$0xff]
        %v4931 = vld [vmem:[%s51] sm:$0x1]
        %v4933 = vlaneseq
        %v4934 = vshrl.u32 %v4933, 7
        %v4935 = vsub.s32 0, %v4934
        %v4936 = vrot.slane %v4931, %v4935
        %v4939 = vsel %vm2063, %v4925, 0
        %v4942 = vsel %vm2063, %v4926, 0
        %4944 = vmatprep.subr.mxu0 0.0
        %4945 = vmatpush1.msra.mxu0 0.0
        %4946 = vmatprep.subr.mxu0 0.0
        %4947 = vmatpush1.msra.mxu0 0.0
        %4948 = vmatprep.subr.mxu0 0.0
        %4949 = vmatpush1.msra.mxu0 0.0
        %4950 = vmatprep.subr.mxu0 0.0
        %4951 = vmatpush1.msra.mxu0 0.0
        %4952 = vmatprep.subr.mxu0 0.0
        %4953 = vmatpush1.msra.mxu0 0.0
        %4954 = vmatprep.subr.mxu0 0.0
        %4955 = vmatpush1.msra.mxu0 0.0
        %4956 = vmatprep.subr.mxu0 0.0
        %4957 = vmatpush1.msra.mxu0 0.0
        %4958 = vmatprep.subr.mxu0 0.0
        %4959 = vmatpush1.msra.mxu0 0.0
        %4960 = vmatprep.subr.mxu0 0.0
        %4961 = vmatpush1.msra.mxu0 0.0
        %4962 = vmatprep.subr.mxu0 0.0
        %4963 = vmatpush1.msra.mxu0 0.0
        %4964 = vmatprep.subr.mxu0 0.0
        %4965 = vmatpush1.msra.mxu0 0.0
        %4966 = vmatprep.subr.mxu0 0.0
        %4967 = vmatpush1.msra.mxu0 0.0
        %4968 = vmatprep.subr.mxu0 0.0
        %4969 = vmatpush1.msra.mxu0 %v4930
        %4970 = vmatprep.subr.mxu0 0.0
        %4971 = vmatpush1.msra.mxu0 %v4929
        %4972 = vmatprep.subr.mxu0 0.0
        %4973 = vmatpush1.msra.mxu0 %v4928
        %4974 = vmatprep.subr.mxu0 0.0
        %4975 = vmatpush1.msra.mxu0 %v4927
        %4976 = vmatprep.subr.mxu0 0.0
        %4977 = vmatpush2.msra.mxu0 0.0
        %4978 = vmatprep.subr.mxu0 0.0
        %4979 = vmatpush2.msra.mxu0 0.0
        %4980 = vmatprep.subr.mxu0 0.0
        %4981 = vmatpush2.msra.mxu0 0.0
        %4982 = vmatprep.subr.mxu0 0.0
        %4983 = vmatpush2.msra.mxu0 0.0
        %4984 = vmatprep.subr.mxu0 0.0
        %4985 = vmatpush2.msra.mxu0 0.0
        %4986 = vmatprep.subr.mxu0 0.0
        %4987 = vmatpush2.msra.mxu0 0.0
        %4988 = vmatprep.subr.mxu0 0.0
        %4989 = vmatpush2.msra.mxu0 0.0
        %4990 = vmatprep.subr.mxu0 0.0
        %4991 = vmatpush2.msra.mxu0 0.0
        %4992 = vmatprep.subr.mxu0 0.0
        %4993 = vmatpush2.msra.mxu0 0.0
        %4994 = vmatprep.subr.mxu0 0.0
        %4995 = vmatpush2.msra.mxu0 0.0
        %4996 = vmatprep.subr.mxu0 0.0
        %4997 = vmatpush2.msra.mxu0 0.0
        %4998 = vmatprep.subr.mxu0 0.0
        %4999 = vmatpush2.msra.mxu0 0.0
        %5000 = vmatprep.subr.mxu0 0.0
        %5001 = vmatpush2.msra.mxu0 0.0
        %5002 = vmatprep.subr.mxu0 0.0
        %5003 = vmatpush2.msra.mxu0 0.0
        %5004 = vmatprep.subr.mxu0 0.0
        %5005 = vmatpush2.msra.mxu0 0.0
        %5006 = vmatprep.subr.mxu0 0.0
        %5007 = vmatpush2.msra.mxu0 0.0
        %5008 = vmatprep.mubr.f32.mxu0 0.0
        %5009 = vmatmul.mubr.f32.gmra.mxu0 %v4939
        %v5010 = vpop.f32.mrf.mxu0
        %v5011 = vadd.f32 %v4936, %v5010
        %v5012 = vpop.f32.mrf.mxu0
        %5013 = vmatprep.mubr.f32.mxu0 0.0
        %5014 = vmatmul.mubr.f32.gmra.mxu0 %v4942
        %v5015 = vpop.f32.mrf.mxu0
        %v5016 = vadd.f32 %v4936, %v5015
        %v5017 = vpop.f32.mrf.mxu0
        %5018 = vdwg.mxu0
        %v5019 = vmul.f32 %v5011, 0.5
        %v5020 = vmul.f32 %v5016, 0.5
        %v5021 = vmul.f32 %v5011, 0.70710677
        %v5022 = vmul.f32 %v5016, 0.70710677
        %v5023 = verf.f32.pop %v5021
        %v5024 = verf.f32.pop %v5022
        %v5025 = vadd.f32 %v5023, 1.0
        %v5026 = vadd.f32 %v5024, 1.0
        %v5027 = vmul.f32 %v5019, %v5025
        %v5028 = vmul.f32 %v5020, %v5026
        %v5029 = vld [vmem:[%s53] sm:$0xff]
        %v5030 = vld [vmem:[%s53 + $0x8] sm:$0xff]
        %v5031 = vld [vmem:[%s53 + $0x10] sm:$0xff]
        %v5032 = vld [vmem:[%s53 + $0x18] sm:$0xff]
        %v5033 = vld [vmem:[%s53 + $0x20] sm:$0xff]
        %v5034 = vld [vmem:[%s53 + $0x28] sm:$0xff]
        %v5035 = vld [vmem:[%s53 + $0x30] sm:$0xff]
        %v5036 = vld [vmem:[%s53 + $0x38] sm:$0xff]
        %v5037 = vld [vmem:[%s53 + $0x40] sm:$0xff]
        %v5038 = vld [vmem:[%s53 + $0x48] sm:$0xff]
        %v5039 = vld [vmem:[%s53 + $0x50] sm:$0xff]
        %v5040 = vld [vmem:[%s53 + $0x58] sm:$0xff]
        %v5041 = vld [vmem:[%s53 + $0x60] sm:$0xff]
        %v5042 = vld [vmem:[%s53 + $0x68] sm:$0xff]
        %v5043 = vld [vmem:[%s53 + $0x70] sm:$0xff]
        %v5044 = vld [vmem:[%s53 + $0x78] sm:$0xff]
        %5045 = vmatprep.subr.mxu0 0.0
        %5046 = vmatpush1.msra.mxu0 %v5044
        %5047 = vmatprep.subr.mxu0 0.0
        %5048 = vmatpush1.msra.mxu0 %v5043
        %5049 = vmatprep.subr.mxu0 0.0
        %5050 = vmatpush1.msra.mxu0 %v5042
        %5051 = vmatprep.subr.mxu0 0.0
        %5052 = vmatpush1.msra.mxu0 %v5041
        %5053 = vmatprep.subr.mxu0 0.0
        %5054 = vmatpush1.msra.mxu0 %v5040
        %5055 = vmatprep.subr.mxu0 0.0
        %5056 = vmatpush1.msra.mxu0 %v5039
        %5057 = vmatprep.subr.mxu0 0.0
        %5058 = vmatpush1.msra.mxu0 %v5038
        %5059 = vmatprep.subr.mxu0 0.0
        %5060 = vmatpush1.msra.mxu0 %v5037
        %5061 = vmatprep.subr.mxu0 0.0
        %5062 = vmatpush1.msra.mxu0 %v5036
        %5063 = vmatprep.subr.mxu0 0.0
        %5064 = vmatpush1.msra.mxu0 %v5035
        %5065 = vmatprep.subr.mxu0 0.0
        %5066 = vmatpush1.msra.mxu0 %v5034
        %5067 = vmatprep.subr.mxu0 0.0
        %5068 = vmatpush1.msra.mxu0 %v5033
        %5069 = vmatprep.subr.mxu0 0.0
        %5070 = vmatpush1.msra.mxu0 %v5032
        %5071 = vmatprep.subr.mxu0 0.0
        %5072 = vmatpush1.msra.mxu0 %v5031
        %5073 = vmatprep.subr.mxu0 0.0
        %5074 = vmatpush1.msra.mxu0 %v5030
        %5075 = vmatprep.subr.mxu0 0.0
        %5076 = vmatpush1.msra.mxu0 %v5029
        %5077 = vmatprep.subr.mxu0 0.0
        %5078 = vmatpush2.msra.mxu0 0.0
        %5079 = vmatprep.subr.mxu0 0.0
        %5080 = vmatpush2.msra.mxu0 0.0
        %5081 = vmatprep.subr.mxu0 0.0
        %5082 = vmatpush2.msra.mxu0 0.0
        %5083 = vmatprep.subr.mxu0 0.0
        %5084 = vmatpush2.msra.mxu0 0.0
        %5085 = vmatprep.subr.mxu0 0.0
        %5086 = vmatpush2.msra.mxu0 0.0
        %5087 = vmatprep.subr.mxu0 0.0
        %5088 = vmatpush2.msra.mxu0 0.0
        %5089 = vmatprep.subr.mxu0 0.0
        %5090 = vmatpush2.msra.mxu0 0.0
        %5091 = vmatprep.subr.mxu0 0.0
        %5092 = vmatpush2.msra.mxu0 0.0
        %5093 = vmatprep.subr.mxu0 0.0
        %5094 = vmatpush2.msra.mxu0 0.0
        %5095 = vmatprep.subr.mxu0 0.0
        %5096 = vmatpush2.msra.mxu0 0.0
        %5097 = vmatprep.subr.mxu0 0.0
        %5098 = vmatpush2.msra.mxu0 0.0
        %5099 = vmatprep.subr.mxu0 0.0
        %5100 = vmatpush2.msra.mxu0 0.0
        %5101 = vmatprep.subr.mxu0 0.0
        %5102 = vmatpush2.msra.mxu0 0.0
        %5103 = vmatprep.subr.mxu0 0.0
        %5104 = vmatpush2.msra.mxu0 0.0
        %5105 = vmatprep.subr.mxu0 0.0
        %5106 = vmatpush2.msra.mxu0 0.0
        %5107 = vmatprep.subr.mxu0 0.0
        %5108 = vmatpush2.msra.mxu0 0.0
        %5109 = vmatprep.mubr.f32.mxu0 0.0
        %5110 = vmatmul.mubr.f32.gmra.mxu0 %v5027
        %v5111 = vpop.f32.mrf.mxu0
        %v5112 = vadd.f32 0.0, %v5111
        %v5113 = vpop.f32.mrf.mxu0
        %5114 = vmatprep.mubr.f32.mxu0 0.0
        %5115 = vmatmul.mubr.f32.gmra.mxu0 %v5028
        %v5116 = vpop.f32.mrf.mxu0
        %v5117 = vadd.f32 0.0, %v5116
        %v5118 = vpop.f32.mrf.mxu0
        %5119 = vdwg.mxu0
        %v5120 = vadd.f32 %v4881, %v5112
        %v5121 = vadd.f32 %v4882, %v5117
        %v5122 = vld [vmem:[%s55] sm:$0x1]
        %v5124 = vlaneseq
        %v5125 = vshrl.u32 %v5124, 7
        %v5126 = vsub.s32 0, %v5125
        %v5127 = vrot.slane %v5122, %v5126
        %v5129 = vadd.f32 %v5120, %v5127
        %v5130 = vadd.f32 %v5121, %v5127
        %v5131 = vld [vmem:[%s57] sm:$0x1]
        %v5132 = vld [vmem:[%s59] sm:$0x1]
        %v5133 = vsel %vm2063, %v5129, 0.0
        %5134 = vadd.xlane.f32.xlu0 %v5133
        %v5135 = vpop.xlane.xlu0 %5134
        %v5136 = vsel %vm2063, %v5130, 0.0
        %5137 = vadd.xlane.f32.xlu0 %v5136
        %v5138 = vpop.xlane.xlu0 %5137
        %v5139 = vmul.f32 %v5135, %v2070
        %v5140 = vmul.f32 %v5138, %v2070
        %v5141 = vsub.f32 %v5129, %v5139
        %v5142 = vsub.f32 %v5130, %v5140
        %v5143 = vmul.f32 %v5141, %v5141
        %v5144 = vmul.f32 %v5142, %v5142
        %v5145 = vsel %vm2063, %v5143, 0.0
        %5146 = vadd.xlane.f32.xlu0 %v5145
        %v5147 = vpop.xlane.xlu0 %5146
        %v5148 = vsel %vm2063, %v5144, 0.0
        %5149 = vadd.xlane.f32.xlu0 %v5148
        %v5150 = vpop.xlane.xlu0 %5149
        %v5151 = vmul.f32 %v5147, %v2070
        %v5152 = vmul.f32 %v5150, %v2070
        %v5153 = vadd.f32 %v5151, 1e-05
        %v5154 = vadd.f32 %v5152, 1e-05
        %v5155 = vrsqrt.pop %v5153
        %v5156 = vrsqrt.pop %v5154
        %v5157 = vmul.f32 %v5141, %v5155
        %v5158 = vmul.f32 %v5142, %v5156
        %v5160 = vlaneseq
        %v5161 = vshrl.u32 %v5160, 7
        %v5162 = vsub.s32 0, %v5161
        %v5163 = vrot.slane %v5131, %v5162
        %v5165 = vmul.f32 %v5157, %v5163
        %v5166 = vmul.f32 %v5158, %v5163
        %v5168 = vlaneseq
        %v5169 = vshrl.u32 %v5168, 7
        %v5170 = vsub.s32 0, %v5169
        %v5171 = vrot.slane %v5132, %v5170
        %v5173 = vadd.f32 %v5165, %v5171
        %v5174 = vadd.f32 %v5166, %v5171
        %5175 = vst.msk [vmem:[%s1954] sm:$0xff] %vm2063, %v5173
        %5176 = vst.msk [vmem:[%s1954 + $0x8] sm:$0xff] %vm2063, %v5174
        %v5177 = vld [vmem:[%s61] sm:$0xff]
        %v5178 = vld [vmem:[%s61 + $0x8] sm:$0xff]
        %v5179 = vld [vmem:[%s61 + $0x10] sm:$0xff]
        %v5180 = vld [vmem:[%s61 + $0x18] sm:$0xff]
        %v5181 = vld [vmem:[#allocation2] sm:$0x1]
        %v5183 = vlaneseq
        %v5184 = vshrl.u32 %v5183, 7
        %v5185 = vsub.s32 0, %v5184
        %v5186 = vrot.slane %v5181, %v5185
        %v5189 = vsel %vm2063, %v5173, 0
        %v5192 = vsel %vm2063, %v5174, 0
        %5194 = vmatprep.subr.mxu0 0.0
        %5195 = vmatpush1.msra.mxu0 0.0
        %5196 = vmatprep.subr.mxu0 0.0
        %5197 = vmatpush1.msra.mxu0 0.0
        %5198 = vmatprep.subr.mxu0 0.0
        %5199 = vmatpush1.msra.mxu0 0.0
        %5200 = vmatprep.subr.mxu0 0.0
        %5201 = vmatpush1.msra.mxu0 0.0
        %5202 = vmatprep.subr.mxu0 0.0
        %5203 = vmatpush1.msra.mxu0 0.0
        %5204 = vmatprep.subr.mxu0 0.0
        %5205 = vmatpush1.msra.mxu0 0.0
        %5206 = vmatprep.subr.mxu0 0.0
        %5207 = vmatpush1.msra.mxu0 0.0
        %5208 = vmatprep.subr.mxu0 0.0
        %5209 = vmatpush1.msra.mxu0 0.0
        %5210 = vmatprep.subr.mxu0 0.0
        %5211 = vmatpush1.msra.mxu0 0.0
        %5212 = vmatprep.subr.mxu0 0.0
        %5213 = vmatpush1.msra.mxu0 0.0
        %5214 = vmatprep.subr.mxu0 0.0
        %5215 = vmatpush1.msra.mxu0 0.0
        %5216 = vmatprep.subr.mxu0 0.0
        %5217 = vmatpush1.msra.mxu0 0.0
        %5218 = vmatprep.subr.mxu0 0.0
        %5219 = vmatpush1.msra.mxu0 %v5180
        %5220 = vmatprep.subr.mxu0 0.0
        %5221 = vmatpush1.msra.mxu0 %v5179
        %5222 = vmatprep.subr.mxu0 0.0
        %5223 = vmatpush1.msra.mxu0 %v5178
        %5224 = vmatprep.subr.mxu0 0.0
        %5225 = vmatpush1.msra.mxu0 %v5177
        %5226 = vmatprep.subr.mxu0 0.0
        %5227 = vmatpush2.msra.mxu0 0.0
        %5228 = vmatprep.subr.mxu0 0.0
        %5229 = vmatpush2.msra.mxu0 0.0
        %5230 = vmatprep.subr.mxu0 0.0
        %5231 = vmatpush2.msra.mxu0 0.0
        %5232 = vmatprep.subr.mxu0 0.0
        %5233 = vmatpush2.msra.mxu0 0.0
        %5234 = vmatprep.subr.mxu0 0.0
        %5235 = vmatpush2.msra.mxu0 0.0
        %5236 = vmatprep.subr.mxu0 0.0
        %5237 = vmatpush2.msra.mxu0 0.0
        %5238 = vmatprep.subr.mxu0 0.0
        %5239 = vmatpush2.msra.mxu0 0.0
        %5240 = vmatprep.subr.mxu0 0.0
        %5241 = vmatpush2.msra.mxu0 0.0
        %5242 = vmatprep.subr.mxu0 0.0
        %5243 = vmatpush2.msra.mxu0 0.0
        %5244 = vmatprep.subr.mxu0 0.0
        %5245 = vmatpush2.msra.mxu0 0.0
        %5246 = vmatprep.subr.mxu0 0.0
        %5247 = vmatpush2.msra.mxu0 0.0
        %5248 = vmatprep.subr.mxu0 0.0
        %5249 = vmatpush2.msra.mxu0 0.0
        %5250 = vmatprep.subr.mxu0 0.0
        %5251 = vmatpush2.msra.mxu0 0.0
        %5252 = vmatprep.subr.mxu0 0.0
        %5253 = vmatpush2.msra.mxu0 0.0
        %5254 = vmatprep.subr.mxu0 0.0
        %5255 = vmatpush2.msra.mxu0 0.0
        %5256 = vmatprep.subr.mxu0 0.0
        %5257 = vmatpush2.msra.mxu0 0.0
        %5258 = vmatprep.mubr.f32.mxu0 0.0
        %5259 = vmatmul.mubr.f32.gmra.mxu0 %v5189
        %v5260 = vpop.f32.mrf.mxu0
        %v5261 = vadd.f32 %v5186, %v5260
        %v5262 = vpop.f32.mrf.mxu0
        %5263 = vmatprep.mubr.f32.mxu0 0.0
        %5264 = vmatmul.mubr.f32.gmra.mxu0 %v5192
        %v5265 = vpop.f32.mrf.mxu0
        %v5266 = vadd.f32 %v5186, %v5265
        %v5267 = vpop.f32.mrf.mxu0
        %5268 = vdwg.mxu0
        %v5269 = vld [vmem:[%s65] sm:$0xff]
        %v5270 = vld [vmem:[%s65 + $0x8] sm:$0xff]
        %v5271 = vld [vmem:[%s65 + $0x10] sm:$0xff]
        %v5272 = vld [vmem:[%s65 + $0x18] sm:$0xff]
        %v5273 = vld [vmem:[%s65 + $0x20] sm:$0xff]
        %v5274 = vld [vmem:[%s65 + $0x28] sm:$0xff]
        %v5275 = vld [vmem:[%s65 + $0x30] sm:$0xff]
        %v5276 = vld [vmem:[%s65 + $0x38] sm:$0xff]
        %v5277 = vld [vmem:[#allocation5] sm:$0x1]
        %v5279 = vlaneseq
        %v5280 = vshrl.u32 %v5279, 7
        %v5281 = vsub.s32 0, %v5280
        %v5282 = vrot.slane %v5277, %v5281
        %vm5284 = vcmask 523264
        %v5286 = vsel %vm5284, %v5261, 0
        %v5289 = vsel %vm5284, %v5266, 0
        %5291 = vmatprep.subr.mxu0 0.0
        %5292 = vmatpush1.msra.mxu0 0.0
        %5293 = vmatprep.subr.mxu0 0.0
        %5294 = vmatpush1.msra.mxu0 0.0
        %5295 = vmatprep.subr.mxu0 0.0
        %5296 = vmatpush1.msra.mxu0 0.0
        %5297 = vmatprep.subr.mxu0 0.0
        %5298 = vmatpush1.msra.mxu0 0.0
        %5299 = vmatprep.subr.mxu0 0.0
        %5300 = vmatpush1.msra.mxu0 0.0
        %5301 = vmatprep.subr.mxu0 0.0
        %5302 = vmatpush1.msra.mxu0 0.0
        %5303 = vmatprep.subr.mxu0 0.0
        %5304 = vmatpush1.msra.mxu0 0.0
        %5305 = vmatprep.subr.mxu0 0.0
        %5306 = vmatpush1.msra.mxu0 0.0
        %5307 = vmatprep.subr.mxu0 0.0
        %5308 = vmatpush1.msra.mxu0 %v5276
        %5309 = vmatprep.subr.mxu0 0.0
        %5310 = vmatpush1.msra.mxu0 %v5275
        %5311 = vmatprep.subr.mxu0 0.0
        %5312 = vmatpush1.msra.mxu0 %v5274
        %5313 = vmatprep.subr.mxu0 0.0
        %5314 = vmatpush1.msra.mxu0 %v5273
        %5315 = vmatprep.subr.mxu0 0.0
        %5316 = vmatpush1.msra.mxu0 %v5272
        %5317 = vmatprep.subr.mxu0 0.0
        %5318 = vmatpush1.msra.mxu0 %v5271
        %5319 = vmatprep.subr.mxu0 0.0
        %5320 = vmatpush1.msra.mxu0 %v5270
        %5321 = vmatprep.subr.mxu0 0.0
        %5322 = vmatpush1.msra.mxu0 %v5269
        %5323 = vmatprep.subr.mxu0 0.0
        %5324 = vmatpush2.msra.mxu0 0.0
        %5325 = vmatprep.subr.mxu0 0.0
        %5326 = vmatpush2.msra.mxu0 0.0
        %5327 = vmatprep.subr.mxu0 0.0
        %5328 = vmatpush2.msra.mxu0 0.0
        %5329 = vmatprep.subr.mxu0 0.0
        %5330 = vmatpush2.msra.mxu0 0.0
        %5331 = vmatprep.subr.mxu0 0.0
        %5332 = vmatpush2.msra.mxu0 0.0
        %5333 = vmatprep.subr.mxu0 0.0
        %5334 = vmatpush2.msra.mxu0 0.0
        %5335 = vmatprep.subr.mxu0 0.0
        %5336 = vmatpush2.msra.mxu0 0.0
        %5337 = vmatprep.subr.mxu0 0.0
        %5338 = vmatpush2.msra.mxu0 0.0
        %5339 = vmatprep.subr.mxu0 0.0
        %5340 = vmatpush2.msra.mxu0 0.0
        %5341 = vmatprep.subr.mxu0 0.0
        %5342 = vmatpush2.msra.mxu0 0.0
        %5343 = vmatprep.subr.mxu0 0.0
        %5344 = vmatpush2.msra.mxu0 0.0
        %5345 = vmatprep.subr.mxu0 0.0
        %5346 = vmatpush2.msra.mxu0 0.0
        %5347 = vmatprep.subr.mxu0 0.0
        %5348 = vmatpush2.msra.mxu0 0.0
        %5349 = vmatprep.subr.mxu0 0.0
        %5350 = vmatpush2.msra.mxu0 0.0
        %5351 = vmatprep.subr.mxu0 0.0
        %5352 = vmatpush2.msra.mxu0 0.0
        %5353 = vmatprep.subr.mxu0 0.0
        %5354 = vmatpush2.msra.mxu0 0.0
        %5355 = vmatprep.mubr.f32.mxu0 0.0
        %5356 = vmatmul.mubr.f32.gmra.mxu0 %v5286
        %v5357 = vpop.f32.mrf.mxu0
        %v5358 = vadd.f32 %v5282, %v5357
        %v5359 = vpop.f32.mrf.mxu0
        %5360 = vmatprep.mubr.f32.mxu0 0.0
        %5361 = vmatmul.mubr.f32.gmra.mxu0 %v5289
        %v5362 = vpop.f32.mrf.mxu0
        %v5363 = vadd.f32 %v5282, %v5362
        %v5364 = vpop.f32.mrf.mxu0
        %5365 = vdwg.mxu0
        %v5366 = vmul.f32 %v5358, 0.5
        %v5367 = vmul.f32 %v5363, 0.5
        %v5368 = vmul.f32 %v5358, 0.70710677
        %v5369 = vmul.f32 %v5363, 0.70710677
        %v5370 = verf.f32.pop %v5368
        %v5371 = verf.f32.pop %v5369
        %v5372 = vadd.f32 %v5370, 1.0
        %v5373 = vadd.f32 %v5371, 1.0
        %v5374 = vmul.f32 %v5366, %v5372
        %v5375 = vmul.f32 %v5367, %v5373
        %v5376 = vld [vmem:[%s69] sm:$0xff]
        %v5377 = vld [vmem:[%s69 + $0x8] sm:$0xff]
        %v5378 = vld [vmem:[%s69 + $0x10] sm:$0xff]
        %v5379 = vld [vmem:[%s69 + $0x18] sm:$0xff]
        %v5380 = vld [vmem:[%s69 + $0x20] sm:$0xff]
        %v5381 = vld [vmem:[%s69 + $0x28] sm:$0xff]
        %v5382 = vld [vmem:[%s69 + $0x30] sm:$0xff]
        %v5383 = vld [vmem:[%s69 + $0x38] sm:$0xff]
        %v5384 = vld [vmem:[#allocation7] sm:$0x1]
        %v5386 = vlaneseq
        %v5387 = vshrl.u32 %v5386, 7
        %v5388 = vsub.s32 0, %v5387
        %v5389 = vrot.slane %v5384, %v5388
        %v5392 = vsel %vm5284, %v5374, 0
        %v5395 = vsel %vm5284, %v5375, 0
        %5397 = vmatprep.subr.mxu0 0.0
        %5398 = vmatpush1.msra.mxu0 0.0
        %5399 = vmatprep.subr.mxu0 0.0
        %5400 = vmatpush1.msra.mxu0 0.0
        %5401 = vmatprep.subr.mxu0 0.0
        %5402 = vmatpush1.msra.mxu0 0.0
        %5403 = vmatprep.subr.mxu0 0.0
        %5404 = vmatpush1.msra.mxu0 0.0
        %5405 = vmatprep.subr.mxu0 0.0
        %5406 = vmatpush1.msra.mxu0 0.0
        %5407 = vmatprep.subr.mxu0 0.0
        %5408 = vmatpush1.msra.mxu0 0.0
        %5409 = vmatprep.subr.mxu0 0.0
        %5410 = vmatpush1.msra.mxu0 0.0
        %5411 = vmatprep.subr.mxu0 0.0
        %5412 = vmatpush1.msra.mxu0 0.0
        %5413 = vmatprep.subr.mxu0 0.0
        %5414 = vmatpush1.msra.mxu0 %v5383
        %5415 = vmatprep.subr.mxu0 0.0
        %5416 = vmatpush1.msra.mxu0 %v5382
        %5417 = vmatprep.subr.mxu0 0.0
        %5418 = vmatpush1.msra.mxu0 %v5381
        %5419 = vmatprep.subr.mxu0 0.0
        %5420 = vmatpush1.msra.mxu0 %v5380
        %5421 = vmatprep.subr.mxu0 0.0
        %5422 = vmatpush1.msra.mxu0 %v5379
        %5423 = vmatprep.subr.mxu0 0.0
        %5424 = vmatpush1.msra.mxu0 %v5378
        %5425 = vmatprep.subr.mxu0 0.0
        %5426 = vmatpush1.msra.mxu0 %v5377
        %5427 = vmatprep.subr.mxu0 0.0
        %5428 = vmatpush1.msra.mxu0 %v5376
        %5429 = vmatprep.subr.mxu0 0.0
        %5430 = vmatpush2.msra.mxu0 0.0
        %5431 = vmatprep.subr.mxu0 0.0
        %5432 = vmatpush2.msra.mxu0 0.0
        %5433 = vmatprep.subr.mxu0 0.0
        %5434 = vmatpush2.msra.mxu0 0.0
        %5435 = vmatprep.subr.mxu0 0.0
        %5436 = vmatpush2.msra.mxu0 0.0
        %5437 = vmatprep.subr.mxu0 0.0
        %5438 = vmatpush2.msra.mxu0 0.0
        %5439 = vmatprep.subr.mxu0 0.0
        %5440 = vmatpush2.msra.mxu0 0.0
        %5441 = vmatprep.subr.mxu0 0.0
        %5442 = vmatpush2.msra.mxu0 0.0
        %5443 = vmatprep.subr.mxu0 0.0
        %5444 = vmatpush2.msra.mxu0 0.0
        %5445 = vmatprep.subr.mxu0 0.0
        %5446 = vmatpush2.msra.mxu0 0.0
        %5447 = vmatprep.subr.mxu0 0.0
        %5448 = vmatpush2.msra.mxu0 0.0
        %5449 = vmatprep.subr.mxu0 0.0
        %5450 = vmatpush2.msra.mxu0 0.0
        %5451 = vmatprep.subr.mxu0 0.0
        %5452 = vmatpush2.msra.mxu0 0.0
        %5453 = vmatprep.subr.mxu0 0.0
        %5454 = vmatpush2.msra.mxu0 0.0
        %5455 = vmatprep.subr.mxu0 0.0
        %5456 = vmatpush2.msra.mxu0 0.0
        %5457 = vmatprep.subr.mxu0 0.0
        %5458 = vmatpush2.msra.mxu0 0.0
        %5459 = vmatprep.subr.mxu0 0.0
        %5460 = vmatpush2.msra.mxu0 0.0
        %5461 = vmatprep.mubr.f32.mxu0 0.0
        %5462 = vmatmul.mubr.f32.gmra.mxu0 %v5392
        %v5463 = vpop.f32.mrf.mxu0
        %v5464 = vadd.f32 %v5389, %v5463
        %v5465 = vpop.f32.mrf.mxu0
        %5466 = vmatprep.mubr.f32.mxu0 0.0
        %5467 = vmatmul.mubr.f32.gmra.mxu0 %v5395
        %v5468 = vpop.f32.mrf.mxu0
        %v5469 = vadd.f32 %v5389, %v5468
        %v5470 = vpop.f32.mrf.mxu0
        %5471 = vdwg.mxu0
        %v5472 = vmul.f32 %v5464, %v5464
        %v5473 = vmul.f32 %v5469, %v5469
        %v5474 = vsel %vm2063, %v5472, 0.0
        %5475 = vadd.xlane.f32.xlu0 %v5474
        %v5476 = vpop.xlane.xlu0 %5475
        %v5477 = vsel %vm2063, %v5473, 0.0
        %5478 = vadd.xlane.f32.xlu0 %v5477
        %v5479 = vpop.xlane.xlu0 %5478
        %v5480 = vrsqrt.pop %v5476
        %v5481 = vmul.f32 %v5476, %v5480
        %vm5482 = vcmp.eq.f32.partialorder %v5476, inf
        %v5483 = vsel %vm5482, %v5476, %v5481
        %vm5484 = vcmp.eq.f32.partialorder %v5476, 0.0
        %v5485 = vand.u32 %v5476, 2147483648
        %v5486 = vsel %vm5484, %v5485, %v5483
        %v5487 = vrsqrt.pop %v5479
        %v5488 = vmul.f32 %v5479, %v5487
        %vm5489 = vcmp.eq.f32.partialorder %v5479, inf
        %v5490 = vsel %vm5489, %v5479, %v5488
        %vm5491 = vcmp.eq.f32.partialorder %v5479, 0.0
        %v5492 = vand.u32 %v5479, 2147483648
        %v5493 = vsel %vm5491, %v5492, %v5490
        %v5494 = vmax.f32 %v5486, 1e-12
        %v5495 = vmax.f32 %v5493, 1e-12
        %v5496 = vrcp.pop %v5494
        %v5497 = vrcp.pop %v5495
        %v5498 = vmul.f32 %v5464, %v5496
        %v5499 = vmul.f32 %v5469, %v5497
        %v5500 = vld [vmem:[%s73] sm:$0xff]
        %v5501 = vld [vmem:[%s73 + $0x8] sm:$0xff]
        %v5502 = vld [vmem:[%s73 + $0x10] sm:$0xff]
        %v5503 = vld [vmem:[%s73 + $0x18] sm:$0xff]
        %v5505 = vsel %vm2063, %v5498, 0
        %v5508 = vsel %vm2063, %v5499, 0
        %5510 = vmatprep.subr.mxu0 0.0
        %5511 = vmatpush1.msra.mxu0 0.0
        %5512 = vmatprep.subr.mxu0 0.0
        %5513 = vmatpush1.msra.mxu0 0.0
        %5514 = vmatprep.subr.mxu0 0.0
        %5515 = vmatpush1.msra.mxu0 0.0
        %5516 = vmatprep.subr.mxu0 0.0
        %5517 = vmatpush1.msra.mxu0 0.0
        %5518 = vmatprep.subr.mxu0 0.0
        %5519 = vmatpush1.msra.mxu0 0.0
        %5520 = vmatprep.subr.mxu0 0.0
        %5521 = vmatpush1.msra.mxu0 0.0
        %5522 = vmatprep.subr.mxu0 0.0
        %5523 = vmatpush1.msra.mxu0 0.0
        %5524 = vmatprep.subr.mxu0 0.0
        %5525 = vmatpush1.msra.mxu0 0.0
        %5526 = vmatprep.subr.mxu0 0.0
        %5527 = vmatpush1.msra.mxu0 0.0
        %5528 = vmatprep.subr.mxu0 0.0
        %5529 = vmatpush1.msra.mxu0 0.0
        %5530 = vmatprep.subr.mxu0 0.0
        %5531 = vmatpush1.msra.mxu0 0.0
        %5532 = vmatprep.subr.mxu0 0.0
        %5533 = vmatpush1.msra.mxu0 0.0
        %5534 = vmatprep.subr.mxu0 0.0
        %5535 = vmatpush1.msra.mxu0 %v5503
        %5536 = vmatprep.subr.mxu0 0.0
        %5537 = vmatpush1.msra.mxu0 %v5502
        %5538 = vmatprep.subr.mxu0 0.0
        %5539 = vmatpush1.msra.mxu0 %v5501
        %5540 = vmatprep.subr.mxu0 0.0
        %5541 = vmatpush1.msra.mxu0 %v5500
        %5542 = vmatprep.subr.mxu0 0.0
        %5543 = vmatpush2.msra.mxu0 0.0
        %5544 = vmatprep.subr.mxu0 0.0
        %5545 = vmatpush2.msra.mxu0 0.0
        %5546 = vmatprep.subr.mxu0 0.0
        %5547 = vmatpush2.msra.mxu0 0.0
        %5548 = vmatprep.subr.mxu0 0.0
        %5549 = vmatpush2.msra.mxu0 0.0
        %5550 = vmatprep.subr.mxu0 0.0
        %5551 = vmatpush2.msra.mxu0 0.0
        %5552 = vmatprep.subr.mxu0 0.0
        %5553 = vmatpush2.msra.mxu0 0.0
        %5554 = vmatprep.subr.mxu0 0.0
        %5555 = vmatpush2.msra.mxu0 0.0
        %5556 = vmatprep.subr.mxu0 0.0
        %5557 = vmatpush2.msra.mxu0 0.0
        %5558 = vmatprep.subr.mxu0 0.0
        %5559 = vmatpush2.msra.mxu0 0.0
        %5560 = vmatprep.subr.mxu0 0.0
        %5561 = vmatpush2.msra.mxu0 0.0
        %5562 = vmatprep.subr.mxu0 0.0
        %5563 = vmatpush2.msra.mxu0 0.0
        %5564 = vmatprep.subr.mxu0 0.0
        %5565 = vmatpush2.msra.mxu0 0.0
        %5566 = vmatprep.subr.mxu0 0.0
        %5567 = vmatpush2.msra.mxu0 0.0
        %5568 = vmatprep.subr.mxu0 0.0
        %5569 = vmatpush2.msra.mxu0 0.0
        %5570 = vmatprep.subr.mxu0 0.0
        %5571 = vmatpush2.msra.mxu0 0.0
        %5572 = vmatprep.subr.mxu0 0.0
        %5573 = vmatpush2.msra.mxu0 0.0
        %5574 = vmatprep.mubr.f32.mxu0 0.0
        %5575 = vmatmul.mubr.f32.gmra.mxu0 %v5505
        %v5576 = vpop.f32.mrf.mxu0
        %v5577 = vadd.f32 0.0, %v5576
        %v5578 = vpop.f32.mrf.mxu0
        %5579 = vmatprep.mubr.f32.mxu0 0.0
        %5580 = vmatmul.mubr.f32.gmra.mxu0 %v5508
        %v5581 = vpop.f32.mrf.mxu0
        %v5582 = vadd.f32 0.0, %v5581
        %v5583 = vpop.f32.mrf.mxu0
        %5584 = vdwg.mxu0
        %5585 = vst.msk [vmem:[%s1947] sm:$0xff] %vm1975, %v5577
        %5586 = vst.msk [vmem:[%s1947 + $0x8] sm:$0xff] %vm1975, %v5582
        %v5587 = vld [vmem:[#allocation8] sm:$0x1]
        %v5588 = vld [vmem:[#allocation10] sm:$0x1]
        %v5589 = vsel %vm2063, %v5173, 0.0
        %5590 = vadd.xlane.f32.xlu0 %v5589
        %v5591 = vpop.xlane.xlu0 %5590
        %v5592 = vsel %vm2063, %v5174, 0.0
        %5593 = vadd.xlane.f32.xlu0 %v5592
        %v5594 = vpop.xlane.xlu0 %5593
        %v5595 = vmul.f32 %v5591, %v2070
        %v5596 = vmul.f32 %v5594, %v2070
        %v5597 = vsub.f32 %v5173, %v5595
        %v5598 = vsub.f32 %v5174, %v5596
        %v5599 = vmul.f32 %v5597, %v5597
        %v5600 = vmul.f32 %v5598, %v5598
        %v5601 = vsel %vm2063, %v5599, 0.0
        %5602 = vadd.xlane.f32.xlu0 %v5601
        %v5603 = vpop.xlane.xlu0 %5602
        %v5604 = vsel %vm2063, %v5600, 0.0
        %5605 = vadd.xlane.f32.xlu0 %v5604
        %v5606 = vpop.xlane.xlu0 %5605
        %v5607 = vmul.f32 %v5603, %v2070
        %v5608 = vmul.f32 %v5606, %v2070
        %v5609 = vadd.f32 %v5607, 1e-05
        %v5610 = vadd.f32 %v5608, 1e-05
        %v5611 = vrsqrt.pop %v5609
        %v5612 = vrsqrt.pop %v5610
        %v5613 = vmul.f32 %v5597, %v5611
        %v5614 = vmul.f32 %v5598, %v5612
        %v5616 = vlaneseq
        %v5617 = vshrl.u32 %v5616, 7
        %v5618 = vsub.s32 0, %v5617
        %v5619 = vrot.slane %v5587, %v5618
        %v5621 = vmul.f32 %v5613, %v5619
        %v5622 = vmul.f32 %v5614, %v5619
        %v5624 = vlaneseq
        %v5625 = vshrl.u32 %v5624, 7
        %v5626 = vsub.s32 0, %v5625
        %v5627 = vrot.slane %v5588, %v5626
        %v5629 = vadd.f32 %v5621, %v5627
        %v5630 = vadd.f32 %v5622, %v5627
        %v5631 = vld [vmem:[%s79] sm:$0xff]
        %v5632 = vld [vmem:[%s79 + $0x8] sm:$0xff]
        %v5633 = vld [vmem:[%s79 + $0x10] sm:$0xff]
        %v5634 = vld [vmem:[%s79 + $0x18] sm:$0xff]
        %v5635 = vld [vmem:[#allocation11] sm:$0x1]
        %v5637 = vlaneseq
        %v5638 = vshrl.u32 %v5637, 7
        %v5639 = vsub.s32 0, %v5638
        %v5640 = vrot.slane %v5635, %v5639
        %v5643 = vsel %vm2063, %v5629, 0
        %v5646 = vsel %vm2063, %v5630, 0
        %5648 = vmatprep.subr.mxu0 0.0
        %5649 = vmatpush1.msra.mxu0 0.0
        %5650 = vmatprep.subr.mxu0 0.0
        %5651 = vmatpush1.msra.mxu0 0.0
        %5652 = vmatprep.subr.mxu0 0.0
        %5653 = vmatpush1.msra.mxu0 0.0
        %5654 = vmatprep.subr.mxu0 0.0
        %5655 = vmatpush1.msra.mxu0 0.0
        %5656 = vmatprep.subr.mxu0 0.0
        %5657 = vmatpush1.msra.mxu0 0.0
        %5658 = vmatprep.subr.mxu0 0.0
        %5659 = vmatpush1.msra.mxu0 0.0
        %5660 = vmatprep.subr.mxu0 0.0
        %5661 = vmatpush1.msra.mxu0 0.0
        %5662 = vmatprep.subr.mxu0 0.0
        %5663 = vmatpush1.msra.mxu0 0.0
        %5664 = vmatprep.subr.mxu0 0.0
        %5665 = vmatpush1.msra.mxu0 0.0
        %5666 = vmatprep.subr.mxu0 0.0
        %5667 = vmatpush1.msra.mxu0 0.0
        %5668 = vmatprep.subr.mxu0 0.0
        %5669 = vmatpush1.msra.mxu0 0.0
        %5670 = vmatprep.subr.mxu0 0.0
        %5671 = vmatpush1.msra.mxu0 0.0
        %5672 = vmatprep.subr.mxu0 0.0
        %5673 = vmatpush1.msra.mxu0 %v5634
        %5674 = vmatprep.subr.mxu0 0.0
        %5675 = vmatpush1.msra.mxu0 %v5633
        %5676 = vmatprep.subr.mxu0 0.0
        %5677 = vmatpush1.msra.mxu0 %v5632
        %5678 = vmatprep.subr.mxu0 0.0
        %5679 = vmatpush1.msra.mxu0 %v5631
        %5680 = vmatprep.subr.mxu0 0.0
        %5681 = vmatpush2.msra.mxu0 0.0
        %5682 = vmatprep.subr.mxu0 0.0
        %5683 = vmatpush2.msra.mxu0 0.0
        %5684 = vmatprep.subr.mxu0 0.0
        %5685 = vmatpush2.msra.mxu0 0.0
        %5686 = vmatprep.subr.mxu0 0.0
        %5687 = vmatpush2.msra.mxu0 0.0
        %5688 = vmatprep.subr.mxu0 0.0
        %5689 = vmatpush2.msra.mxu0 0.0
        %5690 = vmatprep.subr.mxu0 0.0
        %5691 = vmatpush2.msra.mxu0 0.0
        %5692 = vmatprep.subr.mxu0 0.0
        %5693 = vmatpush2.msra.mxu0 0.0
        %5694 = vmatprep.subr.mxu0 0.0
        %5695 = vmatpush2.msra.mxu0 0.0
        %5696 = vmatprep.subr.mxu0 0.0
        %5697 = vmatpush2.msra.mxu0 0.0
        %5698 = vmatprep.subr.mxu0 0.0
        %5699 = vmatpush2.msra.mxu0 0.0
        %5700 = vmatprep.subr.mxu0 0.0
        %5701 = vmatpush2.msra.mxu0 0.0
        %5702 = vmatprep.subr.mxu0 0.0
        %5703 = vmatpush2.msra.mxu0 0.0
        %5704 = vmatprep.subr.mxu0 0.0
        %5705 = vmatpush2.msra.mxu0 0.0
        %5706 = vmatprep.subr.mxu0 0.0
        %5707 = vmatpush2.msra.mxu0 0.0
        %5708 = vmatprep.subr.mxu0 0.0
        %5709 = vmatpush2.msra.mxu0 0.0
        %5710 = vmatprep.subr.mxu0 0.0
        %5711 = vmatpush2.msra.mxu0 0.0
        %5712 = vmatprep.mubr.f32.mxu0 0.0
        %5713 = vmatmul.mubr.f32.gmra.mxu0 %v5643
        %v5714 = vpop.f32.mrf.mxu0
        %v5715 = vadd.f32 %v5640, %v5714
        %v5716 = vpop.f32.mrf.mxu0
        %5717 = vmatprep.mubr.f32.mxu0 0.0
        %5718 = vmatmul.mubr.f32.gmra.mxu0 %v5646
        %v5719 = vpop.f32.mrf.mxu0
        %v5720 = vadd.f32 %v5640, %v5719
        %v5721 = vpop.f32.mrf.mxu0
        %5722 = vdwg.mxu0
        %v5723 = vld [vmem:[%s83] sm:$0xff]
        %v5724 = vld [vmem:[%s83 + $0x8] sm:$0xff]
        %v5725 = vld [vmem:[%s83 + $0x10] sm:$0xff]
        %v5726 = vld [vmem:[%s83 + $0x18] sm:$0xff]
        %v5727 = vld [vmem:[#allocation13] sm:$0x1]
        %v5729 = vlaneseq
        %v5730 = vshrl.u32 %v5729, 7
        %v5731 = vsub.s32 0, %v5730
        %v5732 = vrot.slane %v5727, %v5731
        %5734 = vmatprep.subr.mxu0 0.0
        %5735 = vmatpush1.msra.mxu0 0.0
        %5736 = vmatprep.subr.mxu0 0.0
        %5737 = vmatpush1.msra.mxu0 0.0
        %5738 = vmatprep.subr.mxu0 0.0
        %5739 = vmatpush1.msra.mxu0 0.0
        %5740 = vmatprep.subr.mxu0 0.0
        %5741 = vmatpush1.msra.mxu0 0.0
        %5742 = vmatprep.subr.mxu0 0.0
        %5743 = vmatpush1.msra.mxu0 0.0
        %5744 = vmatprep.subr.mxu0 0.0
        %5745 = vmatpush1.msra.mxu0 0.0
        %5746 = vmatprep.subr.mxu0 0.0
        %5747 = vmatpush1.msra.mxu0 0.0
        %5748 = vmatprep.subr.mxu0 0.0
        %5749 = vmatpush1.msra.mxu0 0.0
        %5750 = vmatprep.subr.mxu0 0.0
        %5751 = vmatpush1.msra.mxu0 0.0
        %5752 = vmatprep.subr.mxu0 0.0
        %5753 = vmatpush1.msra.mxu0 0.0
        %5754 = vmatprep.subr.mxu0 0.0
        %5755 = vmatpush1.msra.mxu0 0.0
        %5756 = vmatprep.subr.mxu0 0.0
        %5757 = vmatpush1.msra.mxu0 0.0
        %5758 = vmatprep.subr.mxu0 0.0
        %5759 = vmatpush1.msra.mxu0 %v5726
        %5760 = vmatprep.subr.mxu0 0.0
        %5761 = vmatpush1.msra.mxu0 %v5725
        %5762 = vmatprep.subr.mxu0 0.0
        %5763 = vmatpush1.msra.mxu0 %v5724
        %5764 = vmatprep.subr.mxu0 0.0
        %5765 = vmatpush1.msra.mxu0 %v5723
        %5766 = vmatprep.subr.mxu0 0.0
        %5767 = vmatpush2.msra.mxu0 0.0
        %5768 = vmatprep.subr.mxu0 0.0
        %5769 = vmatpush2.msra.mxu0 0.0
        %5770 = vmatprep.subr.mxu0 0.0
        %5771 = vmatpush2.msra.mxu0 0.0
        %5772 = vmatprep.subr.mxu0 0.0
        %5773 = vmatpush2.msra.mxu0 0.0
        %5774 = vmatprep.subr.mxu0 0.0
        %5775 = vmatpush2.msra.mxu0 0.0
        %5776 = vmatprep.subr.mxu0 0.0
        %5777 = vmatpush2.msra.mxu0 0.0
        %5778 = vmatprep.subr.mxu0 0.0
        %5779 = vmatpush2.msra.mxu0 0.0
        %5780 = vmatprep.subr.mxu0 0.0
        %5781 = vmatpush2.msra.mxu0 0.0
        %5782 = vmatprep.subr.mxu0 0.0
        %5783 = vmatpush2.msra.mxu0 0.0
        %5784 = vmatprep.subr.mxu0 0.0
        %5785 = vmatpush2.msra.mxu0 0.0
        %5786 = vmatprep.subr.mxu0 0.0
        %5787 = vmatpush2.msra.mxu0 0.0
        %5788 = vmatprep.subr.mxu0 0.0
        %5789 = vmatpush2.msra.mxu0 0.0
        %5790 = vmatprep.subr.mxu0 0.0
        %5791 = vmatpush2.msra.mxu0 0.0
        %5792 = vmatprep.subr.mxu0 0.0
        %5793 = vmatpush2.msra.mxu0 0.0
        %5794 = vmatprep.subr.mxu0 0.0
        %5795 = vmatpush2.msra.mxu0 0.0
        %5796 = vmatprep.subr.mxu0 0.0
        %5797 = vmatpush2.msra.mxu0 0.0
        %5798 = vmatprep.mubr.f32.mxu0 0.0
        %5799 = vmatmul.mubr.f32.gmra.mxu0 %v5643
        %v5800 = vpop.f32.mrf.mxu0
        %v5801 = vadd.f32 %v5732, %v5800
        %v5802 = vpop.f32.mrf.mxu0
        %5803 = vmatprep.mubr.f32.mxu0 0.0
        %5804 = vmatmul.mubr.f32.gmra.mxu0 %v5646
        %v5805 = vpop.f32.mrf.mxu0
        %v5806 = vadd.f32 %v5732, %v5805
        %v5807 = vpop.f32.mrf.mxu0
        %5808 = vdwg.mxu0
        %v5809 = vld [vmem:[%s87] sm:$0xff]
        %v5810 = vld [vmem:[%s87 + $0x8] sm:$0xff]
        %v5811 = vld [vmem:[%s87 + $0x10] sm:$0xff]
        %v5812 = vld [vmem:[%s87 + $0x18] sm:$0xff]
        %v5813 = vld [vmem:[#allocation14] sm:$0x1]
        %v5815 = vlaneseq
        %v5816 = vshrl.u32 %v5815, 7
        %v5817 = vsub.s32 0, %v5816
        %v5818 = vrot.slane %v5813, %v5817
        %5820 = vmatprep.subr.mxu0 0.0
        %5821 = vmatpush1.msra.mxu0 0.0
        %5822 = vmatprep.subr.mxu0 0.0
        %5823 = vmatpush1.msra.mxu0 0.0
        %5824 = vmatprep.subr.mxu0 0.0
        %5825 = vmatpush1.msra.mxu0 0.0
        %5826 = vmatprep.subr.mxu0 0.0
        %5827 = vmatpush1.msra.mxu0 0.0
        %5828 = vmatprep.subr.mxu0 0.0
        %5829 = vmatpush1.msra.mxu0 0.0
        %5830 = vmatprep.subr.mxu0 0.0
        %5831 = vmatpush1.msra.mxu0 0.0
        %5832 = vmatprep.subr.mxu0 0.0
        %5833 = vmatpush1.msra.mxu0 0.0
        %5834 = vmatprep.subr.mxu0 0.0
        %5835 = vmatpush1.msra.mxu0 0.0
        %5836 = vmatprep.subr.mxu0 0.0
        %5837 = vmatpush1.msra.mxu0 0.0
        %5838 = vmatprep.subr.mxu0 0.0
        %5839 = vmatpush1.msra.mxu0 0.0
        %5840 = vmatprep.subr.mxu0 0.0
        %5841 = vmatpush1.msra.mxu0 0.0
        %5842 = vmatprep.subr.mxu0 0.0
        %5843 = vmatpush1.msra.mxu0 0.0
        %5844 = vmatprep.subr.mxu0 0.0
        %5845 = vmatpush1.msra.mxu0 %v5812
        %5846 = vmatprep.subr.mxu0 0.0
        %5847 = vmatpush1.msra.mxu0 %v5811
        %5848 = vmatprep.subr.mxu0 0.0
        %5849 = vmatpush1.msra.mxu0 %v5810
        %5850 = vmatprep.subr.mxu0 0.0
        %5851 = vmatpush1.msra.mxu0 %v5809
        %5852 = vmatprep.subr.mxu0 0.0
        %5853 = vmatpush2.msra.mxu0 0.0
        %5854 = vmatprep.subr.mxu0 0.0
        %5855 = vmatpush2.msra.mxu0 0.0
        %5856 = vmatprep.subr.mxu0 0.0
        %5857 = vmatpush2.msra.mxu0 0.0
        %5858 = vmatprep.subr.mxu0 0.0
        %5859 = vmatpush2.msra.mxu0 0.0
        %5860 = vmatprep.subr.mxu0 0.0
        %5861 = vmatpush2.msra.mxu0 0.0
        %5862 = vmatprep.subr.mxu0 0.0
        %5863 = vmatpush2.msra.mxu0 0.0
        %5864 = vmatprep.subr.mxu0 0.0
        %5865 = vmatpush2.msra.mxu0 0.0
        %5866 = vmatprep.subr.mxu0 0.0
        %5867 = vmatpush2.msra.mxu0 0.0
        %5868 = vmatprep.subr.mxu0 0.0
        %5869 = vmatpush2.msra.mxu0 0.0
        %5870 = vmatprep.subr.mxu0 0.0
        %5871 = vmatpush2.msra.mxu0 0.0
        %5872 = vmatprep.subr.mxu0 0.0
        %5873 = vmatpush2.msra.mxu0 0.0
        %5874 = vmatprep.subr.mxu0 0.0
        %5875 = vmatpush2.msra.mxu0 0.0
        %5876 = vmatprep.subr.mxu0 0.0
        %5877 = vmatpush2.msra.mxu0 0.0
        %5878 = vmatprep.subr.mxu0 0.0
        %5879 = vmatpush2.msra.mxu0 0.0
        %5880 = vmatprep.subr.mxu0 0.0
        %5881 = vmatpush2.msra.mxu0 0.0
        %5882 = vmatprep.subr.mxu0 0.0
        %5883 = vmatpush2.msra.mxu0 0.0
        %5884 = vmatprep.mubr.f32.mxu0 0.0
        %5885 = vmatmul.mubr.f32.gmra.mxu0 %v5643
        %v5886 = vpop.f32.mrf.mxu0
        %v5887 = vadd.f32 %v5818, %v5886
        %v5888 = vpop.f32.mrf.mxu0
        %5889 = vmatprep.mubr.f32.mxu0 0.0
        %5890 = vmatmul.mubr.f32.gmra.mxu0 %v5646
        %v5891 = vpop.f32.mrf.mxu0
        %v5892 = vadd.f32 %v5818, %v5891
        %v5893 = vpop.f32.mrf.mxu0
        %5894 = vdwg.mxu0
        %v5895 = vld [vmem:[%s91] sm:$0xff]
        %v5896 = vld [vmem:[%s91 + $0x8] sm:$0xff]
        %v5897 = vld [vmem:[%s91 + $0x10] sm:$0xff]
        %v5898 = vld [vmem:[%s91 + $0x18] sm:$0xff]
        %v5900 = vsel %vm2209, %v5715, 0
        %v5903 = vsel %vm2209, %v5720, 0
        %v5906 = vsel %vm2209, %v5801, 0
        %v5909 = vsel %vm2209, %v5806, 0
        %5911 = vmatprep.subr.mxu0 0.0
        %5912 = vmatpush1.xpose.msra.mxu0 0.0
        %5913 = vmatprep.subr.mxu0 0.0
        %5914 = vmatpush1.xpose.msra.mxu0 0.0
        %5915 = vmatprep.subr.mxu0 0.0
        %5916 = vmatpush1.xpose.msra.mxu0 0.0
        %5917 = vmatprep.subr.mxu0 0.0
        %5918 = vmatpush1.xpose.msra.mxu0 0.0
        %5919 = vmatprep.subr.mxu0 0.0
        %5920 = vmatpush1.xpose.msra.mxu0 0.0
        %5921 = vmatprep.subr.mxu0 0.0
        %5922 = vmatpush1.xpose.msra.mxu0 0.0
        %5923 = vmatprep.subr.mxu0 0.0
        %5924 = vmatpush1.xpose.msra.mxu0 0.0
        %5925 = vmatprep.subr.mxu0 0.0
        %5926 = vmatpush1.xpose.msra.mxu0 0.0
        %5927 = vmatprep.subr.mxu0 0.0
        %5928 = vmatpush1.xpose.msra.mxu0 0.0
        %5929 = vmatprep.subr.mxu0 0.0
        %5930 = vmatpush1.xpose.msra.mxu0 0.0
        %5931 = vmatprep.subr.mxu0 0.0
        %5932 = vmatpush1.xpose.msra.mxu0 0.0
        %5933 = vmatprep.subr.mxu0 0.0
        %5934 = vmatpush1.xpose.msra.mxu0 0.0
        %5935 = vmatprep.subr.mxu0 0.0
        %5936 = vmatpush1.xpose.msra.mxu0 0.0
        %5937 = vmatprep.subr.mxu0 0.0
        %5938 = vmatpush1.xpose.msra.mxu0 0.0
        %5939 = vmatprep.subr.mxu0 0.0
        %5940 = vmatpush1.xpose.msra.mxu0 %v5909
        %5941 = vmatprep.subr.mxu0 0.0
        %5942 = vmatpush1.xpose.msra.mxu0 %v5906
        %5943 = vmatprep.subr.mxu0 0.0
        %5944 = vmatpush2.xpose.msra.mxu0 0.0
        %5945 = vmatprep.subr.mxu0 0.0
        %5946 = vmatpush2.xpose.msra.mxu0 0.0
        %5947 = vmatprep.subr.mxu0 0.0
        %5948 = vmatpush2.xpose.msra.mxu0 0.0
        %5949 = vmatprep.subr.mxu0 0.0
        %5950 = vmatpush2.xpose.msra.mxu0 0.0
        %5951 = vmatprep.subr.mxu0 0.0
        %5952 = vmatpush2.xpose.msra.mxu0 0.0
        %5953 = vmatprep.subr.mxu0 0.0
        %5954 = vmatpush2.xpose.msra.mxu0 0.0
        %5955 = vmatprep.subr.mxu0 0.0
        %5956 = vmatpush2.xpose.msra.mxu0 0.0
        %5957 = vmatprep.subr.mxu0 0.0
        %5958 = vmatpush2.xpose.msra.mxu0 0.0
        %5959 = vmatprep.subr.mxu0 0.0
        %5960 = vmatpush2.xpose.msra.mxu0 0.0
        %5961 = vmatprep.subr.mxu0 0.0
        %5962 = vmatpush2.xpose.msra.mxu0 0.0
        %5963 = vmatprep.subr.mxu0 0.0
        %5964 = vmatpush2.xpose.msra.mxu0 0.0
        %5965 = vmatprep.subr.mxu0 0.0
        %5966 = vmatpush2.xpose.msra.mxu0 0.0
        %5967 = vmatprep.subr.mxu0 0.0
        %5968 = vmatpush2.xpose.msra.mxu0 0.0
        %5969 = vmatprep.subr.mxu0 0.0
        %5970 = vmatpush2.xpose.msra.mxu0 0.0
        %5971 = vmatprep.subr.mxu0 0.0
        %5972 = vmatpush2.xpose.msra.mxu0 0.0
        %5973 = vmatprep.subr.mxu0 0.0
        %5974 = vmatpush2.xpose.msra.mxu0 0.0
        %5975 = vmatprep.mubr.f32.mxu0 0.0
        %5976 = vmatmul.mubr.f32.gmra.mxu0 %v5900
        %v5977 = vpop.f32.mrf.mxu0
        %v5978 = vadd.f32 0.0, %v5977
        %v5979 = vpop.f32.mrf.mxu0
        %5980 = vmatprep.mubr.f32.mxu0 0.0
        %5981 = vmatmul.mubr.f32.gmra.mxu0 %v5903
        %v5982 = vpop.f32.mrf.mxu0
        %v5983 = vadd.f32 0.0, %v5982
        %v5984 = vpop.f32.mrf.mxu0
        %5985 = vdwg.mxu0
        %v5986 = vmul.f32 %v5978, 0.35355338
        %v5987 = vmul.f32 %v5983, 0.35355338
        %v5988 = vsel %vm2295, %v5986, -inf
        %5989 = vmax.xlane.f32.xlu0 %v5988
        %v5990 = vpop.xlane.xlu0 %5989
        %v5991 = vsel %vm2295, %v5987, -inf
        %5992 = vmax.xlane.f32.xlu0 %v5991
        %v5993 = vpop.xlane.xlu0 %5992
        %v5994 = vsub.f32 %v5986, %v5990
        %v5995 = vsub.f32 %v5987, %v5993
        %v5996 = vmul.f32 %v5994, 1.442695
        %v5997 = vpow.pop %v5996
        %v5998 = vmul.f32 %v5995, 1.442695
        %v5999 = vpow.pop %v5998
        %v6000 = vsel %vm2295, %v5997, 0.0
        %6001 = vadd.xlane.f32.xlu0 %v6000
        %v6002 = vpop.xlane.xlu0 %6001
        %v6003 = vsel %vm2295, %v5999, 0.0
        %6004 = vadd.xlane.f32.xlu0 %v6003
        %v6005 = vpop.xlane.xlu0 %6004
        %v6006 = vrcp.pop %v6002
        %v6007 = vrcp.pop %v6005
        %v6008 = vmul.f32 %v5997, %v6006
        %v6009 = vmul.f32 %v5999, %v6007
        %v6011 = vsel %vm2295, %v6008, 0
        %v6014 = vsel %vm2295, %v6009, 0
        %6016 = vmatprep.subr.mxu0 0.0
        %6017 = vmatpush1.msra.mxu0 0.0
        %6018 = vmatprep.subr.mxu0 0.0
        %6019 = vmatpush1.msra.mxu0 0.0
        %6020 = vmatprep.subr.mxu0 0.0
        %6021 = vmatpush1.msra.mxu0 0.0
        %6022 = vmatprep.subr.mxu0 0.0
        %6023 = vmatpush1.msra.mxu0 0.0
        %6024 = vmatprep.subr.mxu0 0.0
        %6025 = vmatpush1.msra.mxu0 0.0
        %6026 = vmatprep.subr.mxu0 0.0
        %6027 = vmatpush1.msra.mxu0 0.0
        %6028 = vmatprep.subr.mxu0 0.0
        %6029 = vmatpush1.msra.mxu0 0.0
        %6030 = vmatprep.subr.mxu0 0.0
        %6031 = vmatpush1.msra.mxu0 0.0
        %6032 = vmatprep.subr.mxu0 0.0
        %6033 = vmatpush1.msra.mxu0 0.0
        %6034 = vmatprep.subr.mxu0 0.0
        %6035 = vmatpush1.msra.mxu0 0.0
        %6036 = vmatprep.subr.mxu0 0.0
        %6037 = vmatpush1.msra.mxu0 0.0
        %6038 = vmatprep.subr.mxu0 0.0
        %6039 = vmatpush1.msra.mxu0 0.0
        %6040 = vmatprep.subr.mxu0 0.0
        %6041 = vmatpush1.msra.mxu0 0.0
        %6042 = vmatprep.subr.mxu0 0.0
        %6043 = vmatpush1.msra.mxu0 0.0
        %6044 = vmatprep.subr.mxu0 0.0
        %6045 = vmatpush1.msra.mxu0 %v5892
        %6046 = vmatprep.subr.mxu0 0.0
        %6047 = vmatpush1.msra.mxu0 %v5887
        %6048 = vmatprep.subr.mxu0 0.0
        %6049 = vmatpush2.msra.mxu0 0.0
        %6050 = vmatprep.subr.mxu0 0.0
        %6051 = vmatpush2.msra.mxu0 0.0
        %6052 = vmatprep.subr.mxu0 0.0
        %6053 = vmatpush2.msra.mxu0 0.0
        %6054 = vmatprep.subr.mxu0 0.0
        %6055 = vmatpush2.msra.mxu0 0.0
        %6056 = vmatprep.subr.mxu0 0.0
        %6057 = vmatpush2.msra.mxu0 0.0
        %6058 = vmatprep.subr.mxu0 0.0
        %6059 = vmatpush2.msra.mxu0 0.0
        %6060 = vmatprep.subr.mxu0 0.0
        %6061 = vmatpush2.msra.mxu0 0.0
        %6062 = vmatprep.subr.mxu0 0.0
        %6063 = vmatpush2.msra.mxu0 0.0
        %6064 = vmatprep.subr.mxu0 0.0
        %6065 = vmatpush2.msra.mxu0 0.0
        %6066 = vmatprep.subr.mxu0 0.0
        %6067 = vmatpush2.msra.mxu0 0.0
        %6068 = vmatprep.subr.mxu0 0.0
        %6069 = vmatpush2.msra.mxu0 0.0
        %6070 = vmatprep.subr.mxu0 0.0
        %6071 = vmatpush2.msra.mxu0 0.0
        %6072 = vmatprep.subr.mxu0 0.0
        %6073 = vmatpush2.msra.mxu0 0.0
        %6074 = vmatprep.subr.mxu0 0.0
        %6075 = vmatpush2.msra.mxu0 0.0
        %6076 = vmatprep.subr.mxu0 0.0
        %6077 = vmatpush2.msra.mxu0 0.0
        %6078 = vmatprep.subr.mxu0 0.0
        %6079 = vmatpush2.msra.mxu0 0.0
        %6080 = vmatprep.mubr.f32.mxu0 0.0
        %6081 = vmatmul.mubr.f32.gmra.mxu0 %v6011
        %v6082 = vpop.f32.mrf.mxu0
        %v6083 = vadd.f32 0.0, %v6082
        %v6084 = vpop.f32.mrf.mxu0
        %6085 = vmatprep.mubr.f32.mxu0 0.0
        %6086 = vmatmul.mubr.f32.gmra.mxu0 %v6014
        %v6087 = vpop.f32.mrf.mxu0
        %v6088 = vadd.f32 0.0, %v6087
        %v6089 = vpop.f32.mrf.mxu0
        %6090 = vdwg.mxu0
        %6091 = vrot.lane.b32.xlu0 %v5715, 120
        %v6092 = vpop.permute.xlu0 %6091
        %6093 = vrot.lane.b32.xlu0 %v5720, 120
        %v6094 = vpop.permute.xlu0 %6093
        %6095 = vrot.lane.b32.xlu0 %v5801, 120
        %v6096 = vpop.permute.xlu0 %6095
        %6097 = vrot.lane.b32.xlu0 %v5806, 120
        %v6098 = vpop.permute.xlu0 %6097
        %v6099 = vsel %vm2209, %v6092, 0
        %v6101 = vsel %vm2209, %v6094, 0
        %v6103 = vsel %vm2209, %v6096, 0
        %v6105 = vsel %vm2209, %v6098, 0
        %6107 = vmatprep.subr.mxu0 0.0
        %6108 = vmatpush1.xpose.msra.mxu0 0.0
        %6109 = vmatprep.subr.mxu0 0.0
        %6110 = vmatpush1.xpose.msra.mxu0 0.0
        %6111 = vmatprep.subr.mxu0 0.0
        %6112 = vmatpush1.xpose.msra.mxu0 0.0
        %6113 = vmatprep.subr.mxu0 0.0
        %6114 = vmatpush1.xpose.msra.mxu0 0.0
        %6115 = vmatprep.subr.mxu0 0.0
        %6116 = vmatpush1.xpose.msra.mxu0 0.0
        %6117 = vmatprep.subr.mxu0 0.0
        %6118 = vmatpush1.xpose.msra.mxu0 0.0
        %6119 = vmatprep.subr.mxu0 0.0
        %6120 = vmatpush1.xpose.msra.mxu0 0.0
        %6121 = vmatprep.subr.mxu0 0.0
        %6122 = vmatpush1.xpose.msra.mxu0 0.0
        %6123 = vmatprep.subr.mxu0 0.0
        %6124 = vmatpush1.xpose.msra.mxu0 0.0
        %6125 = vmatprep.subr.mxu0 0.0
        %6126 = vmatpush1.xpose.msra.mxu0 0.0
        %6127 = vmatprep.subr.mxu0 0.0
        %6128 = vmatpush1.xpose.msra.mxu0 0.0
        %6129 = vmatprep.subr.mxu0 0.0
        %6130 = vmatpush1.xpose.msra.mxu0 0.0
        %6131 = vmatprep.subr.mxu0 0.0
        %6132 = vmatpush1.xpose.msra.mxu0 0.0
        %6133 = vmatprep.subr.mxu0 0.0
        %6134 = vmatpush1.xpose.msra.mxu0 0.0
        %6135 = vmatprep.subr.mxu0 0.0
        %6136 = vmatpush1.xpose.msra.mxu0 %v6105
        %6137 = vmatprep.subr.mxu0 0.0
        %6138 = vmatpush1.xpose.msra.mxu0 %v6103
        %6139 = vmatprep.subr.mxu0 0.0
        %6140 = vmatpush2.xpose.msra.mxu0 0.0
        %6141 = vmatprep.subr.mxu0 0.0
        %6142 = vmatpush2.xpose.msra.mxu0 0.0
        %6143 = vmatprep.subr.mxu0 0.0
        %6144 = vmatpush2.xpose.msra.mxu0 0.0
        %6145 = vmatprep.subr.mxu0 0.0
        %6146 = vmatpush2.xpose.msra.mxu0 0.0
        %6147 = vmatprep.subr.mxu0 0.0
        %6148 = vmatpush2.xpose.msra.mxu0 0.0
        %6149 = vmatprep.subr.mxu0 0.0
        %6150 = vmatpush2.xpose.msra.mxu0 0.0
        %6151 = vmatprep.subr.mxu0 0.0
        %6152 = vmatpush2.xpose.msra.mxu0 0.0
        %6153 = vmatprep.subr.mxu0 0.0
        %6154 = vmatpush2.xpose.msra.mxu0 0.0
        %6155 = vmatprep.subr.mxu0 0.0
        %6156 = vmatpush2.xpose.msra.mxu0 0.0
        %6157 = vmatprep.subr.mxu0 0.0
        %6158 = vmatpush2.xpose.msra.mxu0 0.0
        %6159 = vmatprep.subr.mxu0 0.0
        %6160 = vmatpush2.xpose.msra.mxu0 0.0
        %6161 = vmatprep.subr.mxu0 0.0
        %6162 = vmatpush2.xpose.msra.mxu0 0.0
        %6163 = vmatprep.subr.mxu0 0.0
        %6164 = vmatpush2.xpose.msra.mxu0 0.0
        %6165 = vmatprep.subr.mxu0 0.0
        %6166 = vmatpush2.xpose.msra.mxu0 0.0
        %6167 = vmatprep.subr.mxu0 0.0
        %6168 = vmatpush2.xpose.msra.mxu0 0.0
        %6169 = vmatprep.subr.mxu0 0.0
        %6170 = vmatpush2.xpose.msra.mxu0 0.0
        %6171 = vmatprep.mubr.f32.mxu0 0.0
        %6172 = vmatmul.mubr.f32.gmra.mxu0 %v6099
        %v6173 = vpop.f32.mrf.mxu0
        %v6174 = vadd.f32 0.0, %v6173
        %v6175 = vpop.f32.mrf.mxu0
        %6176 = vmatprep.mubr.f32.mxu0 0.0
        %6177 = vmatmul.mubr.f32.gmra.mxu0 %v6101
        %v6178 = vpop.f32.mrf.mxu0
        %v6179 = vadd.f32 0.0, %v6178
        %v6180 = vpop.f32.mrf.mxu0
        %6181 = vdwg.mxu0
        %v6182 = vmul.f32 %v6174, 0.35355338
        %v6183 = vmul.f32 %v6179, 0.35355338
        %v6184 = vsel %vm2295, %v6182, -inf
        %6185 = vmax.xlane.f32.xlu0 %v6184
        %v6186 = vpop.xlane.xlu0 %6185
        %v6187 = vsel %vm2295, %v6183, -inf
        %6188 = vmax.xlane.f32.xlu0 %v6187
        %v6189 = vpop.xlane.xlu0 %6188
        %v6190 = vsub.f32 %v6182, %v6186
        %v6191 = vsub.f32 %v6183, %v6189
        %v6192 = vmul.f32 %v6190, 1.442695
        %v6193 = vpow.pop %v6192
        %v6194 = vmul.f32 %v6191, 1.442695
        %v6195 = vpow.pop %v6194
        %v6196 = vsel %vm2295, %v6193, 0.0
        %6197 = vadd.xlane.f32.xlu0 %v6196
        %v6198 = vpop.xlane.xlu0 %6197
        %v6199 = vsel %vm2295, %v6195, 0.0
        %6200 = vadd.xlane.f32.xlu0 %v6199
        %v6201 = vpop.xlane.xlu0 %6200
        %v6202 = vrcp.pop %v6198
        %v6203 = vrcp.pop %v6201
        %v6204 = vmul.f32 %v6193, %v6202
        %v6205 = vmul.f32 %v6195, %v6203
        %6208 = vrot.lane.b32.xlu0 %v5887, 120
        %v6209 = vpop.permute.xlu0 %6208
        %6210 = vrot.lane.b32.xlu0 %v5892, 120
        %v6211 = vpop.permute.xlu0 %6210
        %v6215 = vsel %vm2295, %v6204, 0
        %v6218 = vsel %vm2295, %v6205, 0
        %6220 = vmatprep.subr.mxu0 0.0
        %6221 = vmatpush1.msra.mxu0 0.0
        %6222 = vmatprep.subr.mxu0 0.0
        %6223 = vmatpush1.msra.mxu0 0.0
        %6224 = vmatprep.subr.mxu0 0.0
        %6225 = vmatpush1.msra.mxu0 0.0
        %6226 = vmatprep.subr.mxu0 0.0
        %6227 = vmatpush1.msra.mxu0 0.0
        %6228 = vmatprep.subr.mxu0 0.0
        %6229 = vmatpush1.msra.mxu0 0.0
        %6230 = vmatprep.subr.mxu0 0.0
        %6231 = vmatpush1.msra.mxu0 0.0
        %6232 = vmatprep.subr.mxu0 0.0
        %6233 = vmatpush1.msra.mxu0 0.0
        %6234 = vmatprep.subr.mxu0 0.0
        %6235 = vmatpush1.msra.mxu0 0.0
        %6236 = vmatprep.subr.mxu0 0.0
        %6237 = vmatpush1.msra.mxu0 0.0
        %6238 = vmatprep.subr.mxu0 0.0
        %6239 = vmatpush1.msra.mxu0 0.0
        %6240 = vmatprep.subr.mxu0 0.0
        %6241 = vmatpush1.msra.mxu0 0.0
        %6242 = vmatprep.subr.mxu0 0.0
        %6243 = vmatpush1.msra.mxu0 0.0
        %6244 = vmatprep.subr.mxu0 0.0
        %6245 = vmatpush1.msra.mxu0 0.0
        %6246 = vmatprep.subr.mxu0 0.0
        %6247 = vmatpush1.msra.mxu0 0.0
        %6248 = vmatprep.subr.mxu0 0.0
        %6249 = vmatpush1.msra.mxu0 %v6211
        %6250 = vmatprep.subr.mxu0 0.0
        %6251 = vmatpush1.msra.mxu0 %v6209
        %6252 = vmatprep.subr.mxu0 0.0
        %6253 = vmatpush2.msra.mxu0 0.0
        %6254 = vmatprep.subr.mxu0 0.0
        %6255 = vmatpush2.msra.mxu0 0.0
        %6256 = vmatprep.subr.mxu0 0.0
        %6257 = vmatpush2.msra.mxu0 0.0
        %6258 = vmatprep.subr.mxu0 0.0
        %6259 = vmatpush2.msra.mxu0 0.0
        %6260 = vmatprep.subr.mxu0 0.0
        %6261 = vmatpush2.msra.mxu0 0.0
        %6262 = vmatprep.subr.mxu0 0.0
        %6263 = vmatpush2.msra.mxu0 0.0
        %6264 = vmatprep.subr.mxu0 0.0
        %6265 = vmatpush2.msra.mxu0 0.0
        %6266 = vmatprep.subr.mxu0 0.0
        %6267 = vmatpush2.msra.mxu0 0.0
        %6268 = vmatprep.subr.mxu0 0.0
        %6269 = vmatpush2.msra.mxu0 0.0
        %6270 = vmatprep.subr.mxu0 0.0
        %6271 = vmatpush2.msra.mxu0 0.0
        %6272 = vmatprep.subr.mxu0 0.0
        %6273 = vmatpush2.msra.mxu0 0.0
        %6274 = vmatprep.subr.mxu0 0.0
        %6275 = vmatpush2.msra.mxu0 0.0
        %6276 = vmatprep.subr.mxu0 0.0
        %6277 = vmatpush2.msra.mxu0 0.0
        %6278 = vmatprep.subr.mxu0 0.0
        %6279 = vmatpush2.msra.mxu0 0.0
        %6280 = vmatprep.subr.mxu0 0.0
        %6281 = vmatpush2.msra.mxu0 0.0
        %6282 = vmatprep.subr.mxu0 0.0
        %6283 = vmatpush2.msra.mxu0 0.0
        %6284 = vmatprep.mubr.f32.mxu0 0.0
        %6285 = vmatmul.mubr.f32.gmra.mxu0 %v6215
        %v6286 = vpop.f32.mrf.mxu0
        %v6287 = vadd.f32 0.0, %v6286
        %v6288 = vpop.f32.mrf.mxu0
        %6289 = vmatprep.mubr.f32.mxu0 0.0
        %6290 = vmatmul.mubr.f32.gmra.mxu0 %v6218
        %v6291 = vpop.f32.mrf.mxu0
        %v6292 = vadd.f32 0.0, %v6291
        %v6293 = vpop.f32.mrf.mxu0
        %6294 = vdwg.mxu0
        %v6296 = vsel %vm2209, %v6287, 0
        %v6299 = vsel %vm2209, %v6292, 0
        %6301 = vmatprep.subr.mxu0 0.0
        %6302 = vmatpush1.msra.mxu0 0.0
        %6303 = vmatprep.subr.mxu0 0.0
        %6304 = vmatpush1.msra.mxu0 0.0
        %6305 = vmatprep.subr.mxu0 0.0
        %6306 = vmatpush1.msra.mxu0 0.0
        %6307 = vmatprep.subr.mxu0 0.0
        %6308 = vmatpush1.msra.mxu0 0.0
        %6309 = vmatprep.subr.mxu0 0.0
        %6310 = vmatpush1.msra.mxu0 0.0
        %6311 = vmatprep.subr.mxu0 0.0
        %6312 = vmatpush1.msra.mxu0 0.0
        %6313 = vmatprep.subr.mxu0 0.0
        %6314 = vmatpush1.msra.mxu0 0.0
        %6315 = vmatprep.subr.mxu0 0.0
        %6316 = vmatpush1.msra.mxu0 0.0
        %6317 = vmatprep.subr.mxu0 0.0
        %6318 = vmatpush1.msra.mxu0 0.0
        %6319 = vmatprep.subr.mxu0 0.0
        %6320 = vmatpush1.msra.mxu0 0.0
        %6321 = vmatprep.subr.mxu0 0.0
        %6322 = vmatpush1.msra.mxu0 0.0
        %6323 = vmatprep.subr.mxu0 0.0
        %6324 = vmatpush1.msra.mxu0 0.0
        %6325 = vmatprep.subr.mxu0 0.0
        %6326 = vmatpush1.msra.mxu0 0.0
        %6327 = vmatprep.subr.mxu0 0.0
        %6328 = vmatpush1.msra.mxu0 0.0
        %6329 = vmatprep.subr.mxu0 0.0
        %6330 = vmatpush1.msra.mxu0 0.0
        %6331 = vmatprep.subr.mxu0 0.0
        %6332 = vmatpush1.msra.mxu0 %v5896
        %6333 = vmatprep.subr.mxu0 0.0
        %6334 = vmatpush2.msra.mxu0 0.0
        %6335 = vmatprep.subr.mxu0 0.0
        %6336 = vmatpush2.msra.mxu0 0.0
        %6337 = vmatprep.subr.mxu0 0.0
        %6338 = vmatpush2.msra.mxu0 0.0
        %6339 = vmatprep.subr.mxu0 0.0
        %6340 = vmatpush2.msra.mxu0 0.0
        %6341 = vmatprep.subr.mxu0 0.0
        %6342 = vmatpush2.msra.mxu0 0.0
        %6343 = vmatprep.subr.mxu0 0.0
        %6344 = vmatpush2.msra.mxu0 0.0
        %6345 = vmatprep.subr.mxu0 0.0
        %6346 = vmatpush2.msra.mxu0 0.0
        %6347 = vmatprep.subr.mxu0 0.0
        %6348 = vmatpush2.msra.mxu0 0.0
        %6349 = vmatprep.subr.mxu0 0.0
        %6350 = vmatpush2.msra.mxu0 0.0
        %6351 = vmatprep.subr.mxu0 0.0
        %6352 = vmatpush2.msra.mxu0 0.0
        %6353 = vmatprep.subr.mxu0 0.0
        %6354 = vmatpush2.msra.mxu0 0.0
        %6355 = vmatprep.subr.mxu0 0.0
        %6356 = vmatpush2.msra.mxu0 0.0
        %6357 = vmatprep.subr.mxu0 0.0
        %6358 = vmatpush2.msra.mxu0 0.0
        %6359 = vmatprep.subr.mxu0 0.0
        %6360 = vmatpush2.msra.mxu0 0.0
        %6361 = vmatprep.subr.mxu0 0.0
        %6362 = vmatpush2.msra.mxu0 0.0
        %6363 = vmatprep.subr.mxu0 0.0
        %6364 = vmatpush2.msra.mxu0 0.0
        %6365 = vmatprep.mubr.f32.mxu0 0.0
        %6366 = vmatmul.mubr.f32.gmra.mxu0 %v6296
        %v6367 = vpop.f32.mrf.mxu0
        %v6368 = vadd.f32 0.0, %v6367
        %v6369 = vpop.f32.mrf.mxu0
        %6370 = vmatprep.mubr.f32.mxu0 0.0
        %6371 = vmatmul.mubr.f32.gmra.mxu0 %v6299
        %v6372 = vpop.f32.mrf.mxu0
        %v6373 = vadd.f32 0.0, %v6372
        %v6374 = vpop.f32.mrf.mxu0
        %6375 = vdwg.mxu0
        %v6377 = vsel %vm2209, %v6083, 0
        %v6380 = vsel %vm2209, %v6088, 0
        %6382 = vmatprep.subr.mxu0 0.0
        %6383 = vmatpush1.msra.mxu0 0.0
        %6384 = vmatprep.subr.mxu0 0.0
        %6385 = vmatpush1.msra.mxu0 0.0
        %6386 = vmatprep.subr.mxu0 0.0
        %6387 = vmatpush1.msra.mxu0 0.0
        %6388 = vmatprep.subr.mxu0 0.0
        %6389 = vmatpush1.msra.mxu0 0.0
        %6390 = vmatprep.subr.mxu0 0.0
        %6391 = vmatpush1.msra.mxu0 0.0
        %6392 = vmatprep.subr.mxu0 0.0
        %6393 = vmatpush1.msra.mxu0 0.0
        %6394 = vmatprep.subr.mxu0 0.0
        %6395 = vmatpush1.msra.mxu0 0.0
        %6396 = vmatprep.subr.mxu0 0.0
        %6397 = vmatpush1.msra.mxu0 0.0
        %6398 = vmatprep.subr.mxu0 0.0
        %6399 = vmatpush1.msra.mxu0 0.0
        %6400 = vmatprep.subr.mxu0 0.0
        %6401 = vmatpush1.msra.mxu0 0.0
        %6402 = vmatprep.subr.mxu0 0.0
        %6403 = vmatpush1.msra.mxu0 0.0
        %6404 = vmatprep.subr.mxu0 0.0
        %6405 = vmatpush1.msra.mxu0 0.0
        %6406 = vmatprep.subr.mxu0 0.0
        %6407 = vmatpush1.msra.mxu0 0.0
        %6408 = vmatprep.subr.mxu0 0.0
        %6409 = vmatpush1.msra.mxu0 0.0
        %6410 = vmatprep.subr.mxu0 0.0
        %6411 = vmatpush1.msra.mxu0 0.0
        %6412 = vmatprep.subr.mxu0 0.0
        %6413 = vmatpush1.msra.mxu0 %v5895
        %6414 = vmatprep.subr.mxu0 0.0
        %6415 = vmatpush2.msra.mxu0 0.0
        %6416 = vmatprep.subr.mxu0 0.0
        %6417 = vmatpush2.msra.mxu0 0.0
        %6418 = vmatprep.subr.mxu0 0.0
        %6419 = vmatpush2.msra.mxu0 0.0
        %6420 = vmatprep.subr.mxu0 0.0
        %6421 = vmatpush2.msra.mxu0 0.0
        %6422 = vmatprep.subr.mxu0 0.0
        %6423 = vmatpush2.msra.mxu0 0.0
        %6424 = vmatprep.subr.mxu0 0.0
        %6425 = vmatpush2.msra.mxu0 0.0
        %6426 = vmatprep.subr.mxu0 0.0
        %6427 = vmatpush2.msra.mxu0 0.0
        %6428 = vmatprep.subr.mxu0 0.0
        %6429 = vmatpush2.msra.mxu0 0.0
        %6430 = vmatprep.subr.mxu0 0.0
        %6431 = vmatpush2.msra.mxu0 0.0
        %6432 = vmatprep.subr.mxu0 0.0
        %6433 = vmatpush2.msra.mxu0 0.0
        %6434 = vmatprep.subr.mxu0 0.0
        %6435 = vmatpush2.msra.mxu0 0.0
        %6436 = vmatprep.subr.mxu0 0.0
        %6437 = vmatpush2.msra.mxu0 0.0
        %6438 = vmatprep.subr.mxu0 0.0
        %6439 = vmatpush2.msra.mxu0 0.0
        %6440 = vmatprep.subr.mxu0 0.0
        %6441 = vmatpush2.msra.mxu0 0.0
        %6442 = vmatprep.subr.mxu0 0.0
        %6443 = vmatpush2.msra.mxu0 0.0
        %6444 = vmatprep.subr.mxu0 0.0
        %6445 = vmatpush2.msra.mxu0 0.0
        %6446 = vmatprep.mubr.f32.mxu0 0.0
        %6447 = vmatmul.mubr.f32.gmra.mxu0 %v6377
        %v6448 = vpop.f32.mrf.mxu0
        %v6449 = vadd.f32 %v6368, %v6448
        %v6450 = vpop.f32.mrf.mxu0
        %6451 = vmatprep.mubr.f32.mxu0 0.0
        %6452 = vmatmul.mubr.f32.gmra.mxu0 %v6380
        %v6453 = vpop.f32.mrf.mxu0
        %v6454 = vadd.f32 %v6373, %v6453
        %v6455 = vpop.f32.mrf.mxu0
        %6456 = vdwg.mxu0
        %6457 = vrot.lane.b32.xlu0 %v5715, 112
        %v6458 = vpop.permute.xlu0 %6457
        %6459 = vrot.lane.b32.xlu0 %v5720, 112
        %v6460 = vpop.permute.xlu0 %6459
        %6461 = vrot.lane.b32.xlu0 %v5801, 112
        %v6462 = vpop.permute.xlu0 %6461
        %6463 = vrot.lane.b32.xlu0 %v5806, 112
        %v6464 = vpop.permute.xlu0 %6463
        %v6465 = vsel %vm2209, %v6458, 0
        %v6467 = vsel %vm2209, %v6460, 0
        %v6469 = vsel %vm2209, %v6462, 0
        %v6471 = vsel %vm2209, %v6464, 0
        %6473 = vmatprep.subr.mxu0 0.0
        %6474 = vmatpush1.xpose.msra.mxu0 0.0
        %6475 = vmatprep.subr.mxu0 0.0
        %6476 = vmatpush1.xpose.msra.mxu0 0.0
        %6477 = vmatprep.subr.mxu0 0.0
        %6478 = vmatpush1.xpose.msra.mxu0 0.0
        %6479 = vmatprep.subr.mxu0 0.0
        %6480 = vmatpush1.xpose.msra.mxu0 0.0
        %6481 = vmatprep.subr.mxu0 0.0
        %6482 = vmatpush1.xpose.msra.mxu0 0.0
        %6483 = vmatprep.subr.mxu0 0.0
        %6484 = vmatpush1.xpose.msra.mxu0 0.0
        %6485 = vmatprep.subr.mxu0 0.0
        %6486 = vmatpush1.xpose.msra.mxu0 0.0
        %6487 = vmatprep.subr.mxu0 0.0
        %6488 = vmatpush1.xpose.msra.mxu0 0.0
        %6489 = vmatprep.subr.mxu0 0.0
        %6490 = vmatpush1.xpose.msra.mxu0 0.0
        %6491 = vmatprep.subr.mxu0 0.0
        %6492 = vmatpush1.xpose.msra.mxu0 0.0
        %6493 = vmatprep.subr.mxu0 0.0
        %6494 = vmatpush1.xpose.msra.mxu0 0.0
        %6495 = vmatprep.subr.mxu0 0.0
        %6496 = vmatpush1.xpose.msra.mxu0 0.0
        %6497 = vmatprep.subr.mxu0 0.0
        %6498 = vmatpush1.xpose.msra.mxu0 0.0
        %6499 = vmatprep.subr.mxu0 0.0
        %6500 = vmatpush1.xpose.msra.mxu0 0.0
        %6501 = vmatprep.subr.mxu0 0.0
        %6502 = vmatpush1.xpose.msra.mxu0 %v6471
        %6503 = vmatprep.subr.mxu0 0.0
        %6504 = vmatpush1.xpose.msra.mxu0 %v6469
        %6505 = vmatprep.subr.mxu0 0.0
        %6506 = vmatpush2.xpose.msra.mxu0 0.0
        %6507 = vmatprep.subr.mxu0 0.0
        %6508 = vmatpush2.xpose.msra.mxu0 0.0
        %6509 = vmatprep.subr.mxu0 0.0
        %6510 = vmatpush2.xpose.msra.mxu0 0.0
        %6511 = vmatprep.subr.mxu0 0.0
        %6512 = vmatpush2.xpose.msra.mxu0 0.0
        %6513 = vmatprep.subr.mxu0 0.0
        %6514 = vmatpush2.xpose.msra.mxu0 0.0
        %6515 = vmatprep.subr.mxu0 0.0
        %6516 = vmatpush2.xpose.msra.mxu0 0.0
        %6517 = vmatprep.subr.mxu0 0.0
        %6518 = vmatpush2.xpose.msra.mxu0 0.0
        %6519 = vmatprep.subr.mxu0 0.0
        %6520 = vmatpush2.xpose.msra.mxu0 0.0
        %6521 = vmatprep.subr.mxu0 0.0
        %6522 = vmatpush2.xpose.msra.mxu0 0.0
        %6523 = vmatprep.subr.mxu0 0.0
        %6524 = vmatpush2.xpose.msra.mxu0 0.0
        %6525 = vmatprep.subr.mxu0 0.0
        %6526 = vmatpush2.xpose.msra.mxu0 0.0
        %6527 = vmatprep.subr.mxu0 0.0
        %6528 = vmatpush2.xpose.msra.mxu0 0.0
        %6529 = vmatprep.subr.mxu0 0.0
        %6530 = vmatpush2.xpose.msra.mxu0 0.0
        %6531 = vmatprep.subr.mxu0 0.0
        %6532 = vmatpush2.xpose.msra.mxu0 0.0
        %6533 = vmatprep.subr.mxu0 0.0
        %6534 = vmatpush2.xpose.msra.mxu0 0.0
        %6535 = vmatprep.subr.mxu0 0.0
        %6536 = vmatpush2.xpose.msra.mxu0 0.0
        %6537 = vmatprep.mubr.f32.mxu0 0.0
        %6538 = vmatmul.mubr.f32.gmra.mxu0 %v6465
        %v6539 = vpop.f32.mrf.mxu0
        %v6540 = vadd.f32 0.0, %v6539
        %v6541 = vpop.f32.mrf.mxu0
        %6542 = vmatprep.mubr.f32.mxu0 0.0
        %6543 = vmatmul.mubr.f32.gmra.mxu0 %v6467
        %v6544 = vpop.f32.mrf.mxu0
        %v6545 = vadd.f32 0.0, %v6544
        %v6546 = vpop.f32.mrf.mxu0
        %6547 = vdwg.mxu0
        %v6548 = vmul.f32 %v6540, 0.35355338
        %v6549 = vmul.f32 %v6545, 0.35355338
        %v6550 = vsel %vm2295, %v6548, -inf
        %6551 = vmax.xlane.f32.xlu0 %v6550
        %v6552 = vpop.xlane.xlu0 %6551
        %v6553 = vsel %vm2295, %v6549, -inf
        %6554 = vmax.xlane.f32.xlu0 %v6553
        %v6555 = vpop.xlane.xlu0 %6554
        %v6556 = vsub.f32 %v6548, %v6552
        %v6557 = vsub.f32 %v6549, %v6555
        %v6558 = vmul.f32 %v6556, 1.442695
        %v6559 = vpow.pop %v6558
        %v6560 = vmul.f32 %v6557, 1.442695
        %v6561 = vpow.pop %v6560
        %v6562 = vsel %vm2295, %v6559, 0.0
        %6563 = vadd.xlane.f32.xlu0 %v6562
        %v6564 = vpop.xlane.xlu0 %6563
        %v6565 = vsel %vm2295, %v6561, 0.0
        %6566 = vadd.xlane.f32.xlu0 %v6565
        %v6567 = vpop.xlane.xlu0 %6566
        %v6568 = vrcp.pop %v6564
        %v6569 = vrcp.pop %v6567
        %v6570 = vmul.f32 %v6559, %v6568
        %v6571 = vmul.f32 %v6561, %v6569
        %6572 = vrot.lane.b32.xlu0 %v5887, 112
        %v6573 = vpop.permute.xlu0 %6572
        %6574 = vrot.lane.b32.xlu0 %v5892, 112
        %v6575 = vpop.permute.xlu0 %6574
        %v6579 = vsel %vm2295, %v6570, 0
        %v6582 = vsel %vm2295, %v6571, 0
        %6584 = vmatprep.subr.mxu0 0.0
        %6585 = vmatpush1.msra.mxu0 0.0
        %6586 = vmatprep.subr.mxu0 0.0
        %6587 = vmatpush1.msra.mxu0 0.0
        %6588 = vmatprep.subr.mxu0 0.0
        %6589 = vmatpush1.msra.mxu0 0.0
        %6590 = vmatprep.subr.mxu0 0.0
        %6591 = vmatpush1.msra.mxu0 0.0
        %6592 = vmatprep.subr.mxu0 0.0
        %6593 = vmatpush1.msra.mxu0 0.0
        %6594 = vmatprep.subr.mxu0 0.0
        %6595 = vmatpush1.msra.mxu0 0.0
        %6596 = vmatprep.subr.mxu0 0.0
        %6597 = vmatpush1.msra.mxu0 0.0
        %6598 = vmatprep.subr.mxu0 0.0
        %6599 = vmatpush1.msra.mxu0 0.0
        %6600 = vmatprep.subr.mxu0 0.0
        %6601 = vmatpush1.msra.mxu0 0.0
        %6602 = vmatprep.subr.mxu0 0.0
        %6603 = vmatpush1.msra.mxu0 0.0
        %6604 = vmatprep.subr.mxu0 0.0
        %6605 = vmatpush1.msra.mxu0 0.0
        %6606 = vmatprep.subr.mxu0 0.0
        %6607 = vmatpush1.msra.mxu0 0.0
        %6608 = vmatprep.subr.mxu0 0.0
        %6609 = vmatpush1.msra.mxu0 0.0
        %6610 = vmatprep.subr.mxu0 0.0
        %6611 = vmatpush1.msra.mxu0 0.0
        %6612 = vmatprep.subr.mxu0 0.0
        %6613 = vmatpush1.msra.mxu0 %v6575
        %6614 = vmatprep.subr.mxu0 0.0
        %6615 = vmatpush1.msra.mxu0 %v6573
        %6616 = vmatprep.subr.mxu0 0.0
        %6617 = vmatpush2.msra.mxu0 0.0
        %6618 = vmatprep.subr.mxu0 0.0
        %6619 = vmatpush2.msra.mxu0 0.0
        %6620 = vmatprep.subr.mxu0 0.0
        %6621 = vmatpush2.msra.mxu0 0.0
        %6622 = vmatprep.subr.mxu0 0.0
        %6623 = vmatpush2.msra.mxu0 0.0
        %6624 = vmatprep.subr.mxu0 0.0
        %6625 = vmatpush2.msra.mxu0 0.0
        %6626 = vmatprep.subr.mxu0 0.0
        %6627 = vmatpush2.msra.mxu0 0.0
        %6628 = vmatprep.subr.mxu0 0.0
        %6629 = vmatpush2.msra.mxu0 0.0
        %6630 = vmatprep.subr.mxu0 0.0
        %6631 = vmatpush2.msra.mxu0 0.0
        %6632 = vmatprep.subr.mxu0 0.0
        %6633 = vmatpush2.msra.mxu0 0.0
        %6634 = vmatprep.subr.mxu0 0.0
        %6635 = vmatpush2.msra.mxu0 0.0
        %6636 = vmatprep.subr.mxu0 0.0
        %6637 = vmatpush2.msra.mxu0 0.0
        %6638 = vmatprep.subr.mxu0 0.0
        %6639 = vmatpush2.msra.mxu0 0.0
        %6640 = vmatprep.subr.mxu0 0.0
        %6641 = vmatpush2.msra.mxu0 0.0
        %6642 = vmatprep.subr.mxu0 0.0
        %6643 = vmatpush2.msra.mxu0 0.0
        %6644 = vmatprep.subr.mxu0 0.0
        %6645 = vmatpush2.msra.mxu0 0.0
        %6646 = vmatprep.subr.mxu0 0.0
        %6647 = vmatpush2.msra.mxu0 0.0
        %6648 = vmatprep.mubr.f32.mxu0 0.0
        %6649 = vmatmul.mubr.f32.gmra.mxu0 %v6579
        %v6650 = vpop.f32.mrf.mxu0
        %v6651 = vadd.f32 0.0, %v6650
        %v6652 = vpop.f32.mrf.mxu0
        %6653 = vmatprep.mubr.f32.mxu0 0.0
        %6654 = vmatmul.mubr.f32.gmra.mxu0 %v6582
        %v6655 = vpop.f32.mrf.mxu0
        %v6656 = vadd.f32 0.0, %v6655
        %v6657 = vpop.f32.mrf.mxu0
        %6658 = vdwg.mxu0
        %v6660 = vsel %vm2209, %v6651, 0
        %v6663 = vsel %vm2209, %v6656, 0
        %6665 = vmatprep.subr.mxu0 0.0
        %6666 = vmatpush1.msra.mxu0 0.0
        %6667 = vmatprep.subr.mxu0 0.0
        %6668 = vmatpush1.msra.mxu0 0.0
        %6669 = vmatprep.subr.mxu0 0.0
        %6670 = vmatpush1.msra.mxu0 0.0
        %6671 = vmatprep.subr.mxu0 0.0
        %6672 = vmatpush1.msra.mxu0 0.0
        %6673 = vmatprep.subr.mxu0 0.0
        %6674 = vmatpush1.msra.mxu0 0.0
        %6675 = vmatprep.subr.mxu0 0.0
        %6676 = vmatpush1.msra.mxu0 0.0
        %6677 = vmatprep.subr.mxu0 0.0
        %6678 = vmatpush1.msra.mxu0 0.0
        %6679 = vmatprep.subr.mxu0 0.0
        %6680 = vmatpush1.msra.mxu0 0.0
        %6681 = vmatprep.subr.mxu0 0.0
        %6682 = vmatpush1.msra.mxu0 0.0
        %6683 = vmatprep.subr.mxu0 0.0
        %6684 = vmatpush1.msra.mxu0 0.0
        %6685 = vmatprep.subr.mxu0 0.0
        %6686 = vmatpush1.msra.mxu0 0.0
        %6687 = vmatprep.subr.mxu0 0.0
        %6688 = vmatpush1.msra.mxu0 0.0
        %6689 = vmatprep.subr.mxu0 0.0
        %6690 = vmatpush1.msra.mxu0 0.0
        %6691 = vmatprep.subr.mxu0 0.0
        %6692 = vmatpush1.msra.mxu0 0.0
        %6693 = vmatprep.subr.mxu0 0.0
        %6694 = vmatpush1.msra.mxu0 0.0
        %6695 = vmatprep.subr.mxu0 0.0
        %6696 = vmatpush1.msra.mxu0 %v5897
        %6697 = vmatprep.subr.mxu0 0.0
        %6698 = vmatpush2.msra.mxu0 0.0
        %6699 = vmatprep.subr.mxu0 0.0
        %6700 = vmatpush2.msra.mxu0 0.0
        %6701 = vmatprep.subr.mxu0 0.0
        %6702 = vmatpush2.msra.mxu0 0.0
        %6703 = vmatprep.subr.mxu0 0.0
        %6704 = vmatpush2.msra.mxu0 0.0
        %6705 = vmatprep.subr.mxu0 0.0
        %6706 = vmatpush2.msra.mxu0 0.0
        %6707 = vmatprep.subr.mxu0 0.0
        %6708 = vmatpush2.msra.mxu0 0.0
        %6709 = vmatprep.subr.mxu0 0.0
        %6710 = vmatpush2.msra.mxu0 0.0
        %6711 = vmatprep.subr.mxu0 0.0
        %6712 = vmatpush2.msra.mxu0 0.0
        %6713 = vmatprep.subr.mxu0 0.0
        %6714 = vmatpush2.msra.mxu0 0.0
        %6715 = vmatprep.subr.mxu0 0.0
        %6716 = vmatpush2.msra.mxu0 0.0
        %6717 = vmatprep.subr.mxu0 0.0
        %6718 = vmatpush2.msra.mxu0 0.0
        %6719 = vmatprep.subr.mxu0 0.0
        %6720 = vmatpush2.msra.mxu0 0.0
        %6721 = vmatprep.subr.mxu0 0.0
        %6722 = vmatpush2.msra.mxu0 0.0
        %6723 = vmatprep.subr.mxu0 0.0
        %6724 = vmatpush2.msra.mxu0 0.0
        %6725 = vmatprep.subr.mxu0 0.0
        %6726 = vmatpush2.msra.mxu0 0.0
        %6727 = vmatprep.subr.mxu0 0.0
        %6728 = vmatpush2.msra.mxu0 0.0
        %6729 = vmatprep.mubr.f32.mxu0 0.0
        %6730 = vmatmul.mubr.f32.gmra.mxu0 %v6660
        %v6731 = vpop.f32.mrf.mxu0
        %v6732 = vadd.f32 0.0, %v6731
        %v6733 = vpop.f32.mrf.mxu0
        %6734 = vmatprep.mubr.f32.mxu0 0.0
        %6735 = vmatmul.mubr.f32.gmra.mxu0 %v6663
        %v6736 = vpop.f32.mrf.mxu0
        %v6737 = vadd.f32 0.0, %v6736
        %v6738 = vpop.f32.mrf.mxu0
        %6739 = vdwg.mxu0
        %v6740 = vadd.f32 %v6449, %v6732
        %v6741 = vadd.f32 %v6454, %v6737
        %6742 = vrot.lane.b32.xlu0 %v5715, 104
        %v6743 = vpop.permute.xlu0 %6742
        %6744 = vrot.lane.b32.xlu0 %v5720, 104
        %v6745 = vpop.permute.xlu0 %6744
        %6746 = vrot.lane.b32.xlu0 %v5801, 104
        %v6747 = vpop.permute.xlu0 %6746
        %6748 = vrot.lane.b32.xlu0 %v5806, 104
        %v6749 = vpop.permute.xlu0 %6748
        %v6750 = vsel %vm2209, %v6743, 0
        %v6752 = vsel %vm2209, %v6745, 0
        %v6754 = vsel %vm2209, %v6747, 0
        %v6756 = vsel %vm2209, %v6749, 0
        %6758 = vmatprep.subr.mxu0 0.0
        %6759 = vmatpush1.xpose.msra.mxu0 0.0
        %6760 = vmatprep.subr.mxu0 0.0
        %6761 = vmatpush1.xpose.msra.mxu0 0.0
        %6762 = vmatprep.subr.mxu0 0.0
        %6763 = vmatpush1.xpose.msra.mxu0 0.0
        %6764 = vmatprep.subr.mxu0 0.0
        %6765 = vmatpush1.xpose.msra.mxu0 0.0
        %6766 = vmatprep.subr.mxu0 0.0
        %6767 = vmatpush1.xpose.msra.mxu0 0.0
        %6768 = vmatprep.subr.mxu0 0.0
        %6769 = vmatpush1.xpose.msra.mxu0 0.0
        %6770 = vmatprep.subr.mxu0 0.0
        %6771 = vmatpush1.xpose.msra.mxu0 0.0
        %6772 = vmatprep.subr.mxu0 0.0
        %6773 = vmatpush1.xpose.msra.mxu0 0.0
        %6774 = vmatprep.subr.mxu0 0.0
        %6775 = vmatpush1.xpose.msra.mxu0 0.0
        %6776 = vmatprep.subr.mxu0 0.0
        %6777 = vmatpush1.xpose.msra.mxu0 0.0
        %6778 = vmatprep.subr.mxu0 0.0
        %6779 = vmatpush1.xpose.msra.mxu0 0.0
        %6780 = vmatprep.subr.mxu0 0.0
        %6781 = vmatpush1.xpose.msra.mxu0 0.0
        %6782 = vmatprep.subr.mxu0 0.0
        %6783 = vmatpush1.xpose.msra.mxu0 0.0
        %6784 = vmatprep.subr.mxu0 0.0
        %6785 = vmatpush1.xpose.msra.mxu0 0.0
        %6786 = vmatprep.subr.mxu0 0.0
        %6787 = vmatpush1.xpose.msra.mxu0 %v6756
        %6788 = vmatprep.subr.mxu0 0.0
        %6789 = vmatpush1.xpose.msra.mxu0 %v6754
        %6790 = vmatprep.subr.mxu0 0.0
        %6791 = vmatpush2.xpose.msra.mxu0 0.0
        %6792 = vmatprep.subr.mxu0 0.0
        %6793 = vmatpush2.xpose.msra.mxu0 0.0
        %6794 = vmatprep.subr.mxu0 0.0
        %6795 = vmatpush2.xpose.msra.mxu0 0.0
        %6796 = vmatprep.subr.mxu0 0.0
        %6797 = vmatpush2.xpose.msra.mxu0 0.0
        %6798 = vmatprep.subr.mxu0 0.0
        %6799 = vmatpush2.xpose.msra.mxu0 0.0
        %6800 = vmatprep.subr.mxu0 0.0
        %6801 = vmatpush2.xpose.msra.mxu0 0.0
        %6802 = vmatprep.subr.mxu0 0.0
        %6803 = vmatpush2.xpose.msra.mxu0 0.0
        %6804 = vmatprep.subr.mxu0 0.0
        %6805 = vmatpush2.xpose.msra.mxu0 0.0
        %6806 = vmatprep.subr.mxu0 0.0
        %6807 = vmatpush2.xpose.msra.mxu0 0.0
        %6808 = vmatprep.subr.mxu0 0.0
        %6809 = vmatpush2.xpose.msra.mxu0 0.0
        %6810 = vmatprep.subr.mxu0 0.0
        %6811 = vmatpush2.xpose.msra.mxu0 0.0
        %6812 = vmatprep.subr.mxu0 0.0
        %6813 = vmatpush2.xpose.msra.mxu0 0.0
        %6814 = vmatprep.subr.mxu0 0.0
        %6815 = vmatpush2.xpose.msra.mxu0 0.0
        %6816 = vmatprep.subr.mxu0 0.0
        %6817 = vmatpush2.xpose.msra.mxu0 0.0
        %6818 = vmatprep.subr.mxu0 0.0
        %6819 = vmatpush2.xpose.msra.mxu0 0.0
        %6820 = vmatprep.subr.mxu0 0.0
        %6821 = vmatpush2.xpose.msra.mxu0 0.0
        %6822 = vmatprep.mubr.f32.mxu0 0.0
        %6823 = vmatmul.mubr.f32.gmra.mxu0 %v6750
        %v6824 = vpop.f32.mrf.mxu0
        %v6825 = vadd.f32 0.0, %v6824
        %v6826 = vpop.f32.mrf.mxu0
        %6827 = vmatprep.mubr.f32.mxu0 0.0
        %6828 = vmatmul.mubr.f32.gmra.mxu0 %v6752
        %v6829 = vpop.f32.mrf.mxu0
        %v6830 = vadd.f32 0.0, %v6829
        %v6831 = vpop.f32.mrf.mxu0
        %6832 = vdwg.mxu0
        %v6833 = vmul.f32 %v6825, 0.35355338
        %v6834 = vmul.f32 %v6830, 0.35355338
        %v6835 = vsel %vm2295, %v6833, -inf
        %6836 = vmax.xlane.f32.xlu0 %v6835
        %v6837 = vpop.xlane.xlu0 %6836
        %v6838 = vsel %vm2295, %v6834, -inf
        %6839 = vmax.xlane.f32.xlu0 %v6838
        %v6840 = vpop.xlane.xlu0 %6839
        %v6841 = vsub.f32 %v6833, %v6837
        %v6842 = vsub.f32 %v6834, %v6840
        %v6843 = vmul.f32 %v6841, 1.442695
        %v6844 = vpow.pop %v6843
        %v6845 = vmul.f32 %v6842, 1.442695
        %v6846 = vpow.pop %v6845
        %v6847 = vsel %vm2295, %v6844, 0.0
        %6848 = vadd.xlane.f32.xlu0 %v6847
        %v6849 = vpop.xlane.xlu0 %6848
        %v6850 = vsel %vm2295, %v6846, 0.0
        %6851 = vadd.xlane.f32.xlu0 %v6850
        %v6852 = vpop.xlane.xlu0 %6851
        %v6853 = vrcp.pop %v6849
        %v6854 = vrcp.pop %v6852
        %v6855 = vmul.f32 %v6844, %v6853
        %v6856 = vmul.f32 %v6846, %v6854
        %6857 = vrot.lane.b32.xlu0 %v5887, 104
        %v6858 = vpop.permute.xlu0 %6857
        %6859 = vrot.lane.b32.xlu0 %v5892, 104
        %v6860 = vpop.permute.xlu0 %6859
        %v6864 = vsel %vm2295, %v6855, 0
        %v6867 = vsel %vm2295, %v6856, 0
        %6869 = vmatprep.subr.mxu0 0.0
        %6870 = vmatpush1.msra.mxu0 0.0
        %6871 = vmatprep.subr.mxu0 0.0
        %6872 = vmatpush1.msra.mxu0 0.0
        %6873 = vmatprep.subr.mxu0 0.0
        %6874 = vmatpush1.msra.mxu0 0.0
        %6875 = vmatprep.subr.mxu0 0.0
        %6876 = vmatpush1.msra.mxu0 0.0
        %6877 = vmatprep.subr.mxu0 0.0
        %6878 = vmatpush1.msra.mxu0 0.0
        %6879 = vmatprep.subr.mxu0 0.0
        %6880 = vmatpush1.msra.mxu0 0.0
        %6881 = vmatprep.subr.mxu0 0.0
        %6882 = vmatpush1.msra.mxu0 0.0
        %6883 = vmatprep.subr.mxu0 0.0
        %6884 = vmatpush1.msra.mxu0 0.0
        %6885 = vmatprep.subr.mxu0 0.0
        %6886 = vmatpush1.msra.mxu0 0.0
        %6887 = vmatprep.subr.mxu0 0.0
        %6888 = vmatpush1.msra.mxu0 0.0
        %6889 = vmatprep.subr.mxu0 0.0
        %6890 = vmatpush1.msra.mxu0 0.0
        %6891 = vmatprep.subr.mxu0 0.0
        %6892 = vmatpush1.msra.mxu0 0.0
        %6893 = vmatprep.subr.mxu0 0.0
        %6894 = vmatpush1.msra.mxu0 0.0
        %6895 = vmatprep.subr.mxu0 0.0
        %6896 = vmatpush1.msra.mxu0 0.0
        %6897 = vmatprep.subr.mxu0 0.0
        %6898 = vmatpush1.msra.mxu0 %v6860
        %6899 = vmatprep.subr.mxu0 0.0
        %6900 = vmatpush1.msra.mxu0 %v6858
        %6901 = vmatprep.subr.mxu0 0.0
        %6902 = vmatpush2.msra.mxu0 0.0
        %6903 = vmatprep.subr.mxu0 0.0
        %6904 = vmatpush2.msra.mxu0 0.0
        %6905 = vmatprep.subr.mxu0 0.0
        %6906 = vmatpush2.msra.mxu0 0.0
        %6907 = vmatprep.subr.mxu0 0.0
        %6908 = vmatpush2.msra.mxu0 0.0
        %6909 = vmatprep.subr.mxu0 0.0
        %6910 = vmatpush2.msra.mxu0 0.0
        %6911 = vmatprep.subr.mxu0 0.0
        %6912 = vmatpush2.msra.mxu0 0.0
        %6913 = vmatprep.subr.mxu0 0.0
        %6914 = vmatpush2.msra.mxu0 0.0
        %6915 = vmatprep.subr.mxu0 0.0
        %6916 = vmatpush2.msra.mxu0 0.0
        %6917 = vmatprep.subr.mxu0 0.0
        %6918 = vmatpush2.msra.mxu0 0.0
        %6919 = vmatprep.subr.mxu0 0.0
        %6920 = vmatpush2.msra.mxu0 0.0
        %6921 = vmatprep.subr.mxu0 0.0
        %6922 = vmatpush2.msra.mxu0 0.0
        %6923 = vmatprep.subr.mxu0 0.0
        %6924 = vmatpush2.msra.mxu0 0.0
        %6925 = vmatprep.subr.mxu0 0.0
        %6926 = vmatpush2.msra.mxu0 0.0
        %6927 = vmatprep.subr.mxu0 0.0
        %6928 = vmatpush2.msra.mxu0 0.0
        %6929 = vmatprep.subr.mxu0 0.0
        %6930 = vmatpush2.msra.mxu0 0.0
        %6931 = vmatprep.subr.mxu0 0.0
        %6932 = vmatpush2.msra.mxu0 0.0
        %6933 = vmatprep.mubr.f32.mxu0 0.0
        %6934 = vmatmul.mubr.f32.gmra.mxu0 %v6864
        %v6935 = vpop.f32.mrf.mxu0
        %v6936 = vadd.f32 0.0, %v6935
        %v6937 = vpop.f32.mrf.mxu0
        %6938 = vmatprep.mubr.f32.mxu0 0.0
        %6939 = vmatmul.mubr.f32.gmra.mxu0 %v6867
        %v6940 = vpop.f32.mrf.mxu0
        %v6941 = vadd.f32 0.0, %v6940
        %v6942 = vpop.f32.mrf.mxu0
        %6943 = vdwg.mxu0
        %v6945 = vsel %vm2209, %v6936, 0
        %v6948 = vsel %vm2209, %v6941, 0
        %6950 = vmatprep.subr.mxu0 0.0
        %6951 = vmatpush1.msra.mxu0 0.0
        %6952 = vmatprep.subr.mxu0 0.0
        %6953 = vmatpush1.msra.mxu0 0.0
        %6954 = vmatprep.subr.mxu0 0.0
        %6955 = vmatpush1.msra.mxu0 0.0
        %6956 = vmatprep.subr.mxu0 0.0
        %6957 = vmatpush1.msra.mxu0 0.0
        %6958 = vmatprep.subr.mxu0 0.0
        %6959 = vmatpush1.msra.mxu0 0.0
        %6960 = vmatprep.subr.mxu0 0.0
        %6961 = vmatpush1.msra.mxu0 0.0
        %6962 = vmatprep.subr.mxu0 0.0
        %6963 = vmatpush1.msra.mxu0 0.0
        %6964 = vmatprep.subr.mxu0 0.0
        %6965 = vmatpush1.msra.mxu0 0.0
        %6966 = vmatprep.subr.mxu0 0.0
        %6967 = vmatpush1.msra.mxu0 0.0
        %6968 = vmatprep.subr.mxu0 0.0
        %6969 = vmatpush1.msra.mxu0 0.0
        %6970 = vmatprep.subr.mxu0 0.0
        %6971 = vmatpush1.msra.mxu0 0.0
        %6972 = vmatprep.subr.mxu0 0.0
        %6973 = vmatpush1.msra.mxu0 0.0
        %6974 = vmatprep.subr.mxu0 0.0
        %6975 = vmatpush1.msra.mxu0 0.0
        %6976 = vmatprep.subr.mxu0 0.0
        %6977 = vmatpush1.msra.mxu0 0.0
        %6978 = vmatprep.subr.mxu0 0.0
        %6979 = vmatpush1.msra.mxu0 0.0
        %6980 = vmatprep.subr.mxu0 0.0
        %6981 = vmatpush1.msra.mxu0 %v5898
        %6982 = vmatprep.subr.mxu0 0.0
        %6983 = vmatpush2.msra.mxu0 0.0
        %6984 = vmatprep.subr.mxu0 0.0
        %6985 = vmatpush2.msra.mxu0 0.0
        %6986 = vmatprep.subr.mxu0 0.0
        %6987 = vmatpush2.msra.mxu0 0.0
        %6988 = vmatprep.subr.mxu0 0.0
        %6989 = vmatpush2.msra.mxu0 0.0
        %6990 = vmatprep.subr.mxu0 0.0
        %6991 = vmatpush2.msra.mxu0 0.0
        %6992 = vmatprep.subr.mxu0 0.0
        %6993 = vmatpush2.msra.mxu0 0.0
        %6994 = vmatprep.subr.mxu0 0.0
        %6995 = vmatpush2.msra.mxu0 0.0
        %6996 = vmatprep.subr.mxu0 0.0
        %6997 = vmatpush2.msra.mxu0 0.0
        %6998 = vmatprep.subr.mxu0 0.0
        %6999 = vmatpush2.msra.mxu0 0.0
        %7000 = vmatprep.subr.mxu0 0.0
        %7001 = vmatpush2.msra.mxu0 0.0
        %7002 = vmatprep.subr.mxu0 0.0
        %7003 = vmatpush2.msra.mxu0 0.0
        %7004 = vmatprep.subr.mxu0 0.0
        %7005 = vmatpush2.msra.mxu0 0.0
        %7006 = vmatprep.subr.mxu0 0.0
        %7007 = vmatpush2.msra.mxu0 0.0
        %7008 = vmatprep.subr.mxu0 0.0
        %7009 = vmatpush2.msra.mxu0 0.0
        %7010 = vmatprep.subr.mxu0 0.0
        %7011 = vmatpush2.msra.mxu0 0.0
        %7012 = vmatprep.subr.mxu0 0.0
        %7013 = vmatpush2.msra.mxu0 0.0
        %7014 = vmatprep.mubr.f32.mxu0 0.0
        %7015 = vmatmul.mubr.f32.gmra.mxu0 %v6945
        %v7016 = vpop.f32.mrf.mxu0
        %v7017 = vadd.f32 0.0, %v7016
        %v7018 = vpop.f32.mrf.mxu0
        %7019 = vmatprep.mubr.f32.mxu0 0.0
        %7020 = vmatmul.mubr.f32.gmra.mxu0 %v6948
        %v7021 = vpop.f32.mrf.mxu0
        %v7022 = vadd.f32 0.0, %v7021
        %v7023 = vpop.f32.mrf.mxu0
        %7024 = vdwg.mxu0
        %v7025 = vadd.f32 %v6740, %v7017
        %v7026 = vadd.f32 %v6741, %v7022
        %v7027 = vadd.f32 %v5173, %v7025
        %v7028 = vadd.f32 %v5174, %v7026
        %v7029 = vld [vmem:[#allocation16] sm:$0x1]
        %v7031 = vlaneseq
        %v7032 = vshrl.u32 %v7031, 7
        %v7033 = vsub.s32 0, %v7032
        %v7034 = vrot.slane %v7029, %v7033
        %v7036 = vadd.f32 %v7027, %v7034
        %v7037 = vadd.f32 %v7028, %v7034
        %v7038 = vld [vmem:[#allocation17] sm:$0x1]
        %v7039 = vld [vmem:[#allocation19] sm:$0x1]
        %v7040 = vsel %vm2063, %v7036, 0.0
        %7041 = vadd.xlane.f32.xlu0 %v7040
        %v7042 = vpop.xlane.xlu0 %7041
        %v7043 = vsel %vm2063, %v7037, 0.0
        %7044 = vadd.xlane.f32.xlu0 %v7043
        %v7045 = vpop.xlane.xlu0 %7044
        %v7046 = vmul.f32 %v7042, %v2070
        %v7047 = vmul.f32 %v7045, %v2070
        %v7048 = vsub.f32 %v7036, %v7046
        %v7049 = vsub.f32 %v7037, %v7047
        %v7050 = vmul.f32 %v7048, %v7048
        %v7051 = vmul.f32 %v7049, %v7049
        %v7052 = vsel %vm2063, %v7050, 0.0
        %7053 = vadd.xlane.f32.xlu0 %v7052
        %v7054 = vpop.xlane.xlu0 %7053
        %v7055 = vsel %vm2063, %v7051, 0.0
        %7056 = vadd.xlane.f32.xlu0 %v7055
        %v7057 = vpop.xlane.xlu0 %7056
        %v7058 = vmul.f32 %v7054, %v2070
        %v7059 = vmul.f32 %v7057, %v2070
        %v7060 = vadd.f32 %v7058, 1e-05
        %v7061 = vadd.f32 %v7059, 1e-05
        %v7062 = vrsqrt.pop %v7060
        %v7063 = vrsqrt.pop %v7061
        %v7064 = vmul.f32 %v7048, %v7062
        %v7065 = vmul.f32 %v7049, %v7063
        %v7067 = vlaneseq
        %v7068 = vshrl.u32 %v7067, 7
        %v7069 = vsub.s32 0, %v7068
        %v7070 = vrot.slane %v7038, %v7069
        %v7072 = vmul.f32 %v7064, %v7070
        %v7073 = vmul.f32 %v7065, %v7070
        %v7075 = vlaneseq
        %v7076 = vshrl.u32 %v7075, 7
        %v7077 = vsub.s32 0, %v7076
        %v7078 = vrot.slane %v7039, %v7077
        %v7080 = vadd.f32 %v7072, %v7078
        %v7081 = vadd.f32 %v7073, %v7078
        %v7082 = vld [vmem:[%s99] sm:$0xff]
        %v7083 = vld [vmem:[%s99 + $0x8] sm:$0xff]
        %v7084 = vld [vmem:[%s99 + $0x10] sm:$0xff]
        %v7085 = vld [vmem:[%s99 + $0x18] sm:$0xff]
        %v7086 = vld [vmem:[#allocation20] sm:$0x1]
        %v7088 = vlaneseq
        %v7089 = vshrl.u32 %v7088, 7
        %v7090 = vsub.s32 0, %v7089
        %v7091 = vrot.slane %v7086, %v7090
        %v7094 = vsel %vm2063, %v7080, 0
        %v7097 = vsel %vm2063, %v7081, 0
        %7099 = vmatprep.subr.mxu0 0.0
        %7100 = vmatpush1.msra.mxu0 0.0
        %7101 = vmatprep.subr.mxu0 0.0
        %7102 = vmatpush1.msra.mxu0 0.0
        %7103 = vmatprep.subr.mxu0 0.0
        %7104 = vmatpush1.msra.mxu0 0.0
        %7105 = vmatprep.subr.mxu0 0.0
        %7106 = vmatpush1.msra.mxu0 0.0
        %7107 = vmatprep.subr.mxu0 0.0
        %7108 = vmatpush1.msra.mxu0 0.0
        %7109 = vmatprep.subr.mxu0 0.0
        %7110 = vmatpush1.msra.mxu0 0.0
        %7111 = vmatprep.subr.mxu0 0.0
        %7112 = vmatpush1.msra.mxu0 0.0
        %7113 = vmatprep.subr.mxu0 0.0
        %7114 = vmatpush1.msra.mxu0 0.0
        %7115 = vmatprep.subr.mxu0 0.0
        %7116 = vmatpush1.msra.mxu0 0.0
        %7117 = vmatprep.subr.mxu0 0.0
        %7118 = vmatpush1.msra.mxu0 0.0
        %7119 = vmatprep.subr.mxu0 0.0
        %7120 = vmatpush1.msra.mxu0 0.0
        %7121 = vmatprep.subr.mxu0 0.0
        %7122 = vmatpush1.msra.mxu0 0.0
        %7123 = vmatprep.subr.mxu0 0.0
        %7124 = vmatpush1.msra.mxu0 %v7085
        %7125 = vmatprep.subr.mxu0 0.0
        %7126 = vmatpush1.msra.mxu0 %v7084
        %7127 = vmatprep.subr.mxu0 0.0
        %7128 = vmatpush1.msra.mxu0 %v7083
        %7129 = vmatprep.subr.mxu0 0.0
        %7130 = vmatpush1.msra.mxu0 %v7082
        %7131 = vmatprep.subr.mxu0 0.0
        %7132 = vmatpush2.msra.mxu0 0.0
        %7133 = vmatprep.subr.mxu0 0.0
        %7134 = vmatpush2.msra.mxu0 0.0
        %7135 = vmatprep.subr.mxu0 0.0
        %7136 = vmatpush2.msra.mxu0 0.0
        %7137 = vmatprep.subr.mxu0 0.0
        %7138 = vmatpush2.msra.mxu0 0.0
        %7139 = vmatprep.subr.mxu0 0.0
        %7140 = vmatpush2.msra.mxu0 0.0
        %7141 = vmatprep.subr.mxu0 0.0
        %7142 = vmatpush2.msra.mxu0 0.0
        %7143 = vmatprep.subr.mxu0 0.0
        %7144 = vmatpush2.msra.mxu0 0.0
        %7145 = vmatprep.subr.mxu0 0.0
        %7146 = vmatpush2.msra.mxu0 0.0
        %7147 = vmatprep.subr.mxu0 0.0
        %7148 = vmatpush2.msra.mxu0 0.0
        %7149 = vmatprep.subr.mxu0 0.0
        %7150 = vmatpush2.msra.mxu0 0.0
        %7151 = vmatprep.subr.mxu0 0.0
        %7152 = vmatpush2.msra.mxu0 0.0
        %7153 = vmatprep.subr.mxu0 0.0
        %7154 = vmatpush2.msra.mxu0 0.0
        %7155 = vmatprep.subr.mxu0 0.0
        %7156 = vmatpush2.msra.mxu0 0.0
        %7157 = vmatprep.subr.mxu0 0.0
        %7158 = vmatpush2.msra.mxu0 0.0
        %7159 = vmatprep.subr.mxu0 0.0
        %7160 = vmatpush2.msra.mxu0 0.0
        %7161 = vmatprep.subr.mxu0 0.0
        %7162 = vmatpush2.msra.mxu0 0.0
        %7163 = vmatprep.mubr.f32.mxu0 0.0
        %7164 = vmatmul.mubr.f32.gmra.mxu0 %v7094
        %v7165 = vpop.f32.mrf.mxu0
        %v7166 = vadd.f32 %v7091, %v7165
        %v7167 = vpop.f32.mrf.mxu0
        %7168 = vmatprep.mubr.f32.mxu0 0.0
        %7169 = vmatmul.mubr.f32.gmra.mxu0 %v7097
        %v7170 = vpop.f32.mrf.mxu0
        %v7171 = vadd.f32 %v7091, %v7170
        %v7172 = vpop.f32.mrf.mxu0
        %7173 = vdwg.mxu0
        %v7174 = vmul.f32 %v7166, 0.5
        %v7175 = vmul.f32 %v7171, 0.5
        %v7176 = vmul.f32 %v7166, 0.70710677
        %v7177 = vmul.f32 %v7171, 0.70710677
        %v7178 = verf.f32.pop %v7176
        %v7179 = verf.f32.pop %v7177
        %v7180 = vadd.f32 %v7178, 1.0
        %v7181 = vadd.f32 %v7179, 1.0
        %v7182 = vmul.f32 %v7174, %v7180
        %v7183 = vmul.f32 %v7175, %v7181
        %v7184 = vld [vmem:[%s103] sm:$0xff]
        %v7185 = vld [vmem:[%s103 + $0x8] sm:$0xff]
        %v7186 = vld [vmem:[%s103 + $0x10] sm:$0xff]
        %v7187 = vld [vmem:[%s103 + $0x18] sm:$0xff]
        %v7188 = vld [vmem:[%s103 + $0x20] sm:$0xff]
        %v7189 = vld [vmem:[%s103 + $0x28] sm:$0xff]
        %v7190 = vld [vmem:[%s103 + $0x30] sm:$0xff]
        %v7191 = vld [vmem:[%s103 + $0x38] sm:$0xff]
        %v7192 = vld [vmem:[%s103 + $0x40] sm:$0xff]
        %v7193 = vld [vmem:[%s103 + $0x48] sm:$0xff]
        %v7194 = vld [vmem:[%s103 + $0x50] sm:$0xff]
        %v7195 = vld [vmem:[%s103 + $0x58] sm:$0xff]
        %v7196 = vld [vmem:[%s103 + $0x60] sm:$0xff]
        %v7197 = vld [vmem:[%s103 + $0x68] sm:$0xff]
        %v7198 = vld [vmem:[%s103 + $0x70] sm:$0xff]
        %v7199 = vld [vmem:[%s103 + $0x78] sm:$0xff]
        %7200 = vmatprep.subr.mxu0 0.0
        %7201 = vmatpush1.msra.mxu0 %v7199
        %7202 = vmatprep.subr.mxu0 0.0
        %7203 = vmatpush1.msra.mxu0 %v7198
        %7204 = vmatprep.subr.mxu0 0.0
        %7205 = vmatpush1.msra.mxu0 %v7197
        %7206 = vmatprep.subr.mxu0 0.0
        %7207 = vmatpush1.msra.mxu0 %v7196
        %7208 = vmatprep.subr.mxu0 0.0
        %7209 = vmatpush1.msra.mxu0 %v7195
        %7210 = vmatprep.subr.mxu0 0.0
        %7211 = vmatpush1.msra.mxu0 %v7194
        %7212 = vmatprep.subr.mxu0 0.0
        %7213 = vmatpush1.msra.mxu0 %v7193
        %7214 = vmatprep.subr.mxu0 0.0
        %7215 = vmatpush1.msra.mxu0 %v7192
        %7216 = vmatprep.subr.mxu0 0.0
        %7217 = vmatpush1.msra.mxu0 %v7191
        %7218 = vmatprep.subr.mxu0 0.0
        %7219 = vmatpush1.msra.mxu0 %v7190
        %7220 = vmatprep.subr.mxu0 0.0
        %7221 = vmatpush1.msra.mxu0 %v7189
        %7222 = vmatprep.subr.mxu0 0.0
        %7223 = vmatpush1.msra.mxu0 %v7188
        %7224 = vmatprep.subr.mxu0 0.0
        %7225 = vmatpush1.msra.mxu0 %v7187
        %7226 = vmatprep.subr.mxu0 0.0
        %7227 = vmatpush1.msra.mxu0 %v7186
        %7228 = vmatprep.subr.mxu0 0.0
        %7229 = vmatpush1.msra.mxu0 %v7185
        %7230 = vmatprep.subr.mxu0 0.0
        %7231 = vmatpush1.msra.mxu0 %v7184
        %7232 = vmatprep.subr.mxu0 0.0
        %7233 = vmatpush2.msra.mxu0 0.0
        %7234 = vmatprep.subr.mxu0 0.0
        %7235 = vmatpush2.msra.mxu0 0.0
        %7236 = vmatprep.subr.mxu0 0.0
        %7237 = vmatpush2.msra.mxu0 0.0
        %7238 = vmatprep.subr.mxu0 0.0
        %7239 = vmatpush2.msra.mxu0 0.0
        %7240 = vmatprep.subr.mxu0 0.0
        %7241 = vmatpush2.msra.mxu0 0.0
        %7242 = vmatprep.subr.mxu0 0.0
        %7243 = vmatpush2.msra.mxu0 0.0
        %7244 = vmatprep.subr.mxu0 0.0
        %7245 = vmatpush2.msra.mxu0 0.0
        %7246 = vmatprep.subr.mxu0 0.0
        %7247 = vmatpush2.msra.mxu0 0.0
        %7248 = vmatprep.subr.mxu0 0.0
        %7249 = vmatpush2.msra.mxu0 0.0
        %7250 = vmatprep.subr.mxu0 0.0
        %7251 = vmatpush2.msra.mxu0 0.0
        %7252 = vmatprep.subr.mxu0 0.0
        %7253 = vmatpush2.msra.mxu0 0.0
        %7254 = vmatprep.subr.mxu0 0.0
        %7255 = vmatpush2.msra.mxu0 0.0
        %7256 = vmatprep.subr.mxu0 0.0
        %7257 = vmatpush2.msra.mxu0 0.0
        %7258 = vmatprep.subr.mxu0 0.0
        %7259 = vmatpush2.msra.mxu0 0.0
        %7260 = vmatprep.subr.mxu0 0.0
        %7261 = vmatpush2.msra.mxu0 0.0
        %7262 = vmatprep.subr.mxu0 0.0
        %7263 = vmatpush2.msra.mxu0 0.0
        %7264 = vmatprep.mubr.f32.mxu0 0.0
        %7265 = vmatmul.mubr.f32.gmra.mxu0 %v7182
        %v7266 = vpop.f32.mrf.mxu0
        %v7267 = vadd.f32 0.0, %v7266
        %v7268 = vpop.f32.mrf.mxu0
        %7269 = vmatprep.mubr.f32.mxu0 0.0
        %7270 = vmatmul.mubr.f32.gmra.mxu0 %v7183
        %v7271 = vpop.f32.mrf.mxu0
        %v7272 = vadd.f32 0.0, %v7271
        %v7273 = vpop.f32.mrf.mxu0
        %7274 = vdwg.mxu0
        %v7275 = vadd.f32 %v7036, %v7267
        %v7276 = vadd.f32 %v7037, %v7272
        %v7277 = vld [vmem:[#allocation22] sm:$0x1]
        %v7279 = vlaneseq
        %v7280 = vshrl.u32 %v7279, 7
        %v7281 = vsub.s32 0, %v7280
        %v7282 = vrot.slane %v7277, %v7281
        %v7284 = vadd.f32 %v7275, %v7282
        %v7285 = vadd.f32 %v7276, %v7282
        %v7286 = vld [vmem:[#allocation23] sm:$0x1]
        %v7287 = vld [vmem:[#allocation25] sm:$0x1]
        %v7288 = vsel %vm2063, %v7284, 0.0
        %7289 = vadd.xlane.f32.xlu0 %v7288
        %v7290 = vpop.xlane.xlu0 %7289
        %v7291 = vsel %vm2063, %v7285, 0.0
        %7292 = vadd.xlane.f32.xlu0 %v7291
        %v7293 = vpop.xlane.xlu0 %7292
        %v7294 = vmul.f32 %v7290, %v2070
        %v7295 = vmul.f32 %v7293, %v2070
        %v7296 = vsub.f32 %v7284, %v7294
        %v7297 = vsub.f32 %v7285, %v7295
        %v7298 = vmul.f32 %v7296, %v7296
        %v7299 = vmul.f32 %v7297, %v7297
        %v7300 = vsel %vm2063, %v7298, 0.0
        %7301 = vadd.xlane.f32.xlu0 %v7300
        %v7302 = vpop.xlane.xlu0 %7301
        %v7303 = vsel %vm2063, %v7299, 0.0
        %7304 = vadd.xlane.f32.xlu0 %v7303
        %v7305 = vpop.xlane.xlu0 %7304
        %v7306 = vmul.f32 %v7302, %v2070
        %v7307 = vmul.f32 %v7305, %v2070
        %v7308 = vadd.f32 %v7306, 1e-05
        %v7309 = vadd.f32 %v7307, 1e-05
        %v7310 = vrsqrt.pop %v7308
        %v7311 = vrsqrt.pop %v7309
        %v7312 = vmul.f32 %v7296, %v7310
        %v7313 = vmul.f32 %v7297, %v7311
        %v7315 = vlaneseq
        %v7316 = vshrl.u32 %v7315, 7
        %v7317 = vsub.s32 0, %v7316
        %v7318 = vrot.slane %v7286, %v7317
        %v7320 = vmul.f32 %v7312, %v7318
        %v7321 = vmul.f32 %v7313, %v7318
        %v7323 = vlaneseq
        %v7324 = vshrl.u32 %v7323, 7
        %v7325 = vsub.s32 0, %v7324
        %v7326 = vrot.slane %v7287, %v7325
        %v7328 = vadd.f32 %v7320, %v7326
        %v7329 = vadd.f32 %v7321, %v7326
        %v7330 = vld [vmem:[%s111] sm:$0xff]
        %v7331 = vld [vmem:[%s111 + $0x8] sm:$0xff]
        %v7332 = vld [vmem:[%s111 + $0x10] sm:$0xff]
        %v7333 = vld [vmem:[%s111 + $0x18] sm:$0xff]
        %v7334 = vld [vmem:[#allocation26] sm:$0x1]
        %v7336 = vlaneseq
        %v7337 = vshrl.u32 %v7336, 7
        %v7338 = vsub.s32 0, %v7337
        %v7339 = vrot.slane %v7334, %v7338
        %v7342 = vsel %vm2063, %v7328, 0
        %v7345 = vsel %vm2063, %v7329, 0
        %7347 = vmatprep.subr.mxu0 0.0
        %7348 = vmatpush1.msra.mxu0 0.0
        %7349 = vmatprep.subr.mxu0 0.0
        %7350 = vmatpush1.msra.mxu0 0.0
        %7351 = vmatprep.subr.mxu0 0.0
        %7352 = vmatpush1.msra.mxu0 0.0
        %7353 = vmatprep.subr.mxu0 0.0
        %7354 = vmatpush1.msra.mxu0 0.0
        %7355 = vmatprep.subr.mxu0 0.0
        %7356 = vmatpush1.msra.mxu0 0.0
        %7357 = vmatprep.subr.mxu0 0.0
        %7358 = vmatpush1.msra.mxu0 0.0
        %7359 = vmatprep.subr.mxu0 0.0
        %7360 = vmatpush1.msra.mxu0 0.0
        %7361 = vmatprep.subr.mxu0 0.0
        %7362 = vmatpush1.msra.mxu0 0.0
        %7363 = vmatprep.subr.mxu0 0.0
        %7364 = vmatpush1.msra.mxu0 0.0
        %7365 = vmatprep.subr.mxu0 0.0
        %7366 = vmatpush1.msra.mxu0 0.0
        %7367 = vmatprep.subr.mxu0 0.0
        %7368 = vmatpush1.msra.mxu0 0.0
        %7369 = vmatprep.subr.mxu0 0.0
        %7370 = vmatpush1.msra.mxu0 0.0
        %7371 = vmatprep.subr.mxu0 0.0
        %7372 = vmatpush1.msra.mxu0 %v7333
        %7373 = vmatprep.subr.mxu0 0.0
        %7374 = vmatpush1.msra.mxu0 %v7332
        %7375 = vmatprep.subr.mxu0 0.0
        %7376 = vmatpush1.msra.mxu0 %v7331
        %7377 = vmatprep.subr.mxu0 0.0
        %7378 = vmatpush1.msra.mxu0 %v7330
        %7379 = vmatprep.subr.mxu0 0.0
        %7380 = vmatpush2.msra.mxu0 0.0
        %7381 = vmatprep.subr.mxu0 0.0
        %7382 = vmatpush2.msra.mxu0 0.0
        %7383 = vmatprep.subr.mxu0 0.0
        %7384 = vmatpush2.msra.mxu0 0.0
        %7385 = vmatprep.subr.mxu0 0.0
        %7386 = vmatpush2.msra.mxu0 0.0
        %7387 = vmatprep.subr.mxu0 0.0
        %7388 = vmatpush2.msra.mxu0 0.0
        %7389 = vmatprep.subr.mxu0 0.0
        %7390 = vmatpush2.msra.mxu0 0.0
        %7391 = vmatprep.subr.mxu0 0.0
        %7392 = vmatpush2.msra.mxu0 0.0
        %7393 = vmatprep.subr.mxu0 0.0
        %7394 = vmatpush2.msra.mxu0 0.0
        %7395 = vmatprep.subr.mxu0 0.0
        %7396 = vmatpush2.msra.mxu0 0.0
        %7397 = vmatprep.subr.mxu0 0.0
        %7398 = vmatpush2.msra.mxu0 0.0
        %7399 = vmatprep.subr.mxu0 0.0
        %7400 = vmatpush2.msra.mxu0 0.0
        %7401 = vmatprep.subr.mxu0 0.0
        %7402 = vmatpush2.msra.mxu0 0.0
        %7403 = vmatprep.subr.mxu0 0.0
        %7404 = vmatpush2.msra.mxu0 0.0
        %7405 = vmatprep.subr.mxu0 0.0
        %7406 = vmatpush2.msra.mxu0 0.0
        %7407 = vmatprep.subr.mxu0 0.0
        %7408 = vmatpush2.msra.mxu0 0.0
        %7409 = vmatprep.subr.mxu0 0.0
        %7410 = vmatpush2.msra.mxu0 0.0
        %7411 = vmatprep.mubr.f32.mxu0 0.0
        %7412 = vmatmul.mubr.f32.gmra.mxu0 %v7342
        %v7413 = vpop.f32.mrf.mxu0
        %v7414 = vadd.f32 %v7339, %v7413
        %v7415 = vpop.f32.mrf.mxu0
        %7416 = vmatprep.mubr.f32.mxu0 0.0
        %7417 = vmatmul.mubr.f32.gmra.mxu0 %v7345
        %v7418 = vpop.f32.mrf.mxu0
        %v7419 = vadd.f32 %v7339, %v7418
        %v7420 = vpop.f32.mrf.mxu0
        %7421 = vdwg.mxu0
        %7422 = vst.msk [vmem:[%s1940] sm:$0xff] %vm2295, %v7414
        %7423 = vst.msk [vmem:[%s1940 + $0x8] sm:$0xff] %vm2295, %v7419
        %s7424 = sand.u32 %s1356, 1
        %s7425 = scalar_lea.sflag [#allocation4], %s7424
        %s7426 = sand.u32 %s1356, 1
        %s7427 = smul.addr %s7426, 16
        %s7428 = scalar_lea.vmem [#allocation28], %s7427
        %s7429 = sand.u32 %s146, 1
        %s7430 = scalar_lea.sflag [#allocation30], %s7429
        %s7431 = sand.u32 %s1382, 1
        %s7432 = smul.addr %s7431, 16
        %s7433 = scalar_lea.vmem [#allocation29], %s7432
        %s7434 = sand.u32 %s146, 1
        %s7435 = scalar_lea.sflag [#allocation30], %s7434
        %s7436 = sand.u32 %s1408, 1
        %s7437 = smul.addr %s7436, 16
        %s7438 = scalar_lea.vmem [#allocation31], %s7437
        // Predicated region
        $region313: #{vit4loca_forward.1} parent=247 // pred_check
          %p7439 = pneg %p1366
        $region314: #{vit4loca_forward.1} parent=247 // pred_check_branch
          %7441 = sbr.rel (%p7439) target = $region316
        $region315: #{vit4loca_forward.1} parent=247 // pred_region
          %s7443 = ssub.s32 256, 256
          %7444 = vsyncadd %s7425, %s7443
          %s7445 = smul.addr %s146, 2
          %s7446 = smul.addr %s7445, 128
          %s7447 = scalar_lea.hbm %s115, %s7446
          %s7448 = sshll.u32 %s7428, 4
          %s7449 = int_to_ptr.vmem [resolvable:$true] %s7448
          %7454 = dma.vmem_to_hbm [thread:$0]  %s7449, 256, %s7447, %s7425, 128, 128, 8
        $region316: #{vit4loca_forward.1} parent=247 // pred_fallthru
          _
        // Predicated region
        $region317: #{vit4loca_forward.1} parent=247 // pred_check
          %p7455 = pneg %p1392
        $region318: #{vit4loca_forward.1} parent=247 // pred_check_branch
          %7457 = sbr.rel (%p7455) target = $region320
        $region319: #{vit4loca_forward.1} parent=247 // pred_region
          %s7459 = ssub.s32 256, 256
          %7460 = vsyncadd %s7430, %s7459
          %s7461 = smul.addr %s146, 2
          %s7462 = smul.addr %s7461, 128
          %s7463 = scalar_lea.hbm %s117, %s7462
          %s7464 = sshll.u32 %s7433, 4
          %s7465 = int_to_ptr.vmem [resolvable:$true] %s7464
          %7470 = dma.vmem_to_hbm [thread:$0]  %s7465, 256, %s7463, %s7430, 128, 128, 8
        $region320: #{vit4loca_forward.1} parent=247 // pred_fallthru
          _
        // Predicated region
        $region321: #{vit4loca_forward.1} parent=247 // pred_check
          %p7471 = pneg %p1418
        $region322: #{vit4loca_forward.1} parent=247 // pred_check_branch
          %7473 = sbr.rel (%p7471) target = $region324
        $region323: #{vit4loca_forward.1} parent=247 // pred_region
          %s7475 = ssub.s32 256, 256
          %7476 = vsyncadd %s7435, %s7475
          %s7477 = smul.addr %s146, 2
          %s7478 = smul.addr %s7477, 128
          %s7479 = scalar_lea.hbm %s119, %s7478
          %s7480 = sshll.u32 %s7438, 4
          %s7481 = int_to_ptr.vmem [resolvable:$true] %s7480
          %7486 = dma.vmem_to_hbm [thread:$0]  %s7481, 256, %s7479, %s7435, 128, 128, 8
        $region324: #{vit4loca_forward.1} parent=247 // pred_fallthru
          _
      $region248: #{vit4loca_forward.1} parent=5 // pred_fallthru
        _
      %p7487 = scmp.le.s32.totalorder 2, %s141
      // Predicated region
      $region325: #{vit4loca_forward.1} parent=5 // pred_check
        %p7488 = pneg %p7487
      $region326: #{vit4loca_forward.1} parent=5 // pred_check_branch
        %7490 = sbr.rel (%p7488) target = $region328
      $region327: #{vit4loca_forward.1} parent=5 // pred_region
        %s7491 = ssub.s32 %s141, 2
        // Predicated region
        $region329: #{vit4loca_forward.1} parent=327 // pred_check
          %p7492 = pneg %p1372
        $region330: #{vit4loca_forward.1} parent=327 // pred_check_branch
          %7494 = sbr.rel (%p7492) target = $region332
        $region331: #{vit4loca_forward.1} parent=327 // pred_region
          %s7495 = sand.u32 %s1357, 1
          %s7496 = scalar_lea.sflag [#allocation4], %s7495
          %s7497 = sand.u32 %s1357, 1
          %s7498 = smul.addr %s7497, 16
          %s7499 = scalar_lea.vmem [#allocation28], %s7498
          %7500 = dma.done %s7496, 256
        $region332: #{vit4loca_forward.1} parent=327 // pred_fallthru
          _
        // Predicated region
        $region333: #{vit4loca_forward.1} parent=327 // pred_check
          %p7501 = pneg %p1398
        $region334: #{vit4loca_forward.1} parent=327 // pred_check_branch
          %7503 = sbr.rel (%p7501) target = $region336
        $region335: #{vit4loca_forward.1} parent=327 // pred_region
          %s7504 = sand.u32 %s147, 1
          %s7505 = scalar_lea.sflag [#allocation30], %s7504
          %s7506 = sand.u32 %s1383, 1
          %s7507 = smul.addr %s7506, 16
          %s7508 = scalar_lea.vmem [#allocation29], %s7507
          %7509 = dma.done %s7505, 256
        $region336: #{vit4loca_forward.1} parent=327 // pred_fallthru
          _
        // Predicated region
        $region337: #{vit4loca_forward.1} parent=327 // pred_check
          %p7510 = pneg %p1424
        $region338: #{vit4loca_forward.1} parent=327 // pred_check_branch
          %7512 = sbr.rel (%p7510) target = $region340
        $region339: #{vit4loca_forward.1} parent=327 // pred_region
          %s7513 = sand.u32 %s147, 1
          %s7514 = scalar_lea.sflag [#allocation30], %s7513
          %s7515 = sand.u32 %s1409, 1
          %s7516 = smul.addr %s7515, 16
          %s7517 = scalar_lea.vmem [#allocation31], %s7516
          %7518 = dma.done %s7514, 256
        $region340: #{vit4loca_forward.1} parent=327 // pred_fallthru
          _
      $region328: #{vit4loca_forward.1} parent=5 // pred_fallthru
        _
    $region6: #{vit4loca_forward.1} parent=1 // loop_footer
      %s145 = sadd.s32 1, %s141
    $region7: #{vit4loca_forward.1} parent=1 // loop_footer_branch
      %140 = sbr.rel target = $region3
    $region8: #{vit4loca_forward.1} parent=1 // loop_exit
      _
    %7519 = vsyncpa [#allocation3], 1
    %s7520 = scalar_lea.sflag [#allocation3], 1
    %7521 = vsyncpa %s7520, 1
    %7522 = vsyncpa [#allocation6], 1
    %7523 = vsyncpa [#allocation9], 1
    %7524 = vsyncpa [#allocation12], 1
    %7525 = vsyncpa [#allocation15], 1
    %7526 = vsyncpa [#allocation18], 1
    %7527 = vsyncpa [#allocation21], 1
    %7528 = vsyncpa [#allocation24], 1
    %7529 = vsyncpa [#allocation27], 1
    %7530 = vsyncpa [#allocation4], 1
    %s7531 = scalar_lea.sflag [#allocation4], 1
    %7532 = vsyncpa %s7531, 1
    %7533 = vsyncpa [#allocation30], 1
    %s7534 = scalar_lea.sflag [#allocation30], 1
    %7535 = vsyncpa %s7534, 1

</llo_original>
